<compile_context>
chip_gen: v7x
topology: tpu7x:2x2x1
jax: 0.10.0
libtpu: 0.0.40
codegen_flags: <defaults>
</compile_context>

<pallas_src>
import functools

import jax
import jax.numpy as jnp
from jax import lax
from jax.experimental import pallas as pl
from jax.experimental.pallas import tpu as pltpu


def _round_up(n, m):
    return (n + m - 1) // m * m


def _fused_conv_block_kernel(x_ref, w1_ref, s1_ref, t1_ref,
                             w2_ref, s2_ref, t2_ref, o_ref,
                             xp_ref, patch_ref,
                             *, H, W, Cin, Cout, Cp, Cop):
    """One batch element: (3x3 conv + folded BN + ReLU) x 2, fully in VMEM.

    x_ref     : (1, H, W, Cin)      unpadded input tile (bf16)
    w{1,2}_ref: (9*Cp, Cop)         flattened, zero-padded conv weights (bf16)
    s/t{1,2}  : (1, Cop)            folded BN scale / shift (f32)
    o_ref     : (1, H, W, Cout)     output tile (f32)
    xp_ref    : (H+2, W+2, Cp) bf16 zero-padded working image (halo + chan pad)
    patch_ref : (H*W, 9*Cp)    bf16 im2col patch matrix
    """

    def conv_bn_relu(w_ref, s_ref, t_ref):
        # Build the im2col patch matrix: 9 shifted, full-lane windows of the
        # padded working image, written at 128-aligned lane offsets.
        for tap in range(9):
            dy, dx = tap // 3, tap % 3
            win = xp_ref[dy:dy + H, dx:dx + W, :]            # (H, W, Cp)
            patch_ref[:, tap * Cp:(tap + 1) * Cp] = win.reshape(H * W, Cp)
        # Single MXU matmul per layer, f32 accumulation.
        acc = jnp.dot(patch_ref[...], w_ref[...],
                      preferred_element_type=jnp.float32)    # (H*W, Cop) f32
        y = acc * s_ref[...] + t_ref[...]                    # folded BN + bias
        return jnp.maximum(y, 0.0)                           # ReLU (f32 VPU)

    # ---- layer 1: stage the input into the padded working buffer -----------
    xp_ref[...] = jnp.zeros_like(xp_ref)                     # halo + chan pad
    xp_ref[1:H + 1, 1:W + 1, :Cin] = x_ref[0].astype(xp_ref.dtype)
    h = conv_bn_relu(w1_ref, s1_ref, t1_ref)                 # (H*W, Cop) f32

    # ---- layer 2: intermediate stays in VMEM (no HBM round-trip) ------------
    xp_ref[...] = jnp.zeros_like(xp_ref)
    xp_ref[1:H + 1, 1:W + 1, :Cop] = h.reshape(H, W, Cop).astype(xp_ref.dtype)
    y = conv_bn_relu(w2_ref, s2_ref, t2_ref)                 # (H*W, Cop) f32

    o_ref[0] = y[:, :Cout].reshape(H, W, Cout).astype(o_ref.dtype)


def _prep_layer(w_hwio, bias, bn, cp, cop, eps=1e-5):
    """Fold BN (+ conv bias) into scale/shift; flatten/pad weights for im2col."""
    kh, kw, ci, co = w_hwio.shape
    scale = bn["gamma"] / jnp.sqrt(bn["var"] + eps)
    shift = (bias - bn["mean"]) * scale + bn["beta"]
    w_pad = jnp.zeros((kh, kw, cp, cop), jnp.float32)
    w_pad = w_pad.at[:, :, :ci, :co].set(w_hwio)
    w_flat = w_pad.reshape(kh * kw * cp, cop).astype(jnp.bfloat16)
    scale_p = jnp.zeros((1, cop), jnp.float32).at[0, :co].set(scale)
    shift_p = jnp.zeros((1, cop), jnp.float32).at[0, :co].set(shift)
    return w_flat, scale_p, shift_p


@jax.jit
def conv_block_3_forward(x_nchw, params):
    """Matches conv_block_3.forward (inference BN). NCHW in / NCHW out."""
    N, Cin, H, W = x_nchw.shape
    Cout = params["w1"].shape[-1]
    Cp = _round_up(max(Cin, Cout), 128)      # working (lane) input-chan pad
    Cop = _round_up(Cout, 128)               # working (lane) output-chan pad

    w1, s1, t1 = _prep_layer(params["w1"], params["b1"], params["bn1"], Cp, Cop)
    w2, s2, t2 = _prep_layer(params["w2"], params["b2"], params["bn2"], Cp, Cop)

    # One NCHW -> NHWC transpose at the boundary, fused with the bf16 cast
    # (halves input HBM bytes and feeds the bf16 MXU path).
    x = jnp.transpose(x_nchw, (0, 2, 3, 1)).astype(jnp.bfloat16)

    kernel = functools.partial(_fused_conv_block_kernel,
                               H=H, W=W, Cin=Cin, Cout=Cout, Cp=Cp, Cop=Cop)
    out = pl.pallas_call(
        kernel,
        out_shape=jax.ShapeDtypeStruct((N, H, W, Cout), jnp.float32),
        grid=(N,),
        in_specs=[
            pl.BlockSpec((1, H, W, Cin), lambda n: (n, 0, 0, 0)),
            pl.BlockSpec((9 * Cp, Cop), lambda n: (0, 0)),   # w1 (resident)
            pl.BlockSpec((1, Cop), lambda n: (0, 0)),        # scale1
            pl.BlockSpec((1, Cop), lambda n: (0, 0)),        # shift1
            pl.BlockSpec((9 * Cp, Cop), lambda n: (0, 0)),   # w2 (resident)
            pl.BlockSpec((1, Cop), lambda n: (0, 0)),        # scale2
            pl.BlockSpec((1, Cop), lambda n: (0, 0)),        # shift2
        ],
        out_specs=pl.BlockSpec((1, H, W, Cout), lambda n: (n, 0, 0, 0)),
        scratch_shapes=[
            pltpu.VMEM((H + 2, W + 2, Cp), jnp.bfloat16),    # padded image
            pltpu.VMEM((H * W, 9 * Cp), jnp.bfloat16),       # im2col patches
        ],
        compiler_params=pltpu.CompilerParams(
            dimension_semantics=("parallel",),               # feeds 2 TCs (v7x)
            vmem_limit_bytes=32 * 1024 * 1024,               # tiles sized << 64 MiB
        ),
    )(x, w1, s1, t1, w2, s2, t2)
    return jnp.transpose(out, (0, 3, 1, 2))                  # NHWC -> NCHW


def init_params(key, ch_in, ch_out):
    """Deterministic synthetic parameters matching conv_block_3's shapes.

    Conv weights are stored HWIO (PyTorch OIHW transposed). BatchNorm buffers
    take PyTorch's freshly-initialised values.
    """
    k1, k2, k3, k4 = jax.random.split(key, 4)
    fan1 = ch_in * 9
    w1 = jax.random.uniform(k1, (3, 3, ch_in, ch_out), jnp.float32,
                            -1.0, 1.0) / jnp.sqrt(fan1)
    b1 = jax.random.uniform(k2, (ch_out,), jnp.float32, -1.0, 1.0) / jnp.sqrt(fan1)
    fan2 = ch_out * 9
    w2 = jax.random.uniform(k3, (3, 3, ch_out, ch_out), jnp.float32,
                            -1.0, 1.0) / jnp.sqrt(fan2)
    b2 = jax.random.uniform(k4, (ch_out,), jnp.float32, -1.0, 1.0) / jnp.sqrt(fan2)

    def bn():
        return dict(gamma=jnp.ones((ch_out,), jnp.float32),
                    beta=jnp.zeros((ch_out,), jnp.float32),
                    mean=jnp.zeros((ch_out,), jnp.float32),
                    var=jnp.ones((ch_out,), jnp.float32))

    return dict(w1=w1, b1=b1, bn1=bn(), w2=w2, b2=b2, bn2=bn())


def _reference(x_nchw, params, eps=1e-5):
    """Pure-JAX f32 reference (lax conv) for correctness checking."""
    x = jnp.transpose(x_nchw, (0, 2, 3, 1))
    dn = ("NHWC", "HWIO", "NHWC")

    def block(x, w, b, bn):
        y = lax.conv_general_dilated(x, w, (1, 1), "SAME",
                                     dimension_numbers=dn) + b
        y = (y - bn["mean"]) / jnp.sqrt(bn["var"] + eps) * bn["gamma"] + bn["beta"]
        return jnp.maximum(y, 0.0)

    h = block(x, params["w1"], params["b1"], params["bn1"])
    y = block(h, params["w2"], params["b2"], params["bn2"])
    return jnp.transpose(y, (0, 3, 1, 2))


if __name__ == "__main__":
    N, C_IN, C_OUT, H, W = 2, 4, 8, 16, 16
    key = jax.random.PRNGKey(0)
    kx, kp = jax.random.split(key)
    x = jax.random.normal(kx, (N, C_IN, H, W), jnp.float32)
    params = init_params(kp, C_IN, C_OUT)

    out = jax.block_until_ready(conv_block_3_forward(x, params))
    ref = _reference(x, params)

    assert out.shape == (N, C_OUT, H, W)
    # bf16 matmul inputs (f32 accumulation) -> loosened tolerance vs f32 ref.
    assert jnp.allclose(out, ref, atol=5e-2, rtol=5e-2), \
        float(jnp.max(jnp.abs(out - ref)))
    print("KERNEL_OK")
</pallas_src>

<mosaic_0001>
module attributes {stable_mosaic.version = 11 : i64} {
  func.func @_fused_conv_block_kernel(%arg0: i32, %arg1: memref<1x16x16x4xbf16, #tpu.memory_space<vmem>>, %arg2: memref<1152x128xbf16, #tpu.memory_space<vmem>>, %arg3: memref<1x128xf32, #tpu.memory_space<vmem>>, %arg4: memref<1x128xf32, #tpu.memory_space<vmem>>, %arg5: memref<1152x128xbf16, #tpu.memory_space<vmem>>, %arg6: memref<1x128xf32, #tpu.memory_space<vmem>>, %arg7: memref<1x128xf32, #tpu.memory_space<vmem>>, %arg8: memref<1x16x16x8xf32, #tpu.memory_space<vmem>>, %arg9: memref<18x18x128xbf16, #tpu.memory_space<vmem>>, %arg10: memref<256x1152xbf16, #tpu.memory_space<vmem>>) attributes {dimension_semantics = [#tpu.dimension_semantics<parallel>], iteration_bounds = array<i64: 2>, scalar_prefetch = 0 : i64, scratch_operands = 2 : i64, tpu.core_type = #tpu.core_type<tc>, window_params = [{transform_indices = @transform_0, window_bounds = array<i64: 1, 16, 16, 4>}, {pipeline_mode = #tpu.pipeline_mode<synchronous>, transform_indices = @transform_1, window_bounds = array<i64: 1152, 128>}, {pipeline_mode = #tpu.pipeline_mode<synchronous>, transform_indices = @transform_2, window_bounds = array<i64: 1, 128>}, {pipeline_mode = #tpu.pipeline_mode<synchronous>, transform_indices = @transform_3, window_bounds = array<i64: 1, 128>}, {pipeline_mode = #tpu.pipeline_mode<synchronous>, transform_indices = @transform_4, window_bounds = array<i64: 1152, 128>}, {pipeline_mode = #tpu.pipeline_mode<synchronous>, transform_indices = @transform_5, window_bounds = array<i64: 1, 128>}, {pipeline_mode = #tpu.pipeline_mode<synchronous>, transform_indices = @transform_6, window_bounds = array<i64: 1, 128>}, {transform_indices = @transform_7, window_bounds = array<i64: 1, 16, 16, 8>}]} {
    %cst = arith.constant 0.000000e+00 : bf16
    %0 = vector.broadcast %cst : bf16 to vector<18x18x128xbf16>
    %c0 = arith.constant 0 : index
    %c0_0 = arith.constant 0 : index
    %c0_1 = arith.constant 0 : index
    %1 = vector.load %arg9[%c0, %c0_0, %c0_1] : memref<18x18x128xbf16, #tpu.memory_space<vmem>>, vector<18x18x128xbf16>
    tpu.vector_store %arg9[%c0, %c0_0, %c0_1], %0 {strides = array<i32>} : memref<18x18x128xbf16, #tpu.memory_space<vmem>>, vector<18x18x128xbf16>,
    %c0_2 = arith.constant 0 : index
    %c0_3 = arith.constant 0 : index
    %c0_4 = arith.constant 0 : index
    %c0_5 = arith.constant 0 : index
    %2 = vector.load %arg1[%c0_2, %c0_3, %c0_4, %c0_5] : memref<1x16x16x4xbf16, #tpu.memory_space<vmem>>, vector<1x16x16x4xbf16>
    %3 = vector.shape_cast %2 : vector<1x16x16x4xbf16> to vector<16x16x4xbf16>
    %c1 = arith.constant 1 : index
    %c1_6 = arith.constant 1 : index
    %c0_7 = arith.constant 0 : index
    %4 = vector.load %arg9[%c1, %c1_6, %c0_7] : memref<18x18x128xbf16, #tpu.memory_space<vmem>>, vector<16x16x4xbf16>
    tpu.vector_store %arg9[%c1, %c1_6, %c0_7], %3 {strides = array<i32>} : memref<18x18x128xbf16, #tpu.memory_space<vmem>>, vector<16x16x4xbf16>,
    %c0_8 = arith.constant 0 : index
    %c0_9 = arith.constant 0 : index
    %c0_10 = arith.constant 0 : index
    %5 = vector.load %arg9[%c0_8, %c0_9, %c0_10] : memref<18x18x128xbf16, #tpu.memory_space<vmem>>, vector<16x16x128xbf16>
    %6 = vector.shape_cast %5 : vector<16x16x128xbf16> to vector<256x128xbf16>
    %c0_11 = arith.constant 0 : index
    %c0_12 = arith.constant 0 : index
    %7 = vector.load %arg10[%c0_11, %c0_12] : memref<256x1152xbf16, #tpu.memory_space<vmem>>, vector<256x128xbf16>
    tpu.vector_store %arg10[%c0_11, %c0_12], %6 {strides = array<i32>} : memref<256x1152xbf16, #tpu.memory_space<vmem>>, vector<256x128xbf16>,
    %c0_13 = arith.constant 0 : index
    %c1_14 = arith.constant 1 : index
    %c0_15 = arith.constant 0 : index
    %8 = vector.load %arg9[%c0_13, %c1_14, %c0_15] : memref<18x18x128xbf16, #tpu.memory_space<vmem>>, vector<16x16x128xbf16>
    %9 = vector.shape_cast %8 : vector<16x16x128xbf16> to vector<256x128xbf16>
    %c0_16 = arith.constant 0 : index
    %c128 = arith.constant 128 : index
    %10 = vector.load %arg10[%c0_16, %c128] : memref<256x1152xbf16, #tpu.memory_space<vmem>>, vector<256x128xbf16>
    tpu.vector_store %arg10[%c0_16, %c128], %9 {strides = array<i32>} : memref<256x1152xbf16, #tpu.memory_space<vmem>>, vector<256x128xbf16>,
    %c0_17 = arith.constant 0 : index
    %c2 = arith.constant 2 : index
    %c0_18 = arith.constant 0 : index
    %11 = vector.load %arg9[%c0_17, %c2, %c0_18] : memref<18x18x128xbf16, #tpu.memory_space<vmem>>, vector<16x16x128xbf16>
    %12 = vector.shape_cast %11 : vector<16x16x128xbf16> to vector<256x128xbf16>
    %c0_19 = arith.constant 0 : index
    %c256 = arith.constant 256 : index
    %13 = vector.load %arg10[%c0_19, %c256] : memref<256x1152xbf16, #tpu.memory_space<vmem>>, vector<256x128xbf16>
    tpu.vector_store %arg10[%c0_19, %c256], %12 {strides = array<i32>} : memref<256x1152xbf16, #tpu.memory_space<vmem>>, vector<256x128xbf16>,
    %c1_20 = arith.constant 1 : index
    %c0_21 = arith.constant 0 : index
    %c0_22 = arith.constant 0 : index
    %14 = vector.load %arg9[%c1_20, %c0_21, %c0_22] : memref<18x18x128xbf16, #tpu.memory_space<vmem>>, vector<16x16x128xbf16>
    %15 = vector.shape_cast %14 : vector<16x16x128xbf16> to vector<256x128xbf16>
    %c0_23 = arith.constant 0 : index
    %c384 = arith.constant 384 : index
    %16 = vector.load %arg10[%c0_23, %c384] : memref<256x1152xbf16, #tpu.memory_space<vmem>>, vector<256x128xbf16>
    tpu.vector_store %arg10[%c0_23, %c384], %15 {strides = array<i32>} : memref<256x1152xbf16, #tpu.memory_space<vmem>>, vector<256x128xbf16>,
    %c1_24 = arith.constant 1 : index
    %c1_25 = arith.constant 1 : index
    %c0_26 = arith.constant 0 : index
    %17 = vector.load %arg9[%c1_24, %c1_25, %c0_26] : memref<18x18x128xbf16, #tpu.memory_space<vmem>>, vector<16x16x128xbf16>
    %18 = vector.shape_cast %17 : vector<16x16x128xbf16> to vector<256x128xbf16>
    %c0_27 = arith.constant 0 : index
    %c512 = arith.constant 512 : index
    %19 = vector.load %arg10[%c0_27, %c512] : memref<256x1152xbf16, #tpu.memory_space<vmem>>, vector<256x128xbf16>
    tpu.vector_store %arg10[%c0_27, %c512], %18 {strides = array<i32>} : memref<256x1152xbf16, #tpu.memory_space<vmem>>, vector<256x128xbf16>,
    %c1_28 = arith.constant 1 : index
    %c2_29 = arith.constant 2 : index
    %c0_30 = arith.constant 0 : index
    %20 = vector.load %arg9[%c1_28, %c2_29, %c0_30] : memref<18x18x128xbf16, #tpu.memory_space<vmem>>, vector<16x16x128xbf16>
    %21 = vector.shape_cast %20 : vector<16x16x128xbf16> to vector<256x128xbf16>
    %c0_31 = arith.constant 0 : index
    %c640 = arith.constant 640 : index
    %22 = vector.load %arg10[%c0_31, %c640] : memref<256x1152xbf16, #tpu.memory_space<vmem>>, vector<256x128xbf16>
    tpu.vector_store %arg10[%c0_31, %c640], %21 {strides = array<i32>} : memref<256x1152xbf16, #tpu.memory_space<vmem>>, vector<256x128xbf16>,
    %c2_32 = arith.constant 2 : index
    %c0_33 = arith.constant 0 : index
    %c0_34 = arith.constant 0 : index
    %23 = vector.load %arg9[%c2_32, %c0_33, %c0_34] : memref<18x18x128xbf16, #tpu.memory_space<vmem>>, vector<16x16x128xbf16>
    %24 = vector.shape_cast %23 : vector<16x16x128xbf16> to vector<256x128xbf16>
    %c0_35 = arith.constant 0 : index
    %c768 = arith.constant 768 : index
    %25 = vector.load %arg10[%c0_35, %c768] : memref<256x1152xbf16, #tpu.memory_space<vmem>>, vector<256x128xbf16>
    tpu.vector_store %arg10[%c0_35, %c768], %24 {strides = array<i32>} : memref<256x1152xbf16, #tpu.memory_space<vmem>>, vector<256x128xbf16>,
    %c2_36 = arith.constant 2 : index
    %c1_37 = arith.constant 1 : index
    %c0_38 = arith.constant 0 : index
    %26 = vector.load %arg9[%c2_36, %c1_37, %c0_38] : memref<18x18x128xbf16, #tpu.memory_space<vmem>>, vector<16x16x128xbf16>
    %27 = vector.shape_cast %26 : vector<16x16x128xbf16> to vector<256x128xbf16>
    %c0_39 = arith.constant 0 : index
    %c896 = arith.constant 896 : index
    %28 = vector.load %arg10[%c0_39, %c896] : memref<256x1152xbf16, #tpu.memory_space<vmem>>, vector<256x128xbf16>
    tpu.vector_store %arg10[%c0_39, %c896], %27 {strides = array<i32>} : memref<256x1152xbf16, #tpu.memory_space<vmem>>, vector<256x128xbf16>,
    %c2_40 = arith.constant 2 : index
    %c2_41 = arith.constant 2 : index
    %c0_42 = arith.constant 0 : index
    %29 = vector.load %arg9[%c2_40, %c2_41, %c0_42] : memref<18x18x128xbf16, #tpu.memory_space<vmem>>, vector<16x16x128xbf16>
    %30 = vector.shape_cast %29 : vector<16x16x128xbf16> to vector<256x128xbf16>
    %c0_43 = arith.constant 0 : index
    %c1024 = arith.constant 1024 : index
    %31 = vector.load %arg10[%c0_43, %c1024] : memref<256x1152xbf16, #tpu.memory_space<vmem>>, vector<256x128xbf16>
    tpu.vector_store %arg10[%c0_43, %c1024], %30 {strides = array<i32>} : memref<256x1152xbf16, #tpu.memory_space<vmem>>, vector<256x128xbf16>,
    %c0_44 = arith.constant 0 : index
    %c0_45 = arith.constant 0 : index
    %32 = vector.load %arg10[%c0_44, %c0_45] : memref<256x1152xbf16, #tpu.memory_space<vmem>>, vector<256x1152xbf16>
    %c0_46 = arith.constant 0 : index
    %c0_47 = arith.constant 0 : index
    %33 = vector.load %arg2[%c0_46, %c0_47] : memref<1152x128xbf16, #tpu.memory_space<vmem>>, vector<1152x128xbf16>
    %cst_48 = arith.constant dense<0.000000e+00> : vector<256x128xf32>
    %34 = tpu.matmul %32, %33, %cst_48 {dimension_numbers = #tpu.dot_dimension_numbers<[1], [0], [0], [1], [0, 0, 1, 1], [], []>} : vector<256x1152xbf16>, vector<1152x128xbf16>, vector<256x128xf32> -> vector<256x128xf32>
    %c0_49 = arith.constant 0 : index
    %c0_50 = arith.constant 0 : index
    %35 = vector.load %arg3[%c0_49, %c0_50] : memref<1x128xf32, #tpu.memory_space<vmem>>, vector<1x128xf32>
    %36 = vector.broadcast %35 : vector<1x128xf32> to vector<256x128xf32>
    %37 = arith.mulf %34, %36 : vector<256x128xf32>
    %c0_51 = arith.constant 0 : index
    %c0_52 = arith.constant 0 : index
    %38 = vector.load %arg4[%c0_51, %c0_52] : memref<1x128xf32, #tpu.memory_space<vmem>>, vector<1x128xf32>
    %39 = vector.broadcast %38 : vector<1x128xf32> to vector<256x128xf32>
    %40 = arith.addf %37, %39 : vector<256x128xf32>
    %cst_53 = arith.constant 0.000000e+00 : f32
    %41 = vector.broadcast %cst_53 : f32 to vector<256x128xf32>
    %42 = arith.maximumf %40, %41 : vector<256x128xf32>
    %cst_54 = arith.constant 0.000000e+00 : bf16
    %43 = vector.broadcast %cst_54 : bf16 to vector<18x18x128xbf16>
    %c0_55 = arith.constant 0 : index
    %c0_56 = arith.constant 0 : index
    %c0_57 = arith.constant 0 : index
    %44 = vector.load %arg9[%c0_55, %c0_56, %c0_57] : memref<18x18x128xbf16, #tpu.memory_space<vmem>>, vector<18x18x128xbf16>
    tpu.vector_store %arg9[%c0_55, %c0_56, %c0_57], %43 {strides = array<i32>} : memref<18x18x128xbf16, #tpu.memory_space<vmem>>, vector<18x18x128xbf16>,
    %45 = vector.shape_cast %42 : vector<256x128xf32> to vector<16x16x128xf32>
    %46 = arith.truncf %45 : vector<16x16x128xf32> to vector<16x16x128xbf16>
    %c1_58 = arith.constant 1 : index
    %c1_59 = arith.constant 1 : index
    %c0_60 = arith.constant 0 : index
    %47 = vector.load %arg9[%c1_58, %c1_59, %c0_60] : memref<18x18x128xbf16, #tpu.memory_space<vmem>>, vector<16x16x128xbf16>
    tpu.vector_store %arg9[%c1_58, %c1_59, %c0_60], %46 {strides = array<i32>} : memref<18x18x128xbf16, #tpu.memory_space<vmem>>, vector<16x16x128xbf16>,
    %c0_61 = arith.constant 0 : index
    %c0_62 = arith.constant 0 : index
    %c0_63 = arith.constant 0 : index
    %48 = vector.load %arg9[%c0_61, %c0_62, %c0_63] : memref<18x18x128xbf16, #tpu.memory_space<vmem>>, vector<16x16x128xbf16>
    %49 = vector.shape_cast %48 : vector<16x16x128xbf16> to vector<256x128xbf16>
    %c0_64 = arith.constant 0 : index
    %c0_65 = arith.constant 0 : index
    %50 = vector.load %arg10[%c0_64, %c0_65] : memref<256x1152xbf16, #tpu.memory_space<vmem>>, vector<256x128xbf16>
    tpu.vector_store %arg10[%c0_64, %c0_65], %49 {strides = array<i32>} : memref<256x1152xbf16, #tpu.memory_space<vmem>>, vector<256x128xbf16>,
    %c0_66 = arith.constant 0 : index
    %c1_67 = arith.constant 1 : index
    %c0_68 = arith.constant 0 : index
    %51 = vector.load %arg9[%c0_66, %c1_67, %c0_68] : memref<18x18x128xbf16, #tpu.memory_space<vmem>>, vector<16x16x128xbf16>
    %52 = vector.shape_cast %51 : vector<16x16x128xbf16> to vector<256x128xbf16>
    %c0_69 = arith.constant 0 : index
    %c128_70 = arith.constant 128 : index
    %53 = vector.load %arg10[%c0_69, %c128_70] : memref<256x1152xbf16, #tpu.memory_space<vmem>>, vector<256x128xbf16>
    tpu.vector_store %arg10[%c0_69, %c128_70], %52 {strides = array<i32>} : memref<256x1152xbf16, #tpu.memory_space<vmem>>, vector<256x128xbf16>,
    %c0_71 = arith.constant 0 : index
    %c2_72 = arith.constant 2 : index
    %c0_73 = arith.constant 0 : index
    %54 = vector.load %arg9[%c0_71, %c2_72, %c0_73] : memref<18x18x128xbf16, #tpu.memory_space<vmem>>, vector<16x16x128xbf16>
    %55 = vector.shape_cast %54 : vector<16x16x128xbf16> to vector<256x128xbf16>
    %c0_74 = arith.constant 0 : index
    %c256_75 = arith.constant 256 : index
    %56 = vector.load %arg10[%c0_74, %c256_75] : memref<256x1152xbf16, #tpu.memory_space<vmem>>, vector<256x128xbf16>
    tpu.vector_store %arg10[%c0_74, %c256_75], %55 {strides = array<i32>} : memref<256x1152xbf16, #tpu.memory_space<vmem>>, vector<256x128xbf16>,
    %c1_76 = arith.constant 1 : index
    %c0_77 = arith.constant 0 : index
    %c0_78 = arith.constant 0 : index
    %57 = vector.load %arg9[%c1_76, %c0_77, %c0_78] : memref<18x18x128xbf16, #tpu.memory_space<vmem>>, vector<16x16x128xbf16>
    %58 = vector.shape_cast %57 : vector<16x16x128xbf16> to vector<256x128xbf16>
    %c0_79 = arith.constant 0 : index
    %c384_80 = arith.constant 384 : index
    %59 = vector.load %arg10[%c0_79, %c384_80] : memref<256x1152xbf16, #tpu.memory_space<vmem>>, vector<256x128xbf16>
    tpu.vector_store %arg10[%c0_79, %c384_80], %58 {strides = array<i32>} : memref<256x1152xbf16, #tpu.memory_space<vmem>>, vector<256x128xbf16>,
    %c1_81 = arith.constant 1 : index
    %c1_82 = arith.constant 1 : index
    %c0_83 = arith.constant 0 : index
    %60 = vector.load %arg9[%c1_81, %c1_82, %c0_83] : memref<18x18x128xbf16, #tpu.memory_space<vmem>>, vector<16x16x128xbf16>
    %61 = vector.shape_cast %60 : vector<16x16x128xbf16> to vector<256x128xbf16>
    %c0_84 = arith.constant 0 : index
    %c512_85 = arith.constant 512 : index
    %62 = vector.load %arg10[%c0_84, %c512_85] : memref<256x1152xbf16, #tpu.memory_space<vmem>>, vector<256x128xbf16>
    tpu.vector_store %arg10[%c0_84, %c512_85], %61 {strides = array<i32>} : memref<256x1152xbf16, #tpu.memory_space<vmem>>, vector<256x128xbf16>,
    %c1_86 = arith.constant 1 : index
    %c2_87 = arith.constant 2 : index
    %c0_88 = arith.constant 0 : index
    %63 = vector.load %arg9[%c1_86, %c2_87, %c0_88] : memref<18x18x128xbf16, #tpu.memory_space<vmem>>, vector<16x16x128xbf16>
    %64 = vector.shape_cast %63 : vector<16x16x128xbf16> to vector<256x128xbf16>
    %c0_89 = arith.constant 0 : index
    %c640_90 = arith.constant 640 : index
    %65 = vector.load %arg10[%c0_89, %c640_90] : memref<256x1152xbf16, #tpu.memory_space<vmem>>, vector<256x128xbf16>
    tpu.vector_store %arg10[%c0_89, %c640_90], %64 {strides = array<i32>} : memref<256x1152xbf16, #tpu.memory_space<vmem>>, vector<256x128xbf16>,
    %c2_91 = arith.constant 2 : index
    %c0_92 = arith.constant 0 : index
    %c0_93 = arith.constant 0 : index
    %66 = vector.load %arg9[%c2_91, %c0_92, %c0_93] : memref<18x18x128xbf16, #tpu.memory_space<vmem>>, vector<16x16x128xbf16>
    %67 = vector.shape_cast %66 : vector<16x16x128xbf16> to vector<256x128xbf16>
    %c0_94 = arith.constant 0 : index
    %c768_95 = arith.constant 768 : index
    %68 = vector.load %arg10[%c0_94, %c768_95] : memref<256x1152xbf16, #tpu.memory_space<vmem>>, vector<256x128xbf16>
    tpu.vector_store %arg10[%c0_94, %c768_95], %67 {strides = array<i32>} : memref<256x1152xbf16, #tpu.memory_space<vmem>>, vector<256x128xbf16>,
    %c2_96 = arith.constant 2 : index
    %c1_97 = arith.constant 1 : index
    %c0_98 = arith.constant 0 : index
    %69 = vector.load %arg9[%c2_96, %c1_97, %c0_98] : memref<18x18x128xbf16, #tpu.memory_space<vmem>>, vector<16x16x128xbf16>
    %70 = vector.shape_cast %69 : vector<16x16x128xbf16> to vector<256x128xbf16>
    %c0_99 = arith.constant 0 : index
    %c896_100 = arith.constant 896 : index
    %71 = vector.load %arg10[%c0_99, %c896_100] : memref<256x1152xbf16, #tpu.memory_space<vmem>>, vector<256x128xbf16>
    tpu.vector_store %arg10[%c0_99, %c896_100], %70 {strides = array<i32>} : memref<256x1152xbf16, #tpu.memory_space<vmem>>, vector<256x128xbf16>,
    %c2_101 = arith.constant 2 : index
    %c2_102 = arith.constant 2 : index
    %c0_103 = arith.constant 0 : index
    %72 = vector.load %arg9[%c2_101, %c2_102, %c0_103] : memref<18x18x128xbf16, #tpu.memory_space<vmem>>, vector<16x16x128xbf16>
    %73 = vector.shape_cast %72 : vector<16x16x128xbf16> to vector<256x128xbf16>
    %c0_104 = arith.constant 0 : index
    %c1024_105 = arith.constant 1024 : index
    %74 = vector.load %arg10[%c0_104, %c1024_105] : memref<256x1152xbf16, #tpu.memory_space<vmem>>, vector<256x128xbf16>
    tpu.vector_store %arg10[%c0_104, %c1024_105], %73 {strides = array<i32>} : memref<256x1152xbf16, #tpu.memory_space<vmem>>, vector<256x128xbf16>,
    %c0_106 = arith.constant 0 : index
    %c0_107 = arith.constant 0 : index
    %75 = vector.load %arg10[%c0_106, %c0_107] : memref<256x1152xbf16, #tpu.memory_space<vmem>>, vector<256x1152xbf16>
    %c0_108 = arith.constant 0 : index
    %c0_109 = arith.constant 0 : index
    %76 = vector.load %arg5[%c0_108, %c0_109] : memref<1152x128xbf16, #tpu.memory_space<vmem>>, vector<1152x128xbf16>
    %cst_110 = arith.constant dense<0.000000e+00> : vector<256x128xf32>
    %77 = tpu.matmul %75, %76, %cst_110 {dimension_numbers = #tpu.dot_dimension_numbers<[1], [0], [0], [1], [0, 0, 1, 1], [], []>} : vector<256x1152xbf16>, vector<1152x128xbf16>, vector<256x128xf32> -> vector<256x128xf32>
    %c0_111 = arith.constant 0 : index
    %c0_112 = arith.constant 0 : index
    %78 = vector.load %arg6[%c0_111, %c0_112] : memref<1x128xf32, #tpu.memory_space<vmem>>, vector<1x128xf32>
    %79 = vector.broadcast %78 : vector<1x128xf32> to vector<256x128xf32>
    %80 = arith.mulf %77, %79 : vector<256x128xf32>
    %c0_113 = arith.constant 0 : index
    %c0_114 = arith.constant 0 : index
    %81 = vector.load %arg7[%c0_113, %c0_114] : memref<1x128xf32, #tpu.memory_space<vmem>>, vector<1x128xf32>
    %82 = vector.broadcast %81 : vector<1x128xf32> to vector<256x128xf32>
    %83 = arith.addf %80, %82 : vector<256x128xf32>
    %cst_115 = arith.constant 0.000000e+00 : f32
    %84 = vector.broadcast %cst_115 : f32 to vector<256x128xf32>
    %85 = arith.maximumf %83, %84 : vector<256x128xf32>
    %86 = vector.extract_strided_slice %85 {offsets = [0, 0], sizes = [256, 8], strides = [1, 1]} : vector<256x128xf32> to vector<256x8xf32>
    %87 = vector.shape_cast %86 : vector<256x8xf32> to vector<16x16x8xf32>
    %c0_116 = arith.constant 0 : index
    %c0_117 = arith.constant 0 : index
    %c0_118 = arith.constant 0 : index
    %c0_119 = arith.constant 0 : index
    %88 = vector.load %arg8[%c0_116, %c0_117, %c0_118, %c0_119] : memref<1x16x16x8xf32, #tpu.memory_space<vmem>>, vector<1x16x16x8xf32>
    %89 = vector.shape_cast %88 : vector<1x16x16x8xf32> to vector<16x16x8xf32>
    %90 = vector.shape_cast %87 : vector<16x16x8xf32> to vector<1x16x16x8xf32>
    tpu.vector_store %arg8[%c0_116, %c0_117, %c0_118, %c0_119], %90 {strides = array<i32>} : memref<1x16x16x8xf32, #tpu.memory_space<vmem>>, vector<1x16x16x8xf32>,
    return
  }
  func.func @transform_0(%arg0: i32) -> (i32, i32, i32, i32) {
    %c0_i32 = arith.constant 0 : i32
    %c0_i32_0 = arith.constant 0 : i32
    %c0_i32_1 = arith.constant 0 : i32
    %c0_i32_2 = arith.constant 0 : i32
    return %arg0, %c0_i32, %c0_i32_0, %c0_i32_1 : i32, i32, i32, i32
  }
  func.func @transform_1(%arg0: i32) -> (i32, i32) {
    %c0_i32 = arith.constant 0 : i32
    %c0_i32_0 = arith.constant 0 : i32
    %c0_i32_1 = arith.constant 0 : i32
    return %c0_i32, %c0_i32_0 : i32, i32
  }
  func.func @transform_2(%arg0: i32) -> (i32, i32) {
    %c0_i32 = arith.constant 0 : i32
    %c0_i32_0 = arith.constant 0 : i32
    %c0_i32_1 = arith.constant 0 : i32
    return %c0_i32, %c0_i32_0 : i32, i32
  }
  func.func @transform_3(%arg0: i32) -> (i32, i32) {
    %c0_i32 = arith.constant 0 : i32
    %c0_i32_0 = arith.constant 0 : i32
    %c0_i32_1 = arith.constant 0 : i32
    return %c0_i32, %c0_i32_0 : i32, i32
  }
  func.func @transform_4(%arg0: i32) -> (i32, i32) {
    %c0_i32 = arith.constant 0 : i32
    %c0_i32_0 = arith.constant 0 : i32
    %c0_i32_1 = arith.constant 0 : i32
    return %c0_i32, %c0_i32_0 : i32, i32
  }
  func.func @transform_5(%arg0: i32) -> (i32, i32) {
    %c0_i32 = arith.constant 0 : i32
    %c0_i32_0 = arith.constant 0 : i32
    %c0_i32_1 = arith.constant 0 : i32
    return %c0_i32, %c0_i32_0 : i32, i32
  }
  func.func @transform_6(%arg0: i32) -> (i32, i32) {
    %c0_i32 = arith.constant 0 : i32
    %c0_i32_0 = arith.constant 0 : i32
    %c0_i32_1 = arith.constant 0 : i32
    return %c0_i32, %c0_i32_0 : i32, i32
  }
  func.func @transform_7(%arg0: i32) -> (i32, i32, i32, i32) {
    %c0_i32 = arith.constant 0 : i32
    %c0_i32_0 = arith.constant 0 : i32
    %c0_i32_1 = arith.constant 0 : i32
    %c0_i32_2 = arith.constant 0 : i32
    return %arg0, %c0_i32, %c0_i32_0, %c0_i32_1 : i32, i32, i32, i32
  }
}

</mosaic_0001>

<llo_original>
// kernel: conv_block_3_forward.1
$region0: #{conv_block_3_forward.1}
  #allocation0 [shape = 'u32[]', space=smem, size = 0x4, offset = 0x4, fixed_abs, tag = 'smem constant byte address 0x4 - core index']
  #allocation1 [shape = 'u32[144,128]{1,0:T(1,128)}', space=vmem, size = 0x12000, scoped, tag = 'internal scratch']
  #allocation2 [shape = 'bf16[18,18,128]{2,1,0:T(8,128)(2,1)}', space=vmem, size = 0x1b000, scoped, tag = 'scratch operand']
  #allocation3 [shape = 'bf16[256,1152]{1,0:T(16,128)(2,1)}', space=vmem, size = 0x90000, scoped, tag = 'scratch operand']
  %s0 = inlined_call_operand.vmem [shape: bf16[2,16,16,4], index: 0, kind: input, shape index: {}]
  %s1 = inlined_call_operand.vmem [shape: bf16[1152,128], index: 1, kind: input, shape index: {}]
  %s2 = inlined_call_operand.vmem [shape: f32[1,128], index: 2, kind: input, shape index: {}]
  %s3 = inlined_call_operand.vmem [shape: f32[1,128], index: 3, kind: input, shape index: {}]
  %s4 = inlined_call_operand.vmem [shape: bf16[1152,128], index: 4, kind: input, shape index: {}]
  %s5 = inlined_call_operand.vmem [shape: f32[1,128], index: 5, kind: input, shape index: {}]
  %s6 = inlined_call_operand.vmem [shape: f32[1,128], index: 6, kind: input, shape index: {}]
  %s7 = inlined_call_operand.vmem [shape: f32[2,16,16,8], index: 7, kind: output, shape index: {}]
  %s8 = sld [smem:[#allocation0]]
  $region61: #{conv_block_3_forward.1} parent=0
    _
  %s10 = ssub.s32 1, %s8
  %s11 = scalar_select 0, %s10, %s8
  loop: start=0, step=1, limit=4
  $region2: #{conv_block_3_forward.1} parent=0 // loop_pre_header
    _
  $region3: #{conv_block_3_forward.1} parent=0 // loop_header
    %s13 = sphi 0, %s17
    %p14 = scmp.ge.s32.totalorder %s13, 4
    %s23 = sphi 0, %s25
    %s26 = sphi 0, %s23
    %s27 = sphi 0, %s26
    %s43 = sphi 0, %s27
    %s47 = sphi 0, %s47
    %s49 = sphi 0, %s47
    %s50 = sphi 0, %s49
    %s64 = sphi 0, %s50
    %s68 = sphi 0, %s68
    %s70 = sphi 0, %s68
    %s71 = sphi 0, %s70
    %s85 = sphi 0, %s71
    %s89 = sphi 0, %s89
    %s91 = sphi 0, %s89
    %s92 = sphi 0, %s91
    %s106 = sphi 0, %s92
    %s110 = sphi 0, %s110
    %s112 = sphi 0, %s110
    %s113 = sphi 0, %s112
    %s127 = sphi 0, %s113
    %s131 = sphi 0, %s131
    %s133 = sphi 0, %s131
    %s134 = sphi 0, %s133
    %s148 = sphi 0, %s134
    %s152 = sphi 0, %s152
    %s154 = sphi 0, %s152
    %s155 = sphi 0, %s154
    %s169 = sphi 0, %s155
    %s175 = sphi 0, %s177
    %s178 = sphi 0, %s175
    %s179 = sphi 0, %s178
    %s195 = sphi 0, %s179
  $region4: #{conv_block_3_forward.1} parent=0 // loop_header_branch
    %16 = sbr.rel (%p14) target = $region8
  $region5: #{conv_block_3_forward.1} parent=0 // loop_body
    %s18 = ssub.s32 %s13, 1
    %s19 = ssub.s32 %s13, 2
    %s20 = sadd.s32 %s13, 1
    %s21 = ssub.s32 %s13, %s20
    %p22 = scmp.eq.s32.totalorder %s21, 0
    %s24 = sadd.s32 %s23, 1
    %s25 = scalar_select %p22, %s23, %s24
    %p28 = pneg %p22
    %p29 = scmp.eq.s32.totalorder %s13, 1
    %p30 = por %p28, %p29
    %p31 = scmp.ne.s32.totalorder %s23, %s26
    %p32 = scmp.eq.s32.totalorder %s13, 0
    %p33 = por %p31, %p32
    %p34 = scmp.ne.s32.totalorder %s23, %s26
    %p35 = scmp.eq.s32.totalorder %s18, 1
    %p36 = por %p34, %p35
    %p37 = scmp.ne.s32.totalorder %s26, %s27
    %p38 = scmp.eq.s32.totalorder %s18, 0
    %p39 = por %p37, %p38
    %p40 = scmp.ne.s32.totalorder %s26, %s27
    %p41 = scmp.eq.s32.totalorder %s19, 1
    %p42 = por %p40, %p41
    %p44 = scmp.ne.s32.totalorder %s27, %s43
    %p45 = scmp.eq.s32.totalorder %s19, 0
    %p46 = por %p44, %p45
    %s48 = sadd.s32 %s47, 1
    %p51 = scmp.eq.s32.totalorder %s13, 1
    %p52 = scmp.ne.s32.totalorder %s47, %s49
    %p53 = scmp.eq.s32.totalorder %s13, 0
    %p54 = por %p52, %p53
    %p55 = scmp.ne.s32.totalorder %s47, %s49
    %p56 = scmp.eq.s32.totalorder %s18, 1
    %p57 = por %p55, %p56
    %p58 = scmp.ne.s32.totalorder %s49, %s50
    %p59 = scmp.eq.s32.totalorder %s18, 0
    %p60 = por %p58, %p59
    %p61 = scmp.ne.s32.totalorder %s49, %s50
    %p62 = scmp.eq.s32.totalorder %s19, 1
    %p63 = por %p61, %p62
    %p65 = scmp.ne.s32.totalorder %s50, %s64
    %p66 = scmp.eq.s32.totalorder %s19, 0
    %p67 = por %p65, %p66
    %s69 = sadd.s32 %s68, 1
    %p72 = scmp.eq.s32.totalorder %s13, 1
    %p73 = scmp.ne.s32.totalorder %s68, %s70
    %p74 = scmp.eq.s32.totalorder %s13, 0
    %p75 = por %p73, %p74
    %p76 = scmp.ne.s32.totalorder %s68, %s70
    %p77 = scmp.eq.s32.totalorder %s18, 1
    %p78 = por %p76, %p77
    %p79 = scmp.ne.s32.totalorder %s70, %s71
    %p80 = scmp.eq.s32.totalorder %s18, 0
    %p81 = por %p79, %p80
    %p82 = scmp.ne.s32.totalorder %s70, %s71
    %p83 = scmp.eq.s32.totalorder %s19, 1
    %p84 = por %p82, %p83
    %p86 = scmp.ne.s32.totalorder %s71, %s85
    %p87 = scmp.eq.s32.totalorder %s19, 0
    %p88 = por %p86, %p87
    %s90 = sadd.s32 %s89, 1
    %p93 = scmp.eq.s32.totalorder %s13, 1
    %p94 = scmp.ne.s32.totalorder %s89, %s91
    %p95 = scmp.eq.s32.totalorder %s13, 0
    %p96 = por %p94, %p95
    %p97 = scmp.ne.s32.totalorder %s89, %s91
    %p98 = scmp.eq.s32.totalorder %s18, 1
    %p99 = por %p97, %p98
    %p100 = scmp.ne.s32.totalorder %s91, %s92
    %p101 = scmp.eq.s32.totalorder %s18, 0
    %p102 = por %p100, %p101
    %p103 = scmp.ne.s32.totalorder %s91, %s92
    %p104 = scmp.eq.s32.totalorder %s19, 1
    %p105 = por %p103, %p104
    %p107 = scmp.ne.s32.totalorder %s92, %s106
    %p108 = scmp.eq.s32.totalorder %s19, 0
    %p109 = por %p107, %p108
    %s111 = sadd.s32 %s110, 1
    %p114 = scmp.eq.s32.totalorder %s13, 1
    %p115 = scmp.ne.s32.totalorder %s110, %s112
    %p116 = scmp.eq.s32.totalorder %s13, 0
    %p117 = por %p115, %p116
    %p118 = scmp.ne.s32.totalorder %s110, %s112
    %p119 = scmp.eq.s32.totalorder %s18, 1
    %p120 = por %p118, %p119
    %p121 = scmp.ne.s32.totalorder %s112, %s113
    %p122 = scmp.eq.s32.totalorder %s18, 0
    %p123 = por %p121, %p122
    %p124 = scmp.ne.s32.totalorder %s112, %s113
    %p125 = scmp.eq.s32.totalorder %s19, 1
    %p126 = por %p124, %p125
    %p128 = scmp.ne.s32.totalorder %s113, %s127
    %p129 = scmp.eq.s32.totalorder %s19, 0
    %p130 = por %p128, %p129
    %s132 = sadd.s32 %s131, 1
    %p135 = scmp.eq.s32.totalorder %s13, 1
    %p136 = scmp.ne.s32.totalorder %s131, %s133
    %p137 = scmp.eq.s32.totalorder %s13, 0
    %p138 = por %p136, %p137
    %p139 = scmp.ne.s32.totalorder %s131, %s133
    %p140 = scmp.eq.s32.totalorder %s18, 1
    %p141 = por %p139, %p140
    %p142 = scmp.ne.s32.totalorder %s133, %s134
    %p143 = scmp.eq.s32.totalorder %s18, 0
    %p144 = por %p142, %p143
    %p145 = scmp.ne.s32.totalorder %s133, %s134
    %p146 = scmp.eq.s32.totalorder %s19, 1
    %p147 = por %p145, %p146
    %p149 = scmp.ne.s32.totalorder %s134, %s148
    %p150 = scmp.eq.s32.totalorder %s19, 0
    %p151 = por %p149, %p150
    %s153 = sadd.s32 %s152, 1
    %p156 = scmp.eq.s32.totalorder %s13, 1
    %p157 = scmp.ne.s32.totalorder %s152, %s154
    %p158 = scmp.eq.s32.totalorder %s13, 0
    %p159 = por %p157, %p158
    %p160 = scmp.ne.s32.totalorder %s152, %s154
    %p161 = scmp.eq.s32.totalorder %s18, 1
    %p162 = por %p160, %p161
    %p163 = scmp.ne.s32.totalorder %s154, %s155
    %p164 = scmp.eq.s32.totalorder %s18, 0
    %p165 = por %p163, %p164
    %p166 = scmp.ne.s32.totalorder %s154, %s155
    %p167 = scmp.eq.s32.totalorder %s19, 1
    %p168 = por %p166, %p167
    %p170 = scmp.ne.s32.totalorder %s155, %s169
    %p171 = scmp.eq.s32.totalorder %s19, 0
    %p172 = por %p170, %p171
    %s173 = ssub.s32 %s13, %s20
    %p174 = scmp.eq.s32.totalorder %s173, 0
    %s176 = sadd.s32 %s175, 1
    %s177 = scalar_select %p174, %s175, %s176
    %p180 = pneg %p174
    %p181 = scmp.eq.s32.totalorder %s13, 1
    %p182 = por %p180, %p181
    %p183 = scmp.ne.s32.totalorder %s175, %s178
    %p184 = scmp.eq.s32.totalorder %s13, 0
    %p185 = por %p183, %p184
    %p186 = scmp.ne.s32.totalorder %s175, %s178
    %p187 = scmp.eq.s32.totalorder %s18, 1
    %p188 = por %p186, %p187
    %p189 = scmp.ne.s32.totalorder %s178, %s179
    %p190 = scmp.eq.s32.totalorder %s18, 0
    %p191 = por %p189, %p190
    %p192 = scmp.ne.s32.totalorder %s178, %s179
    %p193 = scmp.eq.s32.totalorder %s19, 1
    %p194 = por %p192, %p193
    %p196 = scmp.ne.s32.totalorder %s179, %s195
    %p197 = scmp.eq.s32.totalorder %s19, 0
    %p198 = por %p196, %p197
    %p199 = scmp.le.s32.totalorder 1, %s13
    %p200 = scmp.lt.s32.totalorder %s13, 3
    %p201 = pnand %p199, %p200
    %p202 = pneg %p201
    // Predicated region
    $region9: #{conv_block_3_forward.1} parent=5 // pred_check
      _
    $region10: #{conv_block_3_forward.1} parent=5 // pred_check_branch
      %204 = sbr.rel (%p201) target = $region12
    $region11: #{conv_block_3_forward.1} parent=5 // pred_region
      %s205 = ssub.s32 %s13, 1
      // Predicated region
      $region13: #{conv_block_3_forward.1} parent=11 // pred_check
        %p206 = pneg %p60
      $region14: #{conv_block_3_forward.1} parent=11 // pred_check_branch
        %208 = sbr.rel (%p206) target = $region16
      $region15: #{conv_block_3_forward.1} parent=11 // pred_region
        _
      $region16: #{conv_block_3_forward.1} parent=11 // pred_fallthru
        _
      // Predicated region
      $region17: #{conv_block_3_forward.1} parent=11 // pred_check
        %p209 = pneg %p81
      $region18: #{conv_block_3_forward.1} parent=11 // pred_check_branch
        %211 = sbr.rel (%p209) target = $region20
      $region19: #{conv_block_3_forward.1} parent=11 // pred_region
        _
      $region20: #{conv_block_3_forward.1} parent=11 // pred_fallthru
        _
      // Predicated region
      $region21: #{conv_block_3_forward.1} parent=11 // pred_check
        %p212 = pneg %p102
      $region22: #{conv_block_3_forward.1} parent=11 // pred_check_branch
        %214 = sbr.rel (%p212) target = $region24
      $region23: #{conv_block_3_forward.1} parent=11 // pred_region
        _
      $region24: #{conv_block_3_forward.1} parent=11 // pred_fallthru
        _
      // Predicated region
      $region25: #{conv_block_3_forward.1} parent=11 // pred_check
        %p215 = pneg %p123
      $region26: #{conv_block_3_forward.1} parent=11 // pred_check_branch
        %217 = sbr.rel (%p215) target = $region28
      $region27: #{conv_block_3_forward.1} parent=11 // pred_region
        _
      $region28: #{conv_block_3_forward.1} parent=11 // pred_fallthru
        _
      // Predicated region
      $region29: #{conv_block_3_forward.1} parent=11 // pred_check
        %p218 = pneg %p144
      $region30: #{conv_block_3_forward.1} parent=11 // pred_check_branch
        %220 = sbr.rel (%p218) target = $region32
      $region31: #{conv_block_3_forward.1} parent=11 // pred_region
        _
      $region32: #{conv_block_3_forward.1} parent=11 // pred_fallthru
        _
      // Predicated region
      $region33: #{conv_block_3_forward.1} parent=11 // pred_check
        %p221 = pneg %p165
      $region34: #{conv_block_3_forward.1} parent=11 // pred_check_branch
        %223 = sbr.rel (%p221) target = $region36
      $region35: #{conv_block_3_forward.1} parent=11 // pred_region
        _
      $region36: #{conv_block_3_forward.1} parent=11 // pred_fallthru
        _
    $region12: #{conv_block_3_forward.1} parent=5 // pred_fallthru
      _
    %p224 = scmp.lt.s32.totalorder %s13, 2
    // Predicated region
    $region37: #{conv_block_3_forward.1} parent=5 // pred_check
      %p225 = pneg %p224
    $region38: #{conv_block_3_forward.1} parent=5 // pred_check_branch
      %227 = sbr.rel (%p225) target = $region40
    $region39: #{conv_block_3_forward.1} parent=5 // pred_region
      // Predicated region
      $region41: #{conv_block_3_forward.1} parent=39 // pred_check
        %p228 = pneg %p33
      $region42: #{conv_block_3_forward.1} parent=39 // pred_check_branch
        %230 = sbr.rel (%p228) target = $region44
      $region43: #{conv_block_3_forward.1} parent=39 // pred_region
        %p231 = scmp.lt.s32.totalorder %s13, 1
        %s232 = scalar_select %p231, %s13, 1
        %s233 = smul.addr %s232, 32
        %s234 = smul.addr %s233, 4
        %s235 = scalar_lea.vmem %s0, %s234
      $region44: #{conv_block_3_forward.1} parent=39 // pred_fallthru
        _
    $region40: #{conv_block_3_forward.1} parent=5 // pred_fallthru
      _
    %p236 = scmp.le.s32.totalorder 1, %s13
    %p237 = scmp.lt.s32.totalorder %s13, 3
    %p238 = pnand %p236, %p237
    %p239 = pneg %p238
    // Predicated region
    $region45: #{conv_block_3_forward.1} parent=5 // pred_check
      _
    $region46: #{conv_block_3_forward.1} parent=5 // pred_check_branch
      %241 = sbr.rel (%p238) target = $region48
    $region47: #{conv_block_3_forward.1} parent=5 // pred_region
      %s242 = ssub.s32 %s13, 1
      %p243 = scmp.lt.s32.totalorder %s18, 1
      %s244 = scalar_select %p243, %s18, 1
      %s245 = smul.addr %s244, 32
      %s246 = smul.addr %s245, 4
      %s247 = scalar_lea.vmem %s0, %s246
      %p248 = pneg %p39
      %p249 = pneg %p36
      %p250 = pneg %p60
      %p251 = pneg %p57
      %p252 = pneg %p81
      %p253 = pneg %p78
      %p254 = pneg %p102
      %p255 = pneg %p99
      %p256 = pneg %p123
      %p257 = pneg %p120
      %p258 = pneg %p144
      %p259 = pneg %p141
      %p260 = pneg %p165
      %p261 = pneg %p162
      %p262 = pneg %p191
      %p263 = pneg %p188
      %p264 = scmp.lt.s32.totalorder %s18, 1
      %s265 = scalar_select %p264, %s18, 1
      %s266 = smul.addr %s265, 32
      %s267 = smul.addr %s266, 8
      %s268 = scalar_lea.vmem %s7, %s267
      %p269 = scmp.lt.s32.totalorder %s18, 1
      %s270 = scalar_select %p269, %s18, 1
      %s271 = smul.addr %s270, 32
      %s272 = smul.addr %s271, 4
      %s273 = scalar_lea.vmem %s0, %s272
      %p274 = scmp.lt.s32.totalorder %s18, 1
      %s275 = scalar_select %p274, %s18, 1
      %s276 = smul.addr %s275, 32
      %s277 = smul.addr %s276, 8
      %s278 = scalar_lea.vmem %s7, %s277
      %280 = vst [vmem:[#allocation2] sm:$0xf] 0
      %281 = vst [vmem:[#allocation2 + $0x4] sm:$0xf] 0
      %282 = vst [vmem:[#allocation2 + $0x8] sm:$0x1] 0
      %283 = vst [vmem:[#allocation2 + $0xc] sm:$0xf] 0
      %284 = vst [vmem:[#allocation2 + $0x10] sm:$0xf] 0
      %285 = vst [vmem:[#allocation2 + $0x14] sm:$0x1] 0
      %286 = vst [vmem:[#allocation2 + $0x18] sm:$0xf] 0
      %287 = vst [vmem:[#allocation2 + $0x1c] sm:$0xf] 0
      %288 = vst [vmem:[#allocation2 + $0x20] sm:$0x1] 0
      %289 = vst [vmem:[#allocation2 + $0x24] sm:$0xf] 0
      %290 = vst [vmem:[#allocation2 + $0x28] sm:$0xf] 0
      %291 = vst [vmem:[#allocation2 + $0x2c] sm:$0x1] 0
      %292 = vst [vmem:[#allocation2 + $0x30] sm:$0xf] 0
      %293 = vst [vmem:[#allocation2 + $0x34] sm:$0xf] 0
      %294 = vst [vmem:[#allocation2 + $0x38] sm:$0x1] 0
      %295 = vst [vmem:[#allocation2 + $0x3c] sm:$0xf] 0
      %296 = vst [vmem:[#allocation2 + $0x40] sm:$0xf] 0
      %297 = vst [vmem:[#allocation2 + $0x44] sm:$0x1] 0
      %298 = vst [vmem:[#allocation2 + $0x48] sm:$0xf] 0
      %299 = vst [vmem:[#allocation2 + $0x4c] sm:$0xf] 0
      %300 = vst [vmem:[#allocation2 + $0x50] sm:$0x1] 0
      %301 = vst [vmem:[#allocation2 + $0x54] sm:$0xf] 0
      %302 = vst [vmem:[#allocation2 + $0x58] sm:$0xf] 0
      %303 = vst [vmem:[#allocation2 + $0x5c] sm:$0x1] 0
      %304 = vst [vmem:[#allocation2 + $0x60] sm:$0xf] 0
      %305 = vst [vmem:[#allocation2 + $0x64] sm:$0xf] 0
      %306 = vst [vmem:[#allocation2 + $0x68] sm:$0x1] 0
      %307 = vst [vmem:[#allocation2 + $0x6c] sm:$0xf] 0
      %308 = vst [vmem:[#allocation2 + $0x70] sm:$0xf] 0
      %309 = vst [vmem:[#allocation2 + $0x74] sm:$0x1] 0
      %310 = vst [vmem:[#allocation2 + $0x78] sm:$0xf] 0
      %311 = vst [vmem:[#allocation2 + $0x7c] sm:$0xf] 0
      %312 = vst [vmem:[#allocation2 + $0x80] sm:$0x1] 0
      %313 = vst [vmem:[#allocation2 + $0x84] sm:$0xf] 0
      %314 = vst [vmem:[#allocation2 + $0x88] sm:$0xf] 0
      %315 = vst [vmem:[#allocation2 + $0x8c] sm:$0x1] 0
      %316 = vst [vmem:[#allocation2 + $0x90] sm:$0xf] 0
      %317 = vst [vmem:[#allocation2 + $0x94] sm:$0xf] 0
      %318 = vst [vmem:[#allocation2 + $0x98] sm:$0x1] 0
      %319 = vst [vmem:[#allocation2 + $0x9c] sm:$0xf] 0
      %320 = vst [vmem:[#allocation2 + $0xa0] sm:$0xf] 0
      %321 = vst [vmem:[#allocation2 + $0xa4] sm:$0x1] 0
      %322 = vst [vmem:[#allocation2 + $0xa8] sm:$0xf] 0
      %323 = vst [vmem:[#allocation2 + $0xac] sm:$0xf] 0
      %324 = vst [vmem:[#allocation2 + $0xb0] sm:$0x1] 0
      %325 = vst [vmem:[#allocation2 + $0xb4] sm:$0xf] 0
      %326 = vst [vmem:[#allocation2 + $0xb8] sm:$0xf] 0
      %327 = vst [vmem:[#allocation2 + $0xbc] sm:$0x1] 0
      %328 = vst [vmem:[#allocation2 + $0xc0] sm:$0xf] 0
      %329 = vst [vmem:[#allocation2 + $0xc4] sm:$0xf] 0
      %330 = vst [vmem:[#allocation2 + $0xc8] sm:$0x1] 0
      %331 = vst [vmem:[#allocation2 + $0xcc] sm:$0xf] 0
      %332 = vst [vmem:[#allocation2 + $0xd0] sm:$0xf] 0
      %333 = vst [vmem:[#allocation2 + $0xd4] sm:$0x1] 0
      %v334 = vld [vmem:[%s273] sm:$0xf]
      %v335 = vld [vmem:[%s273 + $0x4] sm:$0xf]
      %v336 = vld [vmem:[%s273 + $0x8] sm:$0xf]
      %v337 = vld [vmem:[%s273 + $0xc] sm:$0xf]
      %v338 = vld [vmem:[%s273 + $0x10] sm:$0xf]
      %v339 = vld [vmem:[%s273 + $0x14] sm:$0xf]
      %v340 = vld [vmem:[%s273 + $0x18] sm:$0xf]
      %v341 = vld [vmem:[%s273 + $0x1c] sm:$0xf]
      %v342 = vld [vmem:[%s273 + $0x20] sm:$0xf]
      %v343 = vld [vmem:[%s273 + $0x24] sm:$0xf]
      %v344 = vld [vmem:[%s273 + $0x28] sm:$0xf]
      %v345 = vld [vmem:[%s273 + $0x2c] sm:$0xf]
      %v346 = vld [vmem:[%s273 + $0x30] sm:$0xf]
      %v347 = vld [vmem:[%s273 + $0x34] sm:$0xf]
      %v348 = vld [vmem:[%s273 + $0x38] sm:$0xf]
      %v349 = vld [vmem:[%s273 + $0x3c] sm:$0xf]
      %v350 = vld [vmem:[%s273 + $0x40] sm:$0xf]
      %v351 = vld [vmem:[%s273 + $0x44] sm:$0xf]
      %v352 = vld [vmem:[%s273 + $0x48] sm:$0xf]
      %v353 = vld [vmem:[%s273 + $0x4c] sm:$0xf]
      %v354 = vld [vmem:[%s273 + $0x50] sm:$0xf]
      %v355 = vld [vmem:[%s273 + $0x54] sm:$0xf]
      %v356 = vld [vmem:[%s273 + $0x58] sm:$0xf]
      %v357 = vld [vmem:[%s273 + $0x5c] sm:$0xf]
      %v358 = vld [vmem:[%s273 + $0x60] sm:$0xf]
      %v359 = vld [vmem:[%s273 + $0x64] sm:$0xf]
      %v360 = vld [vmem:[%s273 + $0x68] sm:$0xf]
      %v361 = vld [vmem:[%s273 + $0x6c] sm:$0xf]
      %v362 = vld [vmem:[%s273 + $0x70] sm:$0xf]
      %v363 = vld [vmem:[%s273 + $0x74] sm:$0xf]
      %v364 = vld [vmem:[%s273 + $0x78] sm:$0xf]
      %v365 = vld [vmem:[%s273 + $0x7c] sm:$0xf]
      %vm366 = vsmask.f32 256
      %vm367 = vsmask.f32 4368
      %vm368 = vmor %vm366, %vm367
      %v370 = vshrl.u32 %v334, 16
      %v372 = vrot.slane %v370, 7
      %v373 = vshll.u32 %v334, 16
      %v375 = vor.u32 %v372, %v373
      %v376 = vrot.slane %v372, 4
      %v378 = vshrl.u32 %v335, 16
      %v380 = vrot.slane %v378, 7
      %v381 = vshll.u32 %v335, 16
      %v383 = vor.u32 %v380, %v381
      %v384 = vsel %vm368, %v376, %v383
      %v385 = vrot.slane %v380, 4
      %v387 = vshrl.u32 %v336, 16
      %v389 = vrot.slane %v387, 7
      %v390 = vshll.u32 %v336, 16
      %v392 = vor.u32 %v389, %v390
      %v393 = vrot.slane %v389, 4
      %v395 = vshrl.u32 %v337, 16
      %v397 = vrot.slane %v395, 7
      %v398 = vshll.u32 %v337, 16
      %v400 = vor.u32 %v397, %v398
      %v401 = vsel %vm368, %v393, %v400
      %v402 = vrot.slane %v397, 4
      %v404 = vshrl.u32 %v338, 16
      %v406 = vrot.slane %v404, 7
      %v407 = vshll.u32 %v338, 16
      %v409 = vor.u32 %v406, %v407
      %v410 = vrot.slane %v406, 4
      %v412 = vshrl.u32 %v339, 16
      %v414 = vrot.slane %v412, 7
      %v415 = vshll.u32 %v339, 16
      %v417 = vor.u32 %v414, %v415
      %v418 = vsel %vm368, %v410, %v417
      %v419 = vrot.slane %v414, 4
      %v421 = vshrl.u32 %v340, 16
      %v423 = vrot.slane %v421, 7
      %v424 = vshll.u32 %v340, 16
      %v426 = vor.u32 %v423, %v424
      %v427 = vrot.slane %v423, 4
      %v429 = vshrl.u32 %v341, 16
      %v431 = vrot.slane %v429, 7
      %v432 = vshll.u32 %v341, 16
      %v434 = vor.u32 %v431, %v432
      %v435 = vsel %vm368, %v427, %v434
      %v436 = vrot.slane %v431, 4
      %v438 = vshrl.u32 %v342, 16
      %v440 = vrot.slane %v438, 7
      %v441 = vshll.u32 %v342, 16
      %v443 = vor.u32 %v440, %v441
      %v444 = vrot.slane %v440, 4
      %v446 = vshrl.u32 %v343, 16
      %v448 = vrot.slane %v446, 7
      %v449 = vshll.u32 %v343, 16
      %v451 = vor.u32 %v448, %v449
      %v452 = vsel %vm368, %v444, %v451
      %v453 = vrot.slane %v448, 4
      %v455 = vshrl.u32 %v344, 16
      %v457 = vrot.slane %v455, 7
      %v458 = vshll.u32 %v344, 16
      %v460 = vor.u32 %v457, %v458
      %v461 = vrot.slane %v457, 4
      %v463 = vshrl.u32 %v345, 16
      %v465 = vrot.slane %v463, 7
      %v466 = vshll.u32 %v345, 16
      %v468 = vor.u32 %v465, %v466
      %v469 = vsel %vm368, %v461, %v468
      %v470 = vrot.slane %v465, 4
      %v472 = vshrl.u32 %v346, 16
      %v474 = vrot.slane %v472, 7
      %v475 = vshll.u32 %v346, 16
      %v477 = vor.u32 %v474, %v475
      %v478 = vrot.slane %v474, 4
      %v480 = vshrl.u32 %v347, 16
      %v482 = vrot.slane %v480, 7
      %v483 = vshll.u32 %v347, 16
      %v485 = vor.u32 %v482, %v483
      %v486 = vsel %vm368, %v478, %v485
      %v487 = vrot.slane %v482, 4
      %v489 = vshrl.u32 %v348, 16
      %v491 = vrot.slane %v489, 7
      %v492 = vshll.u32 %v348, 16
      %v494 = vor.u32 %v491, %v492
      %v495 = vrot.slane %v491, 4
      %v497 = vshrl.u32 %v349, 16
      %v499 = vrot.slane %v497, 7
      %v500 = vshll.u32 %v349, 16
      %v502 = vor.u32 %v499, %v500
      %v503 = vsel %vm368, %v495, %v502
      %v504 = vrot.slane %v499, 4
      %v506 = vshrl.u32 %v350, 16
      %v508 = vrot.slane %v506, 7
      %v509 = vshll.u32 %v350, 16
      %v511 = vor.u32 %v508, %v509
      %v512 = vrot.slane %v508, 4
      %v514 = vshrl.u32 %v351, 16
      %v516 = vrot.slane %v514, 7
      %v517 = vshll.u32 %v351, 16
      %v519 = vor.u32 %v516, %v517
      %v520 = vsel %vm368, %v512, %v519
      %v521 = vrot.slane %v516, 4
      %v523 = vshrl.u32 %v352, 16
      %v525 = vrot.slane %v523, 7
      %v526 = vshll.u32 %v352, 16
      %v528 = vor.u32 %v525, %v526
      %v529 = vrot.slane %v525, 4
      %v531 = vshrl.u32 %v353, 16
      %v533 = vrot.slane %v531, 7
      %v534 = vshll.u32 %v353, 16
      %v536 = vor.u32 %v533, %v534
      %v537 = vsel %vm368, %v529, %v536
      %v538 = vrot.slane %v533, 4
      %v540 = vshrl.u32 %v354, 16
      %v542 = vrot.slane %v540, 7
      %v543 = vshll.u32 %v354, 16
      %v545 = vor.u32 %v542, %v543
      %v546 = vrot.slane %v542, 4
      %v548 = vshrl.u32 %v355, 16
      %v550 = vrot.slane %v548, 7
      %v551 = vshll.u32 %v355, 16
      %v553 = vor.u32 %v550, %v551
      %v554 = vsel %vm368, %v546, %v553
      %v555 = vrot.slane %v550, 4
      %v557 = vshrl.u32 %v356, 16
      %v559 = vrot.slane %v557, 7
      %v560 = vshll.u32 %v356, 16
      %v562 = vor.u32 %v559, %v560
      %v563 = vrot.slane %v559, 4
      %v565 = vshrl.u32 %v357, 16
      %v567 = vrot.slane %v565, 7
      %v568 = vshll.u32 %v357, 16
      %v570 = vor.u32 %v567, %v568
      %v571 = vsel %vm368, %v563, %v570
      %v572 = vrot.slane %v567, 4
      %v574 = vshrl.u32 %v358, 16
      %v576 = vrot.slane %v574, 7
      %v577 = vshll.u32 %v358, 16
      %v579 = vor.u32 %v576, %v577
      %v580 = vrot.slane %v576, 4
      %v582 = vshrl.u32 %v359, 16
      %v584 = vrot.slane %v582, 7
      %v585 = vshll.u32 %v359, 16
      %v587 = vor.u32 %v584, %v585
      %v588 = vsel %vm368, %v580, %v587
      %v589 = vrot.slane %v584, 4
      %v591 = vshrl.u32 %v360, 16
      %v593 = vrot.slane %v591, 7
      %v594 = vshll.u32 %v360, 16
      %v596 = vor.u32 %v593, %v594
      %v597 = vrot.slane %v593, 4
      %v599 = vshrl.u32 %v361, 16
      %v601 = vrot.slane %v599, 7
      %v602 = vshll.u32 %v361, 16
      %v604 = vor.u32 %v601, %v602
      %v605 = vsel %vm368, %v597, %v604
      %v606 = vrot.slane %v601, 4
      %v608 = vshrl.u32 %v362, 16
      %v610 = vrot.slane %v608, 7
      %v611 = vshll.u32 %v362, 16
      %v613 = vor.u32 %v610, %v611
      %v614 = vrot.slane %v610, 4
      %v616 = vshrl.u32 %v363, 16
      %v618 = vrot.slane %v616, 7
      %v619 = vshll.u32 %v363, 16
      %v621 = vor.u32 %v618, %v619
      %v622 = vsel %vm368, %v614, %v621
      %v623 = vrot.slane %v618, 4
      %v625 = vshrl.u32 %v364, 16
      %v627 = vrot.slane %v625, 7
      %v628 = vshll.u32 %v364, 16
      %v630 = vor.u32 %v627, %v628
      %v631 = vrot.slane %v627, 4
      %v633 = vshrl.u32 %v365, 16
      %v635 = vrot.slane %v633, 7
      %v636 = vshll.u32 %v365, 16
      %v638 = vor.u32 %v635, %v636
      %v639 = vsel %vm368, %v631, %v638
      %v640 = vrot.slane %v635, 4
      %s689 = scalar_lea.vmem [#allocation2], 12
      %vm690 = vcmask 27648
      %vm691 = vsmask.f32 7938
      %vm692 = vmand %vm690, %vm691
      %v693 = vld [vmem:[%s689] sm:$0xf]
      %v694 = vsel %vm692, %v375, %v693
      %695 = vst [vmem:[%s689] sm:$0xf] %v694
      %vm696 = vcmask 27648
      %697 = vst.msk [vmem:[%s689 + $0x4] sm:$0xf] %vm696, %v384
      %vm698 = vcmask 24576
      %vm699 = vmand %vm698, %vm366
      %v700 = vld [vmem:[%s689 + $0x8] sm:$0x1]
      %v701 = vsel %vm699, %v385, %v700
      %702 = vst [vmem:[%s689 + $0x8] sm:$0x1] %v701
      %v703 = vld [vmem:[%s689 + $0xc] sm:$0xf]
      %v704 = vsel %vm692, %v392, %v703
      %705 = vst [vmem:[%s689 + $0xc] sm:$0xf] %v704
      %706 = vst.msk [vmem:[%s689 + $0x10] sm:$0xf] %vm696, %v401
      %v707 = vld [vmem:[%s689 + $0x14] sm:$0x1]
      %v708 = vsel %vm699, %v402, %v707
      %709 = vst [vmem:[%s689 + $0x14] sm:$0x1] %v708
      %v710 = vld [vmem:[%s689 + $0x18] sm:$0xf]
      %v711 = vsel %vm692, %v409, %v710
      %712 = vst [vmem:[%s689 + $0x18] sm:$0xf] %v711
      %713 = vst.msk [vmem:[%s689 + $0x1c] sm:$0xf] %vm696, %v418
      %v714 = vld [vmem:[%s689 + $0x20] sm:$0x1]
      %v715 = vsel %vm699, %v419, %v714
      %716 = vst [vmem:[%s689 + $0x20] sm:$0x1] %v715
      %v717 = vld [vmem:[%s689 + $0x24] sm:$0xf]
      %v718 = vsel %vm692, %v426, %v717
      %719 = vst [vmem:[%s689 + $0x24] sm:$0xf] %v718
      %720 = vst.msk [vmem:[%s689 + $0x28] sm:$0xf] %vm696, %v435
      %v721 = vld [vmem:[%s689 + $0x2c] sm:$0x1]
      %v722 = vsel %vm699, %v436, %v721
      %723 = vst [vmem:[%s689 + $0x2c] sm:$0x1] %v722
      %v724 = vld [vmem:[%s689 + $0x30] sm:$0xf]
      %v725 = vsel %vm692, %v443, %v724
      %726 = vst [vmem:[%s689 + $0x30] sm:$0xf] %v725
      %727 = vst.msk [vmem:[%s689 + $0x34] sm:$0xf] %vm696, %v452
      %v728 = vld [vmem:[%s689 + $0x38] sm:$0x1]
      %v729 = vsel %vm699, %v453, %v728
      %730 = vst [vmem:[%s689 + $0x38] sm:$0x1] %v729
      %v731 = vld [vmem:[%s689 + $0x3c] sm:$0xf]
      %v732 = vsel %vm692, %v460, %v731
      %733 = vst [vmem:[%s689 + $0x3c] sm:$0xf] %v732
      %734 = vst.msk [vmem:[%s689 + $0x40] sm:$0xf] %vm696, %v469
      %v735 = vld [vmem:[%s689 + $0x44] sm:$0x1]
      %v736 = vsel %vm699, %v470, %v735
      %737 = vst [vmem:[%s689 + $0x44] sm:$0x1] %v736
      %v738 = vld [vmem:[%s689 + $0x48] sm:$0xf]
      %v739 = vsel %vm692, %v477, %v738
      %740 = vst [vmem:[%s689 + $0x48] sm:$0xf] %v739
      %741 = vst.msk [vmem:[%s689 + $0x4c] sm:$0xf] %vm696, %v486
      %v742 = vld [vmem:[%s689 + $0x50] sm:$0x1]
      %v743 = vsel %vm699, %v487, %v742
      %744 = vst [vmem:[%s689 + $0x50] sm:$0x1] %v743
      %v745 = vld [vmem:[%s689 + $0x54] sm:$0xf]
      %v746 = vsel %vm692, %v494, %v745
      %747 = vst [vmem:[%s689 + $0x54] sm:$0xf] %v746
      %748 = vst.msk [vmem:[%s689 + $0x58] sm:$0xf] %vm696, %v503
      %v749 = vld [vmem:[%s689 + $0x5c] sm:$0x1]
      %v750 = vsel %vm699, %v504, %v749
      %751 = vst [vmem:[%s689 + $0x5c] sm:$0x1] %v750
      %v752 = vld [vmem:[%s689 + $0x60] sm:$0xf]
      %v753 = vsel %vm692, %v511, %v752
      %754 = vst [vmem:[%s689 + $0x60] sm:$0xf] %v753
      %755 = vst.msk [vmem:[%s689 + $0x64] sm:$0xf] %vm696, %v520
      %v756 = vld [vmem:[%s689 + $0x68] sm:$0x1]
      %v757 = vsel %vm699, %v521, %v756
      %758 = vst [vmem:[%s689 + $0x68] sm:$0x1] %v757
      %v759 = vld [vmem:[%s689 + $0x6c] sm:$0xf]
      %v760 = vsel %vm692, %v528, %v759
      %761 = vst [vmem:[%s689 + $0x6c] sm:$0xf] %v760
      %762 = vst.msk [vmem:[%s689 + $0x70] sm:$0xf] %vm696, %v537
      %v763 = vld [vmem:[%s689 + $0x74] sm:$0x1]
      %v764 = vsel %vm699, %v538, %v763
      %765 = vst [vmem:[%s689 + $0x74] sm:$0x1] %v764
      %v766 = vld [vmem:[%s689 + $0x78] sm:$0xf]
      %v767 = vsel %vm692, %v545, %v766
      %768 = vst [vmem:[%s689 + $0x78] sm:$0xf] %v767
      %769 = vst.msk [vmem:[%s689 + $0x7c] sm:$0xf] %vm696, %v554
      %v770 = vld [vmem:[%s689 + $0x80] sm:$0x1]
      %v771 = vsel %vm699, %v555, %v770
      %772 = vst [vmem:[%s689 + $0x80] sm:$0x1] %v771
      %v773 = vld [vmem:[%s689 + $0x84] sm:$0xf]
      %v774 = vsel %vm692, %v562, %v773
      %775 = vst [vmem:[%s689 + $0x84] sm:$0xf] %v774
      %776 = vst.msk [vmem:[%s689 + $0x88] sm:$0xf] %vm696, %v571
      %v777 = vld [vmem:[%s689 + $0x8c] sm:$0x1]
      %v778 = vsel %vm699, %v572, %v777
      %779 = vst [vmem:[%s689 + $0x8c] sm:$0x1] %v778
      %v780 = vld [vmem:[%s689 + $0x90] sm:$0xf]
      %v781 = vsel %vm692, %v579, %v780
      %782 = vst [vmem:[%s689 + $0x90] sm:$0xf] %v781
      %783 = vst.msk [vmem:[%s689 + $0x94] sm:$0xf] %vm696, %v588
      %v784 = vld [vmem:[%s689 + $0x98] sm:$0x1]
      %v785 = vsel %vm699, %v589, %v784
      %786 = vst [vmem:[%s689 + $0x98] sm:$0x1] %v785
      %v787 = vld [vmem:[%s689 + $0x9c] sm:$0xf]
      %v788 = vsel %vm692, %v596, %v787
      %789 = vst [vmem:[%s689 + $0x9c] sm:$0xf] %v788
      %790 = vst.msk [vmem:[%s689 + $0xa0] sm:$0xf] %vm696, %v605
      %v791 = vld [vmem:[%s689 + $0xa4] sm:$0x1]
      %v792 = vsel %vm699, %v606, %v791
      %793 = vst [vmem:[%s689 + $0xa4] sm:$0x1] %v792
      %v794 = vld [vmem:[%s689 + $0xa8] sm:$0xf]
      %v795 = vsel %vm692, %v613, %v794
      %796 = vst [vmem:[%s689 + $0xa8] sm:$0xf] %v795
      %797 = vst.msk [vmem:[%s689 + $0xac] sm:$0xf] %vm696, %v622
      %v798 = vld [vmem:[%s689 + $0xb0] sm:$0x1]
      %v799 = vsel %vm699, %v623, %v798
      %800 = vst [vmem:[%s689 + $0xb0] sm:$0x1] %v799
      %v801 = vld [vmem:[%s689 + $0xb4] sm:$0xf]
      %v802 = vsel %vm692, %v630, %v801
      %803 = vst [vmem:[%s689 + $0xb4] sm:$0xf] %v802
      %804 = vst.msk [vmem:[%s689 + $0xb8] sm:$0xf] %vm696, %v639
      %v805 = vld [vmem:[%s689 + $0xbc] sm:$0x1]
      %v806 = vsel %vm699, %v640, %v805
      %807 = vst [vmem:[%s689 + $0xbc] sm:$0x1] %v806
      %v808 = vld [vmem:[#allocation2] sm:$0xf]
      %v809 = vld [vmem:[#allocation2 + $0x4] sm:$0xf]
      %v810 = vld [vmem:[#allocation2 + $0xc] sm:$0xf]
      %v811 = vld [vmem:[#allocation2 + $0x10] sm:$0xf]
      %v812 = vld [vmem:[#allocation2 + $0x18] sm:$0xf]
      %v813 = vld [vmem:[#allocation2 + $0x1c] sm:$0xf]
      %v814 = vld [vmem:[#allocation2 + $0x24] sm:$0xf]
      %v815 = vld [vmem:[#allocation2 + $0x28] sm:$0xf]
      %v816 = vld [vmem:[#allocation2 + $0x30] sm:$0xf]
      %v817 = vld [vmem:[#allocation2 + $0x34] sm:$0xf]
      %v818 = vld [vmem:[#allocation2 + $0x3c] sm:$0xf]
      %v819 = vld [vmem:[#allocation2 + $0x40] sm:$0xf]
      %v820 = vld [vmem:[#allocation2 + $0x48] sm:$0xf]
      %v821 = vld [vmem:[#allocation2 + $0x4c] sm:$0xf]
      %v822 = vld [vmem:[#allocation2 + $0x54] sm:$0xf]
      %v823 = vld [vmem:[#allocation2 + $0x58] sm:$0xf]
      %v824 = vld [vmem:[#allocation2 + $0x60] sm:$0xf]
      %v825 = vld [vmem:[#allocation2 + $0x64] sm:$0xf]
      %v826 = vld [vmem:[#allocation2 + $0x6c] sm:$0xf]
      %v827 = vld [vmem:[#allocation2 + $0x70] sm:$0xf]
      %v828 = vld [vmem:[#allocation2 + $0x78] sm:$0xf]
      %v829 = vld [vmem:[#allocation2 + $0x7c] sm:$0xf]
      %v830 = vld [vmem:[#allocation2 + $0x84] sm:$0xf]
      %v831 = vld [vmem:[#allocation2 + $0x88] sm:$0xf]
      %v832 = vld [vmem:[#allocation2 + $0x90] sm:$0xf]
      %v833 = vld [vmem:[#allocation2 + $0x94] sm:$0xf]
      %v834 = vld [vmem:[#allocation2 + $0x9c] sm:$0xf]
      %v835 = vld [vmem:[#allocation2 + $0xa0] sm:$0xf]
      %v836 = vld [vmem:[#allocation2 + $0xa8] sm:$0xf]
      %v837 = vld [vmem:[#allocation2 + $0xac] sm:$0xf]
      %v838 = vld [vmem:[#allocation2 + $0xb4] sm:$0xf]
      %v839 = vld [vmem:[#allocation2 + $0xb8] sm:$0xf]
      %v872 = vunpack.c.l.b16 %v808
      %v873 = vunpack.c.l.b16 %v809
      %v874 = vunpack.c.l.b16 %v810
      %v875 = vunpack.c.l.b16 %v811
      %v876 = vunpack.c.l.b16 %v812
      %v877 = vunpack.c.l.b16 %v813
      %v878 = vunpack.c.l.b16 %v814
      %v879 = vunpack.c.l.b16 %v815
      %v880 = vunpack.c.l.b16 %v816
      %v881 = vunpack.c.l.b16 %v817
      %v882 = vunpack.c.l.b16 %v818
      %v883 = vunpack.c.l.b16 %v819
      %v884 = vunpack.c.l.b16 %v820
      %v885 = vunpack.c.l.b16 %v821
      %v886 = vunpack.c.l.b16 %v822
      %v887 = vunpack.c.l.b16 %v823
      %v888 = vunpack.c.l.b16 %v824
      %v889 = vunpack.c.l.b16 %v825
      %v890 = vunpack.c.l.b16 %v826
      %v891 = vunpack.c.l.b16 %v827
      %v892 = vunpack.c.l.b16 %v828
      %v893 = vunpack.c.l.b16 %v829
      %v894 = vunpack.c.l.b16 %v830
      %v895 = vunpack.c.l.b16 %v831
      %v896 = vunpack.c.l.b16 %v832
      %v897 = vunpack.c.l.b16 %v833
      %v898 = vunpack.c.l.b16 %v834
      %v899 = vunpack.c.l.b16 %v835
      %v900 = vunpack.c.l.b16 %v836
      %v901 = vunpack.c.l.b16 %v837
      %v902 = vunpack.c.l.b16 %v838
      %v903 = vunpack.c.l.b16 %v839
      %v904 = vpack.c.b16 %v873, %v872
      %v905 = vpack.c.b16 %v875, %v874
      %v906 = vpack.c.b16 %v877, %v876
      %v907 = vpack.c.b16 %v879, %v878
      %v908 = vpack.c.b16 %v881, %v880
      %v909 = vpack.c.b16 %v883, %v882
      %v910 = vpack.c.b16 %v885, %v884
      %v911 = vpack.c.b16 %v887, %v886
      %v912 = vpack.c.b16 %v889, %v888
      %v913 = vpack.c.b16 %v891, %v890
      %v914 = vpack.c.b16 %v893, %v892
      %v915 = vpack.c.b16 %v895, %v894
      %v916 = vpack.c.b16 %v897, %v896
      %v917 = vpack.c.b16 %v899, %v898
      %v918 = vpack.c.b16 %v901, %v900
      %v919 = vpack.c.b16 %v903, %v902
      %936 = vst [vmem:[#allocation3] sm:$0xff] %v904
      %937 = vst [vmem:[#allocation3 + $0x48] sm:$0xff] %v905
      %938 = vst [vmem:[#allocation3 + $0x90] sm:$0xff] %v906
      %939 = vst [vmem:[#allocation3 + $0xd8] sm:$0xff] %v907
      %940 = vst [vmem:[#allocation3 + $0x120] sm:$0xff] %v908
      %941 = vst [vmem:[#allocation3 + $0x168] sm:$0xff] %v909
      %942 = vst [vmem:[#allocation3 + $0x1b0] sm:$0xff] %v910
      %943 = vst [vmem:[#allocation3 + $0x1f8] sm:$0xff] %v911
      %944 = vst [vmem:[#allocation3 + $0x240] sm:$0xff] %v912
      %945 = vst [vmem:[#allocation3 + $0x288] sm:$0xff] %v913
      %946 = vst [vmem:[#allocation3 + $0x2d0] sm:$0xff] %v914
      %947 = vst [vmem:[#allocation3 + $0x318] sm:$0xff] %v915
      %948 = vst [vmem:[#allocation3 + $0x360] sm:$0xff] %v916
      %949 = vst [vmem:[#allocation3 + $0x3a8] sm:$0xff] %v917
      %950 = vst [vmem:[#allocation3 + $0x3f0] sm:$0xff] %v918
      %951 = vst [vmem:[#allocation3 + $0x438] sm:$0xff] %v919
      %v952 = vld [vmem:[#allocation2] sm:$0xf]
      %v953 = vld [vmem:[#allocation2 + $0x4] sm:$0xf]
      %v954 = vld [vmem:[#allocation2 + $0x8] sm:$0x1]
      %v955 = vld [vmem:[#allocation2 + $0xc] sm:$0xf]
      %v956 = vld [vmem:[#allocation2 + $0x10] sm:$0xf]
      %v957 = vld [vmem:[#allocation2 + $0x14] sm:$0x1]
      %v958 = vld [vmem:[#allocation2 + $0x18] sm:$0xf]
      %v959 = vld [vmem:[#allocation2 + $0x1c] sm:$0xf]
      %v960 = vld [vmem:[#allocation2 + $0x20] sm:$0x1]
      %v961 = vld [vmem:[#allocation2 + $0x24] sm:$0xf]
      %v962 = vld [vmem:[#allocation2 + $0x28] sm:$0xf]
      %v963 = vld [vmem:[#allocation2 + $0x2c] sm:$0x1]
      %v964 = vld [vmem:[#allocation2 + $0x30] sm:$0xf]
      %v965 = vld [vmem:[#allocation2 + $0x34] sm:$0xf]
      %v966 = vld [vmem:[#allocation2 + $0x38] sm:$0x1]
      %v967 = vld [vmem:[#allocation2 + $0x3c] sm:$0xf]
      %v968 = vld [vmem:[#allocation2 + $0x40] sm:$0xf]
      %v969 = vld [vmem:[#allocation2 + $0x44] sm:$0x1]
      %v970 = vld [vmem:[#allocation2 + $0x48] sm:$0xf]
      %v971 = vld [vmem:[#allocation2 + $0x4c] sm:$0xf]
      %v972 = vld [vmem:[#allocation2 + $0x50] sm:$0x1]
      %v973 = vld [vmem:[#allocation2 + $0x54] sm:$0xf]
      %v974 = vld [vmem:[#allocation2 + $0x58] sm:$0xf]
      %v975 = vld [vmem:[#allocation2 + $0x5c] sm:$0x1]
      %v976 = vld [vmem:[#allocation2 + $0x60] sm:$0xf]
      %v977 = vld [vmem:[#allocation2 + $0x64] sm:$0xf]
      %v978 = vld [vmem:[#allocation2 + $0x68] sm:$0x1]
      %v979 = vld [vmem:[#allocation2 + $0x6c] sm:$0xf]
      %v980 = vld [vmem:[#allocation2 + $0x70] sm:$0xf]
      %v981 = vld [vmem:[#allocation2 + $0x74] sm:$0x1]
      %v982 = vld [vmem:[#allocation2 + $0x78] sm:$0xf]
      %v983 = vld [vmem:[#allocation2 + $0x7c] sm:$0xf]
      %v984 = vld [vmem:[#allocation2 + $0x80] sm:$0x1]
      %v985 = vld [vmem:[#allocation2 + $0x84] sm:$0xf]
      %v986 = vld [vmem:[#allocation2 + $0x88] sm:$0xf]
      %v987 = vld [vmem:[#allocation2 + $0x8c] sm:$0x1]
      %v988 = vld [vmem:[#allocation2 + $0x90] sm:$0xf]
      %v989 = vld [vmem:[#allocation2 + $0x94] sm:$0xf]
      %v990 = vld [vmem:[#allocation2 + $0x98] sm:$0x1]
      %v991 = vld [vmem:[#allocation2 + $0x9c] sm:$0xf]
      %v992 = vld [vmem:[#allocation2 + $0xa0] sm:$0xf]
      %v993 = vld [vmem:[#allocation2 + $0xa4] sm:$0x1]
      %v994 = vld [vmem:[#allocation2 + $0xa8] sm:$0xf]
      %v995 = vld [vmem:[#allocation2 + $0xac] sm:$0xf]
      %v996 = vld [vmem:[#allocation2 + $0xb0] sm:$0x1]
      %v997 = vld [vmem:[#allocation2 + $0xb4] sm:$0xf]
      %v998 = vld [vmem:[#allocation2 + $0xb8] sm:$0xf]
      %v999 = vld [vmem:[#allocation2 + $0xbc] sm:$0x1]
      %vm1000 = vsmask.f32 3328
      %vm1001 = vsmask.f32 7440
      %vm1002 = vmor %vm1000, %vm1001
      %v1004 = vshrl.u32 %v952, 16
      %v1006 = vrot.slane %v1004, 4
      %v1007 = vshll.u32 %v952, 16
      %v1009 = vrot.slane %v1007, 5
      %v1010 = vor.u32 %v1006, %v1009
      %v1011 = vrot.slane %v1010, 4
      %v1013 = vshll.u32 %v953, 16
      %v1015 = vrot.slane %v1013, 5
      %v1016 = vsel %vm1002, %v1011, %v1015
      %v1017 = vshrl.u32 %v953, 16
      %v1019 = vrot.slane %v1017, 4
      %v1020 = vor.u32 %v1019, %v1015
      %v1021 = vrot.slane %v1020, 4
      %v1023 = vshll.u32 %v954, 16
      %v1025 = vrot.slane %v1023, 5
      %v1026 = vsel %vm1002, %v1021, %v1025
      %v1028 = vshrl.u32 %v955, 16
      %v1030 = vrot.slane %v1028, 4
      %v1031 = vshll.u32 %v955, 16
      %v1033 = vrot.slane %v1031, 5
      %v1034 = vor.u32 %v1030, %v1033
      %v1035 = vrot.slane %v1034, 4
      %v1037 = vshll.u32 %v956, 16
      %v1039 = vrot.slane %v1037, 5
      %v1040 = vsel %vm1002, %v1035, %v1039
      %v1041 = vshrl.u32 %v956, 16
      %v1043 = vrot.slane %v1041, 4
      %v1044 = vor.u32 %v1043, %v1039
      %v1045 = vrot.slane %v1044, 4
      %v1047 = vshll.u32 %v957, 16
      %v1049 = vrot.slane %v1047, 5
      %v1050 = vsel %vm1002, %v1045, %v1049
      %v1052 = vshrl.u32 %v958, 16
      %v1054 = vrot.slane %v1052, 4
      %v1055 = vshll.u32 %v958, 16
      %v1057 = vrot.slane %v1055, 5
      %v1058 = vor.u32 %v1054, %v1057
      %v1059 = vrot.slane %v1058, 4
      %v1061 = vshll.u32 %v959, 16
      %v1063 = vrot.slane %v1061, 5
      %v1064 = vsel %vm1002, %v1059, %v1063
      %v1065 = vshrl.u32 %v959, 16
      %v1067 = vrot.slane %v1065, 4
      %v1068 = vor.u32 %v1067, %v1063
      %v1069 = vrot.slane %v1068, 4
      %v1071 = vshll.u32 %v960, 16
      %v1073 = vrot.slane %v1071, 5
      %v1074 = vsel %vm1002, %v1069, %v1073
      %v1076 = vshrl.u32 %v961, 16
      %v1078 = vrot.slane %v1076, 4
      %v1079 = vshll.u32 %v961, 16
      %v1081 = vrot.slane %v1079, 5
      %v1082 = vor.u32 %v1078, %v1081
      %v1083 = vrot.slane %v1082, 4
      %v1085 = vshll.u32 %v962, 16
      %v1087 = vrot.slane %v1085, 5
      %v1088 = vsel %vm1002, %v1083, %v1087
      %v1089 = vshrl.u32 %v962, 16
      %v1091 = vrot.slane %v1089, 4
      %v1092 = vor.u32 %v1091, %v1087
      %v1093 = vrot.slane %v1092, 4
      %v1095 = vshll.u32 %v963, 16
      %v1097 = vrot.slane %v1095, 5
      %v1098 = vsel %vm1002, %v1093, %v1097
      %v1100 = vshrl.u32 %v964, 16
      %v1102 = vrot.slane %v1100, 4
      %v1103 = vshll.u32 %v964, 16
      %v1105 = vrot.slane %v1103, 5
      %v1106 = vor.u32 %v1102, %v1105
      %v1107 = vrot.slane %v1106, 4
      %v1109 = vshll.u32 %v965, 16
      %v1111 = vrot.slane %v1109, 5
      %v1112 = vsel %vm1002, %v1107, %v1111
      %v1113 = vshrl.u32 %v965, 16
      %v1115 = vrot.slane %v1113, 4
      %v1116 = vor.u32 %v1115, %v1111
      %v1117 = vrot.slane %v1116, 4
      %v1119 = vshll.u32 %v966, 16
      %v1121 = vrot.slane %v1119, 5
      %v1122 = vsel %vm1002, %v1117, %v1121
      %v1124 = vshrl.u32 %v967, 16
      %v1126 = vrot.slane %v1124, 4
      %v1127 = vshll.u32 %v967, 16
      %v1129 = vrot.slane %v1127, 5
      %v1130 = vor.u32 %v1126, %v1129
      %v1131 = vrot.slane %v1130, 4
      %v1133 = vshll.u32 %v968, 16
      %v1135 = vrot.slane %v1133, 5
      %v1136 = vsel %vm1002, %v1131, %v1135
      %v1137 = vshrl.u32 %v968, 16
      %v1139 = vrot.slane %v1137, 4
      %v1140 = vor.u32 %v1139, %v1135
      %v1141 = vrot.slane %v1140, 4
      %v1143 = vshll.u32 %v969, 16
      %v1145 = vrot.slane %v1143, 5
      %v1146 = vsel %vm1002, %v1141, %v1145
      %v1148 = vshrl.u32 %v970, 16
      %v1150 = vrot.slane %v1148, 4
      %v1151 = vshll.u32 %v970, 16
      %v1153 = vrot.slane %v1151, 5
      %v1154 = vor.u32 %v1150, %v1153
      %v1155 = vrot.slane %v1154, 4
      %v1157 = vshll.u32 %v971, 16
      %v1159 = vrot.slane %v1157, 5
      %v1160 = vsel %vm1002, %v1155, %v1159
      %v1161 = vshrl.u32 %v971, 16
      %v1163 = vrot.slane %v1161, 4
      %v1164 = vor.u32 %v1163, %v1159
      %v1165 = vrot.slane %v1164, 4
      %v1167 = vshll.u32 %v972, 16
      %v1169 = vrot.slane %v1167, 5
      %v1170 = vsel %vm1002, %v1165, %v1169
      %v1172 = vshrl.u32 %v973, 16
      %v1174 = vrot.slane %v1172, 4
      %v1175 = vshll.u32 %v973, 16
      %v1177 = vrot.slane %v1175, 5
      %v1178 = vor.u32 %v1174, %v1177
      %v1179 = vrot.slane %v1178, 4
      %v1181 = vshll.u32 %v974, 16
      %v1183 = vrot.slane %v1181, 5
      %v1184 = vsel %vm1002, %v1179, %v1183
      %v1185 = vshrl.u32 %v974, 16
      %v1187 = vrot.slane %v1185, 4
      %v1188 = vor.u32 %v1187, %v1183
      %v1189 = vrot.slane %v1188, 4
      %v1191 = vshll.u32 %v975, 16
      %v1193 = vrot.slane %v1191, 5
      %v1194 = vsel %vm1002, %v1189, %v1193
      %v1196 = vshrl.u32 %v976, 16
      %v1198 = vrot.slane %v1196, 4
      %v1199 = vshll.u32 %v976, 16
      %v1201 = vrot.slane %v1199, 5
      %v1202 = vor.u32 %v1198, %v1201
      %v1203 = vrot.slane %v1202, 4
      %v1205 = vshll.u32 %v977, 16
      %v1207 = vrot.slane %v1205, 5
      %v1208 = vsel %vm1002, %v1203, %v1207
      %v1209 = vshrl.u32 %v977, 16
      %v1211 = vrot.slane %v1209, 4
      %v1212 = vor.u32 %v1211, %v1207
      %v1213 = vrot.slane %v1212, 4
      %v1215 = vshll.u32 %v978, 16
      %v1217 = vrot.slane %v1215, 5
      %v1218 = vsel %vm1002, %v1213, %v1217
      %v1220 = vshrl.u32 %v979, 16
      %v1222 = vrot.slane %v1220, 4
      %v1223 = vshll.u32 %v979, 16
      %v1225 = vrot.slane %v1223, 5
      %v1226 = vor.u32 %v1222, %v1225
      %v1227 = vrot.slane %v1226, 4
      %v1229 = vshll.u32 %v980, 16
      %v1231 = vrot.slane %v1229, 5
      %v1232 = vsel %vm1002, %v1227, %v1231
      %v1233 = vshrl.u32 %v980, 16
      %v1235 = vrot.slane %v1233, 4
      %v1236 = vor.u32 %v1235, %v1231
      %v1237 = vrot.slane %v1236, 4
      %v1239 = vshll.u32 %v981, 16
      %v1241 = vrot.slane %v1239, 5
      %v1242 = vsel %vm1002, %v1237, %v1241
      %v1244 = vshrl.u32 %v982, 16
      %v1246 = vrot.slane %v1244, 4
      %v1247 = vshll.u32 %v982, 16
      %v1249 = vrot.slane %v1247, 5
      %v1250 = vor.u32 %v1246, %v1249
      %v1251 = vrot.slane %v1250, 4
      %v1253 = vshll.u32 %v983, 16
      %v1255 = vrot.slane %v1253, 5
      %v1256 = vsel %vm1002, %v1251, %v1255
      %v1257 = vshrl.u32 %v983, 16
      %v1259 = vrot.slane %v1257, 4
      %v1260 = vor.u32 %v1259, %v1255
      %v1261 = vrot.slane %v1260, 4
      %v1263 = vshll.u32 %v984, 16
      %v1265 = vrot.slane %v1263, 5
      %v1266 = vsel %vm1002, %v1261, %v1265
      %v1268 = vshrl.u32 %v985, 16
      %v1270 = vrot.slane %v1268, 4
      %v1271 = vshll.u32 %v985, 16
      %v1273 = vrot.slane %v1271, 5
      %v1274 = vor.u32 %v1270, %v1273
      %v1275 = vrot.slane %v1274, 4
      %v1277 = vshll.u32 %v986, 16
      %v1279 = vrot.slane %v1277, 5
      %v1280 = vsel %vm1002, %v1275, %v1279
      %v1281 = vshrl.u32 %v986, 16
      %v1283 = vrot.slane %v1281, 4
      %v1284 = vor.u32 %v1283, %v1279
      %v1285 = vrot.slane %v1284, 4
      %v1287 = vshll.u32 %v987, 16
      %v1289 = vrot.slane %v1287, 5
      %v1290 = vsel %vm1002, %v1285, %v1289
      %v1292 = vshrl.u32 %v988, 16
      %v1294 = vrot.slane %v1292, 4
      %v1295 = vshll.u32 %v988, 16
      %v1297 = vrot.slane %v1295, 5
      %v1298 = vor.u32 %v1294, %v1297
      %v1299 = vrot.slane %v1298, 4
      %v1301 = vshll.u32 %v989, 16
      %v1303 = vrot.slane %v1301, 5
      %v1304 = vsel %vm1002, %v1299, %v1303
      %v1305 = vshrl.u32 %v989, 16
      %v1307 = vrot.slane %v1305, 4
      %v1308 = vor.u32 %v1307, %v1303
      %v1309 = vrot.slane %v1308, 4
      %v1311 = vshll.u32 %v990, 16
      %v1313 = vrot.slane %v1311, 5
      %v1314 = vsel %vm1002, %v1309, %v1313
      %v1316 = vshrl.u32 %v991, 16
      %v1318 = vrot.slane %v1316, 4
      %v1319 = vshll.u32 %v991, 16
      %v1321 = vrot.slane %v1319, 5
      %v1322 = vor.u32 %v1318, %v1321
      %v1323 = vrot.slane %v1322, 4
      %v1325 = vshll.u32 %v992, 16
      %v1327 = vrot.slane %v1325, 5
      %v1328 = vsel %vm1002, %v1323, %v1327
      %v1329 = vshrl.u32 %v992, 16
      %v1331 = vrot.slane %v1329, 4
      %v1332 = vor.u32 %v1331, %v1327
      %v1333 = vrot.slane %v1332, 4
      %v1335 = vshll.u32 %v993, 16
      %v1337 = vrot.slane %v1335, 5
      %v1338 = vsel %vm1002, %v1333, %v1337
      %v1340 = vshrl.u32 %v994, 16
      %v1342 = vrot.slane %v1340, 4
      %v1343 = vshll.u32 %v994, 16
      %v1345 = vrot.slane %v1343, 5
      %v1346 = vor.u32 %v1342, %v1345
      %v1347 = vrot.slane %v1346, 4
      %v1349 = vshll.u32 %v995, 16
      %v1351 = vrot.slane %v1349, 5
      %v1352 = vsel %vm1002, %v1347, %v1351
      %v1353 = vshrl.u32 %v995, 16
      %v1355 = vrot.slane %v1353, 4
      %v1356 = vor.u32 %v1355, %v1351
      %v1357 = vrot.slane %v1356, 4
      %v1359 = vshll.u32 %v996, 16
      %v1361 = vrot.slane %v1359, 5
      %v1362 = vsel %vm1002, %v1357, %v1361
      %v1364 = vshrl.u32 %v997, 16
      %v1366 = vrot.slane %v1364, 4
      %v1367 = vshll.u32 %v997, 16
      %v1369 = vrot.slane %v1367, 5
      %v1370 = vor.u32 %v1366, %v1369
      %v1371 = vrot.slane %v1370, 4
      %v1373 = vshll.u32 %v998, 16
      %v1375 = vrot.slane %v1373, 5
      %v1376 = vsel %vm1002, %v1371, %v1375
      %v1377 = vshrl.u32 %v998, 16
      %v1379 = vrot.slane %v1377, 4
      %v1380 = vor.u32 %v1379, %v1375
      %v1381 = vrot.slane %v1380, 4
      %v1383 = vshll.u32 %v999, 16
      %v1385 = vrot.slane %v1383, 5
      %v1386 = vsel %vm1002, %v1381, %v1385
      %v1387 = vunpack.c.l.b16 %v1016
      %v1388 = vunpack.c.l.b16 %v1026
      %v1389 = vunpack.c.l.b16 %v1040
      %v1390 = vunpack.c.l.b16 %v1050
      %v1391 = vunpack.c.l.b16 %v1064
      %v1392 = vunpack.c.l.b16 %v1074
      %v1393 = vunpack.c.l.b16 %v1088
      %v1394 = vunpack.c.l.b16 %v1098
      %v1395 = vunpack.c.l.b16 %v1112
      %v1396 = vunpack.c.l.b16 %v1122
      %v1397 = vunpack.c.l.b16 %v1136
      %v1398 = vunpack.c.l.b16 %v1146
      %v1399 = vunpack.c.l.b16 %v1160
      %v1400 = vunpack.c.l.b16 %v1170
      %v1401 = vunpack.c.l.b16 %v1184
      %v1402 = vunpack.c.l.b16 %v1194
      %v1403 = vunpack.c.l.b16 %v1208
      %v1404 = vunpack.c.l.b16 %v1218
      %v1405 = vunpack.c.l.b16 %v1232
      %v1406 = vunpack.c.l.b16 %v1242
      %v1407 = vunpack.c.l.b16 %v1256
      %v1408 = vunpack.c.l.b16 %v1266
      %v1409 = vunpack.c.l.b16 %v1280
      %v1410 = vunpack.c.l.b16 %v1290
      %v1411 = vunpack.c.l.b16 %v1304
      %v1412 = vunpack.c.l.b16 %v1314
      %v1413 = vunpack.c.l.b16 %v1328
      %v1414 = vunpack.c.l.b16 %v1338
      %v1415 = vunpack.c.l.b16 %v1352
      %v1416 = vunpack.c.l.b16 %v1362
      %v1417 = vunpack.c.l.b16 %v1376
      %v1418 = vunpack.c.l.b16 %v1386
      %v1419 = vpack.c.b16 %v1388, %v1387
      %v1420 = vpack.c.b16 %v1390, %v1389
      %v1421 = vpack.c.b16 %v1392, %v1391
      %v1422 = vpack.c.b16 %v1394, %v1393
      %v1423 = vpack.c.b16 %v1396, %v1395
      %v1424 = vpack.c.b16 %v1398, %v1397
      %v1425 = vpack.c.b16 %v1400, %v1399
      %v1426 = vpack.c.b16 %v1402, %v1401
      %v1427 = vpack.c.b16 %v1404, %v1403
      %v1428 = vpack.c.b16 %v1406, %v1405
      %v1429 = vpack.c.b16 %v1408, %v1407
      %v1430 = vpack.c.b16 %v1410, %v1409
      %v1431 = vpack.c.b16 %v1412, %v1411
      %v1432 = vpack.c.b16 %v1414, %v1413
      %v1433 = vpack.c.b16 %v1416, %v1415
      %v1434 = vpack.c.b16 %v1418, %v1417
      %1451 = vst [vmem:[#allocation3 + $0x8] sm:$0xff] %v1419
      %1452 = vst [vmem:[#allocation3 + $0x50] sm:$0xff] %v1420
      %1453 = vst [vmem:[#allocation3 + $0x98] sm:$0xff] %v1421
      %1454 = vst [vmem:[#allocation3 + $0xe0] sm:$0xff] %v1422
      %1455 = vst [vmem:[#allocation3 + $0x128] sm:$0xff] %v1423
      %1456 = vst [vmem:[#allocation3 + $0x170] sm:$0xff] %v1424
      %1457 = vst [vmem:[#allocation3 + $0x1b8] sm:$0xff] %v1425
      %1458 = vst [vmem:[#allocation3 + $0x200] sm:$0xff] %v1426
      %1459 = vst [vmem:[#allocation3 + $0x248] sm:$0xff] %v1427
      %1460 = vst [vmem:[#allocation3 + $0x290] sm:$0xff] %v1428
      %1461 = vst [vmem:[#allocation3 + $0x2d8] sm:$0xff] %v1429
      %1462 = vst [vmem:[#allocation3 + $0x320] sm:$0xff] %v1430
      %1463 = vst [vmem:[#allocation3 + $0x368] sm:$0xff] %v1431
      %1464 = vst [vmem:[#allocation3 + $0x3b0] sm:$0xff] %v1432
      %1465 = vst [vmem:[#allocation3 + $0x3f8] sm:$0xff] %v1433
      %1466 = vst [vmem:[#allocation3 + $0x440] sm:$0xff] %v1434
      %v1467 = vld [vmem:[#allocation2] sm:$0xe]
      %v1468 = vld [vmem:[#allocation2 + $0x4] sm:$0xf]
      %v1469 = vld [vmem:[#allocation2 + $0x8] sm:$0x1]
      %v1470 = vld [vmem:[#allocation2 + $0xc] sm:$0xe]
      %v1471 = vld [vmem:[#allocation2 + $0x10] sm:$0xf]
      %v1472 = vld [vmem:[#allocation2 + $0x14] sm:$0x1]
      %v1473 = vld [vmem:[#allocation2 + $0x18] sm:$0xe]
      %v1474 = vld [vmem:[#allocation2 + $0x1c] sm:$0xf]
      %v1475 = vld [vmem:[#allocation2 + $0x20] sm:$0x1]
      %v1476 = vld [vmem:[#allocation2 + $0x24] sm:$0xe]
      %v1477 = vld [vmem:[#allocation2 + $0x28] sm:$0xf]
      %v1478 = vld [vmem:[#allocation2 + $0x2c] sm:$0x1]
      %v1479 = vld [vmem:[#allocation2 + $0x30] sm:$0xe]
      %v1480 = vld [vmem:[#allocation2 + $0x34] sm:$0xf]
      %v1481 = vld [vmem:[#allocation2 + $0x38] sm:$0x1]
      %v1482 = vld [vmem:[#allocation2 + $0x3c] sm:$0xe]
      %v1483 = vld [vmem:[#allocation2 + $0x40] sm:$0xf]
      %v1484 = vld [vmem:[#allocation2 + $0x44] sm:$0x1]
      %v1485 = vld [vmem:[#allocation2 + $0x48] sm:$0xe]
      %v1486 = vld [vmem:[#allocation2 + $0x4c] sm:$0xf]
      %v1487 = vld [vmem:[#allocation2 + $0x50] sm:$0x1]
      %v1488 = vld [vmem:[#allocation2 + $0x54] sm:$0xe]
      %v1489 = vld [vmem:[#allocation2 + $0x58] sm:$0xf]
      %v1490 = vld [vmem:[#allocation2 + $0x5c] sm:$0x1]
      %v1491 = vld [vmem:[#allocation2 + $0x60] sm:$0xe]
      %v1492 = vld [vmem:[#allocation2 + $0x64] sm:$0xf]
      %v1493 = vld [vmem:[#allocation2 + $0x68] sm:$0x1]
      %v1494 = vld [vmem:[#allocation2 + $0x6c] sm:$0xe]
      %v1495 = vld [vmem:[#allocation2 + $0x70] sm:$0xf]
      %v1496 = vld [vmem:[#allocation2 + $0x74] sm:$0x1]
      %v1497 = vld [vmem:[#allocation2 + $0x78] sm:$0xe]
      %v1498 = vld [vmem:[#allocation2 + $0x7c] sm:$0xf]
      %v1499 = vld [vmem:[#allocation2 + $0x80] sm:$0x1]
      %v1500 = vld [vmem:[#allocation2 + $0x84] sm:$0xe]
      %v1501 = vld [vmem:[#allocation2 + $0x88] sm:$0xf]
      %v1502 = vld [vmem:[#allocation2 + $0x8c] sm:$0x1]
      %v1503 = vld [vmem:[#allocation2 + $0x90] sm:$0xe]
      %v1504 = vld [vmem:[#allocation2 + $0x94] sm:$0xf]
      %v1505 = vld [vmem:[#allocation2 + $0x98] sm:$0x1]
      %v1506 = vld [vmem:[#allocation2 + $0x9c] sm:$0xe]
      %v1507 = vld [vmem:[#allocation2 + $0xa0] sm:$0xf]
      %v1508 = vld [vmem:[#allocation2 + $0xa4] sm:$0x1]
      %v1509 = vld [vmem:[#allocation2 + $0xa8] sm:$0xe]
      %v1510 = vld [vmem:[#allocation2 + $0xac] sm:$0xf]
      %v1511 = vld [vmem:[#allocation2 + $0xb0] sm:$0x1]
      %v1512 = vld [vmem:[#allocation2 + $0xb4] sm:$0xe]
      %v1513 = vld [vmem:[#allocation2 + $0xb8] sm:$0xf]
      %v1514 = vld [vmem:[#allocation2 + $0xbc] sm:$0x1]
      %vm1563 = vcmask 1042432
      %vm1564 = vcmask 1046532
      %vm1565 = vmor %vm1563, %vm1564
      %v1566 = vrot.slane %v1467, 5
      %v1567 = vrot.slane %v1566, 4
      %v1568 = vrot.slane %v1468, 5
      %v1569 = vsel %vm1565, %v1567, %v1568
      %v1570 = vrot.slane %v1568, 4
      %v1571 = vrot.slane %v1469, 5
      %v1572 = vsel %vm1565, %v1570, %v1571
      %v1573 = vrot.slane %v1470, 5
      %v1574 = vrot.slane %v1573, 4
      %v1575 = vrot.slane %v1471, 5
      %v1576 = vsel %vm1565, %v1574, %v1575
      %v1577 = vrot.slane %v1575, 4
      %v1578 = vrot.slane %v1472, 5
      %v1579 = vsel %vm1565, %v1577, %v1578
      %v1580 = vrot.slane %v1473, 5
      %v1581 = vrot.slane %v1580, 4
      %v1582 = vrot.slane %v1474, 5
      %v1583 = vsel %vm1565, %v1581, %v1582
      %v1584 = vrot.slane %v1582, 4
      %v1585 = vrot.slane %v1475, 5
      %v1586 = vsel %vm1565, %v1584, %v1585
      %v1587 = vrot.slane %v1476, 5
      %v1588 = vrot.slane %v1587, 4
      %v1589 = vrot.slane %v1477, 5
      %v1590 = vsel %vm1565, %v1588, %v1589
      %v1591 = vrot.slane %v1589, 4
      %v1592 = vrot.slane %v1478, 5
      %v1593 = vsel %vm1565, %v1591, %v1592
      %v1594 = vrot.slane %v1479, 5
      %v1595 = vrot.slane %v1594, 4
      %v1596 = vrot.slane %v1480, 5
      %v1597 = vsel %vm1565, %v1595, %v1596
      %v1598 = vrot.slane %v1596, 4
      %v1599 = vrot.slane %v1481, 5
      %v1600 = vsel %vm1565, %v1598, %v1599
      %v1601 = vrot.slane %v1482, 5
      %v1602 = vrot.slane %v1601, 4
      %v1603 = vrot.slane %v1483, 5
      %v1604 = vsel %vm1565, %v1602, %v1603
      %v1605 = vrot.slane %v1603, 4
      %v1606 = vrot.slane %v1484, 5
      %v1607 = vsel %vm1565, %v1605, %v1606
      %v1608 = vrot.slane %v1485, 5
      %v1609 = vrot.slane %v1608, 4
      %v1610 = vrot.slane %v1486, 5
      %v1611 = vsel %vm1565, %v1609, %v1610
      %v1612 = vrot.slane %v1610, 4
      %v1613 = vrot.slane %v1487, 5
      %v1614 = vsel %vm1565, %v1612, %v1613
      %v1615 = vrot.slane %v1488, 5
      %v1616 = vrot.slane %v1615, 4
      %v1617 = vrot.slane %v1489, 5
      %v1618 = vsel %vm1565, %v1616, %v1617
      %v1619 = vrot.slane %v1617, 4
      %v1620 = vrot.slane %v1490, 5
      %v1621 = vsel %vm1565, %v1619, %v1620
      %v1622 = vrot.slane %v1491, 5
      %v1623 = vrot.slane %v1622, 4
      %v1624 = vrot.slane %v1492, 5
      %v1625 = vsel %vm1565, %v1623, %v1624
      %v1626 = vrot.slane %v1624, 4
      %v1627 = vrot.slane %v1493, 5
      %v1628 = vsel %vm1565, %v1626, %v1627
      %v1629 = vrot.slane %v1494, 5
      %v1630 = vrot.slane %v1629, 4
      %v1631 = vrot.slane %v1495, 5
      %v1632 = vsel %vm1565, %v1630, %v1631
      %v1633 = vrot.slane %v1631, 4
      %v1634 = vrot.slane %v1496, 5
      %v1635 = vsel %vm1565, %v1633, %v1634
      %v1636 = vrot.slane %v1497, 5
      %v1637 = vrot.slane %v1636, 4
      %v1638 = vrot.slane %v1498, 5
      %v1639 = vsel %vm1565, %v1637, %v1638
      %v1640 = vrot.slane %v1638, 4
      %v1641 = vrot.slane %v1499, 5
      %v1642 = vsel %vm1565, %v1640, %v1641
      %v1643 = vrot.slane %v1500, 5
      %v1644 = vrot.slane %v1643, 4
      %v1645 = vrot.slane %v1501, 5
      %v1646 = vsel %vm1565, %v1644, %v1645
      %v1647 = vrot.slane %v1645, 4
      %v1648 = vrot.slane %v1502, 5
      %v1649 = vsel %vm1565, %v1647, %v1648
      %v1650 = vrot.slane %v1503, 5
      %v1651 = vrot.slane %v1650, 4
      %v1652 = vrot.slane %v1504, 5
      %v1653 = vsel %vm1565, %v1651, %v1652
      %v1654 = vrot.slane %v1652, 4
      %v1655 = vrot.slane %v1505, 5
      %v1656 = vsel %vm1565, %v1654, %v1655
      %v1657 = vrot.slane %v1506, 5
      %v1658 = vrot.slane %v1657, 4
      %v1659 = vrot.slane %v1507, 5
      %v1660 = vsel %vm1565, %v1658, %v1659
      %v1661 = vrot.slane %v1659, 4
      %v1662 = vrot.slane %v1508, 5
      %v1663 = vsel %vm1565, %v1661, %v1662
      %v1664 = vrot.slane %v1509, 5
      %v1665 = vrot.slane %v1664, 4
      %v1666 = vrot.slane %v1510, 5
      %v1667 = vsel %vm1565, %v1665, %v1666
      %v1668 = vrot.slane %v1666, 4
      %v1669 = vrot.slane %v1511, 5
      %v1670 = vsel %vm1565, %v1668, %v1669
      %v1671 = vrot.slane %v1512, 5
      %v1672 = vrot.slane %v1671, 4
      %v1673 = vrot.slane %v1513, 5
      %v1674 = vsel %vm1565, %v1672, %v1673
      %v1675 = vrot.slane %v1673, 4
      %v1676 = vrot.slane %v1514, 5
      %v1677 = vsel %vm1565, %v1675, %v1676
      %v1678 = vunpack.c.l.b16 %v1569
      %v1679 = vunpack.c.l.b16 %v1572
      %v1680 = vunpack.c.l.b16 %v1576
      %v1681 = vunpack.c.l.b16 %v1579
      %v1682 = vunpack.c.l.b16 %v1583
      %v1683 = vunpack.c.l.b16 %v1586
      %v1684 = vunpack.c.l.b16 %v1590
      %v1685 = vunpack.c.l.b16 %v1593
      %v1686 = vunpack.c.l.b16 %v1597
      %v1687 = vunpack.c.l.b16 %v1600
      %v1688 = vunpack.c.l.b16 %v1604
      %v1689 = vunpack.c.l.b16 %v1607
      %v1690 = vunpack.c.l.b16 %v1611
      %v1691 = vunpack.c.l.b16 %v1614
      %v1692 = vunpack.c.l.b16 %v1618
      %v1693 = vunpack.c.l.b16 %v1621
      %v1694 = vunpack.c.l.b16 %v1625
      %v1695 = vunpack.c.l.b16 %v1628
      %v1696 = vunpack.c.l.b16 %v1632
      %v1697 = vunpack.c.l.b16 %v1635
      %v1698 = vunpack.c.l.b16 %v1639
      %v1699 = vunpack.c.l.b16 %v1642
      %v1700 = vunpack.c.l.b16 %v1646
      %v1701 = vunpack.c.l.b16 %v1649
      %v1702 = vunpack.c.l.b16 %v1653
      %v1703 = vunpack.c.l.b16 %v1656
      %v1704 = vunpack.c.l.b16 %v1660
      %v1705 = vunpack.c.l.b16 %v1663
      %v1706 = vunpack.c.l.b16 %v1667
      %v1707 = vunpack.c.l.b16 %v1670
      %v1708 = vunpack.c.l.b16 %v1674
      %v1709 = vunpack.c.l.b16 %v1677
      %v1710 = vpack.c.b16 %v1679, %v1678
      %v1711 = vpack.c.b16 %v1681, %v1680
      %v1712 = vpack.c.b16 %v1683, %v1682
      %v1713 = vpack.c.b16 %v1685, %v1684
      %v1714 = vpack.c.b16 %v1687, %v1686
      %v1715 = vpack.c.b16 %v1689, %v1688
      %v1716 = vpack.c.b16 %v1691, %v1690
      %v1717 = vpack.c.b16 %v1693, %v1692
      %v1718 = vpack.c.b16 %v1695, %v1694
      %v1719 = vpack.c.b16 %v1697, %v1696
      %v1720 = vpack.c.b16 %v1699, %v1698
      %v1721 = vpack.c.b16 %v1701, %v1700
      %v1722 = vpack.c.b16 %v1703, %v1702
      %v1723 = vpack.c.b16 %v1705, %v1704
      %v1724 = vpack.c.b16 %v1707, %v1706
      %v1725 = vpack.c.b16 %v1709, %v1708
      %1742 = vst [vmem:[#allocation3 + $0x10] sm:$0xff] %v1710
      %1743 = vst [vmem:[#allocation3 + $0x58] sm:$0xff] %v1711
      %1744 = vst [vmem:[#allocation3 + $0xa0] sm:$0xff] %v1712
      %1745 = vst [vmem:[#allocation3 + $0xe8] sm:$0xff] %v1713
      %1746 = vst [vmem:[#allocation3 + $0x130] sm:$0xff] %v1714
      %1747 = vst [vmem:[#allocation3 + $0x178] sm:$0xff] %v1715
      %1748 = vst [vmem:[#allocation3 + $0x1c0] sm:$0xff] %v1716
      %1749 = vst [vmem:[#allocation3 + $0x208] sm:$0xff] %v1717
      %1750 = vst [vmem:[#allocation3 + $0x250] sm:$0xff] %v1718
      %1751 = vst [vmem:[#allocation3 + $0x298] sm:$0xff] %v1719
      %1752 = vst [vmem:[#allocation3 + $0x2e0] sm:$0xff] %v1720
      %1753 = vst [vmem:[#allocation3 + $0x328] sm:$0xff] %v1721
      %1754 = vst [vmem:[#allocation3 + $0x370] sm:$0xff] %v1722
      %1755 = vst [vmem:[#allocation3 + $0x3b8] sm:$0xff] %v1723
      %1756 = vst [vmem:[#allocation3 + $0x400] sm:$0xff] %v1724
      %1757 = vst [vmem:[#allocation3 + $0x448] sm:$0xff] %v1725
      %v1758 = vld [vmem:[%s689] sm:$0xf]
      %v1759 = vld [vmem:[%s689 + $0x4] sm:$0xf]
      %v1760 = vld [vmem:[%s689 + $0xc] sm:$0xf]
      %v1761 = vld [vmem:[%s689 + $0x10] sm:$0xf]
      %v1762 = vld [vmem:[%s689 + $0x18] sm:$0xf]
      %v1763 = vld [vmem:[%s689 + $0x1c] sm:$0xf]
      %v1764 = vld [vmem:[%s689 + $0x24] sm:$0xf]
      %v1765 = vld [vmem:[%s689 + $0x28] sm:$0xf]
      %v1766 = vld [vmem:[%s689 + $0x30] sm:$0xf]
      %v1767 = vld [vmem:[%s689 + $0x34] sm:$0xf]
      %v1768 = vld [vmem:[%s689 + $0x3c] sm:$0xf]
      %v1769 = vld [vmem:[%s689 + $0x40] sm:$0xf]
      %v1770 = vld [vmem:[%s689 + $0x48] sm:$0xf]
      %v1771 = vld [vmem:[%s689 + $0x4c] sm:$0xf]
      %v1772 = vld [vmem:[%s689 + $0x54] sm:$0xf]
      %v1773 = vld [vmem:[%s689 + $0x58] sm:$0xf]
      %v1774 = vld [vmem:[%s689 + $0x60] sm:$0xf]
      %v1775 = vld [vmem:[%s689 + $0x64] sm:$0xf]
      %v1776 = vld [vmem:[%s689 + $0x6c] sm:$0xf]
      %v1777 = vld [vmem:[%s689 + $0x70] sm:$0xf]
      %v1778 = vld [vmem:[%s689 + $0x78] sm:$0xf]
      %v1779 = vld [vmem:[%s689 + $0x7c] sm:$0xf]
      %v1780 = vld [vmem:[%s689 + $0x84] sm:$0xf]
      %v1781 = vld [vmem:[%s689 + $0x88] sm:$0xf]
      %v1782 = vld [vmem:[%s689 + $0x90] sm:$0xf]
      %v1783 = vld [vmem:[%s689 + $0x94] sm:$0xf]
      %v1784 = vld [vmem:[%s689 + $0x9c] sm:$0xf]
      %v1785 = vld [vmem:[%s689 + $0xa0] sm:$0xf]
      %v1786 = vld [vmem:[%s689 + $0xa8] sm:$0xf]
      %v1787 = vld [vmem:[%s689 + $0xac] sm:$0xf]
      %v1788 = vld [vmem:[%s689 + $0xb4] sm:$0xf]
      %v1789 = vld [vmem:[%s689 + $0xb8] sm:$0xf]
      %v1822 = vunpack.c.l.b16 %v1758
      %v1823 = vunpack.c.l.b16 %v1759
      %v1824 = vunpack.c.l.b16 %v1760
      %v1825 = vunpack.c.l.b16 %v1761
      %v1826 = vunpack.c.l.b16 %v1762
      %v1827 = vunpack.c.l.b16 %v1763
      %v1828 = vunpack.c.l.b16 %v1764
      %v1829 = vunpack.c.l.b16 %v1765
      %v1830 = vunpack.c.l.b16 %v1766
      %v1831 = vunpack.c.l.b16 %v1767
      %v1832 = vunpack.c.l.b16 %v1768
      %v1833 = vunpack.c.l.b16 %v1769
      %v1834 = vunpack.c.l.b16 %v1770
      %v1835 = vunpack.c.l.b16 %v1771
      %v1836 = vunpack.c.l.b16 %v1772
      %v1837 = vunpack.c.l.b16 %v1773
      %v1838 = vunpack.c.l.b16 %v1774
      %v1839 = vunpack.c.l.b16 %v1775
      %v1840 = vunpack.c.l.b16 %v1776
      %v1841 = vunpack.c.l.b16 %v1777
      %v1842 = vunpack.c.l.b16 %v1778
      %v1843 = vunpack.c.l.b16 %v1779
      %v1844 = vunpack.c.l.b16 %v1780
      %v1845 = vunpack.c.l.b16 %v1781
      %v1846 = vunpack.c.l.b16 %v1782
      %v1847 = vunpack.c.l.b16 %v1783
      %v1848 = vunpack.c.l.b16 %v1784
      %v1849 = vunpack.c.l.b16 %v1785
      %v1850 = vunpack.c.l.b16 %v1786
      %v1851 = vunpack.c.l.b16 %v1787
      %v1852 = vunpack.c.l.b16 %v1788
      %v1853 = vunpack.c.l.b16 %v1789
      %v1854 = vpack.c.b16 %v1823, %v1822
      %v1855 = vpack.c.b16 %v1825, %v1824
      %v1856 = vpack.c.b16 %v1827, %v1826
      %v1857 = vpack.c.b16 %v1829, %v1828
      %v1858 = vpack.c.b16 %v1831, %v1830
      %v1859 = vpack.c.b16 %v1833, %v1832
      %v1860 = vpack.c.b16 %v1835, %v1834
      %v1861 = vpack.c.b16 %v1837, %v1836
      %v1862 = vpack.c.b16 %v1839, %v1838
      %v1863 = vpack.c.b16 %v1841, %v1840
      %v1864 = vpack.c.b16 %v1843, %v1842
      %v1865 = vpack.c.b16 %v1845, %v1844
      %v1866 = vpack.c.b16 %v1847, %v1846
      %v1867 = vpack.c.b16 %v1849, %v1848
      %v1868 = vpack.c.b16 %v1851, %v1850
      %v1869 = vpack.c.b16 %v1853, %v1852
      %1886 = vst [vmem:[#allocation3 + $0x18] sm:$0xff] %v1854
      %1887 = vst [vmem:[#allocation3 + $0x60] sm:$0xff] %v1855
      %1888 = vst [vmem:[#allocation3 + $0xa8] sm:$0xff] %v1856
      %1889 = vst [vmem:[#allocation3 + $0xf0] sm:$0xff] %v1857
      %1890 = vst [vmem:[#allocation3 + $0x138] sm:$0xff] %v1858
      %1891 = vst [vmem:[#allocation3 + $0x180] sm:$0xff] %v1859
      %1892 = vst [vmem:[#allocation3 + $0x1c8] sm:$0xff] %v1860
      %1893 = vst [vmem:[#allocation3 + $0x210] sm:$0xff] %v1861
      %1894 = vst [vmem:[#allocation3 + $0x258] sm:$0xff] %v1862
      %1895 = vst [vmem:[#allocation3 + $0x2a0] sm:$0xff] %v1863
      %1896 = vst [vmem:[#allocation3 + $0x2e8] sm:$0xff] %v1864
      %1897 = vst [vmem:[#allocation3 + $0x330] sm:$0xff] %v1865
      %1898 = vst [vmem:[#allocation3 + $0x378] sm:$0xff] %v1866
      %1899 = vst [vmem:[#allocation3 + $0x3c0] sm:$0xff] %v1867
      %1900 = vst [vmem:[#allocation3 + $0x408] sm:$0xff] %v1868
      %1901 = vst [vmem:[#allocation3 + $0x450] sm:$0xff] %v1869
      %v1902 = vld [vmem:[%s689] sm:$0xf]
      %v1903 = vld [vmem:[%s689 + $0x4] sm:$0xf]
      %v1904 = vld [vmem:[%s689 + $0x8] sm:$0x1]
      %v1905 = vld [vmem:[%s689 + $0xc] sm:$0xf]
      %v1906 = vld [vmem:[%s689 + $0x10] sm:$0xf]
      %v1907 = vld [vmem:[%s689 + $0x14] sm:$0x1]
      %v1908 = vld [vmem:[%s689 + $0x18] sm:$0xf]
      %v1909 = vld [vmem:[%s689 + $0x1c] sm:$0xf]
      %v1910 = vld [vmem:[%s689 + $0x20] sm:$0x1]
      %v1911 = vld [vmem:[%s689 + $0x24] sm:$0xf]
      %v1912 = vld [vmem:[%s689 + $0x28] sm:$0xf]
      %v1913 = vld [vmem:[%s689 + $0x2c] sm:$0x1]
      %v1914 = vld [vmem:[%s689 + $0x30] sm:$0xf]
      %v1915 = vld [vmem:[%s689 + $0x34] sm:$0xf]
      %v1916 = vld [vmem:[%s689 + $0x38] sm:$0x1]
      %v1917 = vld [vmem:[%s689 + $0x3c] sm:$0xf]
      %v1918 = vld [vmem:[%s689 + $0x40] sm:$0xf]
      %v1919 = vld [vmem:[%s689 + $0x44] sm:$0x1]
      %v1920 = vld [vmem:[%s689 + $0x48] sm:$0xf]
      %v1921 = vld [vmem:[%s689 + $0x4c] sm:$0xf]
      %v1922 = vld [vmem:[%s689 + $0x50] sm:$0x1]
      %v1923 = vld [vmem:[%s689 + $0x54] sm:$0xf]
      %v1924 = vld [vmem:[%s689 + $0x58] sm:$0xf]
      %v1925 = vld [vmem:[%s689 + $0x5c] sm:$0x1]
      %v1926 = vld [vmem:[%s689 + $0x60] sm:$0xf]
      %v1927 = vld [vmem:[%s689 + $0x64] sm:$0xf]
      %v1928 = vld [vmem:[%s689 + $0x68] sm:$0x1]
      %v1929 = vld [vmem:[%s689 + $0x6c] sm:$0xf]
      %v1930 = vld [vmem:[%s689 + $0x70] sm:$0xf]
      %v1931 = vld [vmem:[%s689 + $0x74] sm:$0x1]
      %v1932 = vld [vmem:[%s689 + $0x78] sm:$0xf]
      %v1933 = vld [vmem:[%s689 + $0x7c] sm:$0xf]
      %v1934 = vld [vmem:[%s689 + $0x80] sm:$0x1]
      %v1935 = vld [vmem:[%s689 + $0x84] sm:$0xf]
      %v1936 = vld [vmem:[%s689 + $0x88] sm:$0xf]
      %v1937 = vld [vmem:[%s689 + $0x8c] sm:$0x1]
      %v1938 = vld [vmem:[%s689 + $0x90] sm:$0xf]
      %v1939 = vld [vmem:[%s689 + $0x94] sm:$0xf]
      %v1940 = vld [vmem:[%s689 + $0x98] sm:$0x1]
      %v1941 = vld [vmem:[%s689 + $0x9c] sm:$0xf]
      %v1942 = vld [vmem:[%s689 + $0xa0] sm:$0xf]
      %v1943 = vld [vmem:[%s689 + $0xa4] sm:$0x1]
      %v1944 = vld [vmem:[%s689 + $0xa8] sm:$0xf]
      %v1945 = vld [vmem:[%s689 + $0xac] sm:$0xf]
      %v1946 = vld [vmem:[%s689 + $0xb0] sm:$0x1]
      %v1947 = vld [vmem:[%s689 + $0xb4] sm:$0xf]
      %v1948 = vld [vmem:[%s689 + $0xb8] sm:$0xf]
      %v1949 = vld [vmem:[%s689 + $0xbc] sm:$0x1]
      %v1951 = vshrl.u32 %v1902, 16
      %v1953 = vrot.slane %v1951, 4
      %v1954 = vshll.u32 %v1902, 16
      %v1956 = vrot.slane %v1954, 5
      %v1957 = vor.u32 %v1953, %v1956
      %v1958 = vrot.slane %v1957, 4
      %v1960 = vshll.u32 %v1903, 16
      %v1962 = vrot.slane %v1960, 5
      %v1963 = vsel %vm1002, %v1958, %v1962
      %v1964 = vshrl.u32 %v1903, 16
      %v1966 = vrot.slane %v1964, 4
      %v1967 = vor.u32 %v1966, %v1962
      %v1968 = vrot.slane %v1967, 4
      %v1970 = vshll.u32 %v1904, 16
      %v1972 = vrot.slane %v1970, 5
      %v1973 = vsel %vm1002, %v1968, %v1972
      %v1975 = vshrl.u32 %v1905, 16
      %v1977 = vrot.slane %v1975, 4
      %v1978 = vshll.u32 %v1905, 16
      %v1980 = vrot.slane %v1978, 5
      %v1981 = vor.u32 %v1977, %v1980
      %v1982 = vrot.slane %v1981, 4
      %v1984 = vshll.u32 %v1906, 16
      %v1986 = vrot.slane %v1984, 5
      %v1987 = vsel %vm1002, %v1982, %v1986
      %v1988 = vshrl.u32 %v1906, 16
      %v1990 = vrot.slane %v1988, 4
      %v1991 = vor.u32 %v1990, %v1986
      %v1992 = vrot.slane %v1991, 4
      %v1994 = vshll.u32 %v1907, 16
      %v1996 = vrot.slane %v1994, 5
      %v1997 = vsel %vm1002, %v1992, %v1996
      %v1999 = vshrl.u32 %v1908, 16
      %v2001 = vrot.slane %v1999, 4
      %v2002 = vshll.u32 %v1908, 16
      %v2004 = vrot.slane %v2002, 5
      %v2005 = vor.u32 %v2001, %v2004
      %v2006 = vrot.slane %v2005, 4
      %v2008 = vshll.u32 %v1909, 16
      %v2010 = vrot.slane %v2008, 5
      %v2011 = vsel %vm1002, %v2006, %v2010
      %v2012 = vshrl.u32 %v1909, 16
      %v2014 = vrot.slane %v2012, 4
      %v2015 = vor.u32 %v2014, %v2010
      %v2016 = vrot.slane %v2015, 4
      %v2018 = vshll.u32 %v1910, 16
      %v2020 = vrot.slane %v2018, 5
      %v2021 = vsel %vm1002, %v2016, %v2020
      %v2023 = vshrl.u32 %v1911, 16
      %v2025 = vrot.slane %v2023, 4
      %v2026 = vshll.u32 %v1911, 16
      %v2028 = vrot.slane %v2026, 5
      %v2029 = vor.u32 %v2025, %v2028
      %v2030 = vrot.slane %v2029, 4
      %v2032 = vshll.u32 %v1912, 16
      %v2034 = vrot.slane %v2032, 5
      %v2035 = vsel %vm1002, %v2030, %v2034
      %v2036 = vshrl.u32 %v1912, 16
      %v2038 = vrot.slane %v2036, 4
      %v2039 = vor.u32 %v2038, %v2034
      %v2040 = vrot.slane %v2039, 4
      %v2042 = vshll.u32 %v1913, 16
      %v2044 = vrot.slane %v2042, 5
      %v2045 = vsel %vm1002, %v2040, %v2044
      %v2047 = vshrl.u32 %v1914, 16
      %v2049 = vrot.slane %v2047, 4
      %v2050 = vshll.u32 %v1914, 16
      %v2052 = vrot.slane %v2050, 5
      %v2053 = vor.u32 %v2049, %v2052
      %v2054 = vrot.slane %v2053, 4
      %v2056 = vshll.u32 %v1915, 16
      %v2058 = vrot.slane %v2056, 5
      %v2059 = vsel %vm1002, %v2054, %v2058
      %v2060 = vshrl.u32 %v1915, 16
      %v2062 = vrot.slane %v2060, 4
      %v2063 = vor.u32 %v2062, %v2058
      %v2064 = vrot.slane %v2063, 4
      %v2066 = vshll.u32 %v1916, 16
      %v2068 = vrot.slane %v2066, 5
      %v2069 = vsel %vm1002, %v2064, %v2068
      %v2071 = vshrl.u32 %v1917, 16
      %v2073 = vrot.slane %v2071, 4
      %v2074 = vshll.u32 %v1917, 16
      %v2076 = vrot.slane %v2074, 5
      %v2077 = vor.u32 %v2073, %v2076
      %v2078 = vrot.slane %v2077, 4
      %v2080 = vshll.u32 %v1918, 16
      %v2082 = vrot.slane %v2080, 5
      %v2083 = vsel %vm1002, %v2078, %v2082
      %v2084 = vshrl.u32 %v1918, 16
      %v2086 = vrot.slane %v2084, 4
      %v2087 = vor.u32 %v2086, %v2082
      %v2088 = vrot.slane %v2087, 4
      %v2090 = vshll.u32 %v1919, 16
      %v2092 = vrot.slane %v2090, 5
      %v2093 = vsel %vm1002, %v2088, %v2092
      %v2095 = vshrl.u32 %v1920, 16
      %v2097 = vrot.slane %v2095, 4
      %v2098 = vshll.u32 %v1920, 16
      %v2100 = vrot.slane %v2098, 5
      %v2101 = vor.u32 %v2097, %v2100
      %v2102 = vrot.slane %v2101, 4
      %v2104 = vshll.u32 %v1921, 16
      %v2106 = vrot.slane %v2104, 5
      %v2107 = vsel %vm1002, %v2102, %v2106
      %v2108 = vshrl.u32 %v1921, 16
      %v2110 = vrot.slane %v2108, 4
      %v2111 = vor.u32 %v2110, %v2106
      %v2112 = vrot.slane %v2111, 4
      %v2114 = vshll.u32 %v1922, 16
      %v2116 = vrot.slane %v2114, 5
      %v2117 = vsel %vm1002, %v2112, %v2116
      %v2119 = vshrl.u32 %v1923, 16
      %v2121 = vrot.slane %v2119, 4
      %v2122 = vshll.u32 %v1923, 16
      %v2124 = vrot.slane %v2122, 5
      %v2125 = vor.u32 %v2121, %v2124
      %v2126 = vrot.slane %v2125, 4
      %v2128 = vshll.u32 %v1924, 16
      %v2130 = vrot.slane %v2128, 5
      %v2131 = vsel %vm1002, %v2126, %v2130
      %v2132 = vshrl.u32 %v1924, 16
      %v2134 = vrot.slane %v2132, 4
      %v2135 = vor.u32 %v2134, %v2130
      %v2136 = vrot.slane %v2135, 4
      %v2138 = vshll.u32 %v1925, 16
      %v2140 = vrot.slane %v2138, 5
      %v2141 = vsel %vm1002, %v2136, %v2140
      %v2143 = vshrl.u32 %v1926, 16
      %v2145 = vrot.slane %v2143, 4
      %v2146 = vshll.u32 %v1926, 16
      %v2148 = vrot.slane %v2146, 5
      %v2149 = vor.u32 %v2145, %v2148
      %v2150 = vrot.slane %v2149, 4
      %v2152 = vshll.u32 %v1927, 16
      %v2154 = vrot.slane %v2152, 5
      %v2155 = vsel %vm1002, %v2150, %v2154
      %v2156 = vshrl.u32 %v1927, 16
      %v2158 = vrot.slane %v2156, 4
      %v2159 = vor.u32 %v2158, %v2154
      %v2160 = vrot.slane %v2159, 4
      %v2162 = vshll.u32 %v1928, 16
      %v2164 = vrot.slane %v2162, 5
      %v2165 = vsel %vm1002, %v2160, %v2164
      %v2167 = vshrl.u32 %v1929, 16
      %v2169 = vrot.slane %v2167, 4
      %v2170 = vshll.u32 %v1929, 16
      %v2172 = vrot.slane %v2170, 5
      %v2173 = vor.u32 %v2169, %v2172
      %v2174 = vrot.slane %v2173, 4
      %v2176 = vshll.u32 %v1930, 16
      %v2178 = vrot.slane %v2176, 5
      %v2179 = vsel %vm1002, %v2174, %v2178
      %v2180 = vshrl.u32 %v1930, 16
      %v2182 = vrot.slane %v2180, 4
      %v2183 = vor.u32 %v2182, %v2178
      %v2184 = vrot.slane %v2183, 4
      %v2186 = vshll.u32 %v1931, 16
      %v2188 = vrot.slane %v2186, 5
      %v2189 = vsel %vm1002, %v2184, %v2188
      %v2191 = vshrl.u32 %v1932, 16
      %v2193 = vrot.slane %v2191, 4
      %v2194 = vshll.u32 %v1932, 16
      %v2196 = vrot.slane %v2194, 5
      %v2197 = vor.u32 %v2193, %v2196
      %v2198 = vrot.slane %v2197, 4
      %v2200 = vshll.u32 %v1933, 16
      %v2202 = vrot.slane %v2200, 5
      %v2203 = vsel %vm1002, %v2198, %v2202
      %v2204 = vshrl.u32 %v1933, 16
      %v2206 = vrot.slane %v2204, 4
      %v2207 = vor.u32 %v2206, %v2202
      %v2208 = vrot.slane %v2207, 4
      %v2210 = vshll.u32 %v1934, 16
      %v2212 = vrot.slane %v2210, 5
      %v2213 = vsel %vm1002, %v2208, %v2212
      %v2215 = vshrl.u32 %v1935, 16
      %v2217 = vrot.slane %v2215, 4
      %v2218 = vshll.u32 %v1935, 16
      %v2220 = vrot.slane %v2218, 5
      %v2221 = vor.u32 %v2217, %v2220
      %v2222 = vrot.slane %v2221, 4
      %v2224 = vshll.u32 %v1936, 16
      %v2226 = vrot.slane %v2224, 5
      %v2227 = vsel %vm1002, %v2222, %v2226
      %v2228 = vshrl.u32 %v1936, 16
      %v2230 = vrot.slane %v2228, 4
      %v2231 = vor.u32 %v2230, %v2226
      %v2232 = vrot.slane %v2231, 4
      %v2234 = vshll.u32 %v1937, 16
      %v2236 = vrot.slane %v2234, 5
      %v2237 = vsel %vm1002, %v2232, %v2236
      %v2239 = vshrl.u32 %v1938, 16
      %v2241 = vrot.slane %v2239, 4
      %v2242 = vshll.u32 %v1938, 16
      %v2244 = vrot.slane %v2242, 5
      %v2245 = vor.u32 %v2241, %v2244
      %v2246 = vrot.slane %v2245, 4
      %v2248 = vshll.u32 %v1939, 16
      %v2250 = vrot.slane %v2248, 5
      %v2251 = vsel %vm1002, %v2246, %v2250
      %v2252 = vshrl.u32 %v1939, 16
      %v2254 = vrot.slane %v2252, 4
      %v2255 = vor.u32 %v2254, %v2250
      %v2256 = vrot.slane %v2255, 4
      %v2258 = vshll.u32 %v1940, 16
      %v2260 = vrot.slane %v2258, 5
      %v2261 = vsel %vm1002, %v2256, %v2260
      %v2263 = vshrl.u32 %v1941, 16
      %v2265 = vrot.slane %v2263, 4
      %v2266 = vshll.u32 %v1941, 16
      %v2268 = vrot.slane %v2266, 5
      %v2269 = vor.u32 %v2265, %v2268
      %v2270 = vrot.slane %v2269, 4
      %v2272 = vshll.u32 %v1942, 16
      %v2274 = vrot.slane %v2272, 5
      %v2275 = vsel %vm1002, %v2270, %v2274
      %v2276 = vshrl.u32 %v1942, 16
      %v2278 = vrot.slane %v2276, 4
      %v2279 = vor.u32 %v2278, %v2274
      %v2280 = vrot.slane %v2279, 4
      %v2282 = vshll.u32 %v1943, 16
      %v2284 = vrot.slane %v2282, 5
      %v2285 = vsel %vm1002, %v2280, %v2284
      %v2287 = vshrl.u32 %v1944, 16
      %v2289 = vrot.slane %v2287, 4
      %v2290 = vshll.u32 %v1944, 16
      %v2292 = vrot.slane %v2290, 5
      %v2293 = vor.u32 %v2289, %v2292
      %v2294 = vrot.slane %v2293, 4
      %v2296 = vshll.u32 %v1945, 16
      %v2298 = vrot.slane %v2296, 5
      %v2299 = vsel %vm1002, %v2294, %v2298
      %v2300 = vshrl.u32 %v1945, 16
      %v2302 = vrot.slane %v2300, 4
      %v2303 = vor.u32 %v2302, %v2298
      %v2304 = vrot.slane %v2303, 4
      %v2306 = vshll.u32 %v1946, 16
      %v2308 = vrot.slane %v2306, 5
      %v2309 = vsel %vm1002, %v2304, %v2308
      %v2311 = vshrl.u32 %v1947, 16
      %v2313 = vrot.slane %v2311, 4
      %v2314 = vshll.u32 %v1947, 16
      %v2316 = vrot.slane %v2314, 5
      %v2317 = vor.u32 %v2313, %v2316
      %v2318 = vrot.slane %v2317, 4
      %v2320 = vshll.u32 %v1948, 16
      %v2322 = vrot.slane %v2320, 5
      %v2323 = vsel %vm1002, %v2318, %v2322
      %v2324 = vshrl.u32 %v1948, 16
      %v2326 = vrot.slane %v2324, 4
      %v2327 = vor.u32 %v2326, %v2322
      %v2328 = vrot.slane %v2327, 4
      %v2330 = vshll.u32 %v1949, 16
      %v2332 = vrot.slane %v2330, 5
      %v2333 = vsel %vm1002, %v2328, %v2332
      %v2334 = vunpack.c.l.b16 %v1963
      %v2335 = vunpack.c.l.b16 %v1973
      %v2336 = vunpack.c.l.b16 %v1987
      %v2337 = vunpack.c.l.b16 %v1997
      %v2338 = vunpack.c.l.b16 %v2011
      %v2339 = vunpack.c.l.b16 %v2021
      %v2340 = vunpack.c.l.b16 %v2035
      %v2341 = vunpack.c.l.b16 %v2045
      %v2342 = vunpack.c.l.b16 %v2059
      %v2343 = vunpack.c.l.b16 %v2069
      %v2344 = vunpack.c.l.b16 %v2083
      %v2345 = vunpack.c.l.b16 %v2093
      %v2346 = vunpack.c.l.b16 %v2107
      %v2347 = vunpack.c.l.b16 %v2117
      %v2348 = vunpack.c.l.b16 %v2131
      %v2349 = vunpack.c.l.b16 %v2141
      %v2350 = vunpack.c.l.b16 %v2155
      %v2351 = vunpack.c.l.b16 %v2165
      %v2352 = vunpack.c.l.b16 %v2179
      %v2353 = vunpack.c.l.b16 %v2189
      %v2354 = vunpack.c.l.b16 %v2203
      %v2355 = vunpack.c.l.b16 %v2213
      %v2356 = vunpack.c.l.b16 %v2227
      %v2357 = vunpack.c.l.b16 %v2237
      %v2358 = vunpack.c.l.b16 %v2251
      %v2359 = vunpack.c.l.b16 %v2261
      %v2360 = vunpack.c.l.b16 %v2275
      %v2361 = vunpack.c.l.b16 %v2285
      %v2362 = vunpack.c.l.b16 %v2299
      %v2363 = vunpack.c.l.b16 %v2309
      %v2364 = vunpack.c.l.b16 %v2323
      %v2365 = vunpack.c.l.b16 %v2333
      %v2366 = vpack.c.b16 %v2335, %v2334
      %v2367 = vpack.c.b16 %v2337, %v2336
      %v2368 = vpack.c.b16 %v2339, %v2338
      %v2369 = vpack.c.b16 %v2341, %v2340
      %v2370 = vpack.c.b16 %v2343, %v2342
      %v2371 = vpack.c.b16 %v2345, %v2344
      %v2372 = vpack.c.b16 %v2347, %v2346
      %v2373 = vpack.c.b16 %v2349, %v2348
      %v2374 = vpack.c.b16 %v2351, %v2350
      %v2375 = vpack.c.b16 %v2353, %v2352
      %v2376 = vpack.c.b16 %v2355, %v2354
      %v2377 = vpack.c.b16 %v2357, %v2356
      %v2378 = vpack.c.b16 %v2359, %v2358
      %v2379 = vpack.c.b16 %v2361, %v2360
      %v2380 = vpack.c.b16 %v2363, %v2362
      %v2381 = vpack.c.b16 %v2365, %v2364
      %2398 = vst [vmem:[#allocation3 + $0x20] sm:$0xff] %v2366
      %2399 = vst [vmem:[#allocation3 + $0x68] sm:$0xff] %v2367
      %2400 = vst [vmem:[#allocation3 + $0xb0] sm:$0xff] %v2368
      %2401 = vst [vmem:[#allocation3 + $0xf8] sm:$0xff] %v2369
      %2402 = vst [vmem:[#allocation3 + $0x140] sm:$0xff] %v2370
      %2403 = vst [vmem:[#allocation3 + $0x188] sm:$0xff] %v2371
      %2404 = vst [vmem:[#allocation3 + $0x1d0] sm:$0xff] %v2372
      %2405 = vst [vmem:[#allocation3 + $0x218] sm:$0xff] %v2373
      %2406 = vst [vmem:[#allocation3 + $0x260] sm:$0xff] %v2374
      %2407 = vst [vmem:[#allocation3 + $0x2a8] sm:$0xff] %v2375
      %2408 = vst [vmem:[#allocation3 + $0x2f0] sm:$0xff] %v2376
      %2409 = vst [vmem:[#allocation3 + $0x338] sm:$0xff] %v2377
      %2410 = vst [vmem:[#allocation3 + $0x380] sm:$0xff] %v2378
      %2411 = vst [vmem:[#allocation3 + $0x3c8] sm:$0xff] %v2379
      %2412 = vst [vmem:[#allocation3 + $0x410] sm:$0xff] %v2380
      %2413 = vst [vmem:[#allocation3 + $0x458] sm:$0xff] %v2381
      %v2414 = vld [vmem:[%s689] sm:$0xe]
      %v2415 = vld [vmem:[%s689 + $0x4] sm:$0xf]
      %v2416 = vld [vmem:[%s689 + $0x8] sm:$0x1]
      %v2417 = vld [vmem:[%s689 + $0xc] sm:$0xe]
      %v2418 = vld [vmem:[%s689 + $0x10] sm:$0xf]
      %v2419 = vld [vmem:[%s689 + $0x14] sm:$0x1]
      %v2420 = vld [vmem:[%s689 + $0x18] sm:$0xe]
      %v2421 = vld [vmem:[%s689 + $0x1c] sm:$0xf]
      %v2422 = vld [vmem:[%s689 + $0x20] sm:$0x1]
      %v2423 = vld [vmem:[%s689 + $0x24] sm:$0xe]
      %v2424 = vld [vmem:[%s689 + $0x28] sm:$0xf]
      %v2425 = vld [vmem:[%s689 + $0x2c] sm:$0x1]
      %v2426 = vld [vmem:[%s689 + $0x30] sm:$0xe]
      %v2427 = vld [vmem:[%s689 + $0x34] sm:$0xf]
      %v2428 = vld [vmem:[%s689 + $0x38] sm:$0x1]
      %v2429 = vld [vmem:[%s689 + $0x3c] sm:$0xe]
      %v2430 = vld [vmem:[%s689 + $0x40] sm:$0xf]
      %v2431 = vld [vmem:[%s689 + $0x44] sm:$0x1]
      %v2432 = vld [vmem:[%s689 + $0x48] sm:$0xe]
      %v2433 = vld [vmem:[%s689 + $0x4c] sm:$0xf]
      %v2434 = vld [vmem:[%s689 + $0x50] sm:$0x1]
      %v2435 = vld [vmem:[%s689 + $0x54] sm:$0xe]
      %v2436 = vld [vmem:[%s689 + $0x58] sm:$0xf]
      %v2437 = vld [vmem:[%s689 + $0x5c] sm:$0x1]
      %v2438 = vld [vmem:[%s689 + $0x60] sm:$0xe]
      %v2439 = vld [vmem:[%s689 + $0x64] sm:$0xf]
      %v2440 = vld [vmem:[%s689 + $0x68] sm:$0x1]
      %v2441 = vld [vmem:[%s689 + $0x6c] sm:$0xe]
      %v2442 = vld [vmem:[%s689 + $0x70] sm:$0xf]
      %v2443 = vld [vmem:[%s689 + $0x74] sm:$0x1]
      %v2444 = vld [vmem:[%s689 + $0x78] sm:$0xe]
      %v2445 = vld [vmem:[%s689 + $0x7c] sm:$0xf]
      %v2446 = vld [vmem:[%s689 + $0x80] sm:$0x1]
      %v2447 = vld [vmem:[%s689 + $0x84] sm:$0xe]
      %v2448 = vld [vmem:[%s689 + $0x88] sm:$0xf]
      %v2449 = vld [vmem:[%s689 + $0x8c] sm:$0x1]
      %v2450 = vld [vmem:[%s689 + $0x90] sm:$0xe]
      %v2451 = vld [vmem:[%s689 + $0x94] sm:$0xf]
      %v2452 = vld [vmem:[%s689 + $0x98] sm:$0x1]
      %v2453 = vld [vmem:[%s689 + $0x9c] sm:$0xe]
      %v2454 = vld [vmem:[%s689 + $0xa0] sm:$0xf]
      %v2455 = vld [vmem:[%s689 + $0xa4] sm:$0x1]
      %v2456 = vld [vmem:[%s689 + $0xa8] sm:$0xe]
      %v2457 = vld [vmem:[%s689 + $0xac] sm:$0xf]
      %v2458 = vld [vmem:[%s689 + $0xb0] sm:$0x1]
      %v2459 = vld [vmem:[%s689 + $0xb4] sm:$0xe]
      %v2460 = vld [vmem:[%s689 + $0xb8] sm:$0xf]
      %v2461 = vld [vmem:[%s689 + $0xbc] sm:$0x1]
      %v2510 = vrot.slane %v2414, 5
      %v2511 = vrot.slane %v2510, 4
      %v2512 = vrot.slane %v2415, 5
      %v2513 = vsel %vm1565, %v2511, %v2512
      %v2514 = vrot.slane %v2512, 4
      %v2515 = vrot.slane %v2416, 5
      %v2516 = vsel %vm1565, %v2514, %v2515
      %v2517 = vrot.slane %v2417, 5
      %v2518 = vrot.slane %v2517, 4
      %v2519 = vrot.slane %v2418, 5
      %v2520 = vsel %vm1565, %v2518, %v2519
      %v2521 = vrot.slane %v2519, 4
      %v2522 = vrot.slane %v2419, 5
      %v2523 = vsel %vm1565, %v2521, %v2522
      %v2524 = vrot.slane %v2420, 5
      %v2525 = vrot.slane %v2524, 4
      %v2526 = vrot.slane %v2421, 5
      %v2527 = vsel %vm1565, %v2525, %v2526
      %v2528 = vrot.slane %v2526, 4
      %v2529 = vrot.slane %v2422, 5
      %v2530 = vsel %vm1565, %v2528, %v2529
      %v2531 = vrot.slane %v2423, 5
      %v2532 = vrot.slane %v2531, 4
      %v2533 = vrot.slane %v2424, 5
      %v2534 = vsel %vm1565, %v2532, %v2533
      %v2535 = vrot.slane %v2533, 4
      %v2536 = vrot.slane %v2425, 5
      %v2537 = vsel %vm1565, %v2535, %v2536
      %v2538 = vrot.slane %v2426, 5
      %v2539 = vrot.slane %v2538, 4
      %v2540 = vrot.slane %v2427, 5
      %v2541 = vsel %vm1565, %v2539, %v2540
      %v2542 = vrot.slane %v2540, 4
      %v2543 = vrot.slane %v2428, 5
      %v2544 = vsel %vm1565, %v2542, %v2543
      %v2545 = vrot.slane %v2429, 5
      %v2546 = vrot.slane %v2545, 4
      %v2547 = vrot.slane %v2430, 5
      %v2548 = vsel %vm1565, %v2546, %v2547
      %v2549 = vrot.slane %v2547, 4
      %v2550 = vrot.slane %v2431, 5
      %v2551 = vsel %vm1565, %v2549, %v2550
      %v2552 = vrot.slane %v2432, 5
      %v2553 = vrot.slane %v2552, 4
      %v2554 = vrot.slane %v2433, 5
      %v2555 = vsel %vm1565, %v2553, %v2554
      %v2556 = vrot.slane %v2554, 4
      %v2557 = vrot.slane %v2434, 5
      %v2558 = vsel %vm1565, %v2556, %v2557
      %v2559 = vrot.slane %v2435, 5
      %v2560 = vrot.slane %v2559, 4
      %v2561 = vrot.slane %v2436, 5
      %v2562 = vsel %vm1565, %v2560, %v2561
      %v2563 = vrot.slane %v2561, 4
      %v2564 = vrot.slane %v2437, 5
      %v2565 = vsel %vm1565, %v2563, %v2564
      %v2566 = vrot.slane %v2438, 5
      %v2567 = vrot.slane %v2566, 4
      %v2568 = vrot.slane %v2439, 5
      %v2569 = vsel %vm1565, %v2567, %v2568
      %v2570 = vrot.slane %v2568, 4
      %v2571 = vrot.slane %v2440, 5
      %v2572 = vsel %vm1565, %v2570, %v2571
      %v2573 = vrot.slane %v2441, 5
      %v2574 = vrot.slane %v2573, 4
      %v2575 = vrot.slane %v2442, 5
      %v2576 = vsel %vm1565, %v2574, %v2575
      %v2577 = vrot.slane %v2575, 4
      %v2578 = vrot.slane %v2443, 5
      %v2579 = vsel %vm1565, %v2577, %v2578
      %v2580 = vrot.slane %v2444, 5
      %v2581 = vrot.slane %v2580, 4
      %v2582 = vrot.slane %v2445, 5
      %v2583 = vsel %vm1565, %v2581, %v2582
      %v2584 = vrot.slane %v2582, 4
      %v2585 = vrot.slane %v2446, 5
      %v2586 = vsel %vm1565, %v2584, %v2585
      %v2587 = vrot.slane %v2447, 5
      %v2588 = vrot.slane %v2587, 4
      %v2589 = vrot.slane %v2448, 5
      %v2590 = vsel %vm1565, %v2588, %v2589
      %v2591 = vrot.slane %v2589, 4
      %v2592 = vrot.slane %v2449, 5
      %v2593 = vsel %vm1565, %v2591, %v2592
      %v2594 = vrot.slane %v2450, 5
      %v2595 = vrot.slane %v2594, 4
      %v2596 = vrot.slane %v2451, 5
      %v2597 = vsel %vm1565, %v2595, %v2596
      %v2598 = vrot.slane %v2596, 4
      %v2599 = vrot.slane %v2452, 5
      %v2600 = vsel %vm1565, %v2598, %v2599
      %v2601 = vrot.slane %v2453, 5
      %v2602 = vrot.slane %v2601, 4
      %v2603 = vrot.slane %v2454, 5
      %v2604 = vsel %vm1565, %v2602, %v2603
      %v2605 = vrot.slane %v2603, 4
      %v2606 = vrot.slane %v2455, 5
      %v2607 = vsel %vm1565, %v2605, %v2606
      %v2608 = vrot.slane %v2456, 5
      %v2609 = vrot.slane %v2608, 4
      %v2610 = vrot.slane %v2457, 5
      %v2611 = vsel %vm1565, %v2609, %v2610
      %v2612 = vrot.slane %v2610, 4
      %v2613 = vrot.slane %v2458, 5
      %v2614 = vsel %vm1565, %v2612, %v2613
      %v2615 = vrot.slane %v2459, 5
      %v2616 = vrot.slane %v2615, 4
      %v2617 = vrot.slane %v2460, 5
      %v2618 = vsel %vm1565, %v2616, %v2617
      %v2619 = vrot.slane %v2617, 4
      %v2620 = vrot.slane %v2461, 5
      %v2621 = vsel %vm1565, %v2619, %v2620
      %v2622 = vunpack.c.l.b16 %v2513
      %v2623 = vunpack.c.l.b16 %v2516
      %v2624 = vunpack.c.l.b16 %v2520
      %v2625 = vunpack.c.l.b16 %v2523
      %v2626 = vunpack.c.l.b16 %v2527
      %v2627 = vunpack.c.l.b16 %v2530
      %v2628 = vunpack.c.l.b16 %v2534
      %v2629 = vunpack.c.l.b16 %v2537
      %v2630 = vunpack.c.l.b16 %v2541
      %v2631 = vunpack.c.l.b16 %v2544
      %v2632 = vunpack.c.l.b16 %v2548
      %v2633 = vunpack.c.l.b16 %v2551
      %v2634 = vunpack.c.l.b16 %v2555
      %v2635 = vunpack.c.l.b16 %v2558
      %v2636 = vunpack.c.l.b16 %v2562
      %v2637 = vunpack.c.l.b16 %v2565
      %v2638 = vunpack.c.l.b16 %v2569
      %v2639 = vunpack.c.l.b16 %v2572
      %v2640 = vunpack.c.l.b16 %v2576
      %v2641 = vunpack.c.l.b16 %v2579
      %v2642 = vunpack.c.l.b16 %v2583
      %v2643 = vunpack.c.l.b16 %v2586
      %v2644 = vunpack.c.l.b16 %v2590
      %v2645 = vunpack.c.l.b16 %v2593
      %v2646 = vunpack.c.l.b16 %v2597
      %v2647 = vunpack.c.l.b16 %v2600
      %v2648 = vunpack.c.l.b16 %v2604
      %v2649 = vunpack.c.l.b16 %v2607
      %v2650 = vunpack.c.l.b16 %v2611
      %v2651 = vunpack.c.l.b16 %v2614
      %v2652 = vunpack.c.l.b16 %v2618
      %v2653 = vunpack.c.l.b16 %v2621
      %v2654 = vpack.c.b16 %v2623, %v2622
      %v2655 = vpack.c.b16 %v2625, %v2624
      %v2656 = vpack.c.b16 %v2627, %v2626
      %v2657 = vpack.c.b16 %v2629, %v2628
      %v2658 = vpack.c.b16 %v2631, %v2630
      %v2659 = vpack.c.b16 %v2633, %v2632
      %v2660 = vpack.c.b16 %v2635, %v2634
      %v2661 = vpack.c.b16 %v2637, %v2636
      %v2662 = vpack.c.b16 %v2639, %v2638
      %v2663 = vpack.c.b16 %v2641, %v2640
      %v2664 = vpack.c.b16 %v2643, %v2642
      %v2665 = vpack.c.b16 %v2645, %v2644
      %v2666 = vpack.c.b16 %v2647, %v2646
      %v2667 = vpack.c.b16 %v2649, %v2648
      %v2668 = vpack.c.b16 %v2651, %v2650
      %v2669 = vpack.c.b16 %v2653, %v2652
      %2686 = vst [vmem:[#allocation3 + $0x28] sm:$0xff] %v2654
      %2687 = vst [vmem:[#allocation3 + $0x70] sm:$0xff] %v2655
      %2688 = vst [vmem:[#allocation3 + $0xb8] sm:$0xff] %v2656
      %2689 = vst [vmem:[#allocation3 + $0x100] sm:$0xff] %v2657
      %2690 = vst [vmem:[#allocation3 + $0x148] sm:$0xff] %v2658
      %2691 = vst [vmem:[#allocation3 + $0x190] sm:$0xff] %v2659
      %2692 = vst [vmem:[#allocation3 + $0x1d8] sm:$0xff] %v2660
      %2693 = vst [vmem:[#allocation3 + $0x220] sm:$0xff] %v2661
      %2694 = vst [vmem:[#allocation3 + $0x268] sm:$0xff] %v2662
      %2695 = vst [vmem:[#allocation3 + $0x2b0] sm:$0xff] %v2663
      %2696 = vst [vmem:[#allocation3 + $0x2f8] sm:$0xff] %v2664
      %2697 = vst [vmem:[#allocation3 + $0x340] sm:$0xff] %v2665
      %2698 = vst [vmem:[#allocation3 + $0x388] sm:$0xff] %v2666
      %2699 = vst [vmem:[#allocation3 + $0x3d0] sm:$0xff] %v2667
      %2700 = vst [vmem:[#allocation3 + $0x418] sm:$0xff] %v2668
      %2701 = vst [vmem:[#allocation3 + $0x460] sm:$0xff] %v2669
      %s2702 = scalar_lea.vmem [#allocation2], 24
      %v2703 = vld [vmem:[%s2702] sm:$0xf]
      %v2704 = vld [vmem:[%s2702 + $0x4] sm:$0xf]
      %v2705 = vld [vmem:[%s2702 + $0xc] sm:$0xf]
      %v2706 = vld [vmem:[%s2702 + $0x10] sm:$0xf]
      %v2707 = vld [vmem:[%s2702 + $0x18] sm:$0xf]
      %v2708 = vld [vmem:[%s2702 + $0x1c] sm:$0xf]
      %v2709 = vld [vmem:[%s2702 + $0x24] sm:$0xf]
      %v2710 = vld [vmem:[%s2702 + $0x28] sm:$0xf]
      %v2711 = vld [vmem:[%s2702 + $0x30] sm:$0xf]
      %v2712 = vld [vmem:[%s2702 + $0x34] sm:$0xf]
      %v2713 = vld [vmem:[%s2702 + $0x3c] sm:$0xf]
      %v2714 = vld [vmem:[%s2702 + $0x40] sm:$0xf]
      %v2715 = vld [vmem:[%s2702 + $0x48] sm:$0xf]
      %v2716 = vld [vmem:[%s2702 + $0x4c] sm:$0xf]
      %v2717 = vld [vmem:[%s2702 + $0x54] sm:$0xf]
      %v2718 = vld [vmem:[%s2702 + $0x58] sm:$0xf]
      %v2719 = vld [vmem:[%s2702 + $0x60] sm:$0xf]
      %v2720 = vld [vmem:[%s2702 + $0x64] sm:$0xf]
      %v2721 = vld [vmem:[%s2702 + $0x6c] sm:$0xf]
      %v2722 = vld [vmem:[%s2702 + $0x70] sm:$0xf]
      %v2723 = vld [vmem:[%s2702 + $0x78] sm:$0xf]
      %v2724 = vld [vmem:[%s2702 + $0x7c] sm:$0xf]
      %v2725 = vld [vmem:[%s2702 + $0x84] sm:$0xf]
      %v2726 = vld [vmem:[%s2702 + $0x88] sm:$0xf]
      %v2727 = vld [vmem:[%s2702 + $0x90] sm:$0xf]
      %v2728 = vld [vmem:[%s2702 + $0x94] sm:$0xf]
      %v2729 = vld [vmem:[%s2702 + $0x9c] sm:$0xf]
      %v2730 = vld [vmem:[%s2702 + $0xa0] sm:$0xf]
      %v2731 = vld [vmem:[%s2702 + $0xa8] sm:$0xf]
      %v2732 = vld [vmem:[%s2702 + $0xac] sm:$0xf]
      %v2733 = vld [vmem:[%s2702 + $0xb4] sm:$0xf]
      %v2734 = vld [vmem:[%s2702 + $0xb8] sm:$0xf]
      %v2767 = vunpack.c.l.b16 %v2703
      %v2768 = vunpack.c.l.b16 %v2704
      %v2769 = vunpack.c.l.b16 %v2705
      %v2770 = vunpack.c.l.b16 %v2706
      %v2771 = vunpack.c.l.b16 %v2707
      %v2772 = vunpack.c.l.b16 %v2708
      %v2773 = vunpack.c.l.b16 %v2709
      %v2774 = vunpack.c.l.b16 %v2710
      %v2775 = vunpack.c.l.b16 %v2711
      %v2776 = vunpack.c.l.b16 %v2712
      %v2777 = vunpack.c.l.b16 %v2713
      %v2778 = vunpack.c.l.b16 %v2714
      %v2779 = vunpack.c.l.b16 %v2715
      %v2780 = vunpack.c.l.b16 %v2716
      %v2781 = vunpack.c.l.b16 %v2717
      %v2782 = vunpack.c.l.b16 %v2718
      %v2783 = vunpack.c.l.b16 %v2719
      %v2784 = vunpack.c.l.b16 %v2720
      %v2785 = vunpack.c.l.b16 %v2721
      %v2786 = vunpack.c.l.b16 %v2722
      %v2787 = vunpack.c.l.b16 %v2723
      %v2788 = vunpack.c.l.b16 %v2724
      %v2789 = vunpack.c.l.b16 %v2725
      %v2790 = vunpack.c.l.b16 %v2726
      %v2791 = vunpack.c.l.b16 %v2727
      %v2792 = vunpack.c.l.b16 %v2728
      %v2793 = vunpack.c.l.b16 %v2729
      %v2794 = vunpack.c.l.b16 %v2730
      %v2795 = vunpack.c.l.b16 %v2731
      %v2796 = vunpack.c.l.b16 %v2732
      %v2797 = vunpack.c.l.b16 %v2733
      %v2798 = vunpack.c.l.b16 %v2734
      %v2799 = vpack.c.b16 %v2768, %v2767
      %v2800 = vpack.c.b16 %v2770, %v2769
      %v2801 = vpack.c.b16 %v2772, %v2771
      %v2802 = vpack.c.b16 %v2774, %v2773
      %v2803 = vpack.c.b16 %v2776, %v2775
      %v2804 = vpack.c.b16 %v2778, %v2777
      %v2805 = vpack.c.b16 %v2780, %v2779
      %v2806 = vpack.c.b16 %v2782, %v2781
      %v2807 = vpack.c.b16 %v2784, %v2783
      %v2808 = vpack.c.b16 %v2786, %v2785
      %v2809 = vpack.c.b16 %v2788, %v2787
      %v2810 = vpack.c.b16 %v2790, %v2789
      %v2811 = vpack.c.b16 %v2792, %v2791
      %v2812 = vpack.c.b16 %v2794, %v2793
      %v2813 = vpack.c.b16 %v2796, %v2795
      %v2814 = vpack.c.b16 %v2798, %v2797
      %2831 = vst [vmem:[#allocation3 + $0x30] sm:$0xff] %v2799
      %2832 = vst [vmem:[#allocation3 + $0x78] sm:$0xff] %v2800
      %2833 = vst [vmem:[#allocation3 + $0xc0] sm:$0xff] %v2801
      %2834 = vst [vmem:[#allocation3 + $0x108] sm:$0xff] %v2802
      %2835 = vst [vmem:[#allocation3 + $0x150] sm:$0xff] %v2803
      %2836 = vst [vmem:[#allocation3 + $0x198] sm:$0xff] %v2804
      %2837 = vst [vmem:[#allocation3 + $0x1e0] sm:$0xff] %v2805
      %2838 = vst [vmem:[#allocation3 + $0x228] sm:$0xff] %v2806
      %2839 = vst [vmem:[#allocation3 + $0x270] sm:$0xff] %v2807
      %2840 = vst [vmem:[#allocation3 + $0x2b8] sm:$0xff] %v2808
      %2841 = vst [vmem:[#allocation3 + $0x300] sm:$0xff] %v2809
      %2842 = vst [vmem:[#allocation3 + $0x348] sm:$0xff] %v2810
      %2843 = vst [vmem:[#allocation3 + $0x390] sm:$0xff] %v2811
      %2844 = vst [vmem:[#allocation3 + $0x3d8] sm:$0xff] %v2812
      %2845 = vst [vmem:[#allocation3 + $0x420] sm:$0xff] %v2813
      %2846 = vst [vmem:[#allocation3 + $0x468] sm:$0xff] %v2814
      %v2847 = vld [vmem:[%s2702] sm:$0xf]
      %v2848 = vld [vmem:[%s2702 + $0x4] sm:$0xf]
      %v2849 = vld [vmem:[%s2702 + $0x8] sm:$0x1]
      %v2850 = vld [vmem:[%s2702 + $0xc] sm:$0xf]
      %v2851 = vld [vmem:[%s2702 + $0x10] sm:$0xf]
      %v2852 = vld [vmem:[%s2702 + $0x14] sm:$0x1]
      %v2853 = vld [vmem:[%s2702 + $0x18] sm:$0xf]
      %v2854 = vld [vmem:[%s2702 + $0x1c] sm:$0xf]
      %v2855 = vld [vmem:[%s2702 + $0x20] sm:$0x1]
      %v2856 = vld [vmem:[%s2702 + $0x24] sm:$0xf]
      %v2857 = vld [vmem:[%s2702 + $0x28] sm:$0xf]
      %v2858 = vld [vmem:[%s2702 + $0x2c] sm:$0x1]
      %v2859 = vld [vmem:[%s2702 + $0x30] sm:$0xf]
      %v2860 = vld [vmem:[%s2702 + $0x34] sm:$0xf]
      %v2861 = vld [vmem:[%s2702 + $0x38] sm:$0x1]
      %v2862 = vld [vmem:[%s2702 + $0x3c] sm:$0xf]
      %v2863 = vld [vmem:[%s2702 + $0x40] sm:$0xf]
      %v2864 = vld [vmem:[%s2702 + $0x44] sm:$0x1]
      %v2865 = vld [vmem:[%s2702 + $0x48] sm:$0xf]
      %v2866 = vld [vmem:[%s2702 + $0x4c] sm:$0xf]
      %v2867 = vld [vmem:[%s2702 + $0x50] sm:$0x1]
      %v2868 = vld [vmem:[%s2702 + $0x54] sm:$0xf]
      %v2869 = vld [vmem:[%s2702 + $0x58] sm:$0xf]
      %v2870 = vld [vmem:[%s2702 + $0x5c] sm:$0x1]
      %v2871 = vld [vmem:[%s2702 + $0x60] sm:$0xf]
      %v2872 = vld [vmem:[%s2702 + $0x64] sm:$0xf]
      %v2873 = vld [vmem:[%s2702 + $0x68] sm:$0x1]
      %v2874 = vld [vmem:[%s2702 + $0x6c] sm:$0xf]
      %v2875 = vld [vmem:[%s2702 + $0x70] sm:$0xf]
      %v2876 = vld [vmem:[%s2702 + $0x74] sm:$0x1]
      %v2877 = vld [vmem:[%s2702 + $0x78] sm:$0xf]
      %v2878 = vld [vmem:[%s2702 + $0x7c] sm:$0xf]
      %v2879 = vld [vmem:[%s2702 + $0x80] sm:$0x1]
      %v2880 = vld [vmem:[%s2702 + $0x84] sm:$0xf]
      %v2881 = vld [vmem:[%s2702 + $0x88] sm:$0xf]
      %v2882 = vld [vmem:[%s2702 + $0x8c] sm:$0x1]
      %v2883 = vld [vmem:[%s2702 + $0x90] sm:$0xf]
      %v2884 = vld [vmem:[%s2702 + $0x94] sm:$0xf]
      %v2885 = vld [vmem:[%s2702 + $0x98] sm:$0x1]
      %v2886 = vld [vmem:[%s2702 + $0x9c] sm:$0xf]
      %v2887 = vld [vmem:[%s2702 + $0xa0] sm:$0xf]
      %v2888 = vld [vmem:[%s2702 + $0xa4] sm:$0x1]
      %v2889 = vld [vmem:[%s2702 + $0xa8] sm:$0xf]
      %v2890 = vld [vmem:[%s2702 + $0xac] sm:$0xf]
      %v2891 = vld [vmem:[%s2702 + $0xb0] sm:$0x1]
      %v2892 = vld [vmem:[%s2702 + $0xb4] sm:$0xf]
      %v2893 = vld [vmem:[%s2702 + $0xb8] sm:$0xf]
      %v2894 = vld [vmem:[%s2702 + $0xbc] sm:$0x1]
      %v2896 = vshrl.u32 %v2847, 16
      %v2898 = vrot.slane %v2896, 4
      %v2899 = vshll.u32 %v2847, 16
      %v2901 = vrot.slane %v2899, 5
      %v2902 = vor.u32 %v2898, %v2901
      %v2903 = vrot.slane %v2902, 4
      %v2905 = vshll.u32 %v2848, 16
      %v2907 = vrot.slane %v2905, 5
      %v2908 = vsel %vm1002, %v2903, %v2907
      %v2909 = vshrl.u32 %v2848, 16
      %v2911 = vrot.slane %v2909, 4
      %v2912 = vor.u32 %v2911, %v2907
      %v2913 = vrot.slane %v2912, 4
      %v2915 = vshll.u32 %v2849, 16
      %v2917 = vrot.slane %v2915, 5
      %v2918 = vsel %vm1002, %v2913, %v2917
      %v2920 = vshrl.u32 %v2850, 16
      %v2922 = vrot.slane %v2920, 4
      %v2923 = vshll.u32 %v2850, 16
      %v2925 = vrot.slane %v2923, 5
      %v2926 = vor.u32 %v2922, %v2925
      %v2927 = vrot.slane %v2926, 4
      %v2929 = vshll.u32 %v2851, 16
      %v2931 = vrot.slane %v2929, 5
      %v2932 = vsel %vm1002, %v2927, %v2931
      %v2933 = vshrl.u32 %v2851, 16
      %v2935 = vrot.slane %v2933, 4
      %v2936 = vor.u32 %v2935, %v2931
      %v2937 = vrot.slane %v2936, 4
      %v2939 = vshll.u32 %v2852, 16
      %v2941 = vrot.slane %v2939, 5
      %v2942 = vsel %vm1002, %v2937, %v2941
      %v2944 = vshrl.u32 %v2853, 16
      %v2946 = vrot.slane %v2944, 4
      %v2947 = vshll.u32 %v2853, 16
      %v2949 = vrot.slane %v2947, 5
      %v2950 = vor.u32 %v2946, %v2949
      %v2951 = vrot.slane %v2950, 4
      %v2953 = vshll.u32 %v2854, 16
      %v2955 = vrot.slane %v2953, 5
      %v2956 = vsel %vm1002, %v2951, %v2955
      %v2957 = vshrl.u32 %v2854, 16
      %v2959 = vrot.slane %v2957, 4
      %v2960 = vor.u32 %v2959, %v2955
      %v2961 = vrot.slane %v2960, 4
      %v2963 = vshll.u32 %v2855, 16
      %v2965 = vrot.slane %v2963, 5
      %v2966 = vsel %vm1002, %v2961, %v2965
      %v2968 = vshrl.u32 %v2856, 16
      %v2970 = vrot.slane %v2968, 4
      %v2971 = vshll.u32 %v2856, 16
      %v2973 = vrot.slane %v2971, 5
      %v2974 = vor.u32 %v2970, %v2973
      %v2975 = vrot.slane %v2974, 4
      %v2977 = vshll.u32 %v2857, 16
      %v2979 = vrot.slane %v2977, 5
      %v2980 = vsel %vm1002, %v2975, %v2979
      %v2981 = vshrl.u32 %v2857, 16
      %v2983 = vrot.slane %v2981, 4
      %v2984 = vor.u32 %v2983, %v2979
      %v2985 = vrot.slane %v2984, 4
      %v2987 = vshll.u32 %v2858, 16
      %v2989 = vrot.slane %v2987, 5
      %v2990 = vsel %vm1002, %v2985, %v2989
      %v2992 = vshrl.u32 %v2859, 16
      %v2994 = vrot.slane %v2992, 4
      %v2995 = vshll.u32 %v2859, 16
      %v2997 = vrot.slane %v2995, 5
      %v2998 = vor.u32 %v2994, %v2997
      %v2999 = vrot.slane %v2998, 4
      %v3001 = vshll.u32 %v2860, 16
      %v3003 = vrot.slane %v3001, 5
      %v3004 = vsel %vm1002, %v2999, %v3003
      %v3005 = vshrl.u32 %v2860, 16
      %v3007 = vrot.slane %v3005, 4
      %v3008 = vor.u32 %v3007, %v3003
      %v3009 = vrot.slane %v3008, 4
      %v3011 = vshll.u32 %v2861, 16
      %v3013 = vrot.slane %v3011, 5
      %v3014 = vsel %vm1002, %v3009, %v3013
      %v3016 = vshrl.u32 %v2862, 16
      %v3018 = vrot.slane %v3016, 4
      %v3019 = vshll.u32 %v2862, 16
      %v3021 = vrot.slane %v3019, 5
      %v3022 = vor.u32 %v3018, %v3021
      %v3023 = vrot.slane %v3022, 4
      %v3025 = vshll.u32 %v2863, 16
      %v3027 = vrot.slane %v3025, 5
      %v3028 = vsel %vm1002, %v3023, %v3027
      %v3029 = vshrl.u32 %v2863, 16
      %v3031 = vrot.slane %v3029, 4
      %v3032 = vor.u32 %v3031, %v3027
      %v3033 = vrot.slane %v3032, 4
      %v3035 = vshll.u32 %v2864, 16
      %v3037 = vrot.slane %v3035, 5
      %v3038 = vsel %vm1002, %v3033, %v3037
      %v3040 = vshrl.u32 %v2865, 16
      %v3042 = vrot.slane %v3040, 4
      %v3043 = vshll.u32 %v2865, 16
      %v3045 = vrot.slane %v3043, 5
      %v3046 = vor.u32 %v3042, %v3045
      %v3047 = vrot.slane %v3046, 4
      %v3049 = vshll.u32 %v2866, 16
      %v3051 = vrot.slane %v3049, 5
      %v3052 = vsel %vm1002, %v3047, %v3051
      %v3053 = vshrl.u32 %v2866, 16
      %v3055 = vrot.slane %v3053, 4
      %v3056 = vor.u32 %v3055, %v3051
      %v3057 = vrot.slane %v3056, 4
      %v3059 = vshll.u32 %v2867, 16
      %v3061 = vrot.slane %v3059, 5
      %v3062 = vsel %vm1002, %v3057, %v3061
      %v3064 = vshrl.u32 %v2868, 16
      %v3066 = vrot.slane %v3064, 4
      %v3067 = vshll.u32 %v2868, 16
      %v3069 = vrot.slane %v3067, 5
      %v3070 = vor.u32 %v3066, %v3069
      %v3071 = vrot.slane %v3070, 4
      %v3073 = vshll.u32 %v2869, 16
      %v3075 = vrot.slane %v3073, 5
      %v3076 = vsel %vm1002, %v3071, %v3075
      %v3077 = vshrl.u32 %v2869, 16
      %v3079 = vrot.slane %v3077, 4
      %v3080 = vor.u32 %v3079, %v3075
      %v3081 = vrot.slane %v3080, 4
      %v3083 = vshll.u32 %v2870, 16
      %v3085 = vrot.slane %v3083, 5
      %v3086 = vsel %vm1002, %v3081, %v3085
      %v3088 = vshrl.u32 %v2871, 16
      %v3090 = vrot.slane %v3088, 4
      %v3091 = vshll.u32 %v2871, 16
      %v3093 = vrot.slane %v3091, 5
      %v3094 = vor.u32 %v3090, %v3093
      %v3095 = vrot.slane %v3094, 4
      %v3097 = vshll.u32 %v2872, 16
      %v3099 = vrot.slane %v3097, 5
      %v3100 = vsel %vm1002, %v3095, %v3099
      %v3101 = vshrl.u32 %v2872, 16
      %v3103 = vrot.slane %v3101, 4
      %v3104 = vor.u32 %v3103, %v3099
      %v3105 = vrot.slane %v3104, 4
      %v3107 = vshll.u32 %v2873, 16
      %v3109 = vrot.slane %v3107, 5
      %v3110 = vsel %vm1002, %v3105, %v3109
      %v3112 = vshrl.u32 %v2874, 16
      %v3114 = vrot.slane %v3112, 4
      %v3115 = vshll.u32 %v2874, 16
      %v3117 = vrot.slane %v3115, 5
      %v3118 = vor.u32 %v3114, %v3117
      %v3119 = vrot.slane %v3118, 4
      %v3121 = vshll.u32 %v2875, 16
      %v3123 = vrot.slane %v3121, 5
      %v3124 = vsel %vm1002, %v3119, %v3123
      %v3125 = vshrl.u32 %v2875, 16
      %v3127 = vrot.slane %v3125, 4
      %v3128 = vor.u32 %v3127, %v3123
      %v3129 = vrot.slane %v3128, 4
      %v3131 = vshll.u32 %v2876, 16
      %v3133 = vrot.slane %v3131, 5
      %v3134 = vsel %vm1002, %v3129, %v3133
      %v3136 = vshrl.u32 %v2877, 16
      %v3138 = vrot.slane %v3136, 4
      %v3139 = vshll.u32 %v2877, 16
      %v3141 = vrot.slane %v3139, 5
      %v3142 = vor.u32 %v3138, %v3141
      %v3143 = vrot.slane %v3142, 4
      %v3145 = vshll.u32 %v2878, 16
      %v3147 = vrot.slane %v3145, 5
      %v3148 = vsel %vm1002, %v3143, %v3147
      %v3149 = vshrl.u32 %v2878, 16
      %v3151 = vrot.slane %v3149, 4
      %v3152 = vor.u32 %v3151, %v3147
      %v3153 = vrot.slane %v3152, 4
      %v3155 = vshll.u32 %v2879, 16
      %v3157 = vrot.slane %v3155, 5
      %v3158 = vsel %vm1002, %v3153, %v3157
      %v3160 = vshrl.u32 %v2880, 16
      %v3162 = vrot.slane %v3160, 4
      %v3163 = vshll.u32 %v2880, 16
      %v3165 = vrot.slane %v3163, 5
      %v3166 = vor.u32 %v3162, %v3165
      %v3167 = vrot.slane %v3166, 4
      %v3169 = vshll.u32 %v2881, 16
      %v3171 = vrot.slane %v3169, 5
      %v3172 = vsel %vm1002, %v3167, %v3171
      %v3173 = vshrl.u32 %v2881, 16
      %v3175 = vrot.slane %v3173, 4
      %v3176 = vor.u32 %v3175, %v3171
      %v3177 = vrot.slane %v3176, 4
      %v3179 = vshll.u32 %v2882, 16
      %v3181 = vrot.slane %v3179, 5
      %v3182 = vsel %vm1002, %v3177, %v3181
      %v3184 = vshrl.u32 %v2883, 16
      %v3186 = vrot.slane %v3184, 4
      %v3187 = vshll.u32 %v2883, 16
      %v3189 = vrot.slane %v3187, 5
      %v3190 = vor.u32 %v3186, %v3189
      %v3191 = vrot.slane %v3190, 4
      %v3193 = vshll.u32 %v2884, 16
      %v3195 = vrot.slane %v3193, 5
      %v3196 = vsel %vm1002, %v3191, %v3195
      %v3197 = vshrl.u32 %v2884, 16
      %v3199 = vrot.slane %v3197, 4
      %v3200 = vor.u32 %v3199, %v3195
      %v3201 = vrot.slane %v3200, 4
      %v3203 = vshll.u32 %v2885, 16
      %v3205 = vrot.slane %v3203, 5
      %v3206 = vsel %vm1002, %v3201, %v3205
      %v3208 = vshrl.u32 %v2886, 16
      %v3210 = vrot.slane %v3208, 4
      %v3211 = vshll.u32 %v2886, 16
      %v3213 = vrot.slane %v3211, 5
      %v3214 = vor.u32 %v3210, %v3213
      %v3215 = vrot.slane %v3214, 4
      %v3217 = vshll.u32 %v2887, 16
      %v3219 = vrot.slane %v3217, 5
      %v3220 = vsel %vm1002, %v3215, %v3219
      %v3221 = vshrl.u32 %v2887, 16
      %v3223 = vrot.slane %v3221, 4
      %v3224 = vor.u32 %v3223, %v3219
      %v3225 = vrot.slane %v3224, 4
      %v3227 = vshll.u32 %v2888, 16
      %v3229 = vrot.slane %v3227, 5
      %v3230 = vsel %vm1002, %v3225, %v3229
      %v3232 = vshrl.u32 %v2889, 16
      %v3234 = vrot.slane %v3232, 4
      %v3235 = vshll.u32 %v2889, 16
      %v3237 = vrot.slane %v3235, 5
      %v3238 = vor.u32 %v3234, %v3237
      %v3239 = vrot.slane %v3238, 4
      %v3241 = vshll.u32 %v2890, 16
      %v3243 = vrot.slane %v3241, 5
      %v3244 = vsel %vm1002, %v3239, %v3243
      %v3245 = vshrl.u32 %v2890, 16
      %v3247 = vrot.slane %v3245, 4
      %v3248 = vor.u32 %v3247, %v3243
      %v3249 = vrot.slane %v3248, 4
      %v3251 = vshll.u32 %v2891, 16
      %v3253 = vrot.slane %v3251, 5
      %v3254 = vsel %vm1002, %v3249, %v3253
      %v3256 = vshrl.u32 %v2892, 16
      %v3258 = vrot.slane %v3256, 4
      %v3259 = vshll.u32 %v2892, 16
      %v3261 = vrot.slane %v3259, 5
      %v3262 = vor.u32 %v3258, %v3261
      %v3263 = vrot.slane %v3262, 4
      %v3265 = vshll.u32 %v2893, 16
      %v3267 = vrot.slane %v3265, 5
      %v3268 = vsel %vm1002, %v3263, %v3267
      %v3269 = vshrl.u32 %v2893, 16
      %v3271 = vrot.slane %v3269, 4
      %v3272 = vor.u32 %v3271, %v3267
      %v3273 = vrot.slane %v3272, 4
      %v3275 = vshll.u32 %v2894, 16
      %v3277 = vrot.slane %v3275, 5
      %v3278 = vsel %vm1002, %v3273, %v3277
      %v3279 = vunpack.c.l.b16 %v2908
      %v3280 = vunpack.c.l.b16 %v2918
      %v3281 = vunpack.c.l.b16 %v2932
      %v3282 = vunpack.c.l.b16 %v2942
      %v3283 = vunpack.c.l.b16 %v2956
      %v3284 = vunpack.c.l.b16 %v2966
      %v3285 = vunpack.c.l.b16 %v2980
      %v3286 = vunpack.c.l.b16 %v2990
      %v3287 = vunpack.c.l.b16 %v3004
      %v3288 = vunpack.c.l.b16 %v3014
      %v3289 = vunpack.c.l.b16 %v3028
      %v3290 = vunpack.c.l.b16 %v3038
      %v3291 = vunpack.c.l.b16 %v3052
      %v3292 = vunpack.c.l.b16 %v3062
      %v3293 = vunpack.c.l.b16 %v3076
      %v3294 = vunpack.c.l.b16 %v3086
      %v3295 = vunpack.c.l.b16 %v3100
      %v3296 = vunpack.c.l.b16 %v3110
      %v3297 = vunpack.c.l.b16 %v3124
      %v3298 = vunpack.c.l.b16 %v3134
      %v3299 = vunpack.c.l.b16 %v3148
      %v3300 = vunpack.c.l.b16 %v3158
      %v3301 = vunpack.c.l.b16 %v3172
      %v3302 = vunpack.c.l.b16 %v3182
      %v3303 = vunpack.c.l.b16 %v3196
      %v3304 = vunpack.c.l.b16 %v3206
      %v3305 = vunpack.c.l.b16 %v3220
      %v3306 = vunpack.c.l.b16 %v3230
      %v3307 = vunpack.c.l.b16 %v3244
      %v3308 = vunpack.c.l.b16 %v3254
      %v3309 = vunpack.c.l.b16 %v3268
      %v3310 = vunpack.c.l.b16 %v3278
      %v3311 = vpack.c.b16 %v3280, %v3279
      %v3312 = vpack.c.b16 %v3282, %v3281
      %v3313 = vpack.c.b16 %v3284, %v3283
      %v3314 = vpack.c.b16 %v3286, %v3285
      %v3315 = vpack.c.b16 %v3288, %v3287
      %v3316 = vpack.c.b16 %v3290, %v3289
      %v3317 = vpack.c.b16 %v3292, %v3291
      %v3318 = vpack.c.b16 %v3294, %v3293
      %v3319 = vpack.c.b16 %v3296, %v3295
      %v3320 = vpack.c.b16 %v3298, %v3297
      %v3321 = vpack.c.b16 %v3300, %v3299
      %v3322 = vpack.c.b16 %v3302, %v3301
      %v3323 = vpack.c.b16 %v3304, %v3303
      %v3324 = vpack.c.b16 %v3306, %v3305
      %v3325 = vpack.c.b16 %v3308, %v3307
      %v3326 = vpack.c.b16 %v3310, %v3309
      %3343 = vst [vmem:[#allocation3 + $0x38] sm:$0xff] %v3311
      %3344 = vst [vmem:[#allocation3 + $0x80] sm:$0xff] %v3312
      %3345 = vst [vmem:[#allocation3 + $0xc8] sm:$0xff] %v3313
      %3346 = vst [vmem:[#allocation3 + $0x110] sm:$0xff] %v3314
      %3347 = vst [vmem:[#allocation3 + $0x158] sm:$0xff] %v3315
      %3348 = vst [vmem:[#allocation3 + $0x1a0] sm:$0xff] %v3316
      %3349 = vst [vmem:[#allocation3 + $0x1e8] sm:$0xff] %v3317
      %3350 = vst [vmem:[#allocation3 + $0x230] sm:$0xff] %v3318
      %3351 = vst [vmem:[#allocation3 + $0x278] sm:$0xff] %v3319
      %3352 = vst [vmem:[#allocation3 + $0x2c0] sm:$0xff] %v3320
      %3353 = vst [vmem:[#allocation3 + $0x308] sm:$0xff] %v3321
      %3354 = vst [vmem:[#allocation3 + $0x350] sm:$0xff] %v3322
      %3355 = vst [vmem:[#allocation3 + $0x398] sm:$0xff] %v3323
      %3356 = vst [vmem:[#allocation3 + $0x3e0] sm:$0xff] %v3324
      %3357 = vst [vmem:[#allocation3 + $0x428] sm:$0xff] %v3325
      %3358 = vst [vmem:[#allocation3 + $0x470] sm:$0xff] %v3326
      %v3359 = vld [vmem:[%s2702] sm:$0xe]
      %v3360 = vld [vmem:[%s2702 + $0x4] sm:$0xf]
      %v3361 = vld [vmem:[%s2702 + $0x8] sm:$0x1]
      %v3362 = vld [vmem:[%s2702 + $0xc] sm:$0xe]
      %v3363 = vld [vmem:[%s2702 + $0x10] sm:$0xf]
      %v3364 = vld [vmem:[%s2702 + $0x14] sm:$0x1]
      %v3365 = vld [vmem:[%s2702 + $0x18] sm:$0xe]
      %v3366 = vld [vmem:[%s2702 + $0x1c] sm:$0xf]
      %v3367 = vld [vmem:[%s2702 + $0x20] sm:$0x1]
      %v3368 = vld [vmem:[%s2702 + $0x24] sm:$0xe]
      %v3369 = vld [vmem:[%s2702 + $0x28] sm:$0xf]
      %v3370 = vld [vmem:[%s2702 + $0x2c] sm:$0x1]
      %v3371 = vld [vmem:[%s2702 + $0x30] sm:$0xe]
      %v3372 = vld [vmem:[%s2702 + $0x34] sm:$0xf]
      %v3373 = vld [vmem:[%s2702 + $0x38] sm:$0x1]
      %v3374 = vld [vmem:[%s2702 + $0x3c] sm:$0xe]
      %v3375 = vld [vmem:[%s2702 + $0x40] sm:$0xf]
      %v3376 = vld [vmem:[%s2702 + $0x44] sm:$0x1]
      %v3377 = vld [vmem:[%s2702 + $0x48] sm:$0xe]
      %v3378 = vld [vmem:[%s2702 + $0x4c] sm:$0xf]
      %v3379 = vld [vmem:[%s2702 + $0x50] sm:$0x1]
      %v3380 = vld [vmem:[%s2702 + $0x54] sm:$0xe]
      %v3381 = vld [vmem:[%s2702 + $0x58] sm:$0xf]
      %v3382 = vld [vmem:[%s2702 + $0x5c] sm:$0x1]
      %v3383 = vld [vmem:[%s2702 + $0x60] sm:$0xe]
      %v3384 = vld [vmem:[%s2702 + $0x64] sm:$0xf]
      %v3385 = vld [vmem:[%s2702 + $0x68] sm:$0x1]
      %v3386 = vld [vmem:[%s2702 + $0x6c] sm:$0xe]
      %v3387 = vld [vmem:[%s2702 + $0x70] sm:$0xf]
      %v3388 = vld [vmem:[%s2702 + $0x74] sm:$0x1]
      %v3389 = vld [vmem:[%s2702 + $0x78] sm:$0xe]
      %v3390 = vld [vmem:[%s2702 + $0x7c] sm:$0xf]
      %v3391 = vld [vmem:[%s2702 + $0x80] sm:$0x1]
      %v3392 = vld [vmem:[%s2702 + $0x84] sm:$0xe]
      %v3393 = vld [vmem:[%s2702 + $0x88] sm:$0xf]
      %v3394 = vld [vmem:[%s2702 + $0x8c] sm:$0x1]
      %v3395 = vld [vmem:[%s2702 + $0x90] sm:$0xe]
      %v3396 = vld [vmem:[%s2702 + $0x94] sm:$0xf]
      %v3397 = vld [vmem:[%s2702 + $0x98] sm:$0x1]
      %v3398 = vld [vmem:[%s2702 + $0x9c] sm:$0xe]
      %v3399 = vld [vmem:[%s2702 + $0xa0] sm:$0xf]
      %v3400 = vld [vmem:[%s2702 + $0xa4] sm:$0x1]
      %v3401 = vld [vmem:[%s2702 + $0xa8] sm:$0xe]
      %v3402 = vld [vmem:[%s2702 + $0xac] sm:$0xf]
      %v3403 = vld [vmem:[%s2702 + $0xb0] sm:$0x1]
      %v3404 = vld [vmem:[%s2702 + $0xb4] sm:$0xe]
      %v3405 = vld [vmem:[%s2702 + $0xb8] sm:$0xf]
      %v3406 = vld [vmem:[%s2702 + $0xbc] sm:$0x1]
      %v3455 = vrot.slane %v3359, 5
      %v3456 = vrot.slane %v3455, 4
      %v3457 = vrot.slane %v3360, 5
      %v3458 = vsel %vm1565, %v3456, %v3457
      %v3459 = vrot.slane %v3457, 4
      %v3460 = vrot.slane %v3361, 5
      %v3461 = vsel %vm1565, %v3459, %v3460
      %v3462 = vrot.slane %v3362, 5
      %v3463 = vrot.slane %v3462, 4
      %v3464 = vrot.slane %v3363, 5
      %v3465 = vsel %vm1565, %v3463, %v3464
      %v3466 = vrot.slane %v3464, 4
      %v3467 = vrot.slane %v3364, 5
      %v3468 = vsel %vm1565, %v3466, %v3467
      %v3469 = vrot.slane %v3365, 5
      %v3470 = vrot.slane %v3469, 4
      %v3471 = vrot.slane %v3366, 5
      %v3472 = vsel %vm1565, %v3470, %v3471
      %v3473 = vrot.slane %v3471, 4
      %v3474 = vrot.slane %v3367, 5
      %v3475 = vsel %vm1565, %v3473, %v3474
      %v3476 = vrot.slane %v3368, 5
      %v3477 = vrot.slane %v3476, 4
      %v3478 = vrot.slane %v3369, 5
      %v3479 = vsel %vm1565, %v3477, %v3478
      %v3480 = vrot.slane %v3478, 4
      %v3481 = vrot.slane %v3370, 5
      %v3482 = vsel %vm1565, %v3480, %v3481
      %v3483 = vrot.slane %v3371, 5
      %v3484 = vrot.slane %v3483, 4
      %v3485 = vrot.slane %v3372, 5
      %v3486 = vsel %vm1565, %v3484, %v3485
      %v3487 = vrot.slane %v3485, 4
      %v3488 = vrot.slane %v3373, 5
      %v3489 = vsel %vm1565, %v3487, %v3488
      %v3490 = vrot.slane %v3374, 5
      %v3491 = vrot.slane %v3490, 4
      %v3492 = vrot.slane %v3375, 5
      %v3493 = vsel %vm1565, %v3491, %v3492
      %v3494 = vrot.slane %v3492, 4
      %v3495 = vrot.slane %v3376, 5
      %v3496 = vsel %vm1565, %v3494, %v3495
      %v3497 = vrot.slane %v3377, 5
      %v3498 = vrot.slane %v3497, 4
      %v3499 = vrot.slane %v3378, 5
      %v3500 = vsel %vm1565, %v3498, %v3499
      %v3501 = vrot.slane %v3499, 4
      %v3502 = vrot.slane %v3379, 5
      %v3503 = vsel %vm1565, %v3501, %v3502
      %v3504 = vrot.slane %v3380, 5
      %v3505 = vrot.slane %v3504, 4
      %v3506 = vrot.slane %v3381, 5
      %v3507 = vsel %vm1565, %v3505, %v3506
      %v3508 = vrot.slane %v3506, 4
      %v3509 = vrot.slane %v3382, 5
      %v3510 = vsel %vm1565, %v3508, %v3509
      %v3511 = vrot.slane %v3383, 5
      %v3512 = vrot.slane %v3511, 4
      %v3513 = vrot.slane %v3384, 5
      %v3514 = vsel %vm1565, %v3512, %v3513
      %v3515 = vrot.slane %v3513, 4
      %v3516 = vrot.slane %v3385, 5
      %v3517 = vsel %vm1565, %v3515, %v3516
      %v3518 = vrot.slane %v3386, 5
      %v3519 = vrot.slane %v3518, 4
      %v3520 = vrot.slane %v3387, 5
      %v3521 = vsel %vm1565, %v3519, %v3520
      %v3522 = vrot.slane %v3520, 4
      %v3523 = vrot.slane %v3388, 5
      %v3524 = vsel %vm1565, %v3522, %v3523
      %v3525 = vrot.slane %v3389, 5
      %v3526 = vrot.slane %v3525, 4
      %v3527 = vrot.slane %v3390, 5
      %v3528 = vsel %vm1565, %v3526, %v3527
      %v3529 = vrot.slane %v3527, 4
      %v3530 = vrot.slane %v3391, 5
      %v3531 = vsel %vm1565, %v3529, %v3530
      %v3532 = vrot.slane %v3392, 5
      %v3533 = vrot.slane %v3532, 4
      %v3534 = vrot.slane %v3393, 5
      %v3535 = vsel %vm1565, %v3533, %v3534
      %v3536 = vrot.slane %v3534, 4
      %v3537 = vrot.slane %v3394, 5
      %v3538 = vsel %vm1565, %v3536, %v3537
      %v3539 = vrot.slane %v3395, 5
      %v3540 = vrot.slane %v3539, 4
      %v3541 = vrot.slane %v3396, 5
      %v3542 = vsel %vm1565, %v3540, %v3541
      %v3543 = vrot.slane %v3541, 4
      %v3544 = vrot.slane %v3397, 5
      %v3545 = vsel %vm1565, %v3543, %v3544
      %v3546 = vrot.slane %v3398, 5
      %v3547 = vrot.slane %v3546, 4
      %v3548 = vrot.slane %v3399, 5
      %v3549 = vsel %vm1565, %v3547, %v3548
      %v3550 = vrot.slane %v3548, 4
      %v3551 = vrot.slane %v3400, 5
      %v3552 = vsel %vm1565, %v3550, %v3551
      %v3553 = vrot.slane %v3401, 5
      %v3554 = vrot.slane %v3553, 4
      %v3555 = vrot.slane %v3402, 5
      %v3556 = vsel %vm1565, %v3554, %v3555
      %v3557 = vrot.slane %v3555, 4
      %v3558 = vrot.slane %v3403, 5
      %v3559 = vsel %vm1565, %v3557, %v3558
      %v3560 = vrot.slane %v3404, 5
      %v3561 = vrot.slane %v3560, 4
      %v3562 = vrot.slane %v3405, 5
      %v3563 = vsel %vm1565, %v3561, %v3562
      %v3564 = vrot.slane %v3562, 4
      %v3565 = vrot.slane %v3406, 5
      %v3566 = vsel %vm1565, %v3564, %v3565
      %v3567 = vunpack.c.l.b16 %v3458
      %v3568 = vunpack.c.l.b16 %v3461
      %v3569 = vunpack.c.l.b16 %v3465
      %v3570 = vunpack.c.l.b16 %v3468
      %v3571 = vunpack.c.l.b16 %v3472
      %v3572 = vunpack.c.l.b16 %v3475
      %v3573 = vunpack.c.l.b16 %v3479
      %v3574 = vunpack.c.l.b16 %v3482
      %v3575 = vunpack.c.l.b16 %v3486
      %v3576 = vunpack.c.l.b16 %v3489
      %v3577 = vunpack.c.l.b16 %v3493
      %v3578 = vunpack.c.l.b16 %v3496
      %v3579 = vunpack.c.l.b16 %v3500
      %v3580 = vunpack.c.l.b16 %v3503
      %v3581 = vunpack.c.l.b16 %v3507
      %v3582 = vunpack.c.l.b16 %v3510
      %v3583 = vunpack.c.l.b16 %v3514
      %v3584 = vunpack.c.l.b16 %v3517
      %v3585 = vunpack.c.l.b16 %v3521
      %v3586 = vunpack.c.l.b16 %v3524
      %v3587 = vunpack.c.l.b16 %v3528
      %v3588 = vunpack.c.l.b16 %v3531
      %v3589 = vunpack.c.l.b16 %v3535
      %v3590 = vunpack.c.l.b16 %v3538
      %v3591 = vunpack.c.l.b16 %v3542
      %v3592 = vunpack.c.l.b16 %v3545
      %v3593 = vunpack.c.l.b16 %v3549
      %v3594 = vunpack.c.l.b16 %v3552
      %v3595 = vunpack.c.l.b16 %v3556
      %v3596 = vunpack.c.l.b16 %v3559
      %v3597 = vunpack.c.l.b16 %v3563
      %v3598 = vunpack.c.l.b16 %v3566
      %v3599 = vpack.c.b16 %v3568, %v3567
      %v3600 = vpack.c.b16 %v3570, %v3569
      %v3601 = vpack.c.b16 %v3572, %v3571
      %v3602 = vpack.c.b16 %v3574, %v3573
      %v3603 = vpack.c.b16 %v3576, %v3575
      %v3604 = vpack.c.b16 %v3578, %v3577
      %v3605 = vpack.c.b16 %v3580, %v3579
      %v3606 = vpack.c.b16 %v3582, %v3581
      %v3607 = vpack.c.b16 %v3584, %v3583
      %v3608 = vpack.c.b16 %v3586, %v3585
      %v3609 = vpack.c.b16 %v3588, %v3587
      %v3610 = vpack.c.b16 %v3590, %v3589
      %v3611 = vpack.c.b16 %v3592, %v3591
      %v3612 = vpack.c.b16 %v3594, %v3593
      %v3613 = vpack.c.b16 %v3596, %v3595
      %v3614 = vpack.c.b16 %v3598, %v3597
      %3631 = vst [vmem:[#allocation3 + $0x40] sm:$0xff] %v3599
      %3632 = vst [vmem:[#allocation3 + $0x88] sm:$0xff] %v3600
      %3633 = vst [vmem:[#allocation3 + $0xd0] sm:$0xff] %v3601
      %3634 = vst [vmem:[#allocation3 + $0x118] sm:$0xff] %v3602
      %3635 = vst [vmem:[#allocation3 + $0x160] sm:$0xff] %v3603
      %3636 = vst [vmem:[#allocation3 + $0x1a8] sm:$0xff] %v3604
      %3637 = vst [vmem:[#allocation3 + $0x1f0] sm:$0xff] %v3605
      %3638 = vst [vmem:[#allocation3 + $0x238] sm:$0xff] %v3606
      %3639 = vst [vmem:[#allocation3 + $0x280] sm:$0xff] %v3607
      %3640 = vst [vmem:[#allocation3 + $0x2c8] sm:$0xff] %v3608
      %3641 = vst [vmem:[#allocation3 + $0x310] sm:$0xff] %v3609
      %3642 = vst [vmem:[#allocation3 + $0x358] sm:$0xff] %v3610
      %3643 = vst [vmem:[#allocation3 + $0x3a0] sm:$0xff] %v3611
      %3644 = vst [vmem:[#allocation3 + $0x3e8] sm:$0xff] %v3612
      %3645 = vst [vmem:[#allocation3 + $0x430] sm:$0xff] %v3613
      %3646 = vst [vmem:[#allocation3 + $0x478] sm:$0xff] %v3614
      %v3647 = vld [vmem:[#allocation3] sm:$0xff]
      %v3648 = vld [vmem:[#allocation3 + $0x8] sm:$0xff]
      %v3649 = vld [vmem:[#allocation3 + $0x10] sm:$0xff]
      %v3650 = vld [vmem:[#allocation3 + $0x18] sm:$0xff]
      %v3651 = vld [vmem:[#allocation3 + $0x20] sm:$0xff]
      %v3652 = vld [vmem:[#allocation3 + $0x28] sm:$0xff]
      %v3653 = vld [vmem:[#allocation3 + $0x30] sm:$0xff]
      %v3654 = vld [vmem:[#allocation3 + $0x38] sm:$0xff]
      %v3655 = vld [vmem:[#allocation3 + $0x40] sm:$0xff]
      %v3656 = vld [vmem:[#allocation3 + $0x48] sm:$0xff]
      %v3657 = vld [vmem:[#allocation3 + $0x50] sm:$0xff]
      %v3658 = vld [vmem:[#allocation3 + $0x58] sm:$0xff]
      %v3659 = vld [vmem:[#allocation3 + $0x60] sm:$0xff]
      %v3660 = vld [vmem:[#allocation3 + $0x68] sm:$0xff]
      %v3661 = vld [vmem:[#allocation3 + $0x70] sm:$0xff]
      %v3662 = vld [vmem:[#allocation3 + $0x78] sm:$0xff]
      %v3663 = vld [vmem:[#allocation3 + $0x80] sm:$0xff]
      %v3664 = vld [vmem:[#allocation3 + $0x88] sm:$0xff]
      %v3665 = vld [vmem:[#allocation3 + $0x90] sm:$0xff]
      %v3666 = vld [vmem:[#allocation3 + $0x98] sm:$0xff]
      %v3667 = vld [vmem:[#allocation3 + $0xa0] sm:$0xff]
      %v3668 = vld [vmem:[#allocation3 + $0xa8] sm:$0xff]
      %v3669 = vld [vmem:[#allocation3 + $0xb0] sm:$0xff]
      %v3670 = vld [vmem:[#allocation3 + $0xb8] sm:$0xff]
      %v3671 = vld [vmem:[#allocation3 + $0xc0] sm:$0xff]
      %v3672 = vld [vmem:[#allocation3 + $0xc8] sm:$0xff]
      %v3673 = vld [vmem:[#allocation3 + $0xd0] sm:$0xff]
      %v3674 = vld [vmem:[#allocation3 + $0xd8] sm:$0xff]
      %v3675 = vld [vmem:[#allocation3 + $0xe0] sm:$0xff]
      %v3676 = vld [vmem:[#allocation3 + $0xe8] sm:$0xff]
      %v3677 = vld [vmem:[#allocation3 + $0xf0] sm:$0xff]
      %v3678 = vld [vmem:[#allocation3 + $0xf8] sm:$0xff]
      %v3679 = vld [vmem:[#allocation3 + $0x100] sm:$0xff]
      %v3680 = vld [vmem:[#allocation3 + $0x108] sm:$0xff]
      %v3681 = vld [vmem:[#allocation3 + $0x110] sm:$0xff]
      %v3682 = vld [vmem:[#allocation3 + $0x118] sm:$0xff]
      %v3683 = vld [vmem:[#allocation3 + $0x120] sm:$0xff]
      %v3684 = vld [vmem:[#allocation3 + $0x128] sm:$0xff]
      %v3685 = vld [vmem:[#allocation3 + $0x130] sm:$0xff]
      %v3686 = vld [vmem:[#allocation3 + $0x138] sm:$0xff]
      %v3687 = vld [vmem:[#allocation3 + $0x140] sm:$0xff]
      %v3688 = vld [vmem:[#allocation3 + $0x148] sm:$0xff]
      %v3689 = vld [vmem:[#allocation3 + $0x150] sm:$0xff]
      %v3690 = vld [vmem:[#allocation3 + $0x158] sm:$0xff]
      %v3691 = vld [vmem:[#allocation3 + $0x160] sm:$0xff]
      %v3692 = vld [vmem:[#allocation3 + $0x168] sm:$0xff]
      %v3693 = vld [vmem:[#allocation3 + $0x170] sm:$0xff]
      %v3694 = vld [vmem:[#allocation3 + $0x178] sm:$0xff]
      %v3695 = vld [vmem:[#allocation3 + $0x180] sm:$0xff]
      %v3696 = vld [vmem:[#allocation3 + $0x188] sm:$0xff]
      %v3697 = vld [vmem:[#allocation3 + $0x190] sm:$0xff]
      %v3698 = vld [vmem:[#allocation3 + $0x198] sm:$0xff]
      %v3699 = vld [vmem:[#allocation3 + $0x1a0] sm:$0xff]
      %v3700 = vld [vmem:[#allocation3 + $0x1a8] sm:$0xff]
      %v3701 = vld [vmem:[#allocation3 + $0x1b0] sm:$0xff]
      %v3702 = vld [vmem:[#allocation3 + $0x1b8] sm:$0xff]
      %v3703 = vld [vmem:[#allocation3 + $0x1c0] sm:$0xff]
      %v3704 = vld [vmem:[#allocation3 + $0x1c8] sm:$0xff]
      %v3705 = vld [vmem:[#allocation3 + $0x1d0] sm:$0xff]
      %v3706 = vld [vmem:[#allocation3 + $0x1d8] sm:$0xff]
      %v3707 = vld [vmem:[#allocation3 + $0x1e0] sm:$0xff]
      %v3708 = vld [vmem:[#allocation3 + $0x1e8] sm:$0xff]
      %v3709 = vld [vmem:[#allocation3 + $0x1f0] sm:$0xff]
      %v3710 = vld [vmem:[#allocation3 + $0x1f8] sm:$0xff]
      %v3711 = vld [vmem:[#allocation3 + $0x200] sm:$0xff]
      %v3712 = vld [vmem:[#allocation3 + $0x208] sm:$0xff]
      %v3713 = vld [vmem:[#allocation3 + $0x210] sm:$0xff]
      %v3714 = vld [vmem:[#allocation3 + $0x218] sm:$0xff]
      %v3715 = vld [vmem:[#allocation3 + $0x220] sm:$0xff]
      %v3716 = vld [vmem:[#allocation3 + $0x228] sm:$0xff]
      %v3717 = vld [vmem:[#allocation3 + $0x230] sm:$0xff]
      %v3718 = vld [vmem:[#allocation3 + $0x238] sm:$0xff]
      %v3719 = vld [vmem:[#allocation3 + $0x240] sm:$0xff]
      %v3720 = vld [vmem:[#allocation3 + $0x248] sm:$0xff]
      %v3721 = vld [vmem:[#allocation3 + $0x250] sm:$0xff]
      %v3722 = vld [vmem:[#allocation3 + $0x258] sm:$0xff]
      %v3723 = vld [vmem:[#allocation3 + $0x260] sm:$0xff]
      %v3724 = vld [vmem:[#allocation3 + $0x268] sm:$0xff]
      %v3725 = vld [vmem:[#allocation3 + $0x270] sm:$0xff]
      %v3726 = vld [vmem:[#allocation3 + $0x278] sm:$0xff]
      %v3727 = vld [vmem:[#allocation3 + $0x280] sm:$0xff]
      %v3728 = vld [vmem:[#allocation3 + $0x288] sm:$0xff]
      %v3729 = vld [vmem:[#allocation3 + $0x290] sm:$0xff]
      %v3730 = vld [vmem:[#allocation3 + $0x298] sm:$0xff]
      %v3731 = vld [vmem:[#allocation3 + $0x2a0] sm:$0xff]
      %v3732 = vld [vmem:[#allocation3 + $0x2a8] sm:$0xff]
      %v3733 = vld [vmem:[#allocation3 + $0x2b0] sm:$0xff]
      %v3734 = vld [vmem:[#allocation3 + $0x2b8] sm:$0xff]
      %v3735 = vld [vmem:[#allocation3 + $0x2c0] sm:$0xff]
      %v3736 = vld [vmem:[#allocation3 + $0x2c8] sm:$0xff]
      %v3737 = vld [vmem:[#allocation3 + $0x2d0] sm:$0xff]
      %v3738 = vld [vmem:[#allocation3 + $0x2d8] sm:$0xff]
      %v3739 = vld [vmem:[#allocation3 + $0x2e0] sm:$0xff]
      %v3740 = vld [vmem:[#allocation3 + $0x2e8] sm:$0xff]
      %v3741 = vld [vmem:[#allocation3 + $0x2f0] sm:$0xff]
      %v3742 = vld [vmem:[#allocation3 + $0x2f8] sm:$0xff]
      %v3743 = vld [vmem:[#allocation3 + $0x300] sm:$0xff]
      %v3744 = vld [vmem:[#allocation3 + $0x308] sm:$0xff]
      %v3745 = vld [vmem:[#allocation3 + $0x310] sm:$0xff]
      %v3746 = vld [vmem:[#allocation3 + $0x318] sm:$0xff]
      %v3747 = vld [vmem:[#allocation3 + $0x320] sm:$0xff]
      %v3748 = vld [vmem:[#allocation3 + $0x328] sm:$0xff]
      %v3749 = vld [vmem:[#allocation3 + $0x330] sm:$0xff]
      %v3750 = vld [vmem:[#allocation3 + $0x338] sm:$0xff]
      %v3751 = vld [vmem:[#allocation3 + $0x340] sm:$0xff]
      %v3752 = vld [vmem:[#allocation3 + $0x348] sm:$0xff]
      %v3753 = vld [vmem:[#allocation3 + $0x350] sm:$0xff]
      %v3754 = vld [vmem:[#allocation3 + $0x358] sm:$0xff]
      %v3755 = vld [vmem:[#allocation3 + $0x360] sm:$0xff]
      %v3756 = vld [vmem:[#allocation3 + $0x368] sm:$0xff]
      %v3757 = vld [vmem:[#allocation3 + $0x370] sm:$0xff]
      %v3758 = vld [vmem:[#allocation3 + $0x378] sm:$0xff]
      %v3759 = vld [vmem:[#allocation3 + $0x380] sm:$0xff]
      %v3760 = vld [vmem:[#allocation3 + $0x388] sm:$0xff]
      %v3761 = vld [vmem:[#allocation3 + $0x390] sm:$0xff]
      %v3762 = vld [vmem:[#allocation3 + $0x398] sm:$0xff]
      %v3763 = vld [vmem:[#allocation3 + $0x3a0] sm:$0xff]
      %v3764 = vld [vmem:[#allocation3 + $0x3a8] sm:$0xff]
      %v3765 = vld [vmem:[#allocation3 + $0x3b0] sm:$0xff]
      %v3766 = vld [vmem:[#allocation3 + $0x3b8] sm:$0xff]
      %v3767 = vld [vmem:[#allocation3 + $0x3c0] sm:$0xff]
      %v3768 = vld [vmem:[#allocation3 + $0x3c8] sm:$0xff]
      %v3769 = vld [vmem:[#allocation3 + $0x3d0] sm:$0xff]
      %v3770 = vld [vmem:[#allocation3 + $0x3d8] sm:$0xff]
      %v3771 = vld [vmem:[#allocation3 + $0x3e0] sm:$0xff]
      %v3772 = vld [vmem:[#allocation3 + $0x3e8] sm:$0xff]
      %v3773 = vld [vmem:[#allocation3 + $0x3f0] sm:$0xff]
      %v3774 = vld [vmem:[#allocation3 + $0x3f8] sm:$0xff]
      %v3775 = vld [vmem:[#allocation3 + $0x400] sm:$0xff]
      %v3776 = vld [vmem:[#allocation3 + $0x408] sm:$0xff]
      %v3777 = vld [vmem:[#allocation3 + $0x410] sm:$0xff]
      %v3778 = vld [vmem:[#allocation3 + $0x418] sm:$0xff]
      %v3779 = vld [vmem:[#allocation3 + $0x420] sm:$0xff]
      %v3780 = vld [vmem:[#allocation3 + $0x428] sm:$0xff]
      %v3781 = vld [vmem:[#allocation3 + $0x430] sm:$0xff]
      %v3782 = vld [vmem:[#allocation3 + $0x438] sm:$0xff]
      %v3783 = vld [vmem:[#allocation3 + $0x440] sm:$0xff]
      %v3784 = vld [vmem:[#allocation3 + $0x448] sm:$0xff]
      %v3785 = vld [vmem:[#allocation3 + $0x450] sm:$0xff]
      %v3786 = vld [vmem:[#allocation3 + $0x458] sm:$0xff]
      %v3787 = vld [vmem:[#allocation3 + $0x460] sm:$0xff]
      %v3788 = vld [vmem:[#allocation3 + $0x468] sm:$0xff]
      %v3789 = vld [vmem:[#allocation3 + $0x470] sm:$0xff]
      %v3790 = vld [vmem:[#allocation3 + $0x478] sm:$0xff]
      %v3791 = vld [vmem:[%s1] sm:$0xf]
      %v3792 = vld [vmem:[%s1 + $0x4] sm:$0xf]
      %v3793 = vld [vmem:[%s1 + $0x8] sm:$0xf]
      %v3794 = vld [vmem:[%s1 + $0xc] sm:$0xf]
      %v3795 = vld [vmem:[%s1 + $0x10] sm:$0xf]
      %v3796 = vld [vmem:[%s1 + $0x14] sm:$0xf]
      %v3797 = vld [vmem:[%s1 + $0x18] sm:$0xf]
      %v3798 = vld [vmem:[%s1 + $0x1c] sm:$0xf]
      %v3799 = vld [vmem:[%s1 + $0x20] sm:$0xf]
      %v3800 = vld [vmem:[%s1 + $0x24] sm:$0xf]
      %v3801 = vld [vmem:[%s1 + $0x28] sm:$0xf]
      %v3802 = vld [vmem:[%s1 + $0x2c] sm:$0xf]
      %v3803 = vld [vmem:[%s1 + $0x30] sm:$0xf]
      %v3804 = vld [vmem:[%s1 + $0x34] sm:$0xf]
      %v3805 = vld [vmem:[%s1 + $0x38] sm:$0xf]
      %v3806 = vld [vmem:[%s1 + $0x3c] sm:$0xf]
      %v3807 = vld [vmem:[%s1 + $0x40] sm:$0xf]
      %v3808 = vld [vmem:[%s1 + $0x44] sm:$0xf]
      %v3809 = vld [vmem:[%s1 + $0x48] sm:$0xf]
      %v3810 = vld [vmem:[%s1 + $0x4c] sm:$0xf]
      %v3811 = vld [vmem:[%s1 + $0x50] sm:$0xf]
      %v3812 = vld [vmem:[%s1 + $0x54] sm:$0xf]
      %v3813 = vld [vmem:[%s1 + $0x58] sm:$0xf]
      %v3814 = vld [vmem:[%s1 + $0x5c] sm:$0xf]
      %v3815 = vld [vmem:[%s1 + $0x60] sm:$0xf]
      %v3816 = vld [vmem:[%s1 + $0x64] sm:$0xf]
      %v3817 = vld [vmem:[%s1 + $0x68] sm:$0xf]
      %v3818 = vld [vmem:[%s1 + $0x6c] sm:$0xf]
      %v3819 = vld [vmem:[%s1 + $0x70] sm:$0xf]
      %v3820 = vld [vmem:[%s1 + $0x74] sm:$0xf]
      %v3821 = vld [vmem:[%s1 + $0x78] sm:$0xf]
      %v3822 = vld [vmem:[%s1 + $0x7c] sm:$0xf]
      %v3823 = vld [vmem:[%s1 + $0x80] sm:$0xf]
      %v3824 = vld [vmem:[%s1 + $0x84] sm:$0xf]
      %v3825 = vld [vmem:[%s1 + $0x88] sm:$0xf]
      %v3826 = vld [vmem:[%s1 + $0x8c] sm:$0xf]
      %v3827 = vld [vmem:[%s1 + $0x90] sm:$0xf]
      %v3828 = vld [vmem:[%s1 + $0x94] sm:$0xf]
      %v3829 = vld [vmem:[%s1 + $0x98] sm:$0xf]
      %v3830 = vld [vmem:[%s1 + $0x9c] sm:$0xf]
      %v3831 = vld [vmem:[%s1 + $0xa0] sm:$0xf]
      %v3832 = vld [vmem:[%s1 + $0xa4] sm:$0xf]
      %v3833 = vld [vmem:[%s1 + $0xa8] sm:$0xf]
      %v3834 = vld [vmem:[%s1 + $0xac] sm:$0xf]
      %v3835 = vld [vmem:[%s1 + $0xb0] sm:$0xf]
      %v3836 = vld [vmem:[%s1 + $0xb4] sm:$0xf]
      %v3837 = vld [vmem:[%s1 + $0xb8] sm:$0xf]
      %v3838 = vld [vmem:[%s1 + $0xbc] sm:$0xf]
      %v3839 = vld [vmem:[%s1 + $0xc0] sm:$0xf]
      %v3840 = vld [vmem:[%s1 + $0xc4] sm:$0xf]
      %v3841 = vld [vmem:[%s1 + $0xc8] sm:$0xf]
      %v3842 = vld [vmem:[%s1 + $0xcc] sm:$0xf]
      %v3843 = vld [vmem:[%s1 + $0xd0] sm:$0xf]
      %v3844 = vld [vmem:[%s1 + $0xd4] sm:$0xf]
      %v3845 = vld [vmem:[%s1 + $0xd8] sm:$0xf]
      %v3846 = vld [vmem:[%s1 + $0xdc] sm:$0xf]
      %v3847 = vld [vmem:[%s1 + $0xe0] sm:$0xf]
      %v3848 = vld [vmem:[%s1 + $0xe4] sm:$0xf]
      %v3849 = vld [vmem:[%s1 + $0xe8] sm:$0xf]
      %v3850 = vld [vmem:[%s1 + $0xec] sm:$0xf]
      %v3851 = vld [vmem:[%s1 + $0xf0] sm:$0xf]
      %v3852 = vld [vmem:[%s1 + $0xf4] sm:$0xf]
      %v3853 = vld [vmem:[%s1 + $0xf8] sm:$0xf]
      %v3854 = vld [vmem:[%s1 + $0xfc] sm:$0xf]
      %v3855 = vld [vmem:[%s1 + $0x100] sm:$0xf]
      %v3856 = vld [vmem:[%s1 + $0x104] sm:$0xf]
      %v3857 = vld [vmem:[%s1 + $0x108] sm:$0xf]
      %v3858 = vld [vmem:[%s1 + $0x10c] sm:$0xf]
      %v3859 = vld [vmem:[%s1 + $0x110] sm:$0xf]
      %v3860 = vld [vmem:[%s1 + $0x114] sm:$0xf]
      %v3861 = vld [vmem:[%s1 + $0x118] sm:$0xf]
      %v3862 = vld [vmem:[%s1 + $0x11c] sm:$0xf]
      %v3863 = vld [vmem:[%s1 + $0x120] sm:$0xf]
      %v3864 = vld [vmem:[%s1 + $0x124] sm:$0xf]
      %v3865 = vld [vmem:[%s1 + $0x128] sm:$0xf]
      %v3866 = vld [vmem:[%s1 + $0x12c] sm:$0xf]
      %v3867 = vld [vmem:[%s1 + $0x130] sm:$0xf]
      %v3868 = vld [vmem:[%s1 + $0x134] sm:$0xf]
      %v3869 = vld [vmem:[%s1 + $0x138] sm:$0xf]
      %v3870 = vld [vmem:[%s1 + $0x13c] sm:$0xf]
      %v3871 = vld [vmem:[%s1 + $0x140] sm:$0xf]
      %v3872 = vld [vmem:[%s1 + $0x144] sm:$0xf]
      %v3873 = vld [vmem:[%s1 + $0x148] sm:$0xf]
      %v3874 = vld [vmem:[%s1 + $0x14c] sm:$0xf]
      %v3875 = vld [vmem:[%s1 + $0x150] sm:$0xf]
      %v3876 = vld [vmem:[%s1 + $0x154] sm:$0xf]
      %v3877 = vld [vmem:[%s1 + $0x158] sm:$0xf]
      %v3878 = vld [vmem:[%s1 + $0x15c] sm:$0xf]
      %v3879 = vld [vmem:[%s1 + $0x160] sm:$0xf]
      %v3880 = vld [vmem:[%s1 + $0x164] sm:$0xf]
      %v3881 = vld [vmem:[%s1 + $0x168] sm:$0xf]
      %v3882 = vld [vmem:[%s1 + $0x16c] sm:$0xf]
      %v3883 = vld [vmem:[%s1 + $0x170] sm:$0xf]
      %v3884 = vld [vmem:[%s1 + $0x174] sm:$0xf]
      %v3885 = vld [vmem:[%s1 + $0x178] sm:$0xf]
      %v3886 = vld [vmem:[%s1 + $0x17c] sm:$0xf]
      %v3887 = vld [vmem:[%s1 + $0x180] sm:$0xf]
      %v3888 = vld [vmem:[%s1 + $0x184] sm:$0xf]
      %v3889 = vld [vmem:[%s1 + $0x188] sm:$0xf]
      %v3890 = vld [vmem:[%s1 + $0x18c] sm:$0xf]
      %v3891 = vld [vmem:[%s1 + $0x190] sm:$0xf]
      %v3892 = vld [vmem:[%s1 + $0x194] sm:$0xf]
      %v3893 = vld [vmem:[%s1 + $0x198] sm:$0xf]
      %v3894 = vld [vmem:[%s1 + $0x19c] sm:$0xf]
      %v3895 = vld [vmem:[%s1 + $0x1a0] sm:$0xf]
      %v3896 = vld [vmem:[%s1 + $0x1a4] sm:$0xf]
      %v3897 = vld [vmem:[%s1 + $0x1a8] sm:$0xf]
      %v3898 = vld [vmem:[%s1 + $0x1ac] sm:$0xf]
      %v3899 = vld [vmem:[%s1 + $0x1b0] sm:$0xf]
      %v3900 = vld [vmem:[%s1 + $0x1b4] sm:$0xf]
      %v3901 = vld [vmem:[%s1 + $0x1b8] sm:$0xf]
      %v3902 = vld [vmem:[%s1 + $0x1bc] sm:$0xf]
      %v3903 = vld [vmem:[%s1 + $0x1c0] sm:$0xf]
      %v3904 = vld [vmem:[%s1 + $0x1c4] sm:$0xf]
      %v3905 = vld [vmem:[%s1 + $0x1c8] sm:$0xf]
      %v3906 = vld [vmem:[%s1 + $0x1cc] sm:$0xf]
      %v3907 = vld [vmem:[%s1 + $0x1d0] sm:$0xf]
      %v3908 = vld [vmem:[%s1 + $0x1d4] sm:$0xf]
      %v3909 = vld [vmem:[%s1 + $0x1d8] sm:$0xf]
      %v3910 = vld [vmem:[%s1 + $0x1dc] sm:$0xf]
      %v3911 = vld [vmem:[%s1 + $0x1e0] sm:$0xf]
      %v3912 = vld [vmem:[%s1 + $0x1e4] sm:$0xf]
      %v3913 = vld [vmem:[%s1 + $0x1e8] sm:$0xf]
      %v3914 = vld [vmem:[%s1 + $0x1ec] sm:$0xf]
      %v3915 = vld [vmem:[%s1 + $0x1f0] sm:$0xf]
      %v3916 = vld [vmem:[%s1 + $0x1f4] sm:$0xf]
      %v3917 = vld [vmem:[%s1 + $0x1f8] sm:$0xf]
      %v3918 = vld [vmem:[%s1 + $0x1fc] sm:$0xf]
      %v3919 = vld [vmem:[%s1 + $0x200] sm:$0xf]
      %v3920 = vld [vmem:[%s1 + $0x204] sm:$0xf]
      %v3921 = vld [vmem:[%s1 + $0x208] sm:$0xf]
      %v3922 = vld [vmem:[%s1 + $0x20c] sm:$0xf]
      %v3923 = vld [vmem:[%s1 + $0x210] sm:$0xf]
      %v3924 = vld [vmem:[%s1 + $0x214] sm:$0xf]
      %v3925 = vld [vmem:[%s1 + $0x218] sm:$0xf]
      %v3926 = vld [vmem:[%s1 + $0x21c] sm:$0xf]
      %v3927 = vld [vmem:[%s1 + $0x220] sm:$0xf]
      %v3928 = vld [vmem:[%s1 + $0x224] sm:$0xf]
      %v3929 = vld [vmem:[%s1 + $0x228] sm:$0xf]
      %v3930 = vld [vmem:[%s1 + $0x22c] sm:$0xf]
      %v3931 = vld [vmem:[%s1 + $0x230] sm:$0xf]
      %v3932 = vld [vmem:[%s1 + $0x234] sm:$0xf]
      %v3933 = vld [vmem:[%s1 + $0x238] sm:$0xf]
      %v3934 = vld [vmem:[%s1 + $0x23c] sm:$0xf]
      %v4079 = vunpack.c.l.b16 %v3791
      %v4080 = vunpack.c.l.b16 %v3792
      %v4081 = vunpack.c.l.b16 %v3793
      %v4082 = vunpack.c.l.b16 %v3794
      %v4083 = vunpack.c.l.b16 %v3795
      %v4084 = vunpack.c.l.b16 %v3796
      %v4085 = vunpack.c.l.b16 %v3797
      %v4086 = vunpack.c.l.b16 %v3798
      %v4087 = vunpack.c.l.b16 %v3799
      %v4088 = vunpack.c.l.b16 %v3800
      %v4089 = vunpack.c.l.b16 %v3801
      %v4090 = vunpack.c.l.b16 %v3802
      %v4091 = vunpack.c.l.b16 %v3803
      %v4092 = vunpack.c.l.b16 %v3804
      %v4093 = vunpack.c.l.b16 %v3805
      %v4094 = vunpack.c.l.b16 %v3806
      %v4095 = vunpack.c.l.b16 %v3807
      %v4096 = vunpack.c.l.b16 %v3808
      %v4097 = vunpack.c.l.b16 %v3809
      %v4098 = vunpack.c.l.b16 %v3810
      %v4099 = vunpack.c.l.b16 %v3811
      %v4100 = vunpack.c.l.b16 %v3812
      %v4101 = vunpack.c.l.b16 %v3813
      %v4102 = vunpack.c.l.b16 %v3814
      %v4103 = vunpack.c.l.b16 %v3815
      %v4104 = vunpack.c.l.b16 %v3816
      %v4105 = vunpack.c.l.b16 %v3817
      %v4106 = vunpack.c.l.b16 %v3818
      %v4107 = vunpack.c.l.b16 %v3819
      %v4108 = vunpack.c.l.b16 %v3820
      %v4109 = vunpack.c.l.b16 %v3821
      %v4110 = vunpack.c.l.b16 %v3822
      %v4111 = vunpack.c.l.b16 %v3823
      %v4112 = vunpack.c.l.b16 %v3824
      %v4113 = vunpack.c.l.b16 %v3825
      %v4114 = vunpack.c.l.b16 %v3826
      %v4115 = vunpack.c.l.b16 %v3827
      %v4116 = vunpack.c.l.b16 %v3828
      %v4117 = vunpack.c.l.b16 %v3829
      %v4118 = vunpack.c.l.b16 %v3830
      %v4119 = vunpack.c.l.b16 %v3831
      %v4120 = vunpack.c.l.b16 %v3832
      %v4121 = vunpack.c.l.b16 %v3833
      %v4122 = vunpack.c.l.b16 %v3834
      %v4123 = vunpack.c.l.b16 %v3835
      %v4124 = vunpack.c.l.b16 %v3836
      %v4125 = vunpack.c.l.b16 %v3837
      %v4126 = vunpack.c.l.b16 %v3838
      %v4127 = vunpack.c.l.b16 %v3839
      %v4128 = vunpack.c.l.b16 %v3840
      %v4129 = vunpack.c.l.b16 %v3841
      %v4130 = vunpack.c.l.b16 %v3842
      %v4131 = vunpack.c.l.b16 %v3843
      %v4132 = vunpack.c.l.b16 %v3844
      %v4133 = vunpack.c.l.b16 %v3845
      %v4134 = vunpack.c.l.b16 %v3846
      %v4135 = vunpack.c.l.b16 %v3847
      %v4136 = vunpack.c.l.b16 %v3848
      %v4137 = vunpack.c.l.b16 %v3849
      %v4138 = vunpack.c.l.b16 %v3850
      %v4139 = vunpack.c.l.b16 %v3851
      %v4140 = vunpack.c.l.b16 %v3852
      %v4141 = vunpack.c.l.b16 %v3853
      %v4142 = vunpack.c.l.b16 %v3854
      %v4143 = vunpack.c.l.b16 %v3855
      %v4144 = vunpack.c.l.b16 %v3856
      %v4145 = vunpack.c.l.b16 %v3857
      %v4146 = vunpack.c.l.b16 %v3858
      %v4147 = vunpack.c.l.b16 %v3859
      %v4148 = vunpack.c.l.b16 %v3860
      %v4149 = vunpack.c.l.b16 %v3861
      %v4150 = vunpack.c.l.b16 %v3862
      %v4151 = vunpack.c.l.b16 %v3863
      %v4152 = vunpack.c.l.b16 %v3864
      %v4153 = vunpack.c.l.b16 %v3865
      %v4154 = vunpack.c.l.b16 %v3866
      %v4155 = vunpack.c.l.b16 %v3867
      %v4156 = vunpack.c.l.b16 %v3868
      %v4157 = vunpack.c.l.b16 %v3869
      %v4158 = vunpack.c.l.b16 %v3870
      %v4159 = vunpack.c.l.b16 %v3871
      %v4160 = vunpack.c.l.b16 %v3872
      %v4161 = vunpack.c.l.b16 %v3873
      %v4162 = vunpack.c.l.b16 %v3874
      %v4163 = vunpack.c.l.b16 %v3875
      %v4164 = vunpack.c.l.b16 %v3876
      %v4165 = vunpack.c.l.b16 %v3877
      %v4166 = vunpack.c.l.b16 %v3878
      %v4167 = vunpack.c.l.b16 %v3879
      %v4168 = vunpack.c.l.b16 %v3880
      %v4169 = vunpack.c.l.b16 %v3881
      %v4170 = vunpack.c.l.b16 %v3882
      %v4171 = vunpack.c.l.b16 %v3883
      %v4172 = vunpack.c.l.b16 %v3884
      %v4173 = vunpack.c.l.b16 %v3885
      %v4174 = vunpack.c.l.b16 %v3886
      %v4175 = vunpack.c.l.b16 %v3887
      %v4176 = vunpack.c.l.b16 %v3888
      %v4177 = vunpack.c.l.b16 %v3889
      %v4178 = vunpack.c.l.b16 %v3890
      %v4179 = vunpack.c.l.b16 %v3891
      %v4180 = vunpack.c.l.b16 %v3892
      %v4181 = vunpack.c.l.b16 %v3893
      %v4182 = vunpack.c.l.b16 %v3894
      %v4183 = vunpack.c.l.b16 %v3895
      %v4184 = vunpack.c.l.b16 %v3896
      %v4185 = vunpack.c.l.b16 %v3897
      %v4186 = vunpack.c.l.b16 %v3898
      %v4187 = vunpack.c.l.b16 %v3899
      %v4188 = vunpack.c.l.b16 %v3900
      %v4189 = vunpack.c.l.b16 %v3901
      %v4190 = vunpack.c.l.b16 %v3902
      %v4191 = vunpack.c.l.b16 %v3903
      %v4192 = vunpack.c.l.b16 %v3904
      %v4193 = vunpack.c.l.b16 %v3905
      %v4194 = vunpack.c.l.b16 %v3906
      %v4195 = vunpack.c.l.b16 %v3907
      %v4196 = vunpack.c.l.b16 %v3908
      %v4197 = vunpack.c.l.b16 %v3909
      %v4198 = vunpack.c.l.b16 %v3910
      %v4199 = vunpack.c.l.b16 %v3911
      %v4200 = vunpack.c.l.b16 %v3912
      %v4201 = vunpack.c.l.b16 %v3913
      %v4202 = vunpack.c.l.b16 %v3914
      %v4203 = vunpack.c.l.b16 %v3915
      %v4204 = vunpack.c.l.b16 %v3916
      %v4205 = vunpack.c.l.b16 %v3917
      %v4206 = vunpack.c.l.b16 %v3918
      %v4207 = vunpack.c.l.b16 %v3919
      %v4208 = vunpack.c.l.b16 %v3920
      %v4209 = vunpack.c.l.b16 %v3921
      %v4210 = vunpack.c.l.b16 %v3922
      %v4211 = vunpack.c.l.b16 %v3923
      %v4212 = vunpack.c.l.b16 %v3924
      %v4213 = vunpack.c.l.b16 %v3925
      %v4214 = vunpack.c.l.b16 %v3926
      %v4215 = vunpack.c.l.b16 %v3927
      %v4216 = vunpack.c.l.b16 %v3928
      %v4217 = vunpack.c.l.b16 %v3929
      %v4218 = vunpack.c.l.b16 %v3930
      %v4219 = vunpack.c.l.b16 %v3931
      %v4220 = vunpack.c.l.b16 %v3932
      %v4221 = vunpack.c.l.b16 %v3933
      %v4222 = vunpack.c.l.b16 %v3934
      %v4223 = vpack.c.b16 %v4080, %v4079
      %v4224 = vpack.c.b16 %v4082, %v4081
      %v4225 = vpack.c.b16 %v4084, %v4083
      %v4226 = vpack.c.b16 %v4086, %v4085
      %v4227 = vpack.c.b16 %v4088, %v4087
      %v4228 = vpack.c.b16 %v4090, %v4089
      %v4229 = vpack.c.b16 %v4092, %v4091
      %v4230 = vpack.c.b16 %v4094, %v4093
      %v4231 = vpack.c.b16 %v4096, %v4095
      %v4232 = vpack.c.b16 %v4098, %v4097
      %v4233 = vpack.c.b16 %v4100, %v4099
      %v4234 = vpack.c.b16 %v4102, %v4101
      %v4235 = vpack.c.b16 %v4104, %v4103
      %v4236 = vpack.c.b16 %v4106, %v4105
      %v4237 = vpack.c.b16 %v4108, %v4107
      %v4238 = vpack.c.b16 %v4110, %v4109
      %v4239 = vpack.c.b16 %v4112, %v4111
      %v4240 = vpack.c.b16 %v4114, %v4113
      %v4241 = vpack.c.b16 %v4116, %v4115
      %v4242 = vpack.c.b16 %v4118, %v4117
      %v4243 = vpack.c.b16 %v4120, %v4119
      %v4244 = vpack.c.b16 %v4122, %v4121
      %v4245 = vpack.c.b16 %v4124, %v4123
      %v4246 = vpack.c.b16 %v4126, %v4125
      %v4247 = vpack.c.b16 %v4128, %v4127
      %v4248 = vpack.c.b16 %v4130, %v4129
      %v4249 = vpack.c.b16 %v4132, %v4131
      %v4250 = vpack.c.b16 %v4134, %v4133
      %v4251 = vpack.c.b16 %v4136, %v4135
      %v4252 = vpack.c.b16 %v4138, %v4137
      %v4253 = vpack.c.b16 %v4140, %v4139
      %v4254 = vpack.c.b16 %v4142, %v4141
      %v4255 = vpack.c.b16 %v4144, %v4143
      %v4256 = vpack.c.b16 %v4146, %v4145
      %v4257 = vpack.c.b16 %v4148, %v4147
      %v4258 = vpack.c.b16 %v4150, %v4149
      %v4259 = vpack.c.b16 %v4152, %v4151
      %v4260 = vpack.c.b16 %v4154, %v4153
      %v4261 = vpack.c.b16 %v4156, %v4155
      %v4262 = vpack.c.b16 %v4158, %v4157
      %v4263 = vpack.c.b16 %v4160, %v4159
      %v4264 = vpack.c.b16 %v4162, %v4161
      %v4265 = vpack.c.b16 %v4164, %v4163
      %v4266 = vpack.c.b16 %v4166, %v4165
      %v4267 = vpack.c.b16 %v4168, %v4167
      %v4268 = vpack.c.b16 %v4170, %v4169
      %v4269 = vpack.c.b16 %v4172, %v4171
      %v4270 = vpack.c.b16 %v4174, %v4173
      %v4271 = vpack.c.b16 %v4176, %v4175
      %v4272 = vpack.c.b16 %v4178, %v4177
      %v4273 = vpack.c.b16 %v4180, %v4179
      %v4274 = vpack.c.b16 %v4182, %v4181
      %v4275 = vpack.c.b16 %v4184, %v4183
      %v4276 = vpack.c.b16 %v4186, %v4185
      %v4277 = vpack.c.b16 %v4188, %v4187
      %v4278 = vpack.c.b16 %v4190, %v4189
      %v4279 = vpack.c.b16 %v4192, %v4191
      %v4280 = vpack.c.b16 %v4194, %v4193
      %v4281 = vpack.c.b16 %v4196, %v4195
      %v4282 = vpack.c.b16 %v4198, %v4197
      %v4283 = vpack.c.b16 %v4200, %v4199
      %v4284 = vpack.c.b16 %v4202, %v4201
      %v4285 = vpack.c.b16 %v4204, %v4203
      %v4286 = vpack.c.b16 %v4206, %v4205
      %v4287 = vpack.c.b16 %v4208, %v4207
      %v4288 = vpack.c.b16 %v4210, %v4209
      %v4289 = vpack.c.b16 %v4212, %v4211
      %v4290 = vpack.c.b16 %v4214, %v4213
      %v4291 = vpack.c.b16 %v4216, %v4215
      %v4292 = vpack.c.b16 %v4218, %v4217
      %v4293 = vpack.c.b16 %v4220, %v4219
      %v4294 = vpack.c.b16 %v4222, %v4221
      %4367 = vmatprep.subr.bf16.mxu0 0
      %4368 = vmatpush1.bf16.msra.mxu0 %v4223
      %4369 = vmatprep.subr.bf16.mxu0 0
      %4370 = vmatpush1.bf16.msra.mxu0 %v4224
      %4371 = vmatprep.subr.bf16.mxu0 0
      %4372 = vmatpush1.bf16.msra.mxu0 %v4225
      %4373 = vmatprep.subr.bf16.mxu0 0
      %4374 = vmatpush1.bf16.msra.mxu0 %v4226
      %4375 = vmatprep.subr.bf16.mxu0 0
      %4376 = vmatpush1.bf16.msra.mxu0 %v4227
      %4377 = vmatprep.subr.bf16.mxu0 0
      %4378 = vmatpush1.bf16.msra.mxu0 %v4228
      %4379 = vmatprep.subr.bf16.mxu0 0
      %4380 = vmatpush1.bf16.msra.mxu0 %v4229
      %4381 = vmatprep.subr.bf16.mxu0 0
      %4382 = vmatpush1.bf16.msra.mxu0 %v4230
      %4383 = vmatprep.subr.bf16.mxu0 0
      %4384 = vmatpush1.bf16.msra.mxu0 %v4231
      %4385 = vmatprep.subr.bf16.mxu0 0
      %4386 = vmatpush1.bf16.msra.mxu0 %v4232
      %4387 = vmatprep.subr.bf16.mxu0 0
      %4388 = vmatpush1.bf16.msra.mxu0 %v4233
      %4389 = vmatprep.subr.bf16.mxu0 0
      %4390 = vmatpush1.bf16.msra.mxu0 %v4234
      %4391 = vmatprep.subr.bf16.mxu0 0
      %4392 = vmatpush1.bf16.msra.mxu0 %v4235
      %4393 = vmatprep.subr.bf16.mxu0 0
      %4394 = vmatpush1.bf16.msra.mxu0 %v4236
      %4395 = vmatprep.subr.bf16.mxu0 0
      %4396 = vmatpush1.bf16.msra.mxu0 %v4237
      %4397 = vmatprep.subr.bf16.mxu0 0
      %4398 = vmatpush1.bf16.msra.mxu0 %v4238
      %4399 = vmatprep.mubr.bf16.mxu0 %v3648
      %4400 = vmatmul.mubr.bf16.gmra.mrb[0].mxu0 %v3647
      %v4401 = vpop.f32.mrb[0].mxu0
      %v4402 = vadd.f32 0.0, %v4401
      %v4403 = vpop.f32.mrb[0].mxu0
      %v4404 = vpop.f32.mrb[0].mxu0
      %v4405 = vadd.f32 0.0, %v4404
      %v4406 = vpop.f32.mrb[0].mxu0
      %4407 = vmatprep.mubr.bf16.mxu0 %v3657
      %4408 = vmatmul.mubr.bf16.gmra.mrb[0].mxu0 %v3656
      %v4409 = vpop.f32.mrb[0].mxu0
      %v4410 = vadd.f32 0.0, %v4409
      %v4411 = vpop.f32.mrb[0].mxu0
      %v4412 = vpop.f32.mrb[0].mxu0
      %v4413 = vadd.f32 0.0, %v4412
      %v4414 = vpop.f32.mrb[0].mxu0
      %4415 = vmatprep.mubr.bf16.mxu0 %v3666
      %4416 = vmatmul.mubr.bf16.gmra.mrb[0].mxu0 %v3665
      %v4417 = vpop.f32.mrb[0].mxu0
      %v4418 = vadd.f32 0.0, %v4417
      %v4419 = vpop.f32.mrb[0].mxu0
      %v4420 = vpop.f32.mrb[0].mxu0
      %v4421 = vadd.f32 0.0, %v4420
      %v4422 = vpop.f32.mrb[0].mxu0
      %4423 = vmatprep.mubr.bf16.mxu0 %v3675
      %4424 = vmatmul.mubr.bf16.gmra.mrb[0].mxu0 %v3674
      %v4425 = vpop.f32.mrb[0].mxu0
      %v4426 = vadd.f32 0.0, %v4425
      %v4427 = vpop.f32.mrb[0].mxu0
      %v4428 = vpop.f32.mrb[0].mxu0
      %v4429 = vadd.f32 0.0, %v4428
      %v4430 = vpop.f32.mrb[0].mxu0
      %4431 = vmatprep.mubr.bf16.mxu0 %v3684
      %4432 = vmatmul.mubr.bf16.gmra.mrb[0].mxu0 %v3683
      %v4433 = vpop.f32.mrb[0].mxu0
      %v4434 = vadd.f32 0.0, %v4433
      %v4435 = vpop.f32.mrb[0].mxu0
      %v4436 = vpop.f32.mrb[0].mxu0
      %v4437 = vadd.f32 0.0, %v4436
      %v4438 = vpop.f32.mrb[0].mxu0
      %4439 = vmatprep.mubr.bf16.mxu0 %v3693
      %4440 = vmatmul.mubr.bf16.gmra.mrb[0].mxu0 %v3692
      %v4441 = vpop.f32.mrb[0].mxu0
      %v4442 = vadd.f32 0.0, %v4441
      %v4443 = vpop.f32.mrb[0].mxu0
      %v4444 = vpop.f32.mrb[0].mxu0
      %v4445 = vadd.f32 0.0, %v4444
      %v4446 = vpop.f32.mrb[0].mxu0
      %4447 = vmatprep.mubr.bf16.mxu0 %v3702
      %4448 = vmatmul.mubr.bf16.gmra.mrb[0].mxu0 %v3701
      %v4449 = vpop.f32.mrb[0].mxu0
      %v4450 = vadd.f32 0.0, %v4449
      %v4451 = vpop.f32.mrb[0].mxu0
      %v4452 = vpop.f32.mrb[0].mxu0
      %v4453 = vadd.f32 0.0, %v4452
      %v4454 = vpop.f32.mrb[0].mxu0
      %4455 = vmatprep.mubr.bf16.mxu0 %v3711
      %4456 = vmatmul.mubr.bf16.gmra.mrb[0].mxu0 %v3710
      %v4457 = vpop.f32.mrb[0].mxu0
      %v4458 = vadd.f32 0.0, %v4457
      %v4459 = vpop.f32.mrb[0].mxu0
      %v4460 = vpop.f32.mrb[0].mxu0
      %v4461 = vadd.f32 0.0, %v4460
      %v4462 = vpop.f32.mrb[0].mxu0
      %4463 = vmatprep.mubr.bf16.mxu0 %v3720
      %4464 = vmatmul.mubr.bf16.gmra.mrb[0].mxu0 %v3719
      %v4465 = vpop.f32.mrb[0].mxu0
      %v4466 = vadd.f32 0.0, %v4465
      %v4467 = vpop.f32.mrb[0].mxu0
      %v4468 = vpop.f32.mrb[0].mxu0
      %v4469 = vadd.f32 0.0, %v4468
      %v4470 = vpop.f32.mrb[0].mxu0
      %4471 = vmatprep.mubr.bf16.mxu0 %v3729
      %4472 = vmatmul.mubr.bf16.gmra.mrb[0].mxu0 %v3728
      %v4473 = vpop.f32.mrb[0].mxu0
      %v4474 = vadd.f32 0.0, %v4473
      %v4475 = vpop.f32.mrb[0].mxu0
      %v4476 = vpop.f32.mrb[0].mxu0
      %v4477 = vadd.f32 0.0, %v4476
      %v4478 = vpop.f32.mrb[0].mxu0
      %4479 = vmatprep.mubr.bf16.mxu0 %v3738
      %4480 = vmatmul.mubr.bf16.gmra.mrb[0].mxu0 %v3737
      %v4481 = vpop.f32.mrb[0].mxu0
      %v4482 = vadd.f32 0.0, %v4481
      %v4483 = vpop.f32.mrb[0].mxu0
      %v4484 = vpop.f32.mrb[0].mxu0
      %v4485 = vadd.f32 0.0, %v4484
      %v4486 = vpop.f32.mrb[0].mxu0
      %4487 = vmatprep.mubr.bf16.mxu0 %v3747
      %4488 = vmatmul.mubr.bf16.gmra.mrb[0].mxu0 %v3746
      %v4489 = vpop.f32.mrb[0].mxu0
      %v4490 = vadd.f32 0.0, %v4489
      %v4491 = vpop.f32.mrb[0].mxu0
      %v4492 = vpop.f32.mrb[0].mxu0
      %v4493 = vadd.f32 0.0, %v4492
      %v4494 = vpop.f32.mrb[0].mxu0
      %4495 = vmatprep.mubr.bf16.mxu0 %v3756
      %4496 = vmatmul.mubr.bf16.gmra.mrb[0].mxu0 %v3755
      %v4497 = vpop.f32.mrb[0].mxu0
      %v4498 = vadd.f32 0.0, %v4497
      %v4499 = vpop.f32.mrb[0].mxu0
      %v4500 = vpop.f32.mrb[0].mxu0
      %v4501 = vadd.f32 0.0, %v4500
      %v4502 = vpop.f32.mrb[0].mxu0
      %4503 = vmatprep.mubr.bf16.mxu0 %v3765
      %4504 = vmatmul.mubr.bf16.gmra.mrb[0].mxu0 %v3764
      %v4505 = vpop.f32.mrb[0].mxu0
      %v4506 = vadd.f32 0.0, %v4505
      %v4507 = vpop.f32.mrb[0].mxu0
      %v4508 = vpop.f32.mrb[0].mxu0
      %v4509 = vadd.f32 0.0, %v4508
      %v4510 = vpop.f32.mrb[0].mxu0
      %4511 = vmatprep.mubr.bf16.mxu0 %v3774
      %4512 = vmatmul.mubr.bf16.gmra.mrb[0].mxu0 %v3773
      %v4513 = vpop.f32.mrb[0].mxu0
      %v4514 = vadd.f32 0.0, %v4513
      %v4515 = vpop.f32.mrb[0].mxu0
      %v4516 = vpop.f32.mrb[0].mxu0
      %v4517 = vadd.f32 0.0, %v4516
      %v4518 = vpop.f32.mrb[0].mxu0
      %4519 = vmatprep.mubr.bf16.mxu0 %v3783
      %4520 = vmatmul.mubr.bf16.gmra.mrb[0].mxu0 %v3782
      %v4521 = vpop.f32.mrb[0].mxu0
      %v4522 = vadd.f32 0.0, %v4521
      %v4523 = vpop.f32.mrb[0].mxu0
      %v4524 = vpop.f32.mrb[0].mxu0
      %v4525 = vadd.f32 0.0, %v4524
      %v4526 = vpop.f32.mrb[0].mxu0
      %4527 = vdwg.mxu0
      %4528 = vmatprep.subr.bf16.mxu0 0
      %4529 = vmatpush1.bf16.msra.mxu0 %v4239
      %4530 = vmatprep.subr.bf16.mxu0 0
      %4531 = vmatpush1.bf16.msra.mxu0 %v4240
      %4532 = vmatprep.subr.bf16.mxu0 0
      %4533 = vmatpush1.bf16.msra.mxu0 %v4241
      %4534 = vmatprep.subr.bf16.mxu0 0
      %4535 = vmatpush1.bf16.msra.mxu0 %v4242
      %4536 = vmatprep.subr.bf16.mxu0 0
      %4537 = vmatpush1.bf16.msra.mxu0 %v4243
      %4538 = vmatprep.subr.bf16.mxu0 0
      %4539 = vmatpush1.bf16.msra.mxu0 %v4244
      %4540 = vmatprep.subr.bf16.mxu0 0
      %4541 = vmatpush1.bf16.msra.mxu0 %v4245
      %4542 = vmatprep.subr.bf16.mxu0 0
      %4543 = vmatpush1.bf16.msra.mxu0 %v4246
      %4544 = vmatprep.subr.bf16.mxu0 0
      %4545 = vmatpush1.bf16.msra.mxu0 %v4247
      %4546 = vmatprep.subr.bf16.mxu0 0
      %4547 = vmatpush1.bf16.msra.mxu0 %v4248
      %4548 = vmatprep.subr.bf16.mxu0 0
      %4549 = vmatpush1.bf16.msra.mxu0 %v4249
      %4550 = vmatprep.subr.bf16.mxu0 0
      %4551 = vmatpush1.bf16.msra.mxu0 %v4250
      %4552 = vmatprep.subr.bf16.mxu0 0
      %4553 = vmatpush1.bf16.msra.mxu0 %v4251
      %4554 = vmatprep.subr.bf16.mxu0 0
      %4555 = vmatpush1.bf16.msra.mxu0 %v4252
      %4556 = vmatprep.subr.bf16.mxu0 0
      %4557 = vmatpush1.bf16.msra.mxu0 %v4253
      %4558 = vmatprep.subr.bf16.mxu0 0
      %4559 = vmatpush1.bf16.msra.mxu0 %v4254
      %4560 = vmatprep.mubr.bf16.mxu0 %v3650
      %4561 = vmatmul.mubr.bf16.gmra.mrb[0].mxu0 %v3649
      %v4562 = vpop.f32.mrb[0].mxu0
      %v4563 = vadd.f32 %v4402, %v4562
      %v4564 = vpop.f32.mrb[0].mxu0
      %v4565 = vpop.f32.mrb[0].mxu0
      %v4566 = vadd.f32 %v4405, %v4565
      %v4567 = vpop.f32.mrb[0].mxu0
      %4568 = vmatprep.mubr.bf16.mxu0 %v3659
      %4569 = vmatmul.mubr.bf16.gmra.mrb[0].mxu0 %v3658
      %v4570 = vpop.f32.mrb[0].mxu0
      %v4571 = vadd.f32 %v4410, %v4570
      %v4572 = vpop.f32.mrb[0].mxu0
      %v4573 = vpop.f32.mrb[0].mxu0
      %v4574 = vadd.f32 %v4413, %v4573
      %v4575 = vpop.f32.mrb[0].mxu0
      %4576 = vmatprep.mubr.bf16.mxu0 %v3668
      %4577 = vmatmul.mubr.bf16.gmra.mrb[0].mxu0 %v3667
      %v4578 = vpop.f32.mrb[0].mxu0
      %v4579 = vadd.f32 %v4418, %v4578
      %v4580 = vpop.f32.mrb[0].mxu0
      %v4581 = vpop.f32.mrb[0].mxu0
      %v4582 = vadd.f32 %v4421, %v4581
      %v4583 = vpop.f32.mrb[0].mxu0
      %4584 = vmatprep.mubr.bf16.mxu0 %v3677
      %4585 = vmatmul.mubr.bf16.gmra.mrb[0].mxu0 %v3676
      %v4586 = vpop.f32.mrb[0].mxu0
      %v4587 = vadd.f32 %v4426, %v4586
      %v4588 = vpop.f32.mrb[0].mxu0
      %v4589 = vpop.f32.mrb[0].mxu0
      %v4590 = vadd.f32 %v4429, %v4589
      %v4591 = vpop.f32.mrb[0].mxu0
      %4592 = vmatprep.mubr.bf16.mxu0 %v3686
      %4593 = vmatmul.mubr.bf16.gmra.mrb[0].mxu0 %v3685
      %v4594 = vpop.f32.mrb[0].mxu0
      %v4595 = vadd.f32 %v4434, %v4594
      %v4596 = vpop.f32.mrb[0].mxu0
      %v4597 = vpop.f32.mrb[0].mxu0
      %v4598 = vadd.f32 %v4437, %v4597
      %v4599 = vpop.f32.mrb[0].mxu0
      %4600 = vmatprep.mubr.bf16.mxu0 %v3695
      %4601 = vmatmul.mubr.bf16.gmra.mrb[0].mxu0 %v3694
      %v4602 = vpop.f32.mrb[0].mxu0
      %v4603 = vadd.f32 %v4442, %v4602
      %v4604 = vpop.f32.mrb[0].mxu0
      %v4605 = vpop.f32.mrb[0].mxu0
      %v4606 = vadd.f32 %v4445, %v4605
      %v4607 = vpop.f32.mrb[0].mxu0
      %4608 = vmatprep.mubr.bf16.mxu0 %v3704
      %4609 = vmatmul.mubr.bf16.gmra.mrb[0].mxu0 %v3703
      %v4610 = vpop.f32.mrb[0].mxu0
      %v4611 = vadd.f32 %v4450, %v4610
      %v4612 = vpop.f32.mrb[0].mxu0
      %v4613 = vpop.f32.mrb[0].mxu0
      %v4614 = vadd.f32 %v4453, %v4613
      %v4615 = vpop.f32.mrb[0].mxu0
      %4616 = vmatprep.mubr.bf16.mxu0 %v3713
      %4617 = vmatmul.mubr.bf16.gmra.mrb[0].mxu0 %v3712
      %v4618 = vpop.f32.mrb[0].mxu0
      %v4619 = vadd.f32 %v4458, %v4618
      %v4620 = vpop.f32.mrb[0].mxu0
      %v4621 = vpop.f32.mrb[0].mxu0
      %v4622 = vadd.f32 %v4461, %v4621
      %v4623 = vpop.f32.mrb[0].mxu0
      %4624 = vmatprep.mubr.bf16.mxu0 %v3722
      %4625 = vmatmul.mubr.bf16.gmra.mrb[0].mxu0 %v3721
      %v4626 = vpop.f32.mrb[0].mxu0
      %v4627 = vadd.f32 %v4466, %v4626
      %v4628 = vpop.f32.mrb[0].mxu0
      %v4629 = vpop.f32.mrb[0].mxu0
      %v4630 = vadd.f32 %v4469, %v4629
      %v4631 = vpop.f32.mrb[0].mxu0
      %4632 = vmatprep.mubr.bf16.mxu0 %v3731
      %4633 = vmatmul.mubr.bf16.gmra.mrb[0].mxu0 %v3730
      %v4634 = vpop.f32.mrb[0].mxu0
      %v4635 = vadd.f32 %v4474, %v4634
      %v4636 = vpop.f32.mrb[0].mxu0
      %v4637 = vpop.f32.mrb[0].mxu0
      %v4638 = vadd.f32 %v4477, %v4637
      %v4639 = vpop.f32.mrb[0].mxu0
      %4640 = vmatprep.mubr.bf16.mxu0 %v3740
      %4641 = vmatmul.mubr.bf16.gmra.mrb[0].mxu0 %v3739
      %v4642 = vpop.f32.mrb[0].mxu0
      %v4643 = vadd.f32 %v4482, %v4642
      %v4644 = vpop.f32.mrb[0].mxu0
      %v4645 = vpop.f32.mrb[0].mxu0
      %v4646 = vadd.f32 %v4485, %v4645
      %v4647 = vpop.f32.mrb[0].mxu0
      %4648 = vmatprep.mubr.bf16.mxu0 %v3749
      %4649 = vmatmul.mubr.bf16.gmra.mrb[0].mxu0 %v3748
      %v4650 = vpop.f32.mrb[0].mxu0
      %v4651 = vadd.f32 %v4490, %v4650
      %v4652 = vpop.f32.mrb[0].mxu0
      %v4653 = vpop.f32.mrb[0].mxu0
      %v4654 = vadd.f32 %v4493, %v4653
      %v4655 = vpop.f32.mrb[0].mxu0
      %4656 = vmatprep.mubr.bf16.mxu0 %v3758
      %4657 = vmatmul.mubr.bf16.gmra.mrb[0].mxu0 %v3757
      %v4658 = vpop.f32.mrb[0].mxu0
      %v4659 = vadd.f32 %v4498, %v4658
      %v4660 = vpop.f32.mrb[0].mxu0
      %v4661 = vpop.f32.mrb[0].mxu0
      %v4662 = vadd.f32 %v4501, %v4661
      %v4663 = vpop.f32.mrb[0].mxu0
      %4664 = vmatprep.mubr.bf16.mxu0 %v3767
      %4665 = vmatmul.mubr.bf16.gmra.mrb[0].mxu0 %v3766
      %v4666 = vpop.f32.mrb[0].mxu0
      %v4667 = vadd.f32 %v4506, %v4666
      %v4668 = vpop.f32.mrb[0].mxu0
      %v4669 = vpop.f32.mrb[0].mxu0
      %v4670 = vadd.f32 %v4509, %v4669
      %v4671 = vpop.f32.mrb[0].mxu0
      %4672 = vmatprep.mubr.bf16.mxu0 %v3776
      %4673 = vmatmul.mubr.bf16.gmra.mrb[0].mxu0 %v3775
      %v4674 = vpop.f32.mrb[0].mxu0
      %v4675 = vadd.f32 %v4514, %v4674
      %v4676 = vpop.f32.mrb[0].mxu0
      %v4677 = vpop.f32.mrb[0].mxu0
      %v4678 = vadd.f32 %v4517, %v4677
      %v4679 = vpop.f32.mrb[0].mxu0
      %4680 = vmatprep.mubr.bf16.mxu0 %v3785
      %4681 = vmatmul.mubr.bf16.gmra.mrb[0].mxu0 %v3784
      %v4682 = vpop.f32.mrb[0].mxu0
      %v4683 = vadd.f32 %v4522, %v4682
      %v4684 = vpop.f32.mrb[0].mxu0
      %v4685 = vpop.f32.mrb[0].mxu0
      %v4686 = vadd.f32 %v4525, %v4685
      %v4687 = vpop.f32.mrb[0].mxu0
      %4688 = vdwg.mxu0
      %4689 = vmatprep.subr.bf16.mxu0 0
      %4690 = vmatpush1.bf16.msra.mxu0 %v4255
      %4691 = vmatprep.subr.bf16.mxu0 0
      %4692 = vmatpush1.bf16.msra.mxu0 %v4256
      %4693 = vmatprep.subr.bf16.mxu0 0
      %4694 = vmatpush1.bf16.msra.mxu0 %v4257
      %4695 = vmatprep.subr.bf16.mxu0 0
      %4696 = vmatpush1.bf16.msra.mxu0 %v4258
      %4697 = vmatprep.subr.bf16.mxu0 0
      %4698 = vmatpush1.bf16.msra.mxu0 %v4259
      %4699 = vmatprep.subr.bf16.mxu0 0
      %4700 = vmatpush1.bf16.msra.mxu0 %v4260
      %4701 = vmatprep.subr.bf16.mxu0 0
      %4702 = vmatpush1.bf16.msra.mxu0 %v4261
      %4703 = vmatprep.subr.bf16.mxu0 0
      %4704 = vmatpush1.bf16.msra.mxu0 %v4262
      %4705 = vmatprep.subr.bf16.mxu0 0
      %4706 = vmatpush1.bf16.msra.mxu0 %v4263
      %4707 = vmatprep.subr.bf16.mxu0 0
      %4708 = vmatpush1.bf16.msra.mxu0 %v4264
      %4709 = vmatprep.subr.bf16.mxu0 0
      %4710 = vmatpush1.bf16.msra.mxu0 %v4265
      %4711 = vmatprep.subr.bf16.mxu0 0
      %4712 = vmatpush1.bf16.msra.mxu0 %v4266
      %4713 = vmatprep.subr.bf16.mxu0 0
      %4714 = vmatpush1.bf16.msra.mxu0 %v4267
      %4715 = vmatprep.subr.bf16.mxu0 0
      %4716 = vmatpush1.bf16.msra.mxu0 %v4268
      %4717 = vmatprep.subr.bf16.mxu0 0
      %4718 = vmatpush1.bf16.msra.mxu0 %v4269
      %4719 = vmatprep.subr.bf16.mxu0 0
      %4720 = vmatpush1.bf16.msra.mxu0 %v4270
      %4721 = vmatprep.mubr.bf16.mxu0 %v3652
      %4722 = vmatmul.mubr.bf16.gmra.mrb[0].mxu0 %v3651
      %v4723 = vpop.f32.mrb[0].mxu0
      %v4724 = vadd.f32 %v4563, %v4723
      %v4725 = vpop.f32.mrb[0].mxu0
      %v4726 = vpop.f32.mrb[0].mxu0
      %v4727 = vadd.f32 %v4566, %v4726
      %v4728 = vpop.f32.mrb[0].mxu0
      %4729 = vmatprep.mubr.bf16.mxu0 %v3661
      %4730 = vmatmul.mubr.bf16.gmra.mrb[0].mxu0 %v3660
      %v4731 = vpop.f32.mrb[0].mxu0
      %v4732 = vadd.f32 %v4571, %v4731
      %v4733 = vpop.f32.mrb[0].mxu0
      %v4734 = vpop.f32.mrb[0].mxu0
      %v4735 = vadd.f32 %v4574, %v4734
      %v4736 = vpop.f32.mrb[0].mxu0
      %4737 = vmatprep.mubr.bf16.mxu0 %v3670
      %4738 = vmatmul.mubr.bf16.gmra.mrb[0].mxu0 %v3669
      %v4739 = vpop.f32.mrb[0].mxu0
      %v4740 = vadd.f32 %v4579, %v4739
      %v4741 = vpop.f32.mrb[0].mxu0
      %v4742 = vpop.f32.mrb[0].mxu0
      %v4743 = vadd.f32 %v4582, %v4742
      %v4744 = vpop.f32.mrb[0].mxu0
      %4745 = vmatprep.mubr.bf16.mxu0 %v3679
      %4746 = vmatmul.mubr.bf16.gmra.mrb[0].mxu0 %v3678
      %v4747 = vpop.f32.mrb[0].mxu0
      %v4748 = vadd.f32 %v4587, %v4747
      %v4749 = vpop.f32.mrb[0].mxu0
      %v4750 = vpop.f32.mrb[0].mxu0
      %v4751 = vadd.f32 %v4590, %v4750
      %v4752 = vpop.f32.mrb[0].mxu0
      %4753 = vmatprep.mubr.bf16.mxu0 %v3688
      %4754 = vmatmul.mubr.bf16.gmra.mrb[0].mxu0 %v3687
      %v4755 = vpop.f32.mrb[0].mxu0
      %v4756 = vadd.f32 %v4595, %v4755
      %v4757 = vpop.f32.mrb[0].mxu0
      %v4758 = vpop.f32.mrb[0].mxu0
      %v4759 = vadd.f32 %v4598, %v4758
      %v4760 = vpop.f32.mrb[0].mxu0
      %4761 = vmatprep.mubr.bf16.mxu0 %v3697
      %4762 = vmatmul.mubr.bf16.gmra.mrb[0].mxu0 %v3696
      %v4763 = vpop.f32.mrb[0].mxu0
      %v4764 = vadd.f32 %v4603, %v4763
      %v4765 = vpop.f32.mrb[0].mxu0
      %v4766 = vpop.f32.mrb[0].mxu0
      %v4767 = vadd.f32 %v4606, %v4766
      %v4768 = vpop.f32.mrb[0].mxu0
      %4769 = vmatprep.mubr.bf16.mxu0 %v3706
      %4770 = vmatmul.mubr.bf16.gmra.mrb[0].mxu0 %v3705
      %v4771 = vpop.f32.mrb[0].mxu0
      %v4772 = vadd.f32 %v4611, %v4771
      %v4773 = vpop.f32.mrb[0].mxu0
      %v4774 = vpop.f32.mrb[0].mxu0
      %v4775 = vadd.f32 %v4614, %v4774
      %v4776 = vpop.f32.mrb[0].mxu0
      %4777 = vmatprep.mubr.bf16.mxu0 %v3715
      %4778 = vmatmul.mubr.bf16.gmra.mrb[0].mxu0 %v3714
      %v4779 = vpop.f32.mrb[0].mxu0
      %v4780 = vadd.f32 %v4619, %v4779
      %v4781 = vpop.f32.mrb[0].mxu0
      %v4782 = vpop.f32.mrb[0].mxu0
      %v4783 = vadd.f32 %v4622, %v4782
      %v4784 = vpop.f32.mrb[0].mxu0
      %4785 = vmatprep.mubr.bf16.mxu0 %v3724
      %4786 = vmatmul.mubr.bf16.gmra.mrb[0].mxu0 %v3723
      %v4787 = vpop.f32.mrb[0].mxu0
      %v4788 = vadd.f32 %v4627, %v4787
      %v4789 = vpop.f32.mrb[0].mxu0
      %v4790 = vpop.f32.mrb[0].mxu0
      %v4791 = vadd.f32 %v4630, %v4790
      %v4792 = vpop.f32.mrb[0].mxu0
      %4793 = vmatprep.mubr.bf16.mxu0 %v3733
      %4794 = vmatmul.mubr.bf16.gmra.mrb[0].mxu0 %v3732
      %v4795 = vpop.f32.mrb[0].mxu0
      %v4796 = vadd.f32 %v4635, %v4795
      %v4797 = vpop.f32.mrb[0].mxu0
      %v4798 = vpop.f32.mrb[0].mxu0
      %v4799 = vadd.f32 %v4638, %v4798
      %v4800 = vpop.f32.mrb[0].mxu0
      %4801 = vmatprep.mubr.bf16.mxu0 %v3742
      %4802 = vmatmul.mubr.bf16.gmra.mrb[0].mxu0 %v3741
      %v4803 = vpop.f32.mrb[0].mxu0
      %v4804 = vadd.f32 %v4643, %v4803
      %v4805 = vpop.f32.mrb[0].mxu0
      %v4806 = vpop.f32.mrb[0].mxu0
      %v4807 = vadd.f32 %v4646, %v4806
      %v4808 = vpop.f32.mrb[0].mxu0
      %4809 = vmatprep.mubr.bf16.mxu0 %v3751
      %4810 = vmatmul.mubr.bf16.gmra.mrb[0].mxu0 %v3750
      %v4811 = vpop.f32.mrb[0].mxu0
      %v4812 = vadd.f32 %v4651, %v4811
      %v4813 = vpop.f32.mrb[0].mxu0
      %v4814 = vpop.f32.mrb[0].mxu0
      %v4815 = vadd.f32 %v4654, %v4814
      %v4816 = vpop.f32.mrb[0].mxu0
      %4817 = vmatprep.mubr.bf16.mxu0 %v3760
      %4818 = vmatmul.mubr.bf16.gmra.mrb[0].mxu0 %v3759
      %v4819 = vpop.f32.mrb[0].mxu0
      %v4820 = vadd.f32 %v4659, %v4819
      %v4821 = vpop.f32.mrb[0].mxu0
      %v4822 = vpop.f32.mrb[0].mxu0
      %v4823 = vadd.f32 %v4662, %v4822
      %v4824 = vpop.f32.mrb[0].mxu0
      %4825 = vmatprep.mubr.bf16.mxu0 %v3769
      %4826 = vmatmul.mubr.bf16.gmra.mrb[0].mxu0 %v3768
      %v4827 = vpop.f32.mrb[0].mxu0
      %v4828 = vadd.f32 %v4667, %v4827
      %v4829 = vpop.f32.mrb[0].mxu0
      %v4830 = vpop.f32.mrb[0].mxu0
      %v4831 = vadd.f32 %v4670, %v4830
      %v4832 = vpop.f32.mrb[0].mxu0
      %4833 = vmatprep.mubr.bf16.mxu0 %v3778
      %4834 = vmatmul.mubr.bf16.gmra.mrb[0].mxu0 %v3777
      %v4835 = vpop.f32.mrb[0].mxu0
      %v4836 = vadd.f32 %v4675, %v4835
      %v4837 = vpop.f32.mrb[0].mxu0
      %v4838 = vpop.f32.mrb[0].mxu0
      %v4839 = vadd.f32 %v4678, %v4838
      %v4840 = vpop.f32.mrb[0].mxu0
      %4841 = vmatprep.mubr.bf16.mxu0 %v3787
      %4842 = vmatmul.mubr.bf16.gmra.mrb[0].mxu0 %v3786
      %v4843 = vpop.f32.mrb[0].mxu0
      %v4844 = vadd.f32 %v4683, %v4843
      %v4845 = vpop.f32.mrb[0].mxu0
      %v4846 = vpop.f32.mrb[0].mxu0
      %v4847 = vadd.f32 %v4686, %v4846
      %v4848 = vpop.f32.mrb[0].mxu0
      %4849 = vdwg.mxu0
      %4850 = vmatprep.subr.bf16.mxu0 0
      %4851 = vmatpush1.bf16.msra.mxu0 %v4271
      %4852 = vmatprep.subr.bf16.mxu0 0
      %4853 = vmatpush1.bf16.msra.mxu0 %v4272
      %4854 = vmatprep.subr.bf16.mxu0 0
      %4855 = vmatpush1.bf16.msra.mxu0 %v4273
      %4856 = vmatprep.subr.bf16.mxu0 0
      %4857 = vmatpush1.bf16.msra.mxu0 %v4274
      %4858 = vmatprep.subr.bf16.mxu0 0
      %4859 = vmatpush1.bf16.msra.mxu0 %v4275
      %4860 = vmatprep.subr.bf16.mxu0 0
      %4861 = vmatpush1.bf16.msra.mxu0 %v4276
      %4862 = vmatprep.subr.bf16.mxu0 0
      %4863 = vmatpush1.bf16.msra.mxu0 %v4277
      %4864 = vmatprep.subr.bf16.mxu0 0
      %4865 = vmatpush1.bf16.msra.mxu0 %v4278
      %4866 = vmatprep.subr.bf16.mxu0 0
      %4867 = vmatpush1.bf16.msra.mxu0 %v4279
      %4868 = vmatprep.subr.bf16.mxu0 0
      %4869 = vmatpush1.bf16.msra.mxu0 %v4280
      %4870 = vmatprep.subr.bf16.mxu0 0
      %4871 = vmatpush1.bf16.msra.mxu0 %v4281
      %4872 = vmatprep.subr.bf16.mxu0 0
      %4873 = vmatpush1.bf16.msra.mxu0 %v4282
      %4874 = vmatprep.subr.bf16.mxu0 0
      %4875 = vmatpush1.bf16.msra.mxu0 %v4283
      %4876 = vmatprep.subr.bf16.mxu0 0
      %4877 = vmatpush1.bf16.msra.mxu0 %v4284
      %4878 = vmatprep.subr.bf16.mxu0 0
      %4879 = vmatpush1.bf16.msra.mxu0 %v4285
      %4880 = vmatprep.subr.bf16.mxu0 0
      %4881 = vmatpush1.bf16.msra.mxu0 %v4286
      %4882 = vmatprep.mubr.bf16.mxu0 %v3654
      %4883 = vmatmul.mubr.bf16.gmra.mrb[0].mxu0 %v3653
      %v4884 = vpop.f32.mrb[0].mxu0
      %v4885 = vadd.f32 %v4724, %v4884
      %v4886 = vpop.f32.mrb[0].mxu0
      %v4887 = vpop.f32.mrb[0].mxu0
      %v4888 = vadd.f32 %v4727, %v4887
      %v4889 = vpop.f32.mrb[0].mxu0
      %4890 = vmatprep.mubr.bf16.mxu0 %v3663
      %4891 = vmatmul.mubr.bf16.gmra.mrb[0].mxu0 %v3662
      %v4892 = vpop.f32.mrb[0].mxu0
      %v4893 = vadd.f32 %v4732, %v4892
      %v4894 = vpop.f32.mrb[0].mxu0
      %v4895 = vpop.f32.mrb[0].mxu0
      %v4896 = vadd.f32 %v4735, %v4895
      %v4897 = vpop.f32.mrb[0].mxu0
      %4898 = vmatprep.mubr.bf16.mxu0 %v3672
      %4899 = vmatmul.mubr.bf16.gmra.mrb[0].mxu0 %v3671
      %v4900 = vpop.f32.mrb[0].mxu0
      %v4901 = vadd.f32 %v4740, %v4900
      %v4902 = vpop.f32.mrb[0].mxu0
      %v4903 = vpop.f32.mrb[0].mxu0
      %v4904 = vadd.f32 %v4743, %v4903
      %v4905 = vpop.f32.mrb[0].mxu0
      %4906 = vmatprep.mubr.bf16.mxu0 %v3681
      %4907 = vmatmul.mubr.bf16.gmra.mrb[0].mxu0 %v3680
      %v4908 = vpop.f32.mrb[0].mxu0
      %v4909 = vadd.f32 %v4748, %v4908
      %v4910 = vpop.f32.mrb[0].mxu0
      %v4911 = vpop.f32.mrb[0].mxu0
      %v4912 = vadd.f32 %v4751, %v4911
      %v4913 = vpop.f32.mrb[0].mxu0
      %4914 = vmatprep.mubr.bf16.mxu0 %v3690
      %4915 = vmatmul.mubr.bf16.gmra.mrb[0].mxu0 %v3689
      %v4916 = vpop.f32.mrb[0].mxu0
      %v4917 = vadd.f32 %v4756, %v4916
      %v4918 = vpop.f32.mrb[0].mxu0
      %v4919 = vpop.f32.mrb[0].mxu0
      %v4920 = vadd.f32 %v4759, %v4919
      %v4921 = vpop.f32.mrb[0].mxu0
      %4922 = vmatprep.mubr.bf16.mxu0 %v3699
      %4923 = vmatmul.mubr.bf16.gmra.mrb[0].mxu0 %v3698
      %v4924 = vpop.f32.mrb[0].mxu0
      %v4925 = vadd.f32 %v4764, %v4924
      %v4926 = vpop.f32.mrb[0].mxu0
      %v4927 = vpop.f32.mrb[0].mxu0
      %v4928 = vadd.f32 %v4767, %v4927
      %v4929 = vpop.f32.mrb[0].mxu0
      %4930 = vmatprep.mubr.bf16.mxu0 %v3708
      %4931 = vmatmul.mubr.bf16.gmra.mrb[0].mxu0 %v3707
      %v4932 = vpop.f32.mrb[0].mxu0
      %v4933 = vadd.f32 %v4772, %v4932
      %v4934 = vpop.f32.mrb[0].mxu0
      %v4935 = vpop.f32.mrb[0].mxu0
      %v4936 = vadd.f32 %v4775, %v4935
      %v4937 = vpop.f32.mrb[0].mxu0
      %4938 = vmatprep.mubr.bf16.mxu0 %v3717
      %4939 = vmatmul.mubr.bf16.gmra.mrb[0].mxu0 %v3716
      %v4940 = vpop.f32.mrb[0].mxu0
      %v4941 = vadd.f32 %v4780, %v4940
      %v4942 = vpop.f32.mrb[0].mxu0
      %v4943 = vpop.f32.mrb[0].mxu0
      %v4944 = vadd.f32 %v4783, %v4943
      %v4945 = vpop.f32.mrb[0].mxu0
      %4946 = vmatprep.mubr.bf16.mxu0 %v3726
      %4947 = vmatmul.mubr.bf16.gmra.mrb[0].mxu0 %v3725
      %v4948 = vpop.f32.mrb[0].mxu0
      %v4949 = vadd.f32 %v4788, %v4948
      %v4950 = vpop.f32.mrb[0].mxu0
      %v4951 = vpop.f32.mrb[0].mxu0
      %v4952 = vadd.f32 %v4791, %v4951
      %v4953 = vpop.f32.mrb[0].mxu0
      %4954 = vmatprep.mubr.bf16.mxu0 %v3735
      %4955 = vmatmul.mubr.bf16.gmra.mrb[0].mxu0 %v3734
      %v4956 = vpop.f32.mrb[0].mxu0
      %v4957 = vadd.f32 %v4796, %v4956
      %v4958 = vpop.f32.mrb[0].mxu0
      %v4959 = vpop.f32.mrb[0].mxu0
      %v4960 = vadd.f32 %v4799, %v4959
      %v4961 = vpop.f32.mrb[0].mxu0
      %4962 = vmatprep.mubr.bf16.mxu0 %v3744
      %4963 = vmatmul.mubr.bf16.gmra.mrb[0].mxu0 %v3743
      %v4964 = vpop.f32.mrb[0].mxu0
      %v4965 = vadd.f32 %v4804, %v4964
      %v4966 = vpop.f32.mrb[0].mxu0
      %v4967 = vpop.f32.mrb[0].mxu0
      %v4968 = vadd.f32 %v4807, %v4967
      %v4969 = vpop.f32.mrb[0].mxu0
      %4970 = vmatprep.mubr.bf16.mxu0 %v3753
      %4971 = vmatmul.mubr.bf16.gmra.mrb[0].mxu0 %v3752
      %v4972 = vpop.f32.mrb[0].mxu0
      %v4973 = vadd.f32 %v4812, %v4972
      %v4974 = vpop.f32.mrb[0].mxu0
      %v4975 = vpop.f32.mrb[0].mxu0
      %v4976 = vadd.f32 %v4815, %v4975
      %v4977 = vpop.f32.mrb[0].mxu0
      %4978 = vmatprep.mubr.bf16.mxu0 %v3762
      %4979 = vmatmul.mubr.bf16.gmra.mrb[0].mxu0 %v3761
      %v4980 = vpop.f32.mrb[0].mxu0
      %v4981 = vadd.f32 %v4820, %v4980
      %v4982 = vpop.f32.mrb[0].mxu0
      %v4983 = vpop.f32.mrb[0].mxu0
      %v4984 = vadd.f32 %v4823, %v4983
      %v4985 = vpop.f32.mrb[0].mxu0
      %4986 = vmatprep.mubr.bf16.mxu0 %v3771
      %4987 = vmatmul.mubr.bf16.gmra.mrb[0].mxu0 %v3770
      %v4988 = vpop.f32.mrb[0].mxu0
      %v4989 = vadd.f32 %v4828, %v4988
      %v4990 = vpop.f32.mrb[0].mxu0
      %v4991 = vpop.f32.mrb[0].mxu0
      %v4992 = vadd.f32 %v4831, %v4991
      %v4993 = vpop.f32.mrb[0].mxu0
      %4994 = vmatprep.mubr.bf16.mxu0 %v3780
      %4995 = vmatmul.mubr.bf16.gmra.mrb[0].mxu0 %v3779
      %v4996 = vpop.f32.mrb[0].mxu0
      %v4997 = vadd.f32 %v4836, %v4996
      %v4998 = vpop.f32.mrb[0].mxu0
      %v4999 = vpop.f32.mrb[0].mxu0
      %v5000 = vadd.f32 %v4839, %v4999
      %v5001 = vpop.f32.mrb[0].mxu0
      %5002 = vmatprep.mubr.bf16.mxu0 %v3789
      %5003 = vmatmul.mubr.bf16.gmra.mrb[0].mxu0 %v3788
      %v5004 = vpop.f32.mrb[0].mxu0
      %v5005 = vadd.f32 %v4844, %v5004
      %v5006 = vpop.f32.mrb[0].mxu0
      %v5007 = vpop.f32.mrb[0].mxu0
      %v5008 = vadd.f32 %v4847, %v5007
      %v5009 = vpop.f32.mrb[0].mxu0
      %5010 = vdwg.mxu0
      %5011 = vmatprep.subr.bf16.mxu0 0
      %5012 = vmatpush1.bf16.msra.mxu0 %v4287
      %5013 = vmatprep.subr.bf16.mxu0 0
      %5014 = vmatpush1.bf16.msra.mxu0 %v4288
      %5015 = vmatprep.subr.bf16.mxu0 0
      %5016 = vmatpush1.bf16.msra.mxu0 %v4289
      %5017 = vmatprep.subr.bf16.mxu0 0
      %5018 = vmatpush1.bf16.msra.mxu0 %v4290
      %5019 = vmatprep.subr.bf16.mxu0 0
      %5020 = vmatpush1.bf16.msra.mxu0 %v4291
      %5021 = vmatprep.subr.bf16.mxu0 0
      %5022 = vmatpush1.bf16.msra.mxu0 %v4292
      %5023 = vmatprep.subr.bf16.mxu0 0
      %5024 = vmatpush1.bf16.msra.mxu0 %v4293
      %5025 = vmatprep.subr.bf16.mxu0 0
      %5026 = vmatpush1.bf16.msra.mxu0 %v4294
      %5027 = vmatprep.subr.bf16.mxu0 0
      %5028 = vmatpush1.bf16.msra.mxu0 0
      %5029 = vmatprep.subr.bf16.mxu0 0
      %5030 = vmatpush1.bf16.msra.mxu0 0
      %5031 = vmatprep.subr.bf16.mxu0 0
      %5032 = vmatpush1.bf16.msra.mxu0 0
      %5033 = vmatprep.subr.bf16.mxu0 0
      %5034 = vmatpush1.bf16.msra.mxu0 0
      %5035 = vmatprep.subr.bf16.mxu0 0
      %5036 = vmatpush1.bf16.msra.mxu0 0
      %5037 = vmatprep.subr.bf16.mxu0 0
      %5038 = vmatpush1.bf16.msra.mxu0 0
      %5039 = vmatprep.subr.bf16.mxu0 0
      %5040 = vmatpush1.bf16.msra.mxu0 0
      %5041 = vmatprep.subr.bf16.mxu0 0
      %5042 = vmatpush1.bf16.msra.mxu0 0
      %5043 = vmatprep.mubr.bf16.mxu0 0
      %5044 = vmatmul.mubr.bf16.gmra.mrb[0].mxu0 %v3655
      %v5045 = vpop.f32.mrb[0].mxu0
      %v5046 = vadd.f32 %v4885, %v5045
      %v5047 = vpop.f32.mrb[0].mxu0
      %v5048 = vpop.f32.mrb[0].mxu0
      %v5049 = vadd.f32 %v4888, %v5048
      %v5050 = vpop.f32.mrb[0].mxu0
      %5051 = vmatprep.mubr.bf16.mxu0 0
      %5052 = vmatmul.mubr.bf16.gmra.mrb[0].mxu0 %v3664
      %v5053 = vpop.f32.mrb[0].mxu0
      %v5054 = vadd.f32 %v4893, %v5053
      %v5055 = vpop.f32.mrb[0].mxu0
      %v5056 = vpop.f32.mrb[0].mxu0
      %v5057 = vadd.f32 %v4896, %v5056
      %v5058 = vpop.f32.mrb[0].mxu0
      %5059 = vmatprep.mubr.bf16.mxu0 0
      %5060 = vmatmul.mubr.bf16.gmra.mrb[0].mxu0 %v3673
      %v5061 = vpop.f32.mrb[0].mxu0
      %v5062 = vadd.f32 %v4901, %v5061
      %v5063 = vpop.f32.mrb[0].mxu0
      %v5064 = vpop.f32.mrb[0].mxu0
      %v5065 = vadd.f32 %v4904, %v5064
      %v5066 = vpop.f32.mrb[0].mxu0
      %5067 = vmatprep.mubr.bf16.mxu0 0
      %5068 = vmatmul.mubr.bf16.gmra.mrb[0].mxu0 %v3682
      %v5069 = vpop.f32.mrb[0].mxu0
      %v5070 = vadd.f32 %v4909, %v5069
      %v5071 = vpop.f32.mrb[0].mxu0
      %v5072 = vpop.f32.mrb[0].mxu0
      %v5073 = vadd.f32 %v4912, %v5072
      %v5074 = vpop.f32.mrb[0].mxu0
      %5075 = vmatprep.mubr.bf16.mxu0 0
      %5076 = vmatmul.mubr.bf16.gmra.mrb[0].mxu0 %v3691
      %v5077 = vpop.f32.mrb[0].mxu0
      %v5078 = vadd.f32 %v4917, %v5077
      %v5079 = vpop.f32.mrb[0].mxu0
      %v5080 = vpop.f32.mrb[0].mxu0
      %v5081 = vadd.f32 %v4920, %v5080
      %v5082 = vpop.f32.mrb[0].mxu0
      %5083 = vmatprep.mubr.bf16.mxu0 0
      %5084 = vmatmul.mubr.bf16.gmra.mrb[0].mxu0 %v3700
      %v5085 = vpop.f32.mrb[0].mxu0
      %v5086 = vadd.f32 %v4925, %v5085
      %v5087 = vpop.f32.mrb[0].mxu0
      %v5088 = vpop.f32.mrb[0].mxu0
      %v5089 = vadd.f32 %v4928, %v5088
      %v5090 = vpop.f32.mrb[0].mxu0
      %5091 = vmatprep.mubr.bf16.mxu0 0
      %5092 = vmatmul.mubr.bf16.gmra.mrb[0].mxu0 %v3709
      %v5093 = vpop.f32.mrb[0].mxu0
      %v5094 = vadd.f32 %v4933, %v5093
      %v5095 = vpop.f32.mrb[0].mxu0
      %v5096 = vpop.f32.mrb[0].mxu0
      %v5097 = vadd.f32 %v4936, %v5096
      %v5098 = vpop.f32.mrb[0].mxu0
      %5099 = vmatprep.mubr.bf16.mxu0 0
      %5100 = vmatmul.mubr.bf16.gmra.mrb[0].mxu0 %v3718
      %v5101 = vpop.f32.mrb[0].mxu0
      %v5102 = vadd.f32 %v4941, %v5101
      %v5103 = vpop.f32.mrb[0].mxu0
      %v5104 = vpop.f32.mrb[0].mxu0
      %v5105 = vadd.f32 %v4944, %v5104
      %v5106 = vpop.f32.mrb[0].mxu0
      %5107 = vmatprep.mubr.bf16.mxu0 0
      %5108 = vmatmul.mubr.bf16.gmra.mrb[0].mxu0 %v3727
      %v5109 = vpop.f32.mrb[0].mxu0
      %v5110 = vadd.f32 %v4949, %v5109
      %v5111 = vpop.f32.mrb[0].mxu0
      %v5112 = vpop.f32.mrb[0].mxu0
      %v5113 = vadd.f32 %v4952, %v5112
      %v5114 = vpop.f32.mrb[0].mxu0
      %5115 = vmatprep.mubr.bf16.mxu0 0
      %5116 = vmatmul.mubr.bf16.gmra.mrb[0].mxu0 %v3736
      %v5117 = vpop.f32.mrb[0].mxu0
      %v5118 = vadd.f32 %v4957, %v5117
      %v5119 = vpop.f32.mrb[0].mxu0
      %v5120 = vpop.f32.mrb[0].mxu0
      %v5121 = vadd.f32 %v4960, %v5120
      %v5122 = vpop.f32.mrb[0].mxu0
      %5123 = vmatprep.mubr.bf16.mxu0 0
      %5124 = vmatmul.mubr.bf16.gmra.mrb[0].mxu0 %v3745
      %v5125 = vpop.f32.mrb[0].mxu0
      %v5126 = vadd.f32 %v4965, %v5125
      %v5127 = vpop.f32.mrb[0].mxu0
      %v5128 = vpop.f32.mrb[0].mxu0
      %v5129 = vadd.f32 %v4968, %v5128
      %v5130 = vpop.f32.mrb[0].mxu0
      %5131 = vmatprep.mubr.bf16.mxu0 0
      %5132 = vmatmul.mubr.bf16.gmra.mrb[0].mxu0 %v3754
      %v5133 = vpop.f32.mrb[0].mxu0
      %v5134 = vadd.f32 %v4973, %v5133
      %v5135 = vpop.f32.mrb[0].mxu0
      %v5136 = vpop.f32.mrb[0].mxu0
      %v5137 = vadd.f32 %v4976, %v5136
      %v5138 = vpop.f32.mrb[0].mxu0
      %5139 = vmatprep.mubr.bf16.mxu0 0
      %5140 = vmatmul.mubr.bf16.gmra.mrb[0].mxu0 %v3763
      %v5141 = vpop.f32.mrb[0].mxu0
      %v5142 = vadd.f32 %v4981, %v5141
      %v5143 = vpop.f32.mrb[0].mxu0
      %v5144 = vpop.f32.mrb[0].mxu0
      %v5145 = vadd.f32 %v4984, %v5144
      %v5146 = vpop.f32.mrb[0].mxu0
      %5147 = vmatprep.mubr.bf16.mxu0 0
      %5148 = vmatmul.mubr.bf16.gmra.mrb[0].mxu0 %v3772
      %v5149 = vpop.f32.mrb[0].mxu0
      %v5150 = vadd.f32 %v4989, %v5149
      %v5151 = vpop.f32.mrb[0].mxu0
      %v5152 = vpop.f32.mrb[0].mxu0
      %v5153 = vadd.f32 %v4992, %v5152
      %v5154 = vpop.f32.mrb[0].mxu0
      %5155 = vmatprep.mubr.bf16.mxu0 0
      %5156 = vmatmul.mubr.bf16.gmra.mrb[0].mxu0 %v3781
      %v5157 = vpop.f32.mrb[0].mxu0
      %v5158 = vadd.f32 %v4997, %v5157
      %v5159 = vpop.f32.mrb[0].mxu0
      %v5160 = vpop.f32.mrb[0].mxu0
      %v5161 = vadd.f32 %v5000, %v5160
      %v5162 = vpop.f32.mrb[0].mxu0
      %5163 = vmatprep.mubr.bf16.mxu0 0
      %5164 = vmatmul.mubr.bf16.gmra.mrb[0].mxu0 %v3790
      %v5165 = vpop.f32.mrb[0].mxu0
      %v5166 = vadd.f32 %v5005, %v5165
      %v5167 = vpop.f32.mrb[0].mxu0
      %v5168 = vpop.f32.mrb[0].mxu0
      %v5169 = vadd.f32 %v5008, %v5168
      %v5170 = vpop.f32.mrb[0].mxu0
      %5171 = vdwg.mxu0
      %v5172 = vld [vmem:[%s2] sm:$0x1]
      %v5174 = vlaneseq
      %v5175 = vshrl.u32 %v5174, 7
      %v5176 = vsub.s32 0, %v5175
      %v5177 = vrot.slane %v5172, %v5176
      %v5179 = vmul.f32 %v5046, %v5177
      %v5180 = vmul.f32 %v5049, %v5177
      %v5181 = vmul.f32 %v5054, %v5177
      %v5182 = vmul.f32 %v5057, %v5177
      %v5183 = vmul.f32 %v5062, %v5177
      %v5184 = vmul.f32 %v5065, %v5177
      %v5185 = vmul.f32 %v5070, %v5177
      %v5186 = vmul.f32 %v5073, %v5177
      %v5187 = vmul.f32 %v5078, %v5177
      %v5188 = vmul.f32 %v5081, %v5177
      %v5189 = vmul.f32 %v5086, %v5177
      %v5190 = vmul.f32 %v5089, %v5177
      %v5191 = vmul.f32 %v5094, %v5177
      %v5192 = vmul.f32 %v5097, %v5177
      %v5193 = vmul.f32 %v5102, %v5177
      %v5194 = vmul.f32 %v5105, %v5177
      %v5195 = vmul.f32 %v5110, %v5177
      %v5196 = vmul.f32 %v5113, %v5177
      %v5197 = vmul.f32 %v5118, %v5177
      %v5198 = vmul.f32 %v5121, %v5177
      %v5199 = vmul.f32 %v5126, %v5177
      %v5200 = vmul.f32 %v5129, %v5177
      %v5201 = vmul.f32 %v5134, %v5177
      %v5202 = vmul.f32 %v5137, %v5177
      %v5203 = vmul.f32 %v5142, %v5177
      %v5204 = vmul.f32 %v5145, %v5177
      %v5205 = vmul.f32 %v5150, %v5177
      %v5206 = vmul.f32 %v5153, %v5177
      %v5207 = vmul.f32 %v5158, %v5177
      %v5208 = vmul.f32 %v5161, %v5177
      %v5209 = vmul.f32 %v5166, %v5177
      %v5210 = vmul.f32 %v5169, %v5177
      %v5211 = vld [vmem:[%s3] sm:$0x1]
      %v5213 = vlaneseq
      %v5214 = vshrl.u32 %v5213, 7
      %v5215 = vsub.s32 0, %v5214
      %v5216 = vrot.slane %v5211, %v5215
      %v5218 = vadd.f32 %v5179, %v5216
      %v5219 = vadd.f32 %v5180, %v5216
      %v5220 = vadd.f32 %v5181, %v5216
      %v5221 = vadd.f32 %v5182, %v5216
      %v5222 = vadd.f32 %v5183, %v5216
      %v5223 = vadd.f32 %v5184, %v5216
      %v5224 = vadd.f32 %v5185, %v5216
      %v5225 = vadd.f32 %v5186, %v5216
      %v5226 = vadd.f32 %v5187, %v5216
      %v5227 = vadd.f32 %v5188, %v5216
      %v5228 = vadd.f32 %v5189, %v5216
      %v5229 = vadd.f32 %v5190, %v5216
      %v5230 = vadd.f32 %v5191, %v5216
      %v5231 = vadd.f32 %v5192, %v5216
      %v5232 = vadd.f32 %v5193, %v5216
      %v5233 = vadd.f32 %v5194, %v5216
      %v5234 = vadd.f32 %v5195, %v5216
      %v5235 = vadd.f32 %v5196, %v5216
      %v5236 = vadd.f32 %v5197, %v5216
      %v5237 = vadd.f32 %v5198, %v5216
      %v5238 = vadd.f32 %v5199, %v5216
      %v5239 = vadd.f32 %v5200, %v5216
      %v5240 = vadd.f32 %v5201, %v5216
      %v5241 = vadd.f32 %v5202, %v5216
      %v5242 = vadd.f32 %v5203, %v5216
      %v5243 = vadd.f32 %v5204, %v5216
      %v5244 = vadd.f32 %v5205, %v5216
      %v5245 = vadd.f32 %v5206, %v5216
      %v5246 = vadd.f32 %v5207, %v5216
      %v5247 = vadd.f32 %v5208, %v5216
      %v5248 = vadd.f32 %v5209, %v5216
      %v5249 = vadd.f32 %v5210, %v5216
      %v5250 = vmax.f32 %v5218, 0.0
      %v5251 = vmax.f32 %v5219, 0.0
      %v5252 = vmax.f32 %v5220, 0.0
      %v5253 = vmax.f32 %v5221, 0.0
      %v5254 = vmax.f32 %v5222, 0.0
      %v5255 = vmax.f32 %v5223, 0.0
      %v5256 = vmax.f32 %v5224, 0.0
      %v5257 = vmax.f32 %v5225, 0.0
      %v5258 = vmax.f32 %v5226, 0.0
      %v5259 = vmax.f32 %v5227, 0.0
      %v5260 = vmax.f32 %v5228, 0.0
      %v5261 = vmax.f32 %v5229, 0.0
      %v5262 = vmax.f32 %v5230, 0.0
      %v5263 = vmax.f32 %v5231, 0.0
      %v5264 = vmax.f32 %v5232, 0.0
      %v5265 = vmax.f32 %v5233, 0.0
      %v5266 = vmax.f32 %v5234, 0.0
      %v5267 = vmax.f32 %v5235, 0.0
      %v5268 = vmax.f32 %v5236, 0.0
      %v5269 = vmax.f32 %v5237, 0.0
      %v5270 = vmax.f32 %v5238, 0.0
      %v5271 = vmax.f32 %v5239, 0.0
      %v5272 = vmax.f32 %v5240, 0.0
      %v5273 = vmax.f32 %v5241, 0.0
      %v5274 = vmax.f32 %v5242, 0.0
      %v5275 = vmax.f32 %v5243, 0.0
      %v5276 = vmax.f32 %v5244, 0.0
      %v5277 = vmax.f32 %v5245, 0.0
      %v5278 = vmax.f32 %v5246, 0.0
      %v5279 = vmax.f32 %v5247, 0.0
      %v5280 = vmax.f32 %v5248, 0.0
      %v5281 = vmax.f32 %v5249, 0.0
      %5282 = vst [vmem:[#allocation2] sm:$0xf] 0
      %5283 = vst [vmem:[#allocation2 + $0x4] sm:$0xf] 0
      %5284 = vst [vmem:[#allocation2 + $0x8] sm:$0x1] 0
      %5285 = vst [vmem:[#allocation2 + $0xc] sm:$0xf] 0
      %5286 = vst [vmem:[#allocation2 + $0x10] sm:$0xf] 0
      %5287 = vst [vmem:[#allocation2 + $0x14] sm:$0x1] 0
      %5288 = vst [vmem:[#allocation2 + $0x18] sm:$0xf] 0
      %5289 = vst [vmem:[#allocation2 + $0x1c] sm:$0xf] 0
      %5290 = vst [vmem:[#allocation2 + $0x20] sm:$0x1] 0
      %5291 = vst [vmem:[#allocation2 + $0x24] sm:$0xf] 0
      %5292 = vst [vmem:[#allocation2 + $0x28] sm:$0xf] 0
      %5293 = vst [vmem:[#allocation2 + $0x2c] sm:$0x1] 0
      %5294 = vst [vmem:[#allocation2 + $0x30] sm:$0xf] 0
      %5295 = vst [vmem:[#allocation2 + $0x34] sm:$0xf] 0
      %5296 = vst [vmem:[#allocation2 + $0x38] sm:$0x1] 0
      %5297 = vst [vmem:[#allocation2 + $0x3c] sm:$0xf] 0
      %5298 = vst [vmem:[#allocation2 + $0x40] sm:$0xf] 0
      %5299 = vst [vmem:[#allocation2 + $0x44] sm:$0x1] 0
      %5300 = vst [vmem:[#allocation2 + $0x48] sm:$0xf] 0
      %5301 = vst [vmem:[#allocation2 + $0x4c] sm:$0xf] 0
      %5302 = vst [vmem:[#allocation2 + $0x50] sm:$0x1] 0
      %5303 = vst [vmem:[#allocation2 + $0x54] sm:$0xf] 0
      %5304 = vst [vmem:[#allocation2 + $0x58] sm:$0xf] 0
      %5305 = vst [vmem:[#allocation2 + $0x5c] sm:$0x1] 0
      %5306 = vst [vmem:[#allocation2 + $0x60] sm:$0xf] 0
      %5307 = vst [vmem:[#allocation2 + $0x64] sm:$0xf] 0
      %5308 = vst [vmem:[#allocation2 + $0x68] sm:$0x1] 0
      %5309 = vst [vmem:[#allocation2 + $0x6c] sm:$0xf] 0
      %5310 = vst [vmem:[#allocation2 + $0x70] sm:$0xf] 0
      %5311 = vst [vmem:[#allocation2 + $0x74] sm:$0x1] 0
      %5312 = vst [vmem:[#allocation2 + $0x78] sm:$0xf] 0
      %5313 = vst [vmem:[#allocation2 + $0x7c] sm:$0xf] 0
      %5314 = vst [vmem:[#allocation2 + $0x80] sm:$0x1] 0
      %5315 = vst [vmem:[#allocation2 + $0x84] sm:$0xf] 0
      %5316 = vst [vmem:[#allocation2 + $0x88] sm:$0xf] 0
      %5317 = vst [vmem:[#allocation2 + $0x8c] sm:$0x1] 0
      %5318 = vst [vmem:[#allocation2 + $0x90] sm:$0xf] 0
      %5319 = vst [vmem:[#allocation2 + $0x94] sm:$0xf] 0
      %5320 = vst [vmem:[#allocation2 + $0x98] sm:$0x1] 0
      %5321 = vst [vmem:[#allocation2 + $0x9c] sm:$0xf] 0
      %5322 = vst [vmem:[#allocation2 + $0xa0] sm:$0xf] 0
      %5323 = vst [vmem:[#allocation2 + $0xa4] sm:$0x1] 0
      %5324 = vst [vmem:[#allocation2 + $0xa8] sm:$0xf] 0
      %5325 = vst [vmem:[#allocation2 + $0xac] sm:$0xf] 0
      %5326 = vst [vmem:[#allocation2 + $0xb0] sm:$0x1] 0
      %5327 = vst [vmem:[#allocation2 + $0xb4] sm:$0xf] 0
      %5328 = vst [vmem:[#allocation2 + $0xb8] sm:$0xf] 0
      %5329 = vst [vmem:[#allocation2 + $0xbc] sm:$0x1] 0
      %5330 = vst [vmem:[#allocation2 + $0xc0] sm:$0xf] 0
      %5331 = vst [vmem:[#allocation2 + $0xc4] sm:$0xf] 0
      %5332 = vst [vmem:[#allocation2 + $0xc8] sm:$0x1] 0
      %5333 = vst [vmem:[#allocation2 + $0xcc] sm:$0xf] 0
      %5334 = vst [vmem:[#allocation2 + $0xd0] sm:$0xf] 0
      %5335 = vst [vmem:[#allocation2 + $0xd4] sm:$0x1] 0
      %v5336 = vpack.c.bf16 %v5251, %v5250
      %v5337 = vpack.c.bf16 %v5253, %v5252
      %v5338 = vpack.c.bf16 %v5255, %v5254
      %v5339 = vpack.c.bf16 %v5257, %v5256
      %v5340 = vpack.c.bf16 %v5259, %v5258
      %v5341 = vpack.c.bf16 %v5261, %v5260
      %v5342 = vpack.c.bf16 %v5263, %v5262
      %v5343 = vpack.c.bf16 %v5265, %v5264
      %v5344 = vpack.c.bf16 %v5267, %v5266
      %v5345 = vpack.c.bf16 %v5269, %v5268
      %v5346 = vpack.c.bf16 %v5271, %v5270
      %v5347 = vpack.c.bf16 %v5273, %v5272
      %v5348 = vpack.c.bf16 %v5275, %v5274
      %v5349 = vpack.c.bf16 %v5277, %v5276
      %v5350 = vpack.c.bf16 %v5279, %v5278
      %v5351 = vpack.c.bf16 %v5281, %v5280
      %v5368 = vunpack.c.l.b16 %v5336
      %v5369 = vunpack.c.h.b16 %v5336
      %v5370 = vunpack.c.l.b16 %v5337
      %v5371 = vunpack.c.h.b16 %v5337
      %v5372 = vunpack.c.l.b16 %v5338
      %v5373 = vunpack.c.h.b16 %v5338
      %v5374 = vunpack.c.l.b16 %v5339
      %v5375 = vunpack.c.h.b16 %v5339
      %v5376 = vunpack.c.l.b16 %v5340
      %v5377 = vunpack.c.h.b16 %v5340
      %v5378 = vunpack.c.l.b16 %v5341
      %v5379 = vunpack.c.h.b16 %v5341
      %v5380 = vunpack.c.l.b16 %v5342
      %v5381 = vunpack.c.h.b16 %v5342
      %v5382 = vunpack.c.l.b16 %v5343
      %v5383 = vunpack.c.h.b16 %v5343
      %v5384 = vunpack.c.l.b16 %v5344
      %v5385 = vunpack.c.h.b16 %v5344
      %v5386 = vunpack.c.l.b16 %v5345
      %v5387 = vunpack.c.h.b16 %v5345
      %v5388 = vunpack.c.l.b16 %v5346
      %v5389 = vunpack.c.h.b16 %v5346
      %v5390 = vunpack.c.l.b16 %v5347
      %v5391 = vunpack.c.h.b16 %v5347
      %v5392 = vunpack.c.l.b16 %v5348
      %v5393 = vunpack.c.h.b16 %v5348
      %v5394 = vunpack.c.l.b16 %v5349
      %v5395 = vunpack.c.h.b16 %v5349
      %v5396 = vunpack.c.l.b16 %v5350
      %v5397 = vunpack.c.h.b16 %v5350
      %v5398 = vunpack.c.l.b16 %v5351
      %v5399 = vunpack.c.h.b16 %v5351
      %v5400 = vpack.c.b16 %v5368, %v5368
      %v5401 = vpack.c.b16 %v5369, %v5369
      %v5402 = vpack.c.b16 %v5370, %v5370
      %v5403 = vpack.c.b16 %v5371, %v5371
      %v5404 = vpack.c.b16 %v5372, %v5372
      %v5405 = vpack.c.b16 %v5373, %v5373
      %v5406 = vpack.c.b16 %v5374, %v5374
      %v5407 = vpack.c.b16 %v5375, %v5375
      %v5408 = vpack.c.b16 %v5376, %v5376
      %v5409 = vpack.c.b16 %v5377, %v5377
      %v5410 = vpack.c.b16 %v5378, %v5378
      %v5411 = vpack.c.b16 %v5379, %v5379
      %v5412 = vpack.c.b16 %v5380, %v5380
      %v5413 = vpack.c.b16 %v5381, %v5381
      %v5414 = vpack.c.b16 %v5382, %v5382
      %v5415 = vpack.c.b16 %v5383, %v5383
      %v5416 = vpack.c.b16 %v5384, %v5384
      %v5417 = vpack.c.b16 %v5385, %v5385
      %v5418 = vpack.c.b16 %v5386, %v5386
      %v5419 = vpack.c.b16 %v5387, %v5387
      %v5420 = vpack.c.b16 %v5388, %v5388
      %v5421 = vpack.c.b16 %v5389, %v5389
      %v5422 = vpack.c.b16 %v5390, %v5390
      %v5423 = vpack.c.b16 %v5391, %v5391
      %v5424 = vpack.c.b16 %v5392, %v5392
      %v5425 = vpack.c.b16 %v5393, %v5393
      %v5426 = vpack.c.b16 %v5394, %v5394
      %v5427 = vpack.c.b16 %v5395, %v5395
      %v5428 = vpack.c.b16 %v5396, %v5396
      %v5429 = vpack.c.b16 %v5397, %v5397
      %v5430 = vpack.c.b16 %v5398, %v5398
      %v5431 = vpack.c.b16 %v5399, %v5399
      %v5433 = vshrl.u32 %v5400, 16
      %v5435 = vrot.slane %v5433, 7
      %v5436 = vshll.u32 %v5400, 16
      %v5438 = vor.u32 %v5435, %v5436
      %v5439 = vrot.slane %v5435, 4
      %v5441 = vshrl.u32 %v5401, 16
      %v5443 = vrot.slane %v5441, 7
      %v5444 = vshll.u32 %v5401, 16
      %v5446 = vor.u32 %v5443, %v5444
      %v5447 = vsel %vm368, %v5439, %v5446
      %v5448 = vrot.slane %v5443, 4
      %v5450 = vshrl.u32 %v5402, 16
      %v5452 = vrot.slane %v5450, 7
      %v5453 = vshll.u32 %v5402, 16
      %v5455 = vor.u32 %v5452, %v5453
      %v5456 = vrot.slane %v5452, 4
      %v5458 = vshrl.u32 %v5403, 16
      %v5460 = vrot.slane %v5458, 7
      %v5461 = vshll.u32 %v5403, 16
      %v5463 = vor.u32 %v5460, %v5461
      %v5464 = vsel %vm368, %v5456, %v5463
      %v5465 = vrot.slane %v5460, 4
      %v5467 = vshrl.u32 %v5404, 16
      %v5469 = vrot.slane %v5467, 7
      %v5470 = vshll.u32 %v5404, 16
      %v5472 = vor.u32 %v5469, %v5470
      %v5473 = vrot.slane %v5469, 4
      %v5475 = vshrl.u32 %v5405, 16
      %v5477 = vrot.slane %v5475, 7
      %v5478 = vshll.u32 %v5405, 16
      %v5480 = vor.u32 %v5477, %v5478
      %v5481 = vsel %vm368, %v5473, %v5480
      %v5482 = vrot.slane %v5477, 4
      %v5484 = vshrl.u32 %v5406, 16
      %v5486 = vrot.slane %v5484, 7
      %v5487 = vshll.u32 %v5406, 16
      %v5489 = vor.u32 %v5486, %v5487
      %v5490 = vrot.slane %v5486, 4
      %v5492 = vshrl.u32 %v5407, 16
      %v5494 = vrot.slane %v5492, 7
      %v5495 = vshll.u32 %v5407, 16
      %v5497 = vor.u32 %v5494, %v5495
      %v5498 = vsel %vm368, %v5490, %v5497
      %v5499 = vrot.slane %v5494, 4
      %v5501 = vshrl.u32 %v5408, 16
      %v5503 = vrot.slane %v5501, 7
      %v5504 = vshll.u32 %v5408, 16
      %v5506 = vor.u32 %v5503, %v5504
      %v5507 = vrot.slane %v5503, 4
      %v5509 = vshrl.u32 %v5409, 16
      %v5511 = vrot.slane %v5509, 7
      %v5512 = vshll.u32 %v5409, 16
      %v5514 = vor.u32 %v5511, %v5512
      %v5515 = vsel %vm368, %v5507, %v5514
      %v5516 = vrot.slane %v5511, 4
      %v5518 = vshrl.u32 %v5410, 16
      %v5520 = vrot.slane %v5518, 7
      %v5521 = vshll.u32 %v5410, 16
      %v5523 = vor.u32 %v5520, %v5521
      %v5524 = vrot.slane %v5520, 4
      %v5526 = vshrl.u32 %v5411, 16
      %v5528 = vrot.slane %v5526, 7
      %v5529 = vshll.u32 %v5411, 16
      %v5531 = vor.u32 %v5528, %v5529
      %v5532 = vsel %vm368, %v5524, %v5531
      %v5533 = vrot.slane %v5528, 4
      %v5535 = vshrl.u32 %v5412, 16
      %v5537 = vrot.slane %v5535, 7
      %v5538 = vshll.u32 %v5412, 16
      %v5540 = vor.u32 %v5537, %v5538
      %v5541 = vrot.slane %v5537, 4
      %v5543 = vshrl.u32 %v5413, 16
      %v5545 = vrot.slane %v5543, 7
      %v5546 = vshll.u32 %v5413, 16
      %v5548 = vor.u32 %v5545, %v5546
      %v5549 = vsel %vm368, %v5541, %v5548
      %v5550 = vrot.slane %v5545, 4
      %v5552 = vshrl.u32 %v5414, 16
      %v5554 = vrot.slane %v5552, 7
      %v5555 = vshll.u32 %v5414, 16
      %v5557 = vor.u32 %v5554, %v5555
      %v5558 = vrot.slane %v5554, 4
      %v5560 = vshrl.u32 %v5415, 16
      %v5562 = vrot.slane %v5560, 7
      %v5563 = vshll.u32 %v5415, 16
      %v5565 = vor.u32 %v5562, %v5563
      %v5566 = vsel %vm368, %v5558, %v5565
      %v5567 = vrot.slane %v5562, 4
      %v5569 = vshrl.u32 %v5416, 16
      %v5571 = vrot.slane %v5569, 7
      %v5572 = vshll.u32 %v5416, 16
      %v5574 = vor.u32 %v5571, %v5572
      %v5575 = vrot.slane %v5571, 4
      %v5577 = vshrl.u32 %v5417, 16
      %v5579 = vrot.slane %v5577, 7
      %v5580 = vshll.u32 %v5417, 16
      %v5582 = vor.u32 %v5579, %v5580
      %v5583 = vsel %vm368, %v5575, %v5582
      %v5584 = vrot.slane %v5579, 4
      %v5586 = vshrl.u32 %v5418, 16
      %v5588 = vrot.slane %v5586, 7
      %v5589 = vshll.u32 %v5418, 16
      %v5591 = vor.u32 %v5588, %v5589
      %v5592 = vrot.slane %v5588, 4
      %v5594 = vshrl.u32 %v5419, 16
      %v5596 = vrot.slane %v5594, 7
      %v5597 = vshll.u32 %v5419, 16
      %v5599 = vor.u32 %v5596, %v5597
      %v5600 = vsel %vm368, %v5592, %v5599
      %v5601 = vrot.slane %v5596, 4
      %v5603 = vshrl.u32 %v5420, 16
      %v5605 = vrot.slane %v5603, 7
      %v5606 = vshll.u32 %v5420, 16
      %v5608 = vor.u32 %v5605, %v5606
      %v5609 = vrot.slane %v5605, 4
      %v5611 = vshrl.u32 %v5421, 16
      %v5613 = vrot.slane %v5611, 7
      %v5614 = vshll.u32 %v5421, 16
      %v5616 = vor.u32 %v5613, %v5614
      %v5617 = vsel %vm368, %v5609, %v5616
      %v5618 = vrot.slane %v5613, 4
      %v5620 = vshrl.u32 %v5422, 16
      %v5622 = vrot.slane %v5620, 7
      %v5623 = vshll.u32 %v5422, 16
      %v5625 = vor.u32 %v5622, %v5623
      %v5626 = vrot.slane %v5622, 4
      %v5628 = vshrl.u32 %v5423, 16
      %v5630 = vrot.slane %v5628, 7
      %v5631 = vshll.u32 %v5423, 16
      %v5633 = vor.u32 %v5630, %v5631
      %v5634 = vsel %vm368, %v5626, %v5633
      %v5635 = vrot.slane %v5630, 4
      %v5637 = vshrl.u32 %v5424, 16
      %v5639 = vrot.slane %v5637, 7
      %v5640 = vshll.u32 %v5424, 16
      %v5642 = vor.u32 %v5639, %v5640
      %v5643 = vrot.slane %v5639, 4
      %v5645 = vshrl.u32 %v5425, 16
      %v5647 = vrot.slane %v5645, 7
      %v5648 = vshll.u32 %v5425, 16
      %v5650 = vor.u32 %v5647, %v5648
      %v5651 = vsel %vm368, %v5643, %v5650
      %v5652 = vrot.slane %v5647, 4
      %v5654 = vshrl.u32 %v5426, 16
      %v5656 = vrot.slane %v5654, 7
      %v5657 = vshll.u32 %v5426, 16
      %v5659 = vor.u32 %v5656, %v5657
      %v5660 = vrot.slane %v5656, 4
      %v5662 = vshrl.u32 %v5427, 16
      %v5664 = vrot.slane %v5662, 7
      %v5665 = vshll.u32 %v5427, 16
      %v5667 = vor.u32 %v5664, %v5665
      %v5668 = vsel %vm368, %v5660, %v5667
      %v5669 = vrot.slane %v5664, 4
      %v5671 = vshrl.u32 %v5428, 16
      %v5673 = vrot.slane %v5671, 7
      %v5674 = vshll.u32 %v5428, 16
      %v5676 = vor.u32 %v5673, %v5674
      %v5677 = vrot.slane %v5673, 4
      %v5679 = vshrl.u32 %v5429, 16
      %v5681 = vrot.slane %v5679, 7
      %v5682 = vshll.u32 %v5429, 16
      %v5684 = vor.u32 %v5681, %v5682
      %v5685 = vsel %vm368, %v5677, %v5684
      %v5686 = vrot.slane %v5681, 4
      %v5688 = vshrl.u32 %v5430, 16
      %v5690 = vrot.slane %v5688, 7
      %v5691 = vshll.u32 %v5430, 16
      %v5693 = vor.u32 %v5690, %v5691
      %v5694 = vrot.slane %v5690, 4
      %v5696 = vshrl.u32 %v5431, 16
      %v5698 = vrot.slane %v5696, 7
      %v5699 = vshll.u32 %v5431, 16
      %v5701 = vor.u32 %v5698, %v5699
      %v5702 = vsel %vm368, %v5694, %v5701
      %v5703 = vrot.slane %v5698, 4
      %vm5752 = vcmask 1043456
      %vm5753 = vmand %vm5752, %vm691
      %v5754 = vld [vmem:[%s689] sm:$0xf]
      %v5755 = vsel %vm5753, %v5438, %v5754
      %5756 = vst [vmem:[%s689] sm:$0xf] %v5755
      %5757 = vst [vmem:[%s689 + $0x4] sm:$0xf] %v5447
      %vm5758 = vcmask 1040384
      %vm5759 = vmand %vm5758, %vm366
      %v5760 = vld [vmem:[%s689 + $0x8] sm:$0x1]
      %v5761 = vsel %vm5759, %v5448, %v5760
      %5762 = vst [vmem:[%s689 + $0x8] sm:$0x1] %v5761
      %v5763 = vld [vmem:[%s689 + $0xc] sm:$0xf]
      %v5764 = vsel %vm5753, %v5455, %v5763
      %5765 = vst [vmem:[%s689 + $0xc] sm:$0xf] %v5764
      %5766 = vst [vmem:[%s689 + $0x10] sm:$0xf] %v5464
      %v5767 = vld [vmem:[%s689 + $0x14] sm:$0x1]
      %v5768 = vsel %vm5759, %v5465, %v5767
      %5769 = vst [vmem:[%s689 + $0x14] sm:$0x1] %v5768
      %v5770 = vld [vmem:[%s689 + $0x18] sm:$0xf]
      %v5771 = vsel %vm5753, %v5472, %v5770
      %5772 = vst [vmem:[%s689 + $0x18] sm:$0xf] %v5771
      %5773 = vst [vmem:[%s689 + $0x1c] sm:$0xf] %v5481
      %v5774 = vld [vmem:[%s689 + $0x20] sm:$0x1]
      %v5775 = vsel %vm5759, %v5482, %v5774
      %5776 = vst [vmem:[%s689 + $0x20] sm:$0x1] %v5775
      %v5777 = vld [vmem:[%s689 + $0x24] sm:$0xf]
      %v5778 = vsel %vm5753, %v5489, %v5777
      %5779 = vst [vmem:[%s689 + $0x24] sm:$0xf] %v5778
      %5780 = vst [vmem:[%s689 + $0x28] sm:$0xf] %v5498
      %v5781 = vld [vmem:[%s689 + $0x2c] sm:$0x1]
      %v5782 = vsel %vm5759, %v5499, %v5781
      %5783 = vst [vmem:[%s689 + $0x2c] sm:$0x1] %v5782
      %v5784 = vld [vmem:[%s689 + $0x30] sm:$0xf]
      %v5785 = vsel %vm5753, %v5506, %v5784
      %5786 = vst [vmem:[%s689 + $0x30] sm:$0xf] %v5785
      %5787 = vst [vmem:[%s689 + $0x34] sm:$0xf] %v5515
      %v5788 = vld [vmem:[%s689 + $0x38] sm:$0x1]
      %v5789 = vsel %vm5759, %v5516, %v5788
      %5790 = vst [vmem:[%s689 + $0x38] sm:$0x1] %v5789
      %v5791 = vld [vmem:[%s689 + $0x3c] sm:$0xf]
      %v5792 = vsel %vm5753, %v5523, %v5791
      %5793 = vst [vmem:[%s689 + $0x3c] sm:$0xf] %v5792
      %5794 = vst [vmem:[%s689 + $0x40] sm:$0xf] %v5532
      %v5795 = vld [vmem:[%s689 + $0x44] sm:$0x1]
      %v5796 = vsel %vm5759, %v5533, %v5795
      %5797 = vst [vmem:[%s689 + $0x44] sm:$0x1] %v5796
      %v5798 = vld [vmem:[%s689 + $0x48] sm:$0xf]
      %v5799 = vsel %vm5753, %v5540, %v5798
      %5800 = vst [vmem:[%s689 + $0x48] sm:$0xf] %v5799
      %5801 = vst [vmem:[%s689 + $0x4c] sm:$0xf] %v5549
      %v5802 = vld [vmem:[%s689 + $0x50] sm:$0x1]
      %v5803 = vsel %vm5759, %v5550, %v5802
      %5804 = vst [vmem:[%s689 + $0x50] sm:$0x1] %v5803
      %v5805 = vld [vmem:[%s689 + $0x54] sm:$0xf]
      %v5806 = vsel %vm5753, %v5557, %v5805
      %5807 = vst [vmem:[%s689 + $0x54] sm:$0xf] %v5806
      %5808 = vst [vmem:[%s689 + $0x58] sm:$0xf] %v5566
      %v5809 = vld [vmem:[%s689 + $0x5c] sm:$0x1]
      %v5810 = vsel %vm5759, %v5567, %v5809
      %5811 = vst [vmem:[%s689 + $0x5c] sm:$0x1] %v5810
      %v5812 = vld [vmem:[%s689 + $0x60] sm:$0xf]
      %v5813 = vsel %vm5753, %v5574, %v5812
      %5814 = vst [vmem:[%s689 + $0x60] sm:$0xf] %v5813
      %5815 = vst [vmem:[%s689 + $0x64] sm:$0xf] %v5583
      %v5816 = vld [vmem:[%s689 + $0x68] sm:$0x1]
      %v5817 = vsel %vm5759, %v5584, %v5816
      %5818 = vst [vmem:[%s689 + $0x68] sm:$0x1] %v5817
      %v5819 = vld [vmem:[%s689 + $0x6c] sm:$0xf]
      %v5820 = vsel %vm5753, %v5591, %v5819
      %5821 = vst [vmem:[%s689 + $0x6c] sm:$0xf] %v5820
      %5822 = vst [vmem:[%s689 + $0x70] sm:$0xf] %v5600
      %v5823 = vld [vmem:[%s689 + $0x74] sm:$0x1]
      %v5824 = vsel %vm5759, %v5601, %v5823
      %5825 = vst [vmem:[%s689 + $0x74] sm:$0x1] %v5824
      %v5826 = vld [vmem:[%s689 + $0x78] sm:$0xf]
      %v5827 = vsel %vm5753, %v5608, %v5826
      %5828 = vst [vmem:[%s689 + $0x78] sm:$0xf] %v5827
      %5829 = vst [vmem:[%s689 + $0x7c] sm:$0xf] %v5617
      %v5830 = vld [vmem:[%s689 + $0x80] sm:$0x1]
      %v5831 = vsel %vm5759, %v5618, %v5830
      %5832 = vst [vmem:[%s689 + $0x80] sm:$0x1] %v5831
      %v5833 = vld [vmem:[%s689 + $0x84] sm:$0xf]
      %v5834 = vsel %vm5753, %v5625, %v5833
      %5835 = vst [vmem:[%s689 + $0x84] sm:$0xf] %v5834
      %5836 = vst [vmem:[%s689 + $0x88] sm:$0xf] %v5634
      %v5837 = vld [vmem:[%s689 + $0x8c] sm:$0x1]
      %v5838 = vsel %vm5759, %v5635, %v5837
      %5839 = vst [vmem:[%s689 + $0x8c] sm:$0x1] %v5838
      %v5840 = vld [vmem:[%s689 + $0x90] sm:$0xf]
      %v5841 = vsel %vm5753, %v5642, %v5840
      %5842 = vst [vmem:[%s689 + $0x90] sm:$0xf] %v5841
      %5843 = vst [vmem:[%s689 + $0x94] sm:$0xf] %v5651
      %v5844 = vld [vmem:[%s689 + $0x98] sm:$0x1]
      %v5845 = vsel %vm5759, %v5652, %v5844
      %5846 = vst [vmem:[%s689 + $0x98] sm:$0x1] %v5845
      %v5847 = vld [vmem:[%s689 + $0x9c] sm:$0xf]
      %v5848 = vsel %vm5753, %v5659, %v5847
      %5849 = vst [vmem:[%s689 + $0x9c] sm:$0xf] %v5848
      %5850 = vst [vmem:[%s689 + $0xa0] sm:$0xf] %v5668
      %v5851 = vld [vmem:[%s689 + $0xa4] sm:$0x1]
      %v5852 = vsel %vm5759, %v5669, %v5851
      %5853 = vst [vmem:[%s689 + $0xa4] sm:$0x1] %v5852
      %v5854 = vld [vmem:[%s689 + $0xa8] sm:$0xf]
      %v5855 = vsel %vm5753, %v5676, %v5854
      %5856 = vst [vmem:[%s689 + $0xa8] sm:$0xf] %v5855
      %5857 = vst [vmem:[%s689 + $0xac] sm:$0xf] %v5685
      %v5858 = vld [vmem:[%s689 + $0xb0] sm:$0x1]
      %v5859 = vsel %vm5759, %v5686, %v5858
      %5860 = vst [vmem:[%s689 + $0xb0] sm:$0x1] %v5859
      %v5861 = vld [vmem:[%s689 + $0xb4] sm:$0xf]
      %v5862 = vsel %vm5753, %v5693, %v5861
      %5863 = vst [vmem:[%s689 + $0xb4] sm:$0xf] %v5862
      %5864 = vst [vmem:[%s689 + $0xb8] sm:$0xf] %v5702
      %v5865 = vld [vmem:[%s689 + $0xbc] sm:$0x1]
      %v5866 = vsel %vm5759, %v5703, %v5865
      %5867 = vst [vmem:[%s689 + $0xbc] sm:$0x1] %v5866
      %v5868 = vld [vmem:[#allocation2] sm:$0xf]
      %v5869 = vld [vmem:[#allocation2 + $0x4] sm:$0xf]
      %v5870 = vld [vmem:[#allocation2 + $0xc] sm:$0xf]
      %v5871 = vld [vmem:[#allocation2 + $0x10] sm:$0xf]
      %v5872 = vld [vmem:[#allocation2 + $0x18] sm:$0xf]
      %v5873 = vld [vmem:[#allocation2 + $0x1c] sm:$0xf]
      %v5874 = vld [vmem:[#allocation2 + $0x24] sm:$0xf]
      %v5875 = vld [vmem:[#allocation2 + $0x28] sm:$0xf]
      %v5876 = vld [vmem:[#allocation2 + $0x30] sm:$0xf]
      %v5877 = vld [vmem:[#allocation2 + $0x34] sm:$0xf]
      %v5878 = vld [vmem:[#allocation2 + $0x3c] sm:$0xf]
      %v5879 = vld [vmem:[#allocation2 + $0x40] sm:$0xf]
      %v5880 = vld [vmem:[#allocation2 + $0x48] sm:$0xf]
      %v5881 = vld [vmem:[#allocation2 + $0x4c] sm:$0xf]
      %v5882 = vld [vmem:[#allocation2 + $0x54] sm:$0xf]
      %v5883 = vld [vmem:[#allocation2 + $0x58] sm:$0xf]
      %v5884 = vld [vmem:[#allocation2 + $0x60] sm:$0xf]
      %v5885 = vld [vmem:[#allocation2 + $0x64] sm:$0xf]
      %v5886 = vld [vmem:[#allocation2 + $0x6c] sm:$0xf]
      %v5887 = vld [vmem:[#allocation2 + $0x70] sm:$0xf]
      %v5888 = vld [vmem:[#allocation2 + $0x78] sm:$0xf]
      %v5889 = vld [vmem:[#allocation2 + $0x7c] sm:$0xf]
      %v5890 = vld [vmem:[#allocation2 + $0x84] sm:$0xf]
      %v5891 = vld [vmem:[#allocation2 + $0x88] sm:$0xf]
      %v5892 = vld [vmem:[#allocation2 + $0x90] sm:$0xf]
      %v5893 = vld [vmem:[#allocation2 + $0x94] sm:$0xf]
      %v5894 = vld [vmem:[#allocation2 + $0x9c] sm:$0xf]
      %v5895 = vld [vmem:[#allocation2 + $0xa0] sm:$0xf]
      %v5896 = vld [vmem:[#allocation2 + $0xa8] sm:$0xf]
      %v5897 = vld [vmem:[#allocation2 + $0xac] sm:$0xf]
      %v5898 = vld [vmem:[#allocation2 + $0xb4] sm:$0xf]
      %v5899 = vld [vmem:[#allocation2 + $0xb8] sm:$0xf]
      %v5932 = vunpack.c.l.b16 %v5868
      %v5933 = vunpack.c.l.b16 %v5869
      %v5934 = vunpack.c.l.b16 %v5870
      %v5935 = vunpack.c.l.b16 %v5871
      %v5936 = vunpack.c.l.b16 %v5872
      %v5937 = vunpack.c.l.b16 %v5873
      %v5938 = vunpack.c.l.b16 %v5874
      %v5939 = vunpack.c.l.b16 %v5875
      %v5940 = vunpack.c.l.b16 %v5876
      %v5941 = vunpack.c.l.b16 %v5877
      %v5942 = vunpack.c.l.b16 %v5878
      %v5943 = vunpack.c.l.b16 %v5879
      %v5944 = vunpack.c.l.b16 %v5880
      %v5945 = vunpack.c.l.b16 %v5881
      %v5946 = vunpack.c.l.b16 %v5882
      %v5947 = vunpack.c.l.b16 %v5883
      %v5948 = vunpack.c.l.b16 %v5884
      %v5949 = vunpack.c.l.b16 %v5885
      %v5950 = vunpack.c.l.b16 %v5886
      %v5951 = vunpack.c.l.b16 %v5887
      %v5952 = vunpack.c.l.b16 %v5888
      %v5953 = vunpack.c.l.b16 %v5889
      %v5954 = vunpack.c.l.b16 %v5890
      %v5955 = vunpack.c.l.b16 %v5891
      %v5956 = vunpack.c.l.b16 %v5892
      %v5957 = vunpack.c.l.b16 %v5893
      %v5958 = vunpack.c.l.b16 %v5894
      %v5959 = vunpack.c.l.b16 %v5895
      %v5960 = vunpack.c.l.b16 %v5896
      %v5961 = vunpack.c.l.b16 %v5897
      %v5962 = vunpack.c.l.b16 %v5898
      %v5963 = vunpack.c.l.b16 %v5899
      %v5964 = vpack.c.b16 %v5933, %v5932
      %v5965 = vpack.c.b16 %v5935, %v5934
      %v5966 = vpack.c.b16 %v5937, %v5936
      %v5967 = vpack.c.b16 %v5939, %v5938
      %v5968 = vpack.c.b16 %v5941, %v5940
      %v5969 = vpack.c.b16 %v5943, %v5942
      %v5970 = vpack.c.b16 %v5945, %v5944
      %v5971 = vpack.c.b16 %v5947, %v5946
      %v5972 = vpack.c.b16 %v5949, %v5948
      %v5973 = vpack.c.b16 %v5951, %v5950
      %v5974 = vpack.c.b16 %v5953, %v5952
      %v5975 = vpack.c.b16 %v5955, %v5954
      %v5976 = vpack.c.b16 %v5957, %v5956
      %v5977 = vpack.c.b16 %v5959, %v5958
      %v5978 = vpack.c.b16 %v5961, %v5960
      %v5979 = vpack.c.b16 %v5963, %v5962
      %5996 = vst [vmem:[#allocation3] sm:$0xff] %v5964
      %5997 = vst [vmem:[#allocation3 + $0x48] sm:$0xff] %v5965
      %5998 = vst [vmem:[#allocation3 + $0x90] sm:$0xff] %v5966
      %5999 = vst [vmem:[#allocation3 + $0xd8] sm:$0xff] %v5967
      %6000 = vst [vmem:[#allocation3 + $0x120] sm:$0xff] %v5968
      %6001 = vst [vmem:[#allocation3 + $0x168] sm:$0xff] %v5969
      %6002 = vst [vmem:[#allocation3 + $0x1b0] sm:$0xff] %v5970
      %6003 = vst [vmem:[#allocation3 + $0x1f8] sm:$0xff] %v5971
      %6004 = vst [vmem:[#allocation3 + $0x240] sm:$0xff] %v5972
      %6005 = vst [vmem:[#allocation3 + $0x288] sm:$0xff] %v5973
      %6006 = vst [vmem:[#allocation3 + $0x2d0] sm:$0xff] %v5974
      %6007 = vst [vmem:[#allocation3 + $0x318] sm:$0xff] %v5975
      %6008 = vst [vmem:[#allocation3 + $0x360] sm:$0xff] %v5976
      %6009 = vst [vmem:[#allocation3 + $0x3a8] sm:$0xff] %v5977
      %6010 = vst [vmem:[#allocation3 + $0x3f0] sm:$0xff] %v5978
      %6011 = vst [vmem:[#allocation3 + $0x438] sm:$0xff] %v5979
      %v6012 = vld [vmem:[#allocation2] sm:$0xf]
      %v6013 = vld [vmem:[#allocation2 + $0x4] sm:$0xf]
      %v6014 = vld [vmem:[#allocation2 + $0x8] sm:$0x1]
      %v6015 = vld [vmem:[#allocation2 + $0xc] sm:$0xf]
      %v6016 = vld [vmem:[#allocation2 + $0x10] sm:$0xf]
      %v6017 = vld [vmem:[#allocation2 + $0x14] sm:$0x1]
      %v6018 = vld [vmem:[#allocation2 + $0x18] sm:$0xf]
      %v6019 = vld [vmem:[#allocation2 + $0x1c] sm:$0xf]
      %v6020 = vld [vmem:[#allocation2 + $0x20] sm:$0x1]
      %v6021 = vld [vmem:[#allocation2 + $0x24] sm:$0xf]
      %v6022 = vld [vmem:[#allocation2 + $0x28] sm:$0xf]
      %v6023 = vld [vmem:[#allocation2 + $0x2c] sm:$0x1]
      %v6024 = vld [vmem:[#allocation2 + $0x30] sm:$0xf]
      %v6025 = vld [vmem:[#allocation2 + $0x34] sm:$0xf]
      %v6026 = vld [vmem:[#allocation2 + $0x38] sm:$0x1]
      %v6027 = vld [vmem:[#allocation2 + $0x3c] sm:$0xf]
      %v6028 = vld [vmem:[#allocation2 + $0x40] sm:$0xf]
      %v6029 = vld [vmem:[#allocation2 + $0x44] sm:$0x1]
      %v6030 = vld [vmem:[#allocation2 + $0x48] sm:$0xf]
      %v6031 = vld [vmem:[#allocation2 + $0x4c] sm:$0xf]
      %v6032 = vld [vmem:[#allocation2 + $0x50] sm:$0x1]
      %v6033 = vld [vmem:[#allocation2 + $0x54] sm:$0xf]
      %v6034 = vld [vmem:[#allocation2 + $0x58] sm:$0xf]
      %v6035 = vld [vmem:[#allocation2 + $0x5c] sm:$0x1]
      %v6036 = vld [vmem:[#allocation2 + $0x60] sm:$0xf]
      %v6037 = vld [vmem:[#allocation2 + $0x64] sm:$0xf]
      %v6038 = vld [vmem:[#allocation2 + $0x68] sm:$0x1]
      %v6039 = vld [vmem:[#allocation2 + $0x6c] sm:$0xf]
      %v6040 = vld [vmem:[#allocation2 + $0x70] sm:$0xf]
      %v6041 = vld [vmem:[#allocation2 + $0x74] sm:$0x1]
      %v6042 = vld [vmem:[#allocation2 + $0x78] sm:$0xf]
      %v6043 = vld [vmem:[#allocation2 + $0x7c] sm:$0xf]
      %v6044 = vld [vmem:[#allocation2 + $0x80] sm:$0x1]
      %v6045 = vld [vmem:[#allocation2 + $0x84] sm:$0xf]
      %v6046 = vld [vmem:[#allocation2 + $0x88] sm:$0xf]
      %v6047 = vld [vmem:[#allocation2 + $0x8c] sm:$0x1]
      %v6048 = vld [vmem:[#allocation2 + $0x90] sm:$0xf]
      %v6049 = vld [vmem:[#allocation2 + $0x94] sm:$0xf]
      %v6050 = vld [vmem:[#allocation2 + $0x98] sm:$0x1]
      %v6051 = vld [vmem:[#allocation2 + $0x9c] sm:$0xf]
      %v6052 = vld [vmem:[#allocation2 + $0xa0] sm:$0xf]
      %v6053 = vld [vmem:[#allocation2 + $0xa4] sm:$0x1]
      %v6054 = vld [vmem:[#allocation2 + $0xa8] sm:$0xf]
      %v6055 = vld [vmem:[#allocation2 + $0xac] sm:$0xf]
      %v6056 = vld [vmem:[#allocation2 + $0xb0] sm:$0x1]
      %v6057 = vld [vmem:[#allocation2 + $0xb4] sm:$0xf]
      %v6058 = vld [vmem:[#allocation2 + $0xb8] sm:$0xf]
      %v6059 = vld [vmem:[#allocation2 + $0xbc] sm:$0x1]
      %v6061 = vshrl.u32 %v6012, 16
      %v6063 = vrot.slane %v6061, 4
      %v6064 = vshll.u32 %v6012, 16
      %v6066 = vrot.slane %v6064, 5
      %v6067 = vor.u32 %v6063, %v6066
      %v6068 = vrot.slane %v6067, 4
      %v6070 = vshll.u32 %v6013, 16
      %v6072 = vrot.slane %v6070, 5
      %v6073 = vsel %vm1002, %v6068, %v6072
      %v6074 = vshrl.u32 %v6013, 16
      %v6076 = vrot.slane %v6074, 4
      %v6077 = vor.u32 %v6076, %v6072
      %v6078 = vrot.slane %v6077, 4
      %v6080 = vshll.u32 %v6014, 16
      %v6082 = vrot.slane %v6080, 5
      %v6083 = vsel %vm1002, %v6078, %v6082
      %v6085 = vshrl.u32 %v6015, 16
      %v6087 = vrot.slane %v6085, 4
      %v6088 = vshll.u32 %v6015, 16
      %v6090 = vrot.slane %v6088, 5
      %v6091 = vor.u32 %v6087, %v6090
      %v6092 = vrot.slane %v6091, 4
      %v6094 = vshll.u32 %v6016, 16
      %v6096 = vrot.slane %v6094, 5
      %v6097 = vsel %vm1002, %v6092, %v6096
      %v6098 = vshrl.u32 %v6016, 16
      %v6100 = vrot.slane %v6098, 4
      %v6101 = vor.u32 %v6100, %v6096
      %v6102 = vrot.slane %v6101, 4
      %v6104 = vshll.u32 %v6017, 16
      %v6106 = vrot.slane %v6104, 5
      %v6107 = vsel %vm1002, %v6102, %v6106
      %v6109 = vshrl.u32 %v6018, 16
      %v6111 = vrot.slane %v6109, 4
      %v6112 = vshll.u32 %v6018, 16
      %v6114 = vrot.slane %v6112, 5
      %v6115 = vor.u32 %v6111, %v6114
      %v6116 = vrot.slane %v6115, 4
      %v6118 = vshll.u32 %v6019, 16
      %v6120 = vrot.slane %v6118, 5
      %v6121 = vsel %vm1002, %v6116, %v6120
      %v6122 = vshrl.u32 %v6019, 16
      %v6124 = vrot.slane %v6122, 4
      %v6125 = vor.u32 %v6124, %v6120
      %v6126 = vrot.slane %v6125, 4
      %v6128 = vshll.u32 %v6020, 16
      %v6130 = vrot.slane %v6128, 5
      %v6131 = vsel %vm1002, %v6126, %v6130
      %v6133 = vshrl.u32 %v6021, 16
      %v6135 = vrot.slane %v6133, 4
      %v6136 = vshll.u32 %v6021, 16
      %v6138 = vrot.slane %v6136, 5
      %v6139 = vor.u32 %v6135, %v6138
      %v6140 = vrot.slane %v6139, 4
      %v6142 = vshll.u32 %v6022, 16
      %v6144 = vrot.slane %v6142, 5
      %v6145 = vsel %vm1002, %v6140, %v6144
      %v6146 = vshrl.u32 %v6022, 16
      %v6148 = vrot.slane %v6146, 4
      %v6149 = vor.u32 %v6148, %v6144
      %v6150 = vrot.slane %v6149, 4
      %v6152 = vshll.u32 %v6023, 16
      %v6154 = vrot.slane %v6152, 5
      %v6155 = vsel %vm1002, %v6150, %v6154
      %v6157 = vshrl.u32 %v6024, 16
      %v6159 = vrot.slane %v6157, 4
      %v6160 = vshll.u32 %v6024, 16
      %v6162 = vrot.slane %v6160, 5
      %v6163 = vor.u32 %v6159, %v6162
      %v6164 = vrot.slane %v6163, 4
      %v6166 = vshll.u32 %v6025, 16
      %v6168 = vrot.slane %v6166, 5
      %v6169 = vsel %vm1002, %v6164, %v6168
      %v6170 = vshrl.u32 %v6025, 16
      %v6172 = vrot.slane %v6170, 4
      %v6173 = vor.u32 %v6172, %v6168
      %v6174 = vrot.slane %v6173, 4
      %v6176 = vshll.u32 %v6026, 16
      %v6178 = vrot.slane %v6176, 5
      %v6179 = vsel %vm1002, %v6174, %v6178
      %v6181 = vshrl.u32 %v6027, 16
      %v6183 = vrot.slane %v6181, 4
      %v6184 = vshll.u32 %v6027, 16
      %v6186 = vrot.slane %v6184, 5
      %v6187 = vor.u32 %v6183, %v6186
      %v6188 = vrot.slane %v6187, 4
      %v6190 = vshll.u32 %v6028, 16
      %v6192 = vrot.slane %v6190, 5
      %v6193 = vsel %vm1002, %v6188, %v6192
      %v6194 = vshrl.u32 %v6028, 16
      %v6196 = vrot.slane %v6194, 4
      %v6197 = vor.u32 %v6196, %v6192
      %v6198 = vrot.slane %v6197, 4
      %v6200 = vshll.u32 %v6029, 16
      %v6202 = vrot.slane %v6200, 5
      %v6203 = vsel %vm1002, %v6198, %v6202
      %v6205 = vshrl.u32 %v6030, 16
      %v6207 = vrot.slane %v6205, 4
      %v6208 = vshll.u32 %v6030, 16
      %v6210 = vrot.slane %v6208, 5
      %v6211 = vor.u32 %v6207, %v6210
      %v6212 = vrot.slane %v6211, 4
      %v6214 = vshll.u32 %v6031, 16
      %v6216 = vrot.slane %v6214, 5
      %v6217 = vsel %vm1002, %v6212, %v6216
      %v6218 = vshrl.u32 %v6031, 16
      %v6220 = vrot.slane %v6218, 4
      %v6221 = vor.u32 %v6220, %v6216
      %v6222 = vrot.slane %v6221, 4
      %v6224 = vshll.u32 %v6032, 16
      %v6226 = vrot.slane %v6224, 5
      %v6227 = vsel %vm1002, %v6222, %v6226
      %v6229 = vshrl.u32 %v6033, 16
      %v6231 = vrot.slane %v6229, 4
      %v6232 = vshll.u32 %v6033, 16
      %v6234 = vrot.slane %v6232, 5
      %v6235 = vor.u32 %v6231, %v6234
      %v6236 = vrot.slane %v6235, 4
      %v6238 = vshll.u32 %v6034, 16
      %v6240 = vrot.slane %v6238, 5
      %v6241 = vsel %vm1002, %v6236, %v6240
      %v6242 = vshrl.u32 %v6034, 16
      %v6244 = vrot.slane %v6242, 4
      %v6245 = vor.u32 %v6244, %v6240
      %v6246 = vrot.slane %v6245, 4
      %v6248 = vshll.u32 %v6035, 16
      %v6250 = vrot.slane %v6248, 5
      %v6251 = vsel %vm1002, %v6246, %v6250
      %v6253 = vshrl.u32 %v6036, 16
      %v6255 = vrot.slane %v6253, 4
      %v6256 = vshll.u32 %v6036, 16
      %v6258 = vrot.slane %v6256, 5
      %v6259 = vor.u32 %v6255, %v6258
      %v6260 = vrot.slane %v6259, 4
      %v6262 = vshll.u32 %v6037, 16
      %v6264 = vrot.slane %v6262, 5
      %v6265 = vsel %vm1002, %v6260, %v6264
      %v6266 = vshrl.u32 %v6037, 16
      %v6268 = vrot.slane %v6266, 4
      %v6269 = vor.u32 %v6268, %v6264
      %v6270 = vrot.slane %v6269, 4
      %v6272 = vshll.u32 %v6038, 16
      %v6274 = vrot.slane %v6272, 5
      %v6275 = vsel %vm1002, %v6270, %v6274
      %v6277 = vshrl.u32 %v6039, 16
      %v6279 = vrot.slane %v6277, 4
      %v6280 = vshll.u32 %v6039, 16
      %v6282 = vrot.slane %v6280, 5
      %v6283 = vor.u32 %v6279, %v6282
      %v6284 = vrot.slane %v6283, 4
      %v6286 = vshll.u32 %v6040, 16
      %v6288 = vrot.slane %v6286, 5
      %v6289 = vsel %vm1002, %v6284, %v6288
      %v6290 = vshrl.u32 %v6040, 16
      %v6292 = vrot.slane %v6290, 4
      %v6293 = vor.u32 %v6292, %v6288
      %v6294 = vrot.slane %v6293, 4
      %v6296 = vshll.u32 %v6041, 16
      %v6298 = vrot.slane %v6296, 5
      %v6299 = vsel %vm1002, %v6294, %v6298
      %v6301 = vshrl.u32 %v6042, 16
      %v6303 = vrot.slane %v6301, 4
      %v6304 = vshll.u32 %v6042, 16
      %v6306 = vrot.slane %v6304, 5
      %v6307 = vor.u32 %v6303, %v6306
      %v6308 = vrot.slane %v6307, 4
      %v6310 = vshll.u32 %v6043, 16
      %v6312 = vrot.slane %v6310, 5
      %v6313 = vsel %vm1002, %v6308, %v6312
      %v6314 = vshrl.u32 %v6043, 16
      %v6316 = vrot.slane %v6314, 4
      %v6317 = vor.u32 %v6316, %v6312
      %v6318 = vrot.slane %v6317, 4
      %v6320 = vshll.u32 %v6044, 16
      %v6322 = vrot.slane %v6320, 5
      %v6323 = vsel %vm1002, %v6318, %v6322
      %v6325 = vshrl.u32 %v6045, 16
      %v6327 = vrot.slane %v6325, 4
      %v6328 = vshll.u32 %v6045, 16
      %v6330 = vrot.slane %v6328, 5
      %v6331 = vor.u32 %v6327, %v6330
      %v6332 = vrot.slane %v6331, 4
      %v6334 = vshll.u32 %v6046, 16
      %v6336 = vrot.slane %v6334, 5
      %v6337 = vsel %vm1002, %v6332, %v6336
      %v6338 = vshrl.u32 %v6046, 16
      %v6340 = vrot.slane %v6338, 4
      %v6341 = vor.u32 %v6340, %v6336
      %v6342 = vrot.slane %v6341, 4
      %v6344 = vshll.u32 %v6047, 16
      %v6346 = vrot.slane %v6344, 5
      %v6347 = vsel %vm1002, %v6342, %v6346
      %v6349 = vshrl.u32 %v6048, 16
      %v6351 = vrot.slane %v6349, 4
      %v6352 = vshll.u32 %v6048, 16
      %v6354 = vrot.slane %v6352, 5
      %v6355 = vor.u32 %v6351, %v6354
      %v6356 = vrot.slane %v6355, 4
      %v6358 = vshll.u32 %v6049, 16
      %v6360 = vrot.slane %v6358, 5
      %v6361 = vsel %vm1002, %v6356, %v6360
      %v6362 = vshrl.u32 %v6049, 16
      %v6364 = vrot.slane %v6362, 4
      %v6365 = vor.u32 %v6364, %v6360
      %v6366 = vrot.slane %v6365, 4
      %v6368 = vshll.u32 %v6050, 16
      %v6370 = vrot.slane %v6368, 5
      %v6371 = vsel %vm1002, %v6366, %v6370
      %v6373 = vshrl.u32 %v6051, 16
      %v6375 = vrot.slane %v6373, 4
      %v6376 = vshll.u32 %v6051, 16
      %v6378 = vrot.slane %v6376, 5
      %v6379 = vor.u32 %v6375, %v6378
      %v6380 = vrot.slane %v6379, 4
      %v6382 = vshll.u32 %v6052, 16
      %v6384 = vrot.slane %v6382, 5
      %v6385 = vsel %vm1002, %v6380, %v6384
      %v6386 = vshrl.u32 %v6052, 16
      %v6388 = vrot.slane %v6386, 4
      %v6389 = vor.u32 %v6388, %v6384
      %v6390 = vrot.slane %v6389, 4
      %v6392 = vshll.u32 %v6053, 16
      %v6394 = vrot.slane %v6392, 5
      %v6395 = vsel %vm1002, %v6390, %v6394
      %v6397 = vshrl.u32 %v6054, 16
      %v6399 = vrot.slane %v6397, 4
      %v6400 = vshll.u32 %v6054, 16
      %v6402 = vrot.slane %v6400, 5
      %v6403 = vor.u32 %v6399, %v6402
      %v6404 = vrot.slane %v6403, 4
      %v6406 = vshll.u32 %v6055, 16
      %v6408 = vrot.slane %v6406, 5
      %v6409 = vsel %vm1002, %v6404, %v6408
      %v6410 = vshrl.u32 %v6055, 16
      %v6412 = vrot.slane %v6410, 4
      %v6413 = vor.u32 %v6412, %v6408
      %v6414 = vrot.slane %v6413, 4
      %v6416 = vshll.u32 %v6056, 16
      %v6418 = vrot.slane %v6416, 5
      %v6419 = vsel %vm1002, %v6414, %v6418
      %v6421 = vshrl.u32 %v6057, 16
      %v6423 = vrot.slane %v6421, 4
      %v6424 = vshll.u32 %v6057, 16
      %v6426 = vrot.slane %v6424, 5
      %v6427 = vor.u32 %v6423, %v6426
      %v6428 = vrot.slane %v6427, 4
      %v6430 = vshll.u32 %v6058, 16
      %v6432 = vrot.slane %v6430, 5
      %v6433 = vsel %vm1002, %v6428, %v6432
      %v6434 = vshrl.u32 %v6058, 16
      %v6436 = vrot.slane %v6434, 4
      %v6437 = vor.u32 %v6436, %v6432
      %v6438 = vrot.slane %v6437, 4
      %v6440 = vshll.u32 %v6059, 16
      %v6442 = vrot.slane %v6440, 5
      %v6443 = vsel %vm1002, %v6438, %v6442
      %v6444 = vunpack.c.l.b16 %v6073
      %v6445 = vunpack.c.l.b16 %v6083
      %v6446 = vunpack.c.l.b16 %v6097
      %v6447 = vunpack.c.l.b16 %v6107
      %v6448 = vunpack.c.l.b16 %v6121
      %v6449 = vunpack.c.l.b16 %v6131
      %v6450 = vunpack.c.l.b16 %v6145
      %v6451 = vunpack.c.l.b16 %v6155
      %v6452 = vunpack.c.l.b16 %v6169
      %v6453 = vunpack.c.l.b16 %v6179
      %v6454 = vunpack.c.l.b16 %v6193
      %v6455 = vunpack.c.l.b16 %v6203
      %v6456 = vunpack.c.l.b16 %v6217
      %v6457 = vunpack.c.l.b16 %v6227
      %v6458 = vunpack.c.l.b16 %v6241
      %v6459 = vunpack.c.l.b16 %v6251
      %v6460 = vunpack.c.l.b16 %v6265
      %v6461 = vunpack.c.l.b16 %v6275
      %v6462 = vunpack.c.l.b16 %v6289
      %v6463 = vunpack.c.l.b16 %v6299
      %v6464 = vunpack.c.l.b16 %v6313
      %v6465 = vunpack.c.l.b16 %v6323
      %v6466 = vunpack.c.l.b16 %v6337
      %v6467 = vunpack.c.l.b16 %v6347
      %v6468 = vunpack.c.l.b16 %v6361
      %v6469 = vunpack.c.l.b16 %v6371
      %v6470 = vunpack.c.l.b16 %v6385
      %v6471 = vunpack.c.l.b16 %v6395
      %v6472 = vunpack.c.l.b16 %v6409
      %v6473 = vunpack.c.l.b16 %v6419
      %v6474 = vunpack.c.l.b16 %v6433
      %v6475 = vunpack.c.l.b16 %v6443
      %v6476 = vpack.c.b16 %v6445, %v6444
      %v6477 = vpack.c.b16 %v6447, %v6446
      %v6478 = vpack.c.b16 %v6449, %v6448
      %v6479 = vpack.c.b16 %v6451, %v6450
      %v6480 = vpack.c.b16 %v6453, %v6452
      %v6481 = vpack.c.b16 %v6455, %v6454
      %v6482 = vpack.c.b16 %v6457, %v6456
      %v6483 = vpack.c.b16 %v6459, %v6458
      %v6484 = vpack.c.b16 %v6461, %v6460
      %v6485 = vpack.c.b16 %v6463, %v6462
      %v6486 = vpack.c.b16 %v6465, %v6464
      %v6487 = vpack.c.b16 %v6467, %v6466
      %v6488 = vpack.c.b16 %v6469, %v6468
      %v6489 = vpack.c.b16 %v6471, %v6470
      %v6490 = vpack.c.b16 %v6473, %v6472
      %v6491 = vpack.c.b16 %v6475, %v6474
      %6508 = vst [vmem:[#allocation3 + $0x8] sm:$0xff] %v6476
      %6509 = vst [vmem:[#allocation3 + $0x50] sm:$0xff] %v6477
      %6510 = vst [vmem:[#allocation3 + $0x98] sm:$0xff] %v6478
      %6511 = vst [vmem:[#allocation3 + $0xe0] sm:$0xff] %v6479
      %6512 = vst [vmem:[#allocation3 + $0x128] sm:$0xff] %v6480
      %6513 = vst [vmem:[#allocation3 + $0x170] sm:$0xff] %v6481
      %6514 = vst [vmem:[#allocation3 + $0x1b8] sm:$0xff] %v6482
      %6515 = vst [vmem:[#allocation3 + $0x200] sm:$0xff] %v6483
      %6516 = vst [vmem:[#allocation3 + $0x248] sm:$0xff] %v6484
      %6517 = vst [vmem:[#allocation3 + $0x290] sm:$0xff] %v6485
      %6518 = vst [vmem:[#allocation3 + $0x2d8] sm:$0xff] %v6486
      %6519 = vst [vmem:[#allocation3 + $0x320] sm:$0xff] %v6487
      %6520 = vst [vmem:[#allocation3 + $0x368] sm:$0xff] %v6488
      %6521 = vst [vmem:[#allocation3 + $0x3b0] sm:$0xff] %v6489
      %6522 = vst [vmem:[#allocation3 + $0x3f8] sm:$0xff] %v6490
      %6523 = vst [vmem:[#allocation3 + $0x440] sm:$0xff] %v6491
      %v6524 = vld [vmem:[#allocation2] sm:$0xe]
      %v6525 = vld [vmem:[#allocation2 + $0x4] sm:$0xf]
      %v6526 = vld [vmem:[#allocation2 + $0x8] sm:$0x1]
      %v6527 = vld [vmem:[#allocation2 + $0xc] sm:$0xe]
      %v6528 = vld [vmem:[#allocation2 + $0x10] sm:$0xf]
      %v6529 = vld [vmem:[#allocation2 + $0x14] sm:$0x1]
      %v6530 = vld [vmem:[#allocation2 + $0x18] sm:$0xe]
      %v6531 = vld [vmem:[#allocation2 + $0x1c] sm:$0xf]
      %v6532 = vld [vmem:[#allocation2 + $0x20] sm:$0x1]
      %v6533 = vld [vmem:[#allocation2 + $0x24] sm:$0xe]
      %v6534 = vld [vmem:[#allocation2 + $0x28] sm:$0xf]
      %v6535 = vld [vmem:[#allocation2 + $0x2c] sm:$0x1]
      %v6536 = vld [vmem:[#allocation2 + $0x30] sm:$0xe]
      %v6537 = vld [vmem:[#allocation2 + $0x34] sm:$0xf]
      %v6538 = vld [vmem:[#allocation2 + $0x38] sm:$0x1]
      %v6539 = vld [vmem:[#allocation2 + $0x3c] sm:$0xe]
      %v6540 = vld [vmem:[#allocation2 + $0x40] sm:$0xf]
      %v6541 = vld [vmem:[#allocation2 + $0x44] sm:$0x1]
      %v6542 = vld [vmem:[#allocation2 + $0x48] sm:$0xe]
      %v6543 = vld [vmem:[#allocation2 + $0x4c] sm:$0xf]
      %v6544 = vld [vmem:[#allocation2 + $0x50] sm:$0x1]
      %v6545 = vld [vmem:[#allocation2 + $0x54] sm:$0xe]
      %v6546 = vld [vmem:[#allocation2 + $0x58] sm:$0xf]
      %v6547 = vld [vmem:[#allocation2 + $0x5c] sm:$0x1]
      %v6548 = vld [vmem:[#allocation2 + $0x60] sm:$0xe]
      %v6549 = vld [vmem:[#allocation2 + $0x64] sm:$0xf]
      %v6550 = vld [vmem:[#allocation2 + $0x68] sm:$0x1]
      %v6551 = vld [vmem:[#allocation2 + $0x6c] sm:$0xe]
      %v6552 = vld [vmem:[#allocation2 + $0x70] sm:$0xf]
      %v6553 = vld [vmem:[#allocation2 + $0x74] sm:$0x1]
      %v6554 = vld [vmem:[#allocation2 + $0x78] sm:$0xe]
      %v6555 = vld [vmem:[#allocation2 + $0x7c] sm:$0xf]
      %v6556 = vld [vmem:[#allocation2 + $0x80] sm:$0x1]
      %v6557 = vld [vmem:[#allocation2 + $0x84] sm:$0xe]
      %v6558 = vld [vmem:[#allocation2 + $0x88] sm:$0xf]
      %v6559 = vld [vmem:[#allocation2 + $0x8c] sm:$0x1]
      %v6560 = vld [vmem:[#allocation2 + $0x90] sm:$0xe]
      %v6561 = vld [vmem:[#allocation2 + $0x94] sm:$0xf]
      %v6562 = vld [vmem:[#allocation2 + $0x98] sm:$0x1]
      %v6563 = vld [vmem:[#allocation2 + $0x9c] sm:$0xe]
      %v6564 = vld [vmem:[#allocation2 + $0xa0] sm:$0xf]
      %v6565 = vld [vmem:[#allocation2 + $0xa4] sm:$0x1]
      %v6566 = vld [vmem:[#allocation2 + $0xa8] sm:$0xe]
      %v6567 = vld [vmem:[#allocation2 + $0xac] sm:$0xf]
      %v6568 = vld [vmem:[#allocation2 + $0xb0] sm:$0x1]
      %v6569 = vld [vmem:[#allocation2 + $0xb4] sm:$0xe]
      %v6570 = vld [vmem:[#allocation2 + $0xb8] sm:$0xf]
      %v6571 = vld [vmem:[#allocation2 + $0xbc] sm:$0x1]
      %v6620 = vrot.slane %v6524, 5
      %v6621 = vrot.slane %v6620, 4
      %v6622 = vrot.slane %v6525, 5
      %v6623 = vsel %vm1565, %v6621, %v6622
      %v6624 = vrot.slane %v6622, 4
      %v6625 = vrot.slane %v6526, 5
      %v6626 = vsel %vm1565, %v6624, %v6625
      %v6627 = vrot.slane %v6527, 5
      %v6628 = vrot.slane %v6627, 4
      %v6629 = vrot.slane %v6528, 5
      %v6630 = vsel %vm1565, %v6628, %v6629
      %v6631 = vrot.slane %v6629, 4
      %v6632 = vrot.slane %v6529, 5
      %v6633 = vsel %vm1565, %v6631, %v6632
      %v6634 = vrot.slane %v6530, 5
      %v6635 = vrot.slane %v6634, 4
      %v6636 = vrot.slane %v6531, 5
      %v6637 = vsel %vm1565, %v6635, %v6636
      %v6638 = vrot.slane %v6636, 4
      %v6639 = vrot.slane %v6532, 5
      %v6640 = vsel %vm1565, %v6638, %v6639
      %v6641 = vrot.slane %v6533, 5
      %v6642 = vrot.slane %v6641, 4
      %v6643 = vrot.slane %v6534, 5
      %v6644 = vsel %vm1565, %v6642, %v6643
      %v6645 = vrot.slane %v6643, 4
      %v6646 = vrot.slane %v6535, 5
      %v6647 = vsel %vm1565, %v6645, %v6646
      %v6648 = vrot.slane %v6536, 5
      %v6649 = vrot.slane %v6648, 4
      %v6650 = vrot.slane %v6537, 5
      %v6651 = vsel %vm1565, %v6649, %v6650
      %v6652 = vrot.slane %v6650, 4
      %v6653 = vrot.slane %v6538, 5
      %v6654 = vsel %vm1565, %v6652, %v6653
      %v6655 = vrot.slane %v6539, 5
      %v6656 = vrot.slane %v6655, 4
      %v6657 = vrot.slane %v6540, 5
      %v6658 = vsel %vm1565, %v6656, %v6657
      %v6659 = vrot.slane %v6657, 4
      %v6660 = vrot.slane %v6541, 5
      %v6661 = vsel %vm1565, %v6659, %v6660
      %v6662 = vrot.slane %v6542, 5
      %v6663 = vrot.slane %v6662, 4
      %v6664 = vrot.slane %v6543, 5
      %v6665 = vsel %vm1565, %v6663, %v6664
      %v6666 = vrot.slane %v6664, 4
      %v6667 = vrot.slane %v6544, 5
      %v6668 = vsel %vm1565, %v6666, %v6667
      %v6669 = vrot.slane %v6545, 5
      %v6670 = vrot.slane %v6669, 4
      %v6671 = vrot.slane %v6546, 5
      %v6672 = vsel %vm1565, %v6670, %v6671
      %v6673 = vrot.slane %v6671, 4
      %v6674 = vrot.slane %v6547, 5
      %v6675 = vsel %vm1565, %v6673, %v6674
      %v6676 = vrot.slane %v6548, 5
      %v6677 = vrot.slane %v6676, 4
      %v6678 = vrot.slane %v6549, 5
      %v6679 = vsel %vm1565, %v6677, %v6678
      %v6680 = vrot.slane %v6678, 4
      %v6681 = vrot.slane %v6550, 5
      %v6682 = vsel %vm1565, %v6680, %v6681
      %v6683 = vrot.slane %v6551, 5
      %v6684 = vrot.slane %v6683, 4
      %v6685 = vrot.slane %v6552, 5
      %v6686 = vsel %vm1565, %v6684, %v6685
      %v6687 = vrot.slane %v6685, 4
      %v6688 = vrot.slane %v6553, 5
      %v6689 = vsel %vm1565, %v6687, %v6688
      %v6690 = vrot.slane %v6554, 5
      %v6691 = vrot.slane %v6690, 4
      %v6692 = vrot.slane %v6555, 5
      %v6693 = vsel %vm1565, %v6691, %v6692
      %v6694 = vrot.slane %v6692, 4
      %v6695 = vrot.slane %v6556, 5
      %v6696 = vsel %vm1565, %v6694, %v6695
      %v6697 = vrot.slane %v6557, 5
      %v6698 = vrot.slane %v6697, 4
      %v6699 = vrot.slane %v6558, 5
      %v6700 = vsel %vm1565, %v6698, %v6699
      %v6701 = vrot.slane %v6699, 4
      %v6702 = vrot.slane %v6559, 5
      %v6703 = vsel %vm1565, %v6701, %v6702
      %v6704 = vrot.slane %v6560, 5
      %v6705 = vrot.slane %v6704, 4
      %v6706 = vrot.slane %v6561, 5
      %v6707 = vsel %vm1565, %v6705, %v6706
      %v6708 = vrot.slane %v6706, 4
      %v6709 = vrot.slane %v6562, 5
      %v6710 = vsel %vm1565, %v6708, %v6709
      %v6711 = vrot.slane %v6563, 5
      %v6712 = vrot.slane %v6711, 4
      %v6713 = vrot.slane %v6564, 5
      %v6714 = vsel %vm1565, %v6712, %v6713
      %v6715 = vrot.slane %v6713, 4
      %v6716 = vrot.slane %v6565, 5
      %v6717 = vsel %vm1565, %v6715, %v6716
      %v6718 = vrot.slane %v6566, 5
      %v6719 = vrot.slane %v6718, 4
      %v6720 = vrot.slane %v6567, 5
      %v6721 = vsel %vm1565, %v6719, %v6720
      %v6722 = vrot.slane %v6720, 4
      %v6723 = vrot.slane %v6568, 5
      %v6724 = vsel %vm1565, %v6722, %v6723
      %v6725 = vrot.slane %v6569, 5
      %v6726 = vrot.slane %v6725, 4
      %v6727 = vrot.slane %v6570, 5
      %v6728 = vsel %vm1565, %v6726, %v6727
      %v6729 = vrot.slane %v6727, 4
      %v6730 = vrot.slane %v6571, 5
      %v6731 = vsel %vm1565, %v6729, %v6730
      %v6732 = vunpack.c.l.b16 %v6623
      %v6733 = vunpack.c.l.b16 %v6626
      %v6734 = vunpack.c.l.b16 %v6630
      %v6735 = vunpack.c.l.b16 %v6633
      %v6736 = vunpack.c.l.b16 %v6637
      %v6737 = vunpack.c.l.b16 %v6640
      %v6738 = vunpack.c.l.b16 %v6644
      %v6739 = vunpack.c.l.b16 %v6647
      %v6740 = vunpack.c.l.b16 %v6651
      %v6741 = vunpack.c.l.b16 %v6654
      %v6742 = vunpack.c.l.b16 %v6658
      %v6743 = vunpack.c.l.b16 %v6661
      %v6744 = vunpack.c.l.b16 %v6665
      %v6745 = vunpack.c.l.b16 %v6668
      %v6746 = vunpack.c.l.b16 %v6672
      %v6747 = vunpack.c.l.b16 %v6675
      %v6748 = vunpack.c.l.b16 %v6679
      %v6749 = vunpack.c.l.b16 %v6682
      %v6750 = vunpack.c.l.b16 %v6686
      %v6751 = vunpack.c.l.b16 %v6689
      %v6752 = vunpack.c.l.b16 %v6693
      %v6753 = vunpack.c.l.b16 %v6696
      %v6754 = vunpack.c.l.b16 %v6700
      %v6755 = vunpack.c.l.b16 %v6703
      %v6756 = vunpack.c.l.b16 %v6707
      %v6757 = vunpack.c.l.b16 %v6710
      %v6758 = vunpack.c.l.b16 %v6714
      %v6759 = vunpack.c.l.b16 %v6717
      %v6760 = vunpack.c.l.b16 %v6721
      %v6761 = vunpack.c.l.b16 %v6724
      %v6762 = vunpack.c.l.b16 %v6728
      %v6763 = vunpack.c.l.b16 %v6731
      %v6764 = vpack.c.b16 %v6733, %v6732
      %v6765 = vpack.c.b16 %v6735, %v6734
      %v6766 = vpack.c.b16 %v6737, %v6736
      %v6767 = vpack.c.b16 %v6739, %v6738
      %v6768 = vpack.c.b16 %v6741, %v6740
      %v6769 = vpack.c.b16 %v6743, %v6742
      %v6770 = vpack.c.b16 %v6745, %v6744
      %v6771 = vpack.c.b16 %v6747, %v6746
      %v6772 = vpack.c.b16 %v6749, %v6748
      %v6773 = vpack.c.b16 %v6751, %v6750
      %v6774 = vpack.c.b16 %v6753, %v6752
      %v6775 = vpack.c.b16 %v6755, %v6754
      %v6776 = vpack.c.b16 %v6757, %v6756
      %v6777 = vpack.c.b16 %v6759, %v6758
      %v6778 = vpack.c.b16 %v6761, %v6760
      %v6779 = vpack.c.b16 %v6763, %v6762
      %6796 = vst [vmem:[#allocation3 + $0x10] sm:$0xff] %v6764
      %6797 = vst [vmem:[#allocation3 + $0x58] sm:$0xff] %v6765
      %6798 = vst [vmem:[#allocation3 + $0xa0] sm:$0xff] %v6766
      %6799 = vst [vmem:[#allocation3 + $0xe8] sm:$0xff] %v6767
      %6800 = vst [vmem:[#allocation3 + $0x130] sm:$0xff] %v6768
      %6801 = vst [vmem:[#allocation3 + $0x178] sm:$0xff] %v6769
      %6802 = vst [vmem:[#allocation3 + $0x1c0] sm:$0xff] %v6770
      %6803 = vst [vmem:[#allocation3 + $0x208] sm:$0xff] %v6771
      %6804 = vst [vmem:[#allocation3 + $0x250] sm:$0xff] %v6772
      %6805 = vst [vmem:[#allocation3 + $0x298] sm:$0xff] %v6773
      %6806 = vst [vmem:[#allocation3 + $0x2e0] sm:$0xff] %v6774
      %6807 = vst [vmem:[#allocation3 + $0x328] sm:$0xff] %v6775
      %6808 = vst [vmem:[#allocation3 + $0x370] sm:$0xff] %v6776
      %6809 = vst [vmem:[#allocation3 + $0x3b8] sm:$0xff] %v6777
      %6810 = vst [vmem:[#allocation3 + $0x400] sm:$0xff] %v6778
      %6811 = vst [vmem:[#allocation3 + $0x448] sm:$0xff] %v6779
      %v6812 = vld [vmem:[%s689] sm:$0xf]
      %v6813 = vld [vmem:[%s689 + $0x4] sm:$0xf]
      %v6814 = vld [vmem:[%s689 + $0xc] sm:$0xf]
      %v6815 = vld [vmem:[%s689 + $0x10] sm:$0xf]
      %v6816 = vld [vmem:[%s689 + $0x18] sm:$0xf]
      %v6817 = vld [vmem:[%s689 + $0x1c] sm:$0xf]
      %v6818 = vld [vmem:[%s689 + $0x24] sm:$0xf]
      %v6819 = vld [vmem:[%s689 + $0x28] sm:$0xf]
      %v6820 = vld [vmem:[%s689 + $0x30] sm:$0xf]
      %v6821 = vld [vmem:[%s689 + $0x34] sm:$0xf]
      %v6822 = vld [vmem:[%s689 + $0x3c] sm:$0xf]
      %v6823 = vld [vmem:[%s689 + $0x40] sm:$0xf]
      %v6824 = vld [vmem:[%s689 + $0x48] sm:$0xf]
      %v6825 = vld [vmem:[%s689 + $0x4c] sm:$0xf]
      %v6826 = vld [vmem:[%s689 + $0x54] sm:$0xf]
      %v6827 = vld [vmem:[%s689 + $0x58] sm:$0xf]
      %v6828 = vld [vmem:[%s689 + $0x60] sm:$0xf]
      %v6829 = vld [vmem:[%s689 + $0x64] sm:$0xf]
      %v6830 = vld [vmem:[%s689 + $0x6c] sm:$0xf]
      %v6831 = vld [vmem:[%s689 + $0x70] sm:$0xf]
      %v6832 = vld [vmem:[%s689 + $0x78] sm:$0xf]
      %v6833 = vld [vmem:[%s689 + $0x7c] sm:$0xf]
      %v6834 = vld [vmem:[%s689 + $0x84] sm:$0xf]
      %v6835 = vld [vmem:[%s689 + $0x88] sm:$0xf]
      %v6836 = vld [vmem:[%s689 + $0x90] sm:$0xf]
      %v6837 = vld [vmem:[%s689 + $0x94] sm:$0xf]
      %v6838 = vld [vmem:[%s689 + $0x9c] sm:$0xf]
      %v6839 = vld [vmem:[%s689 + $0xa0] sm:$0xf]
      %v6840 = vld [vmem:[%s689 + $0xa8] sm:$0xf]
      %v6841 = vld [vmem:[%s689 + $0xac] sm:$0xf]
      %v6842 = vld [vmem:[%s689 + $0xb4] sm:$0xf]
      %v6843 = vld [vmem:[%s689 + $0xb8] sm:$0xf]
      %v6876 = vunpack.c.l.b16 %v6812
      %v6877 = vunpack.c.l.b16 %v6813
      %v6878 = vunpack.c.l.b16 %v6814
      %v6879 = vunpack.c.l.b16 %v6815
      %v6880 = vunpack.c.l.b16 %v6816
      %v6881 = vunpack.c.l.b16 %v6817
      %v6882 = vunpack.c.l.b16 %v6818
      %v6883 = vunpack.c.l.b16 %v6819
      %v6884 = vunpack.c.l.b16 %v6820
      %v6885 = vunpack.c.l.b16 %v6821
      %v6886 = vunpack.c.l.b16 %v6822
      %v6887 = vunpack.c.l.b16 %v6823
      %v6888 = vunpack.c.l.b16 %v6824
      %v6889 = vunpack.c.l.b16 %v6825
      %v6890 = vunpack.c.l.b16 %v6826
      %v6891 = vunpack.c.l.b16 %v6827
      %v6892 = vunpack.c.l.b16 %v6828
      %v6893 = vunpack.c.l.b16 %v6829
      %v6894 = vunpack.c.l.b16 %v6830
      %v6895 = vunpack.c.l.b16 %v6831
      %v6896 = vunpack.c.l.b16 %v6832
      %v6897 = vunpack.c.l.b16 %v6833
      %v6898 = vunpack.c.l.b16 %v6834
      %v6899 = vunpack.c.l.b16 %v6835
      %v6900 = vunpack.c.l.b16 %v6836
      %v6901 = vunpack.c.l.b16 %v6837
      %v6902 = vunpack.c.l.b16 %v6838
      %v6903 = vunpack.c.l.b16 %v6839
      %v6904 = vunpack.c.l.b16 %v6840
      %v6905 = vunpack.c.l.b16 %v6841
      %v6906 = vunpack.c.l.b16 %v6842
      %v6907 = vunpack.c.l.b16 %v6843
      %v6908 = vpack.c.b16 %v6877, %v6876
      %v6909 = vpack.c.b16 %v6879, %v6878
      %v6910 = vpack.c.b16 %v6881, %v6880
      %v6911 = vpack.c.b16 %v6883, %v6882
      %v6912 = vpack.c.b16 %v6885, %v6884
      %v6913 = vpack.c.b16 %v6887, %v6886
      %v6914 = vpack.c.b16 %v6889, %v6888
      %v6915 = vpack.c.b16 %v6891, %v6890
      %v6916 = vpack.c.b16 %v6893, %v6892
      %v6917 = vpack.c.b16 %v6895, %v6894
      %v6918 = vpack.c.b16 %v6897, %v6896
      %v6919 = vpack.c.b16 %v6899, %v6898
      %v6920 = vpack.c.b16 %v6901, %v6900
      %v6921 = vpack.c.b16 %v6903, %v6902
      %v6922 = vpack.c.b16 %v6905, %v6904
      %v6923 = vpack.c.b16 %v6907, %v6906
      %6940 = vst [vmem:[#allocation3 + $0x18] sm:$0xff] %v6908
      %6941 = vst [vmem:[#allocation3 + $0x60] sm:$0xff] %v6909
      %6942 = vst [vmem:[#allocation3 + $0xa8] sm:$0xff] %v6910
      %6943 = vst [vmem:[#allocation3 + $0xf0] sm:$0xff] %v6911
      %6944 = vst [vmem:[#allocation3 + $0x138] sm:$0xff] %v6912
      %6945 = vst [vmem:[#allocation3 + $0x180] sm:$0xff] %v6913
      %6946 = vst [vmem:[#allocation3 + $0x1c8] sm:$0xff] %v6914
      %6947 = vst [vmem:[#allocation3 + $0x210] sm:$0xff] %v6915
      %6948 = vst [vmem:[#allocation3 + $0x258] sm:$0xff] %v6916
      %6949 = vst [vmem:[#allocation3 + $0x2a0] sm:$0xff] %v6917
      %6950 = vst [vmem:[#allocation3 + $0x2e8] sm:$0xff] %v6918
      %6951 = vst [vmem:[#allocation3 + $0x330] sm:$0xff] %v6919
      %6952 = vst [vmem:[#allocation3 + $0x378] sm:$0xff] %v6920
      %6953 = vst [vmem:[#allocation3 + $0x3c0] sm:$0xff] %v6921
      %6954 = vst [vmem:[#allocation3 + $0x408] sm:$0xff] %v6922
      %6955 = vst [vmem:[#allocation3 + $0x450] sm:$0xff] %v6923
      %v6956 = vld [vmem:[%s689] sm:$0xf]
      %v6957 = vld [vmem:[%s689 + $0x4] sm:$0xf]
      %v6958 = vld [vmem:[%s689 + $0x8] sm:$0x1]
      %v6959 = vld [vmem:[%s689 + $0xc] sm:$0xf]
      %v6960 = vld [vmem:[%s689 + $0x10] sm:$0xf]
      %v6961 = vld [vmem:[%s689 + $0x14] sm:$0x1]
      %v6962 = vld [vmem:[%s689 + $0x18] sm:$0xf]
      %v6963 = vld [vmem:[%s689 + $0x1c] sm:$0xf]
      %v6964 = vld [vmem:[%s689 + $0x20] sm:$0x1]
      %v6965 = vld [vmem:[%s689 + $0x24] sm:$0xf]
      %v6966 = vld [vmem:[%s689 + $0x28] sm:$0xf]
      %v6967 = vld [vmem:[%s689 + $0x2c] sm:$0x1]
      %v6968 = vld [vmem:[%s689 + $0x30] sm:$0xf]
      %v6969 = vld [vmem:[%s689 + $0x34] sm:$0xf]
      %v6970 = vld [vmem:[%s689 + $0x38] sm:$0x1]
      %v6971 = vld [vmem:[%s689 + $0x3c] sm:$0xf]
      %v6972 = vld [vmem:[%s689 + $0x40] sm:$0xf]
      %v6973 = vld [vmem:[%s689 + $0x44] sm:$0x1]
      %v6974 = vld [vmem:[%s689 + $0x48] sm:$0xf]
      %v6975 = vld [vmem:[%s689 + $0x4c] sm:$0xf]
      %v6976 = vld [vmem:[%s689 + $0x50] sm:$0x1]
      %v6977 = vld [vmem:[%s689 + $0x54] sm:$0xf]
      %v6978 = vld [vmem:[%s689 + $0x58] sm:$0xf]
      %v6979 = vld [vmem:[%s689 + $0x5c] sm:$0x1]
      %v6980 = vld [vmem:[%s689 + $0x60] sm:$0xf]
      %v6981 = vld [vmem:[%s689 + $0x64] sm:$0xf]
      %v6982 = vld [vmem:[%s689 + $0x68] sm:$0x1]
      %v6983 = vld [vmem:[%s689 + $0x6c] sm:$0xf]
      %v6984 = vld [vmem:[%s689 + $0x70] sm:$0xf]
      %v6985 = vld [vmem:[%s689 + $0x74] sm:$0x1]
      %v6986 = vld [vmem:[%s689 + $0x78] sm:$0xf]
      %v6987 = vld [vmem:[%s689 + $0x7c] sm:$0xf]
      %v6988 = vld [vmem:[%s689 + $0x80] sm:$0x1]
      %v6989 = vld [vmem:[%s689 + $0x84] sm:$0xf]
      %v6990 = vld [vmem:[%s689 + $0x88] sm:$0xf]
      %v6991 = vld [vmem:[%s689 + $0x8c] sm:$0x1]
      %v6992 = vld [vmem:[%s689 + $0x90] sm:$0xf]
      %v6993 = vld [vmem:[%s689 + $0x94] sm:$0xf]
      %v6994 = vld [vmem:[%s689 + $0x98] sm:$0x1]
      %v6995 = vld [vmem:[%s689 + $0x9c] sm:$0xf]
      %v6996 = vld [vmem:[%s689 + $0xa0] sm:$0xf]
      %v6997 = vld [vmem:[%s689 + $0xa4] sm:$0x1]
      %v6998 = vld [vmem:[%s689 + $0xa8] sm:$0xf]
      %v6999 = vld [vmem:[%s689 + $0xac] sm:$0xf]
      %v7000 = vld [vmem:[%s689 + $0xb0] sm:$0x1]
      %v7001 = vld [vmem:[%s689 + $0xb4] sm:$0xf]
      %v7002 = vld [vmem:[%s689 + $0xb8] sm:$0xf]
      %v7003 = vld [vmem:[%s689 + $0xbc] sm:$0x1]
      %v7005 = vshrl.u32 %v6956, 16
      %v7007 = vrot.slane %v7005, 4
      %v7008 = vshll.u32 %v6956, 16
      %v7010 = vrot.slane %v7008, 5
      %v7011 = vor.u32 %v7007, %v7010
      %v7012 = vrot.slane %v7011, 4
      %v7014 = vshll.u32 %v6957, 16
      %v7016 = vrot.slane %v7014, 5
      %v7017 = vsel %vm1002, %v7012, %v7016
      %v7018 = vshrl.u32 %v6957, 16
      %v7020 = vrot.slane %v7018, 4
      %v7021 = vor.u32 %v7020, %v7016
      %v7022 = vrot.slane %v7021, 4
      %v7024 = vshll.u32 %v6958, 16
      %v7026 = vrot.slane %v7024, 5
      %v7027 = vsel %vm1002, %v7022, %v7026
      %v7029 = vshrl.u32 %v6959, 16
      %v7031 = vrot.slane %v7029, 4
      %v7032 = vshll.u32 %v6959, 16
      %v7034 = vrot.slane %v7032, 5
      %v7035 = vor.u32 %v7031, %v7034
      %v7036 = vrot.slane %v7035, 4
      %v7038 = vshll.u32 %v6960, 16
      %v7040 = vrot.slane %v7038, 5
      %v7041 = vsel %vm1002, %v7036, %v7040
      %v7042 = vshrl.u32 %v6960, 16
      %v7044 = vrot.slane %v7042, 4
      %v7045 = vor.u32 %v7044, %v7040
      %v7046 = vrot.slane %v7045, 4
      %v7048 = vshll.u32 %v6961, 16
      %v7050 = vrot.slane %v7048, 5
      %v7051 = vsel %vm1002, %v7046, %v7050
      %v7053 = vshrl.u32 %v6962, 16
      %v7055 = vrot.slane %v7053, 4
      %v7056 = vshll.u32 %v6962, 16
      %v7058 = vrot.slane %v7056, 5
      %v7059 = vor.u32 %v7055, %v7058
      %v7060 = vrot.slane %v7059, 4
      %v7062 = vshll.u32 %v6963, 16
      %v7064 = vrot.slane %v7062, 5
      %v7065 = vsel %vm1002, %v7060, %v7064
      %v7066 = vshrl.u32 %v6963, 16
      %v7068 = vrot.slane %v7066, 4
      %v7069 = vor.u32 %v7068, %v7064
      %v7070 = vrot.slane %v7069, 4
      %v7072 = vshll.u32 %v6964, 16
      %v7074 = vrot.slane %v7072, 5
      %v7075 = vsel %vm1002, %v7070, %v7074
      %v7077 = vshrl.u32 %v6965, 16
      %v7079 = vrot.slane %v7077, 4
      %v7080 = vshll.u32 %v6965, 16
      %v7082 = vrot.slane %v7080, 5
      %v7083 = vor.u32 %v7079, %v7082
      %v7084 = vrot.slane %v7083, 4
      %v7086 = vshll.u32 %v6966, 16
      %v7088 = vrot.slane %v7086, 5
      %v7089 = vsel %vm1002, %v7084, %v7088
      %v7090 = vshrl.u32 %v6966, 16
      %v7092 = vrot.slane %v7090, 4
      %v7093 = vor.u32 %v7092, %v7088
      %v7094 = vrot.slane %v7093, 4
      %v7096 = vshll.u32 %v6967, 16
      %v7098 = vrot.slane %v7096, 5
      %v7099 = vsel %vm1002, %v7094, %v7098
      %v7101 = vshrl.u32 %v6968, 16
      %v7103 = vrot.slane %v7101, 4
      %v7104 = vshll.u32 %v6968, 16
      %v7106 = vrot.slane %v7104, 5
      %v7107 = vor.u32 %v7103, %v7106
      %v7108 = vrot.slane %v7107, 4
      %v7110 = vshll.u32 %v6969, 16
      %v7112 = vrot.slane %v7110, 5
      %v7113 = vsel %vm1002, %v7108, %v7112
      %v7114 = vshrl.u32 %v6969, 16
      %v7116 = vrot.slane %v7114, 4
      %v7117 = vor.u32 %v7116, %v7112
      %v7118 = vrot.slane %v7117, 4
      %v7120 = vshll.u32 %v6970, 16
      %v7122 = vrot.slane %v7120, 5
      %v7123 = vsel %vm1002, %v7118, %v7122
      %v7125 = vshrl.u32 %v6971, 16
      %v7127 = vrot.slane %v7125, 4
      %v7128 = vshll.u32 %v6971, 16
      %v7130 = vrot.slane %v7128, 5
      %v7131 = vor.u32 %v7127, %v7130
      %v7132 = vrot.slane %v7131, 4
      %v7134 = vshll.u32 %v6972, 16
      %v7136 = vrot.slane %v7134, 5
      %v7137 = vsel %vm1002, %v7132, %v7136
      %v7138 = vshrl.u32 %v6972, 16
      %v7140 = vrot.slane %v7138, 4
      %v7141 = vor.u32 %v7140, %v7136
      %v7142 = vrot.slane %v7141, 4
      %v7144 = vshll.u32 %v6973, 16
      %v7146 = vrot.slane %v7144, 5
      %v7147 = vsel %vm1002, %v7142, %v7146
      %v7149 = vshrl.u32 %v6974, 16
      %v7151 = vrot.slane %v7149, 4
      %v7152 = vshll.u32 %v6974, 16
      %v7154 = vrot.slane %v7152, 5
      %v7155 = vor.u32 %v7151, %v7154
      %v7156 = vrot.slane %v7155, 4
      %v7158 = vshll.u32 %v6975, 16
      %v7160 = vrot.slane %v7158, 5
      %v7161 = vsel %vm1002, %v7156, %v7160
      %v7162 = vshrl.u32 %v6975, 16
      %v7164 = vrot.slane %v7162, 4
      %v7165 = vor.u32 %v7164, %v7160
      %v7166 = vrot.slane %v7165, 4
      %v7168 = vshll.u32 %v6976, 16
      %v7170 = vrot.slane %v7168, 5
      %v7171 = vsel %vm1002, %v7166, %v7170
      %v7173 = vshrl.u32 %v6977, 16
      %v7175 = vrot.slane %v7173, 4
      %v7176 = vshll.u32 %v6977, 16
      %v7178 = vrot.slane %v7176, 5
      %v7179 = vor.u32 %v7175, %v7178
      %v7180 = vrot.slane %v7179, 4
      %v7182 = vshll.u32 %v6978, 16
      %v7184 = vrot.slane %v7182, 5
      %v7185 = vsel %vm1002, %v7180, %v7184
      %v7186 = vshrl.u32 %v6978, 16
      %v7188 = vrot.slane %v7186, 4
      %v7189 = vor.u32 %v7188, %v7184
      %v7190 = vrot.slane %v7189, 4
      %v7192 = vshll.u32 %v6979, 16
      %v7194 = vrot.slane %v7192, 5
      %v7195 = vsel %vm1002, %v7190, %v7194
      %v7197 = vshrl.u32 %v6980, 16
      %v7199 = vrot.slane %v7197, 4
      %v7200 = vshll.u32 %v6980, 16
      %v7202 = vrot.slane %v7200, 5
      %v7203 = vor.u32 %v7199, %v7202
      %v7204 = vrot.slane %v7203, 4
      %v7206 = vshll.u32 %v6981, 16
      %v7208 = vrot.slane %v7206, 5
      %v7209 = vsel %vm1002, %v7204, %v7208
      %v7210 = vshrl.u32 %v6981, 16
      %v7212 = vrot.slane %v7210, 4
      %v7213 = vor.u32 %v7212, %v7208
      %v7214 = vrot.slane %v7213, 4
      %v7216 = vshll.u32 %v6982, 16
      %v7218 = vrot.slane %v7216, 5
      %v7219 = vsel %vm1002, %v7214, %v7218
      %v7221 = vshrl.u32 %v6983, 16
      %v7223 = vrot.slane %v7221, 4
      %v7224 = vshll.u32 %v6983, 16
      %v7226 = vrot.slane %v7224, 5
      %v7227 = vor.u32 %v7223, %v7226
      %v7228 = vrot.slane %v7227, 4
      %v7230 = vshll.u32 %v6984, 16
      %v7232 = vrot.slane %v7230, 5
      %v7233 = vsel %vm1002, %v7228, %v7232
      %v7234 = vshrl.u32 %v6984, 16
      %v7236 = vrot.slane %v7234, 4
      %v7237 = vor.u32 %v7236, %v7232
      %v7238 = vrot.slane %v7237, 4
      %v7240 = vshll.u32 %v6985, 16
      %v7242 = vrot.slane %v7240, 5
      %v7243 = vsel %vm1002, %v7238, %v7242
      %v7245 = vshrl.u32 %v6986, 16
      %v7247 = vrot.slane %v7245, 4
      %v7248 = vshll.u32 %v6986, 16
      %v7250 = vrot.slane %v7248, 5
      %v7251 = vor.u32 %v7247, %v7250
      %v7252 = vrot.slane %v7251, 4
      %v7254 = vshll.u32 %v6987, 16
      %v7256 = vrot.slane %v7254, 5
      %v7257 = vsel %vm1002, %v7252, %v7256
      %v7258 = vshrl.u32 %v6987, 16
      %v7260 = vrot.slane %v7258, 4
      %v7261 = vor.u32 %v7260, %v7256
      %v7262 = vrot.slane %v7261, 4
      %v7264 = vshll.u32 %v6988, 16
      %v7266 = vrot.slane %v7264, 5
      %v7267 = vsel %vm1002, %v7262, %v7266
      %v7269 = vshrl.u32 %v6989, 16
      %v7271 = vrot.slane %v7269, 4
      %v7272 = vshll.u32 %v6989, 16
      %v7274 = vrot.slane %v7272, 5
      %v7275 = vor.u32 %v7271, %v7274
      %v7276 = vrot.slane %v7275, 4
      %v7278 = vshll.u32 %v6990, 16
      %v7280 = vrot.slane %v7278, 5
      %v7281 = vsel %vm1002, %v7276, %v7280
      %v7282 = vshrl.u32 %v6990, 16
      %v7284 = vrot.slane %v7282, 4
      %v7285 = vor.u32 %v7284, %v7280
      %v7286 = vrot.slane %v7285, 4
      %v7288 = vshll.u32 %v6991, 16
      %v7290 = vrot.slane %v7288, 5
      %v7291 = vsel %vm1002, %v7286, %v7290
      %v7293 = vshrl.u32 %v6992, 16
      %v7295 = vrot.slane %v7293, 4
      %v7296 = vshll.u32 %v6992, 16
      %v7298 = vrot.slane %v7296, 5
      %v7299 = vor.u32 %v7295, %v7298
      %v7300 = vrot.slane %v7299, 4
      %v7302 = vshll.u32 %v6993, 16
      %v7304 = vrot.slane %v7302, 5
      %v7305 = vsel %vm1002, %v7300, %v7304
      %v7306 = vshrl.u32 %v6993, 16
      %v7308 = vrot.slane %v7306, 4
      %v7309 = vor.u32 %v7308, %v7304
      %v7310 = vrot.slane %v7309, 4
      %v7312 = vshll.u32 %v6994, 16
      %v7314 = vrot.slane %v7312, 5
      %v7315 = vsel %vm1002, %v7310, %v7314
      %v7317 = vshrl.u32 %v6995, 16
      %v7319 = vrot.slane %v7317, 4
      %v7320 = vshll.u32 %v6995, 16
      %v7322 = vrot.slane %v7320, 5
      %v7323 = vor.u32 %v7319, %v7322
      %v7324 = vrot.slane %v7323, 4
      %v7326 = vshll.u32 %v6996, 16
      %v7328 = vrot.slane %v7326, 5
      %v7329 = vsel %vm1002, %v7324, %v7328
      %v7330 = vshrl.u32 %v6996, 16
      %v7332 = vrot.slane %v7330, 4
      %v7333 = vor.u32 %v7332, %v7328
      %v7334 = vrot.slane %v7333, 4
      %v7336 = vshll.u32 %v6997, 16
      %v7338 = vrot.slane %v7336, 5
      %v7339 = vsel %vm1002, %v7334, %v7338
      %v7341 = vshrl.u32 %v6998, 16
      %v7343 = vrot.slane %v7341, 4
      %v7344 = vshll.u32 %v6998, 16
      %v7346 = vrot.slane %v7344, 5
      %v7347 = vor.u32 %v7343, %v7346
      %v7348 = vrot.slane %v7347, 4
      %v7350 = vshll.u32 %v6999, 16
      %v7352 = vrot.slane %v7350, 5
      %v7353 = vsel %vm1002, %v7348, %v7352
      %v7354 = vshrl.u32 %v6999, 16
      %v7356 = vrot.slane %v7354, 4
      %v7357 = vor.u32 %v7356, %v7352
      %v7358 = vrot.slane %v7357, 4
      %v7360 = vshll.u32 %v7000, 16
      %v7362 = vrot.slane %v7360, 5
      %v7363 = vsel %vm1002, %v7358, %v7362
      %v7365 = vshrl.u32 %v7001, 16
      %v7367 = vrot.slane %v7365, 4
      %v7368 = vshll.u32 %v7001, 16
      %v7370 = vrot.slane %v7368, 5
      %v7371 = vor.u32 %v7367, %v7370
      %v7372 = vrot.slane %v7371, 4
      %v7374 = vshll.u32 %v7002, 16
      %v7376 = vrot.slane %v7374, 5
      %v7377 = vsel %vm1002, %v7372, %v7376
      %v7378 = vshrl.u32 %v7002, 16
      %v7380 = vrot.slane %v7378, 4
      %v7381 = vor.u32 %v7380, %v7376
      %v7382 = vrot.slane %v7381, 4
      %v7384 = vshll.u32 %v7003, 16
      %v7386 = vrot.slane %v7384, 5
      %v7387 = vsel %vm1002, %v7382, %v7386
      %v7388 = vunpack.c.l.b16 %v7017
      %v7389 = vunpack.c.l.b16 %v7027
      %v7390 = vunpack.c.l.b16 %v7041
      %v7391 = vunpack.c.l.b16 %v7051
      %v7392 = vunpack.c.l.b16 %v7065
      %v7393 = vunpack.c.l.b16 %v7075
      %v7394 = vunpack.c.l.b16 %v7089
      %v7395 = vunpack.c.l.b16 %v7099
      %v7396 = vunpack.c.l.b16 %v7113
      %v7397 = vunpack.c.l.b16 %v7123
      %v7398 = vunpack.c.l.b16 %v7137
      %v7399 = vunpack.c.l.b16 %v7147
      %v7400 = vunpack.c.l.b16 %v7161
      %v7401 = vunpack.c.l.b16 %v7171
      %v7402 = vunpack.c.l.b16 %v7185
      %v7403 = vunpack.c.l.b16 %v7195
      %v7404 = vunpack.c.l.b16 %v7209
      %v7405 = vunpack.c.l.b16 %v7219
      %v7406 = vunpack.c.l.b16 %v7233
      %v7407 = vunpack.c.l.b16 %v7243
      %v7408 = vunpack.c.l.b16 %v7257
      %v7409 = vunpack.c.l.b16 %v7267
      %v7410 = vunpack.c.l.b16 %v7281
      %v7411 = vunpack.c.l.b16 %v7291
      %v7412 = vunpack.c.l.b16 %v7305
      %v7413 = vunpack.c.l.b16 %v7315
      %v7414 = vunpack.c.l.b16 %v7329
      %v7415 = vunpack.c.l.b16 %v7339
      %v7416 = vunpack.c.l.b16 %v7353
      %v7417 = vunpack.c.l.b16 %v7363
      %v7418 = vunpack.c.l.b16 %v7377
      %v7419 = vunpack.c.l.b16 %v7387
      %v7420 = vpack.c.b16 %v7389, %v7388
      %v7421 = vpack.c.b16 %v7391, %v7390
      %v7422 = vpack.c.b16 %v7393, %v7392
      %v7423 = vpack.c.b16 %v7395, %v7394
      %v7424 = vpack.c.b16 %v7397, %v7396
      %v7425 = vpack.c.b16 %v7399, %v7398
      %v7426 = vpack.c.b16 %v7401, %v7400
      %v7427 = vpack.c.b16 %v7403, %v7402
      %v7428 = vpack.c.b16 %v7405, %v7404
      %v7429 = vpack.c.b16 %v7407, %v7406
      %v7430 = vpack.c.b16 %v7409, %v7408
      %v7431 = vpack.c.b16 %v7411, %v7410
      %v7432 = vpack.c.b16 %v7413, %v7412
      %v7433 = vpack.c.b16 %v7415, %v7414
      %v7434 = vpack.c.b16 %v7417, %v7416
      %v7435 = vpack.c.b16 %v7419, %v7418
      %7452 = vst [vmem:[#allocation3 + $0x20] sm:$0xff] %v7420
      %7453 = vst [vmem:[#allocation3 + $0x68] sm:$0xff] %v7421
      %7454 = vst [vmem:[#allocation3 + $0xb0] sm:$0xff] %v7422
      %7455 = vst [vmem:[#allocation3 + $0xf8] sm:$0xff] %v7423
      %7456 = vst [vmem:[#allocation3 + $0x140] sm:$0xff] %v7424
      %7457 = vst [vmem:[#allocation3 + $0x188] sm:$0xff] %v7425
      %7458 = vst [vmem:[#allocation3 + $0x1d0] sm:$0xff] %v7426
      %7459 = vst [vmem:[#allocation3 + $0x218] sm:$0xff] %v7427
      %7460 = vst [vmem:[#allocation3 + $0x260] sm:$0xff] %v7428
      %7461 = vst [vmem:[#allocation3 + $0x2a8] sm:$0xff] %v7429
      %7462 = vst [vmem:[#allocation3 + $0x2f0] sm:$0xff] %v7430
      %7463 = vst [vmem:[#allocation3 + $0x338] sm:$0xff] %v7431
      %7464 = vst [vmem:[#allocation3 + $0x380] sm:$0xff] %v7432
      %7465 = vst [vmem:[#allocation3 + $0x3c8] sm:$0xff] %v7433
      %7466 = vst [vmem:[#allocation3 + $0x410] sm:$0xff] %v7434
      %7467 = vst [vmem:[#allocation3 + $0x458] sm:$0xff] %v7435
      %v7468 = vld [vmem:[%s689] sm:$0xe]
      %v7469 = vld [vmem:[%s689 + $0x4] sm:$0xf]
      %v7470 = vld [vmem:[%s689 + $0x8] sm:$0x1]
      %v7471 = vld [vmem:[%s689 + $0xc] sm:$0xe]
      %v7472 = vld [vmem:[%s689 + $0x10] sm:$0xf]
      %v7473 = vld [vmem:[%s689 + $0x14] sm:$0x1]
      %v7474 = vld [vmem:[%s689 + $0x18] sm:$0xe]
      %v7475 = vld [vmem:[%s689 + $0x1c] sm:$0xf]
      %v7476 = vld [vmem:[%s689 + $0x20] sm:$0x1]
      %v7477 = vld [vmem:[%s689 + $0x24] sm:$0xe]
      %v7478 = vld [vmem:[%s689 + $0x28] sm:$0xf]
      %v7479 = vld [vmem:[%s689 + $0x2c] sm:$0x1]
      %v7480 = vld [vmem:[%s689 + $0x30] sm:$0xe]
      %v7481 = vld [vmem:[%s689 + $0x34] sm:$0xf]
      %v7482 = vld [vmem:[%s689 + $0x38] sm:$0x1]
      %v7483 = vld [vmem:[%s689 + $0x3c] sm:$0xe]
      %v7484 = vld [vmem:[%s689 + $0x40] sm:$0xf]
      %v7485 = vld [vmem:[%s689 + $0x44] sm:$0x1]
      %v7486 = vld [vmem:[%s689 + $0x48] sm:$0xe]
      %v7487 = vld [vmem:[%s689 + $0x4c] sm:$0xf]
      %v7488 = vld [vmem:[%s689 + $0x50] sm:$0x1]
      %v7489 = vld [vmem:[%s689 + $0x54] sm:$0xe]
      %v7490 = vld [vmem:[%s689 + $0x58] sm:$0xf]
      %v7491 = vld [vmem:[%s689 + $0x5c] sm:$0x1]
      %v7492 = vld [vmem:[%s689 + $0x60] sm:$0xe]
      %v7493 = vld [vmem:[%s689 + $0x64] sm:$0xf]
      %v7494 = vld [vmem:[%s689 + $0x68] sm:$0x1]
      %v7495 = vld [vmem:[%s689 + $0x6c] sm:$0xe]
      %v7496 = vld [vmem:[%s689 + $0x70] sm:$0xf]
      %v7497 = vld [vmem:[%s689 + $0x74] sm:$0x1]
      %v7498 = vld [vmem:[%s689 + $0x78] sm:$0xe]
      %v7499 = vld [vmem:[%s689 + $0x7c] sm:$0xf]
      %v7500 = vld [vmem:[%s689 + $0x80] sm:$0x1]
      %v7501 = vld [vmem:[%s689 + $0x84] sm:$0xe]
      %v7502 = vld [vmem:[%s689 + $0x88] sm:$0xf]
      %v7503 = vld [vmem:[%s689 + $0x8c] sm:$0x1]
      %v7504 = vld [vmem:[%s689 + $0x90] sm:$0xe]
      %v7505 = vld [vmem:[%s689 + $0x94] sm:$0xf]
      %v7506 = vld [vmem:[%s689 + $0x98] sm:$0x1]
      %v7507 = vld [vmem:[%s689 + $0x9c] sm:$0xe]
      %v7508 = vld [vmem:[%s689 + $0xa0] sm:$0xf]
      %v7509 = vld [vmem:[%s689 + $0xa4] sm:$0x1]
      %v7510 = vld [vmem:[%s689 + $0xa8] sm:$0xe]
      %v7511 = vld [vmem:[%s689 + $0xac] sm:$0xf]
      %v7512 = vld [vmem:[%s689 + $0xb0] sm:$0x1]
      %v7513 = vld [vmem:[%s689 + $0xb4] sm:$0xe]
      %v7514 = vld [vmem:[%s689 + $0xb8] sm:$0xf]
      %v7515 = vld [vmem:[%s689 + $0xbc] sm:$0x1]
      %v7564 = vrot.slane %v7468, 5
      %v7565 = vrot.slane %v7564, 4
      %v7566 = vrot.slane %v7469, 5
      %v7567 = vsel %vm1565, %v7565, %v7566
      %v7568 = vrot.slane %v7566, 4
      %v7569 = vrot.slane %v7470, 5
      %v7570 = vsel %vm1565, %v7568, %v7569
      %v7571 = vrot.slane %v7471, 5
      %v7572 = vrot.slane %v7571, 4
      %v7573 = vrot.slane %v7472, 5
      %v7574 = vsel %vm1565, %v7572, %v7573
      %v7575 = vrot.slane %v7573, 4
      %v7576 = vrot.slane %v7473, 5
      %v7577 = vsel %vm1565, %v7575, %v7576
      %v7578 = vrot.slane %v7474, 5
      %v7579 = vrot.slane %v7578, 4
      %v7580 = vrot.slane %v7475, 5
      %v7581 = vsel %vm1565, %v7579, %v7580
      %v7582 = vrot.slane %v7580, 4
      %v7583 = vrot.slane %v7476, 5
      %v7584 = vsel %vm1565, %v7582, %v7583
      %v7585 = vrot.slane %v7477, 5
      %v7586 = vrot.slane %v7585, 4
      %v7587 = vrot.slane %v7478, 5
      %v7588 = vsel %vm1565, %v7586, %v7587
      %v7589 = vrot.slane %v7587, 4
      %v7590 = vrot.slane %v7479, 5
      %v7591 = vsel %vm1565, %v7589, %v7590
      %v7592 = vrot.slane %v7480, 5
      %v7593 = vrot.slane %v7592, 4
      %v7594 = vrot.slane %v7481, 5
      %v7595 = vsel %vm1565, %v7593, %v7594
      %v7596 = vrot.slane %v7594, 4
      %v7597 = vrot.slane %v7482, 5
      %v7598 = vsel %vm1565, %v7596, %v7597
      %v7599 = vrot.slane %v7483, 5
      %v7600 = vrot.slane %v7599, 4
      %v7601 = vrot.slane %v7484, 5
      %v7602 = vsel %vm1565, %v7600, %v7601
      %v7603 = vrot.slane %v7601, 4
      %v7604 = vrot.slane %v7485, 5
      %v7605 = vsel %vm1565, %v7603, %v7604
      %v7606 = vrot.slane %v7486, 5
      %v7607 = vrot.slane %v7606, 4
      %v7608 = vrot.slane %v7487, 5
      %v7609 = vsel %vm1565, %v7607, %v7608
      %v7610 = vrot.slane %v7608, 4
      %v7611 = vrot.slane %v7488, 5
      %v7612 = vsel %vm1565, %v7610, %v7611
      %v7613 = vrot.slane %v7489, 5
      %v7614 = vrot.slane %v7613, 4
      %v7615 = vrot.slane %v7490, 5
      %v7616 = vsel %vm1565, %v7614, %v7615
      %v7617 = vrot.slane %v7615, 4
      %v7618 = vrot.slane %v7491, 5
      %v7619 = vsel %vm1565, %v7617, %v7618
      %v7620 = vrot.slane %v7492, 5
      %v7621 = vrot.slane %v7620, 4
      %v7622 = vrot.slane %v7493, 5
      %v7623 = vsel %vm1565, %v7621, %v7622
      %v7624 = vrot.slane %v7622, 4
      %v7625 = vrot.slane %v7494, 5
      %v7626 = vsel %vm1565, %v7624, %v7625
      %v7627 = vrot.slane %v7495, 5
      %v7628 = vrot.slane %v7627, 4
      %v7629 = vrot.slane %v7496, 5
      %v7630 = vsel %vm1565, %v7628, %v7629
      %v7631 = vrot.slane %v7629, 4
      %v7632 = vrot.slane %v7497, 5
      %v7633 = vsel %vm1565, %v7631, %v7632
      %v7634 = vrot.slane %v7498, 5
      %v7635 = vrot.slane %v7634, 4
      %v7636 = vrot.slane %v7499, 5
      %v7637 = vsel %vm1565, %v7635, %v7636
      %v7638 = vrot.slane %v7636, 4
      %v7639 = vrot.slane %v7500, 5
      %v7640 = vsel %vm1565, %v7638, %v7639
      %v7641 = vrot.slane %v7501, 5
      %v7642 = vrot.slane %v7641, 4
      %v7643 = vrot.slane %v7502, 5
      %v7644 = vsel %vm1565, %v7642, %v7643
      %v7645 = vrot.slane %v7643, 4
      %v7646 = vrot.slane %v7503, 5
      %v7647 = vsel %vm1565, %v7645, %v7646
      %v7648 = vrot.slane %v7504, 5
      %v7649 = vrot.slane %v7648, 4
      %v7650 = vrot.slane %v7505, 5
      %v7651 = vsel %vm1565, %v7649, %v7650
      %v7652 = vrot.slane %v7650, 4
      %v7653 = vrot.slane %v7506, 5
      %v7654 = vsel %vm1565, %v7652, %v7653
      %v7655 = vrot.slane %v7507, 5
      %v7656 = vrot.slane %v7655, 4
      %v7657 = vrot.slane %v7508, 5
      %v7658 = vsel %vm1565, %v7656, %v7657
      %v7659 = vrot.slane %v7657, 4
      %v7660 = vrot.slane %v7509, 5
      %v7661 = vsel %vm1565, %v7659, %v7660
      %v7662 = vrot.slane %v7510, 5
      %v7663 = vrot.slane %v7662, 4
      %v7664 = vrot.slane %v7511, 5
      %v7665 = vsel %vm1565, %v7663, %v7664
      %v7666 = vrot.slane %v7664, 4
      %v7667 = vrot.slane %v7512, 5
      %v7668 = vsel %vm1565, %v7666, %v7667
      %v7669 = vrot.slane %v7513, 5
      %v7670 = vrot.slane %v7669, 4
      %v7671 = vrot.slane %v7514, 5
      %v7672 = vsel %vm1565, %v7670, %v7671
      %v7673 = vrot.slane %v7671, 4
      %v7674 = vrot.slane %v7515, 5
      %v7675 = vsel %vm1565, %v7673, %v7674
      %v7676 = vunpack.c.l.b16 %v7567
      %v7677 = vunpack.c.l.b16 %v7570
      %v7678 = vunpack.c.l.b16 %v7574
      %v7679 = vunpack.c.l.b16 %v7577
      %v7680 = vunpack.c.l.b16 %v7581
      %v7681 = vunpack.c.l.b16 %v7584
      %v7682 = vunpack.c.l.b16 %v7588
      %v7683 = vunpack.c.l.b16 %v7591
      %v7684 = vunpack.c.l.b16 %v7595
      %v7685 = vunpack.c.l.b16 %v7598
      %v7686 = vunpack.c.l.b16 %v7602
      %v7687 = vunpack.c.l.b16 %v7605
      %v7688 = vunpack.c.l.b16 %v7609
      %v7689 = vunpack.c.l.b16 %v7612
      %v7690 = vunpack.c.l.b16 %v7616
      %v7691 = vunpack.c.l.b16 %v7619
      %v7692 = vunpack.c.l.b16 %v7623
      %v7693 = vunpack.c.l.b16 %v7626
      %v7694 = vunpack.c.l.b16 %v7630
      %v7695 = vunpack.c.l.b16 %v7633
      %v7696 = vunpack.c.l.b16 %v7637
      %v7697 = vunpack.c.l.b16 %v7640
      %v7698 = vunpack.c.l.b16 %v7644
      %v7699 = vunpack.c.l.b16 %v7647
      %v7700 = vunpack.c.l.b16 %v7651
      %v7701 = vunpack.c.l.b16 %v7654
      %v7702 = vunpack.c.l.b16 %v7658
      %v7703 = vunpack.c.l.b16 %v7661
      %v7704 = vunpack.c.l.b16 %v7665
      %v7705 = vunpack.c.l.b16 %v7668
      %v7706 = vunpack.c.l.b16 %v7672
      %v7707 = vunpack.c.l.b16 %v7675
      %v7708 = vpack.c.b16 %v7677, %v7676
      %v7709 = vpack.c.b16 %v7679, %v7678
      %v7710 = vpack.c.b16 %v7681, %v7680
      %v7711 = vpack.c.b16 %v7683, %v7682
      %v7712 = vpack.c.b16 %v7685, %v7684
      %v7713 = vpack.c.b16 %v7687, %v7686
      %v7714 = vpack.c.b16 %v7689, %v7688
      %v7715 = vpack.c.b16 %v7691, %v7690
      %v7716 = vpack.c.b16 %v7693, %v7692
      %v7717 = vpack.c.b16 %v7695, %v7694
      %v7718 = vpack.c.b16 %v7697, %v7696
      %v7719 = vpack.c.b16 %v7699, %v7698
      %v7720 = vpack.c.b16 %v7701, %v7700
      %v7721 = vpack.c.b16 %v7703, %v7702
      %v7722 = vpack.c.b16 %v7705, %v7704
      %v7723 = vpack.c.b16 %v7707, %v7706
      %7740 = vst [vmem:[#allocation3 + $0x28] sm:$0xff] %v7708
      %7741 = vst [vmem:[#allocation3 + $0x70] sm:$0xff] %v7709
      %7742 = vst [vmem:[#allocation3 + $0xb8] sm:$0xff] %v7710
      %7743 = vst [vmem:[#allocation3 + $0x100] sm:$0xff] %v7711
      %7744 = vst [vmem:[#allocation3 + $0x148] sm:$0xff] %v7712
      %7745 = vst [vmem:[#allocation3 + $0x190] sm:$0xff] %v7713
      %7746 = vst [vmem:[#allocation3 + $0x1d8] sm:$0xff] %v7714
      %7747 = vst [vmem:[#allocation3 + $0x220] sm:$0xff] %v7715
      %7748 = vst [vmem:[#allocation3 + $0x268] sm:$0xff] %v7716
      %7749 = vst [vmem:[#allocation3 + $0x2b0] sm:$0xff] %v7717
      %7750 = vst [vmem:[#allocation3 + $0x2f8] sm:$0xff] %v7718
      %7751 = vst [vmem:[#allocation3 + $0x340] sm:$0xff] %v7719
      %7752 = vst [vmem:[#allocation3 + $0x388] sm:$0xff] %v7720
      %7753 = vst [vmem:[#allocation3 + $0x3d0] sm:$0xff] %v7721
      %7754 = vst [vmem:[#allocation3 + $0x418] sm:$0xff] %v7722
      %7755 = vst [vmem:[#allocation3 + $0x460] sm:$0xff] %v7723
      %v7756 = vld [vmem:[%s2702] sm:$0xf]
      %v7757 = vld [vmem:[%s2702 + $0x4] sm:$0xf]
      %v7758 = vld [vmem:[%s2702 + $0xc] sm:$0xf]
      %v7759 = vld [vmem:[%s2702 + $0x10] sm:$0xf]
      %v7760 = vld [vmem:[%s2702 + $0x18] sm:$0xf]
      %v7761 = vld [vmem:[%s2702 + $0x1c] sm:$0xf]
      %v7762 = vld [vmem:[%s2702 + $0x24] sm:$0xf]
      %v7763 = vld [vmem:[%s2702 + $0x28] sm:$0xf]
      %v7764 = vld [vmem:[%s2702 + $0x30] sm:$0xf]
      %v7765 = vld [vmem:[%s2702 + $0x34] sm:$0xf]
      %v7766 = vld [vmem:[%s2702 + $0x3c] sm:$0xf]
      %v7767 = vld [vmem:[%s2702 + $0x40] sm:$0xf]
      %v7768 = vld [vmem:[%s2702 + $0x48] sm:$0xf]
      %v7769 = vld [vmem:[%s2702 + $0x4c] sm:$0xf]
      %v7770 = vld [vmem:[%s2702 + $0x54] sm:$0xf]
      %v7771 = vld [vmem:[%s2702 + $0x58] sm:$0xf]
      %v7772 = vld [vmem:[%s2702 + $0x60] sm:$0xf]
      %v7773 = vld [vmem:[%s2702 + $0x64] sm:$0xf]
      %v7774 = vld [vmem:[%s2702 + $0x6c] sm:$0xf]
      %v7775 = vld [vmem:[%s2702 + $0x70] sm:$0xf]
      %v7776 = vld [vmem:[%s2702 + $0x78] sm:$0xf]
      %v7777 = vld [vmem:[%s2702 + $0x7c] sm:$0xf]
      %v7778 = vld [vmem:[%s2702 + $0x84] sm:$0xf]
      %v7779 = vld [vmem:[%s2702 + $0x88] sm:$0xf]
      %v7780 = vld [vmem:[%s2702 + $0x90] sm:$0xf]
      %v7781 = vld [vmem:[%s2702 + $0x94] sm:$0xf]
      %v7782 = vld [vmem:[%s2702 + $0x9c] sm:$0xf]
      %v7783 = vld [vmem:[%s2702 + $0xa0] sm:$0xf]
      %v7784 = vld [vmem:[%s2702 + $0xa8] sm:$0xf]
      %v7785 = vld [vmem:[%s2702 + $0xac] sm:$0xf]
      %v7786 = vld [vmem:[%s2702 + $0xb4] sm:$0xf]
      %v7787 = vld [vmem:[%s2702 + $0xb8] sm:$0xf]
      %v7820 = vunpack.c.l.b16 %v7756
      %v7821 = vunpack.c.l.b16 %v7757
      %v7822 = vunpack.c.l.b16 %v7758
      %v7823 = vunpack.c.l.b16 %v7759
      %v7824 = vunpack.c.l.b16 %v7760
      %v7825 = vunpack.c.l.b16 %v7761
      %v7826 = vunpack.c.l.b16 %v7762
      %v7827 = vunpack.c.l.b16 %v7763
      %v7828 = vunpack.c.l.b16 %v7764
      %v7829 = vunpack.c.l.b16 %v7765
      %v7830 = vunpack.c.l.b16 %v7766
      %v7831 = vunpack.c.l.b16 %v7767
      %v7832 = vunpack.c.l.b16 %v7768
      %v7833 = vunpack.c.l.b16 %v7769
      %v7834 = vunpack.c.l.b16 %v7770
      %v7835 = vunpack.c.l.b16 %v7771
      %v7836 = vunpack.c.l.b16 %v7772
      %v7837 = vunpack.c.l.b16 %v7773
      %v7838 = vunpack.c.l.b16 %v7774
      %v7839 = vunpack.c.l.b16 %v7775
      %v7840 = vunpack.c.l.b16 %v7776
      %v7841 = vunpack.c.l.b16 %v7777
      %v7842 = vunpack.c.l.b16 %v7778
      %v7843 = vunpack.c.l.b16 %v7779
      %v7844 = vunpack.c.l.b16 %v7780
      %v7845 = vunpack.c.l.b16 %v7781
      %v7846 = vunpack.c.l.b16 %v7782
      %v7847 = vunpack.c.l.b16 %v7783
      %v7848 = vunpack.c.l.b16 %v7784
      %v7849 = vunpack.c.l.b16 %v7785
      %v7850 = vunpack.c.l.b16 %v7786
      %v7851 = vunpack.c.l.b16 %v7787
      %v7852 = vpack.c.b16 %v7821, %v7820
      %v7853 = vpack.c.b16 %v7823, %v7822
      %v7854 = vpack.c.b16 %v7825, %v7824
      %v7855 = vpack.c.b16 %v7827, %v7826
      %v7856 = vpack.c.b16 %v7829, %v7828
      %v7857 = vpack.c.b16 %v7831, %v7830
      %v7858 = vpack.c.b16 %v7833, %v7832
      %v7859 = vpack.c.b16 %v7835, %v7834
      %v7860 = vpack.c.b16 %v7837, %v7836
      %v7861 = vpack.c.b16 %v7839, %v7838
      %v7862 = vpack.c.b16 %v7841, %v7840
      %v7863 = vpack.c.b16 %v7843, %v7842
      %v7864 = vpack.c.b16 %v7845, %v7844
      %v7865 = vpack.c.b16 %v7847, %v7846
      %v7866 = vpack.c.b16 %v7849, %v7848
      %v7867 = vpack.c.b16 %v7851, %v7850
      %7884 = vst [vmem:[#allocation3 + $0x30] sm:$0xff] %v7852
      %7885 = vst [vmem:[#allocation3 + $0x78] sm:$0xff] %v7853
      %7886 = vst [vmem:[#allocation3 + $0xc0] sm:$0xff] %v7854
      %7887 = vst [vmem:[#allocation3 + $0x108] sm:$0xff] %v7855
      %7888 = vst [vmem:[#allocation3 + $0x150] sm:$0xff] %v7856
      %7889 = vst [vmem:[#allocation3 + $0x198] sm:$0xff] %v7857
      %7890 = vst [vmem:[#allocation3 + $0x1e0] sm:$0xff] %v7858
      %7891 = vst [vmem:[#allocation3 + $0x228] sm:$0xff] %v7859
      %7892 = vst [vmem:[#allocation3 + $0x270] sm:$0xff] %v7860
      %7893 = vst [vmem:[#allocation3 + $0x2b8] sm:$0xff] %v7861
      %7894 = vst [vmem:[#allocation3 + $0x300] sm:$0xff] %v7862
      %7895 = vst [vmem:[#allocation3 + $0x348] sm:$0xff] %v7863
      %7896 = vst [vmem:[#allocation3 + $0x390] sm:$0xff] %v7864
      %7897 = vst [vmem:[#allocation3 + $0x3d8] sm:$0xff] %v7865
      %7898 = vst [vmem:[#allocation3 + $0x420] sm:$0xff] %v7866
      %7899 = vst [vmem:[#allocation3 + $0x468] sm:$0xff] %v7867
      %v7900 = vld [vmem:[%s2702] sm:$0xf]
      %v7901 = vld [vmem:[%s2702 + $0x4] sm:$0xf]
      %v7902 = vld [vmem:[%s2702 + $0x8] sm:$0x1]
      %v7903 = vld [vmem:[%s2702 + $0xc] sm:$0xf]
      %v7904 = vld [vmem:[%s2702 + $0x10] sm:$0xf]
      %v7905 = vld [vmem:[%s2702 + $0x14] sm:$0x1]
      %v7906 = vld [vmem:[%s2702 + $0x18] sm:$0xf]
      %v7907 = vld [vmem:[%s2702 + $0x1c] sm:$0xf]
      %v7908 = vld [vmem:[%s2702 + $0x20] sm:$0x1]
      %v7909 = vld [vmem:[%s2702 + $0x24] sm:$0xf]
      %v7910 = vld [vmem:[%s2702 + $0x28] sm:$0xf]
      %v7911 = vld [vmem:[%s2702 + $0x2c] sm:$0x1]
      %v7912 = vld [vmem:[%s2702 + $0x30] sm:$0xf]
      %v7913 = vld [vmem:[%s2702 + $0x34] sm:$0xf]
      %v7914 = vld [vmem:[%s2702 + $0x38] sm:$0x1]
      %v7915 = vld [vmem:[%s2702 + $0x3c] sm:$0xf]
      %v7916 = vld [vmem:[%s2702 + $0x40] sm:$0xf]
      %v7917 = vld [vmem:[%s2702 + $0x44] sm:$0x1]
      %v7918 = vld [vmem:[%s2702 + $0x48] sm:$0xf]
      %v7919 = vld [vmem:[%s2702 + $0x4c] sm:$0xf]
      %v7920 = vld [vmem:[%s2702 + $0x50] sm:$0x1]
      %v7921 = vld [vmem:[%s2702 + $0x54] sm:$0xf]
      %v7922 = vld [vmem:[%s2702 + $0x58] sm:$0xf]
      %v7923 = vld [vmem:[%s2702 + $0x5c] sm:$0x1]
      %v7924 = vld [vmem:[%s2702 + $0x60] sm:$0xf]
      %v7925 = vld [vmem:[%s2702 + $0x64] sm:$0xf]
      %v7926 = vld [vmem:[%s2702 + $0x68] sm:$0x1]
      %v7927 = vld [vmem:[%s2702 + $0x6c] sm:$0xf]
      %v7928 = vld [vmem:[%s2702 + $0x70] sm:$0xf]
      %v7929 = vld [vmem:[%s2702 + $0x74] sm:$0x1]
      %v7930 = vld [vmem:[%s2702 + $0x78] sm:$0xf]
      %v7931 = vld [vmem:[%s2702 + $0x7c] sm:$0xf]
      %v7932 = vld [vmem:[%s2702 + $0x80] sm:$0x1]
      %v7933 = vld [vmem:[%s2702 + $0x84] sm:$0xf]
      %v7934 = vld [vmem:[%s2702 + $0x88] sm:$0xf]
      %v7935 = vld [vmem:[%s2702 + $0x8c] sm:$0x1]
      %v7936 = vld [vmem:[%s2702 + $0x90] sm:$0xf]
      %v7937 = vld [vmem:[%s2702 + $0x94] sm:$0xf]
      %v7938 = vld [vmem:[%s2702 + $0x98] sm:$0x1]
      %v7939 = vld [vmem:[%s2702 + $0x9c] sm:$0xf]
      %v7940 = vld [vmem:[%s2702 + $0xa0] sm:$0xf]
      %v7941 = vld [vmem:[%s2702 + $0xa4] sm:$0x1]
      %v7942 = vld [vmem:[%s2702 + $0xa8] sm:$0xf]
      %v7943 = vld [vmem:[%s2702 + $0xac] sm:$0xf]
      %v7944 = vld [vmem:[%s2702 + $0xb0] sm:$0x1]
      %v7945 = vld [vmem:[%s2702 + $0xb4] sm:$0xf]
      %v7946 = vld [vmem:[%s2702 + $0xb8] sm:$0xf]
      %v7947 = vld [vmem:[%s2702 + $0xbc] sm:$0x1]
      %v7949 = vshrl.u32 %v7900, 16
      %v7951 = vrot.slane %v7949, 4
      %v7952 = vshll.u32 %v7900, 16
      %v7954 = vrot.slane %v7952, 5
      %v7955 = vor.u32 %v7951, %v7954
      %v7956 = vrot.slane %v7955, 4
      %v7958 = vshll.u32 %v7901, 16
      %v7960 = vrot.slane %v7958, 5
      %v7961 = vsel %vm1002, %v7956, %v7960
      %v7962 = vshrl.u32 %v7901, 16
      %v7964 = vrot.slane %v7962, 4
      %v7965 = vor.u32 %v7964, %v7960
      %v7966 = vrot.slane %v7965, 4
      %v7968 = vshll.u32 %v7902, 16
      %v7970 = vrot.slane %v7968, 5
      %v7971 = vsel %vm1002, %v7966, %v7970
      %v7973 = vshrl.u32 %v7903, 16
      %v7975 = vrot.slane %v7973, 4
      %v7976 = vshll.u32 %v7903, 16
      %v7978 = vrot.slane %v7976, 5
      %v7979 = vor.u32 %v7975, %v7978
      %v7980 = vrot.slane %v7979, 4
      %v7982 = vshll.u32 %v7904, 16
      %v7984 = vrot.slane %v7982, 5
      %v7985 = vsel %vm1002, %v7980, %v7984
      %v7986 = vshrl.u32 %v7904, 16
      %v7988 = vrot.slane %v7986, 4
      %v7989 = vor.u32 %v7988, %v7984
      %v7990 = vrot.slane %v7989, 4
      %v7992 = vshll.u32 %v7905, 16
      %v7994 = vrot.slane %v7992, 5
      %v7995 = vsel %vm1002, %v7990, %v7994
      %v7997 = vshrl.u32 %v7906, 16
      %v7999 = vrot.slane %v7997, 4
      %v8000 = vshll.u32 %v7906, 16
      %v8002 = vrot.slane %v8000, 5
      %v8003 = vor.u32 %v7999, %v8002
      %v8004 = vrot.slane %v8003, 4
      %v8006 = vshll.u32 %v7907, 16
      %v8008 = vrot.slane %v8006, 5
      %v8009 = vsel %vm1002, %v8004, %v8008
      %v8010 = vshrl.u32 %v7907, 16
      %v8012 = vrot.slane %v8010, 4
      %v8013 = vor.u32 %v8012, %v8008
      %v8014 = vrot.slane %v8013, 4
      %v8016 = vshll.u32 %v7908, 16
      %v8018 = vrot.slane %v8016, 5
      %v8019 = vsel %vm1002, %v8014, %v8018
      %v8021 = vshrl.u32 %v7909, 16
      %v8023 = vrot.slane %v8021, 4
      %v8024 = vshll.u32 %v7909, 16
      %v8026 = vrot.slane %v8024, 5
      %v8027 = vor.u32 %v8023, %v8026
      %v8028 = vrot.slane %v8027, 4
      %v8030 = vshll.u32 %v7910, 16
      %v8032 = vrot.slane %v8030, 5
      %v8033 = vsel %vm1002, %v8028, %v8032
      %v8034 = vshrl.u32 %v7910, 16
      %v8036 = vrot.slane %v8034, 4
      %v8037 = vor.u32 %v8036, %v8032
      %v8038 = vrot.slane %v8037, 4
      %v8040 = vshll.u32 %v7911, 16
      %v8042 = vrot.slane %v8040, 5
      %v8043 = vsel %vm1002, %v8038, %v8042
      %v8045 = vshrl.u32 %v7912, 16
      %v8047 = vrot.slane %v8045, 4
      %v8048 = vshll.u32 %v7912, 16
      %v8050 = vrot.slane %v8048, 5
      %v8051 = vor.u32 %v8047, %v8050
      %v8052 = vrot.slane %v8051, 4
      %v8054 = vshll.u32 %v7913, 16
      %v8056 = vrot.slane %v8054, 5
      %v8057 = vsel %vm1002, %v8052, %v8056
      %v8058 = vshrl.u32 %v7913, 16
      %v8060 = vrot.slane %v8058, 4
      %v8061 = vor.u32 %v8060, %v8056
      %v8062 = vrot.slane %v8061, 4
      %v8064 = vshll.u32 %v7914, 16
      %v8066 = vrot.slane %v8064, 5
      %v8067 = vsel %vm1002, %v8062, %v8066
      %v8069 = vshrl.u32 %v7915, 16
      %v8071 = vrot.slane %v8069, 4
      %v8072 = vshll.u32 %v7915, 16
      %v8074 = vrot.slane %v8072, 5
      %v8075 = vor.u32 %v8071, %v8074
      %v8076 = vrot.slane %v8075, 4
      %v8078 = vshll.u32 %v7916, 16
      %v8080 = vrot.slane %v8078, 5
      %v8081 = vsel %vm1002, %v8076, %v8080
      %v8082 = vshrl.u32 %v7916, 16
      %v8084 = vrot.slane %v8082, 4
      %v8085 = vor.u32 %v8084, %v8080
      %v8086 = vrot.slane %v8085, 4
      %v8088 = vshll.u32 %v7917, 16
      %v8090 = vrot.slane %v8088, 5
      %v8091 = vsel %vm1002, %v8086, %v8090
      %v8093 = vshrl.u32 %v7918, 16
      %v8095 = vrot.slane %v8093, 4
      %v8096 = vshll.u32 %v7918, 16
      %v8098 = vrot.slane %v8096, 5
      %v8099 = vor.u32 %v8095, %v8098
      %v8100 = vrot.slane %v8099, 4
      %v8102 = vshll.u32 %v7919, 16
      %v8104 = vrot.slane %v8102, 5
      %v8105 = vsel %vm1002, %v8100, %v8104
      %v8106 = vshrl.u32 %v7919, 16
      %v8108 = vrot.slane %v8106, 4
      %v8109 = vor.u32 %v8108, %v8104
      %v8110 = vrot.slane %v8109, 4
      %v8112 = vshll.u32 %v7920, 16
      %v8114 = vrot.slane %v8112, 5
      %v8115 = vsel %vm1002, %v8110, %v8114
      %v8117 = vshrl.u32 %v7921, 16
      %v8119 = vrot.slane %v8117, 4
      %v8120 = vshll.u32 %v7921, 16
      %v8122 = vrot.slane %v8120, 5
      %v8123 = vor.u32 %v8119, %v8122
      %v8124 = vrot.slane %v8123, 4
      %v8126 = vshll.u32 %v7922, 16
      %v8128 = vrot.slane %v8126, 5
      %v8129 = vsel %vm1002, %v8124, %v8128
      %v8130 = vshrl.u32 %v7922, 16
      %v8132 = vrot.slane %v8130, 4
      %v8133 = vor.u32 %v8132, %v8128
      %v8134 = vrot.slane %v8133, 4
      %v8136 = vshll.u32 %v7923, 16
      %v8138 = vrot.slane %v8136, 5
      %v8139 = vsel %vm1002, %v8134, %v8138
      %v8141 = vshrl.u32 %v7924, 16
      %v8143 = vrot.slane %v8141, 4
      %v8144 = vshll.u32 %v7924, 16
      %v8146 = vrot.slane %v8144, 5
      %v8147 = vor.u32 %v8143, %v8146
      %v8148 = vrot.slane %v8147, 4
      %v8150 = vshll.u32 %v7925, 16
      %v8152 = vrot.slane %v8150, 5
      %v8153 = vsel %vm1002, %v8148, %v8152
      %v8154 = vshrl.u32 %v7925, 16
      %v8156 = vrot.slane %v8154, 4
      %v8157 = vor.u32 %v8156, %v8152
      %v8158 = vrot.slane %v8157, 4
      %v8160 = vshll.u32 %v7926, 16
      %v8162 = vrot.slane %v8160, 5
      %v8163 = vsel %vm1002, %v8158, %v8162
      %v8165 = vshrl.u32 %v7927, 16
      %v8167 = vrot.slane %v8165, 4
      %v8168 = vshll.u32 %v7927, 16
      %v8170 = vrot.slane %v8168, 5
      %v8171 = vor.u32 %v8167, %v8170
      %v8172 = vrot.slane %v8171, 4
      %v8174 = vshll.u32 %v7928, 16
      %v8176 = vrot.slane %v8174, 5
      %v8177 = vsel %vm1002, %v8172, %v8176
      %v8178 = vshrl.u32 %v7928, 16
      %v8180 = vrot.slane %v8178, 4
      %v8181 = vor.u32 %v8180, %v8176
      %v8182 = vrot.slane %v8181, 4
      %v8184 = vshll.u32 %v7929, 16
      %v8186 = vrot.slane %v8184, 5
      %v8187 = vsel %vm1002, %v8182, %v8186
      %v8189 = vshrl.u32 %v7930, 16
      %v8191 = vrot.slane %v8189, 4
      %v8192 = vshll.u32 %v7930, 16
      %v8194 = vrot.slane %v8192, 5
      %v8195 = vor.u32 %v8191, %v8194
      %v8196 = vrot.slane %v8195, 4
      %v8198 = vshll.u32 %v7931, 16
      %v8200 = vrot.slane %v8198, 5
      %v8201 = vsel %vm1002, %v8196, %v8200
      %v8202 = vshrl.u32 %v7931, 16
      %v8204 = vrot.slane %v8202, 4
      %v8205 = vor.u32 %v8204, %v8200
      %v8206 = vrot.slane %v8205, 4
      %v8208 = vshll.u32 %v7932, 16
      %v8210 = vrot.slane %v8208, 5
      %v8211 = vsel %vm1002, %v8206, %v8210
      %v8213 = vshrl.u32 %v7933, 16
      %v8215 = vrot.slane %v8213, 4
      %v8216 = vshll.u32 %v7933, 16
      %v8218 = vrot.slane %v8216, 5
      %v8219 = vor.u32 %v8215, %v8218
      %v8220 = vrot.slane %v8219, 4
      %v8222 = vshll.u32 %v7934, 16
      %v8224 = vrot.slane %v8222, 5
      %v8225 = vsel %vm1002, %v8220, %v8224
      %v8226 = vshrl.u32 %v7934, 16
      %v8228 = vrot.slane %v8226, 4
      %v8229 = vor.u32 %v8228, %v8224
      %v8230 = vrot.slane %v8229, 4
      %v8232 = vshll.u32 %v7935, 16
      %v8234 = vrot.slane %v8232, 5
      %v8235 = vsel %vm1002, %v8230, %v8234
      %v8237 = vshrl.u32 %v7936, 16
      %v8239 = vrot.slane %v8237, 4
      %v8240 = vshll.u32 %v7936, 16
      %v8242 = vrot.slane %v8240, 5
      %v8243 = vor.u32 %v8239, %v8242
      %v8244 = vrot.slane %v8243, 4
      %v8246 = vshll.u32 %v7937, 16
      %v8248 = vrot.slane %v8246, 5
      %v8249 = vsel %vm1002, %v8244, %v8248
      %v8250 = vshrl.u32 %v7937, 16
      %v8252 = vrot.slane %v8250, 4
      %v8253 = vor.u32 %v8252, %v8248
      %v8254 = vrot.slane %v8253, 4
      %v8256 = vshll.u32 %v7938, 16
      %v8258 = vrot.slane %v8256, 5
      %v8259 = vsel %vm1002, %v8254, %v8258
      %v8261 = vshrl.u32 %v7939, 16
      %v8263 = vrot.slane %v8261, 4
      %v8264 = vshll.u32 %v7939, 16
      %v8266 = vrot.slane %v8264, 5
      %v8267 = vor.u32 %v8263, %v8266
      %v8268 = vrot.slane %v8267, 4
      %v8270 = vshll.u32 %v7940, 16
      %v8272 = vrot.slane %v8270, 5
      %v8273 = vsel %vm1002, %v8268, %v8272
      %v8274 = vshrl.u32 %v7940, 16
      %v8276 = vrot.slane %v8274, 4
      %v8277 = vor.u32 %v8276, %v8272
      %v8278 = vrot.slane %v8277, 4
      %v8280 = vshll.u32 %v7941, 16
      %v8282 = vrot.slane %v8280, 5
      %v8283 = vsel %vm1002, %v8278, %v8282
      %v8285 = vshrl.u32 %v7942, 16
      %v8287 = vrot.slane %v8285, 4
      %v8288 = vshll.u32 %v7942, 16
      %v8290 = vrot.slane %v8288, 5
      %v8291 = vor.u32 %v8287, %v8290
      %v8292 = vrot.slane %v8291, 4
      %v8294 = vshll.u32 %v7943, 16
      %v8296 = vrot.slane %v8294, 5
      %v8297 = vsel %vm1002, %v8292, %v8296
      %v8298 = vshrl.u32 %v7943, 16
      %v8300 = vrot.slane %v8298, 4
      %v8301 = vor.u32 %v8300, %v8296
      %v8302 = vrot.slane %v8301, 4
      %v8304 = vshll.u32 %v7944, 16
      %v8306 = vrot.slane %v8304, 5
      %v8307 = vsel %vm1002, %v8302, %v8306
      %v8309 = vshrl.u32 %v7945, 16
      %v8311 = vrot.slane %v8309, 4
      %v8312 = vshll.u32 %v7945, 16
      %v8314 = vrot.slane %v8312, 5
      %v8315 = vor.u32 %v8311, %v8314
      %v8316 = vrot.slane %v8315, 4
      %v8318 = vshll.u32 %v7946, 16
      %v8320 = vrot.slane %v8318, 5
      %v8321 = vsel %vm1002, %v8316, %v8320
      %v8322 = vshrl.u32 %v7946, 16
      %v8324 = vrot.slane %v8322, 4
      %v8325 = vor.u32 %v8324, %v8320
      %v8326 = vrot.slane %v8325, 4
      %v8328 = vshll.u32 %v7947, 16
      %v8330 = vrot.slane %v8328, 5
      %v8331 = vsel %vm1002, %v8326, %v8330
      %v8332 = vunpack.c.l.b16 %v7961
      %v8333 = vunpack.c.l.b16 %v7971
      %v8334 = vunpack.c.l.b16 %v7985
      %v8335 = vunpack.c.l.b16 %v7995
      %v8336 = vunpack.c.l.b16 %v8009
      %v8337 = vunpack.c.l.b16 %v8019
      %v8338 = vunpack.c.l.b16 %v8033
      %v8339 = vunpack.c.l.b16 %v8043
      %v8340 = vunpack.c.l.b16 %v8057
      %v8341 = vunpack.c.l.b16 %v8067
      %v8342 = vunpack.c.l.b16 %v8081
      %v8343 = vunpack.c.l.b16 %v8091
      %v8344 = vunpack.c.l.b16 %v8105
      %v8345 = vunpack.c.l.b16 %v8115
      %v8346 = vunpack.c.l.b16 %v8129
      %v8347 = vunpack.c.l.b16 %v8139
      %v8348 = vunpack.c.l.b16 %v8153
      %v8349 = vunpack.c.l.b16 %v8163
      %v8350 = vunpack.c.l.b16 %v8177
      %v8351 = vunpack.c.l.b16 %v8187
      %v8352 = vunpack.c.l.b16 %v8201
      %v8353 = vunpack.c.l.b16 %v8211
      %v8354 = vunpack.c.l.b16 %v8225
      %v8355 = vunpack.c.l.b16 %v8235
      %v8356 = vunpack.c.l.b16 %v8249
      %v8357 = vunpack.c.l.b16 %v8259
      %v8358 = vunpack.c.l.b16 %v8273
      %v8359 = vunpack.c.l.b16 %v8283
      %v8360 = vunpack.c.l.b16 %v8297
      %v8361 = vunpack.c.l.b16 %v8307
      %v8362 = vunpack.c.l.b16 %v8321
      %v8363 = vunpack.c.l.b16 %v8331
      %v8364 = vpack.c.b16 %v8333, %v8332
      %v8365 = vpack.c.b16 %v8335, %v8334
      %v8366 = vpack.c.b16 %v8337, %v8336
      %v8367 = vpack.c.b16 %v8339, %v8338
      %v8368 = vpack.c.b16 %v8341, %v8340
      %v8369 = vpack.c.b16 %v8343, %v8342
      %v8370 = vpack.c.b16 %v8345, %v8344
      %v8371 = vpack.c.b16 %v8347, %v8346
      %v8372 = vpack.c.b16 %v8349, %v8348
      %v8373 = vpack.c.b16 %v8351, %v8350
      %v8374 = vpack.c.b16 %v8353, %v8352
      %v8375 = vpack.c.b16 %v8355, %v8354
      %v8376 = vpack.c.b16 %v8357, %v8356
      %v8377 = vpack.c.b16 %v8359, %v8358
      %v8378 = vpack.c.b16 %v8361, %v8360
      %v8379 = vpack.c.b16 %v8363, %v8362
      %8396 = vst [vmem:[#allocation3 + $0x38] sm:$0xff] %v8364
      %8397 = vst [vmem:[#allocation3 + $0x80] sm:$0xff] %v8365
      %8398 = vst [vmem:[#allocation3 + $0xc8] sm:$0xff] %v8366
      %8399 = vst [vmem:[#allocation3 + $0x110] sm:$0xff] %v8367
      %8400 = vst [vmem:[#allocation3 + $0x158] sm:$0xff] %v8368
      %8401 = vst [vmem:[#allocation3 + $0x1a0] sm:$0xff] %v8369
      %8402 = vst [vmem:[#allocation3 + $0x1e8] sm:$0xff] %v8370
      %8403 = vst [vmem:[#allocation3 + $0x230] sm:$0xff] %v8371
      %8404 = vst [vmem:[#allocation3 + $0x278] sm:$0xff] %v8372
      %8405 = vst [vmem:[#allocation3 + $0x2c0] sm:$0xff] %v8373
      %8406 = vst [vmem:[#allocation3 + $0x308] sm:$0xff] %v8374
      %8407 = vst [vmem:[#allocation3 + $0x350] sm:$0xff] %v8375
      %8408 = vst [vmem:[#allocation3 + $0x398] sm:$0xff] %v8376
      %8409 = vst [vmem:[#allocation3 + $0x3e0] sm:$0xff] %v8377
      %8410 = vst [vmem:[#allocation3 + $0x428] sm:$0xff] %v8378
      %8411 = vst [vmem:[#allocation3 + $0x470] sm:$0xff] %v8379
      %v8412 = vld [vmem:[%s2702] sm:$0xe]
      %v8413 = vld [vmem:[%s2702 + $0x4] sm:$0xf]
      %v8414 = vld [vmem:[%s2702 + $0x8] sm:$0x1]
      %v8415 = vld [vmem:[%s2702 + $0xc] sm:$0xe]
      %v8416 = vld [vmem:[%s2702 + $0x10] sm:$0xf]
      %v8417 = vld [vmem:[%s2702 + $0x14] sm:$0x1]
      %v8418 = vld [vmem:[%s2702 + $0x18] sm:$0xe]
      %v8419 = vld [vmem:[%s2702 + $0x1c] sm:$0xf]
      %v8420 = vld [vmem:[%s2702 + $0x20] sm:$0x1]
      %v8421 = vld [vmem:[%s2702 + $0x24] sm:$0xe]
      %v8422 = vld [vmem:[%s2702 + $0x28] sm:$0xf]
      %v8423 = vld [vmem:[%s2702 + $0x2c] sm:$0x1]
      %v8424 = vld [vmem:[%s2702 + $0x30] sm:$0xe]
      %v8425 = vld [vmem:[%s2702 + $0x34] sm:$0xf]
      %v8426 = vld [vmem:[%s2702 + $0x38] sm:$0x1]
      %v8427 = vld [vmem:[%s2702 + $0x3c] sm:$0xe]
      %v8428 = vld [vmem:[%s2702 + $0x40] sm:$0xf]
      %v8429 = vld [vmem:[%s2702 + $0x44] sm:$0x1]
      %v8430 = vld [vmem:[%s2702 + $0x48] sm:$0xe]
      %v8431 = vld [vmem:[%s2702 + $0x4c] sm:$0xf]
      %v8432 = vld [vmem:[%s2702 + $0x50] sm:$0x1]
      %v8433 = vld [vmem:[%s2702 + $0x54] sm:$0xe]
      %v8434 = vld [vmem:[%s2702 + $0x58] sm:$0xf]
      %v8435 = vld [vmem:[%s2702 + $0x5c] sm:$0x1]
      %v8436 = vld [vmem:[%s2702 + $0x60] sm:$0xe]
      %v8437 = vld [vmem:[%s2702 + $0x64] sm:$0xf]
      %v8438 = vld [vmem:[%s2702 + $0x68] sm:$0x1]
      %v8439 = vld [vmem:[%s2702 + $0x6c] sm:$0xe]
      %v8440 = vld [vmem:[%s2702 + $0x70] sm:$0xf]
      %v8441 = vld [vmem:[%s2702 + $0x74] sm:$0x1]
      %v8442 = vld [vmem:[%s2702 + $0x78] sm:$0xe]
      %v8443 = vld [vmem:[%s2702 + $0x7c] sm:$0xf]
      %v8444 = vld [vmem:[%s2702 + $0x80] sm:$0x1]
      %v8445 = vld [vmem:[%s2702 + $0x84] sm:$0xe]
      %v8446 = vld [vmem:[%s2702 + $0x88] sm:$0xf]
      %v8447 = vld [vmem:[%s2702 + $0x8c] sm:$0x1]
      %v8448 = vld [vmem:[%s2702 + $0x90] sm:$0xe]
      %v8449 = vld [vmem:[%s2702 + $0x94] sm:$0xf]
      %v8450 = vld [vmem:[%s2702 + $0x98] sm:$0x1]
      %v8451 = vld [vmem:[%s2702 + $0x9c] sm:$0xe]
      %v8452 = vld [vmem:[%s2702 + $0xa0] sm:$0xf]
      %v8453 = vld [vmem:[%s2702 + $0xa4] sm:$0x1]
      %v8454 = vld [vmem:[%s2702 + $0xa8] sm:$0xe]
      %v8455 = vld [vmem:[%s2702 + $0xac] sm:$0xf]
      %v8456 = vld [vmem:[%s2702 + $0xb0] sm:$0x1]
      %v8457 = vld [vmem:[%s2702 + $0xb4] sm:$0xe]
      %v8458 = vld [vmem:[%s2702 + $0xb8] sm:$0xf]
      %v8459 = vld [vmem:[%s2702 + $0xbc] sm:$0x1]
      %v8508 = vrot.slane %v8412, 5
      %v8509 = vrot.slane %v8508, 4
      %v8510 = vrot.slane %v8413, 5
      %v8511 = vsel %vm1565, %v8509, %v8510
      %v8512 = vrot.slane %v8510, 4
      %v8513 = vrot.slane %v8414, 5
      %v8514 = vsel %vm1565, %v8512, %v8513
      %v8515 = vrot.slane %v8415, 5
      %v8516 = vrot.slane %v8515, 4
      %v8517 = vrot.slane %v8416, 5
      %v8518 = vsel %vm1565, %v8516, %v8517
      %v8519 = vrot.slane %v8517, 4
      %v8520 = vrot.slane %v8417, 5
      %v8521 = vsel %vm1565, %v8519, %v8520
      %v8522 = vrot.slane %v8418, 5
      %v8523 = vrot.slane %v8522, 4
      %v8524 = vrot.slane %v8419, 5
      %v8525 = vsel %vm1565, %v8523, %v8524
      %v8526 = vrot.slane %v8524, 4
      %v8527 = vrot.slane %v8420, 5
      %v8528 = vsel %vm1565, %v8526, %v8527
      %v8529 = vrot.slane %v8421, 5
      %v8530 = vrot.slane %v8529, 4
      %v8531 = vrot.slane %v8422, 5
      %v8532 = vsel %vm1565, %v8530, %v8531
      %v8533 = vrot.slane %v8531, 4
      %v8534 = vrot.slane %v8423, 5
      %v8535 = vsel %vm1565, %v8533, %v8534
      %v8536 = vrot.slane %v8424, 5
      %v8537 = vrot.slane %v8536, 4
      %v8538 = vrot.slane %v8425, 5
      %v8539 = vsel %vm1565, %v8537, %v8538
      %v8540 = vrot.slane %v8538, 4
      %v8541 = vrot.slane %v8426, 5
      %v8542 = vsel %vm1565, %v8540, %v8541
      %v8543 = vrot.slane %v8427, 5
      %v8544 = vrot.slane %v8543, 4
      %v8545 = vrot.slane %v8428, 5
      %v8546 = vsel %vm1565, %v8544, %v8545
      %v8547 = vrot.slane %v8545, 4
      %v8548 = vrot.slane %v8429, 5
      %v8549 = vsel %vm1565, %v8547, %v8548
      %v8550 = vrot.slane %v8430, 5
      %v8551 = vrot.slane %v8550, 4
      %v8552 = vrot.slane %v8431, 5
      %v8553 = vsel %vm1565, %v8551, %v8552
      %v8554 = vrot.slane %v8552, 4
      %v8555 = vrot.slane %v8432, 5
      %v8556 = vsel %vm1565, %v8554, %v8555
      %v8557 = vrot.slane %v8433, 5
      %v8558 = vrot.slane %v8557, 4
      %v8559 = vrot.slane %v8434, 5
      %v8560 = vsel %vm1565, %v8558, %v8559
      %v8561 = vrot.slane %v8559, 4
      %v8562 = vrot.slane %v8435, 5
      %v8563 = vsel %vm1565, %v8561, %v8562
      %v8564 = vrot.slane %v8436, 5
      %v8565 = vrot.slane %v8564, 4
      %v8566 = vrot.slane %v8437, 5
      %v8567 = vsel %vm1565, %v8565, %v8566
      %v8568 = vrot.slane %v8566, 4
      %v8569 = vrot.slane %v8438, 5
      %v8570 = vsel %vm1565, %v8568, %v8569
      %v8571 = vrot.slane %v8439, 5
      %v8572 = vrot.slane %v8571, 4
      %v8573 = vrot.slane %v8440, 5
      %v8574 = vsel %vm1565, %v8572, %v8573
      %v8575 = vrot.slane %v8573, 4
      %v8576 = vrot.slane %v8441, 5
      %v8577 = vsel %vm1565, %v8575, %v8576
      %v8578 = vrot.slane %v8442, 5
      %v8579 = vrot.slane %v8578, 4
      %v8580 = vrot.slane %v8443, 5
      %v8581 = vsel %vm1565, %v8579, %v8580
      %v8582 = vrot.slane %v8580, 4
      %v8583 = vrot.slane %v8444, 5
      %v8584 = vsel %vm1565, %v8582, %v8583
      %v8585 = vrot.slane %v8445, 5
      %v8586 = vrot.slane %v8585, 4
      %v8587 = vrot.slane %v8446, 5
      %v8588 = vsel %vm1565, %v8586, %v8587
      %v8589 = vrot.slane %v8587, 4
      %v8590 = vrot.slane %v8447, 5
      %v8591 = vsel %vm1565, %v8589, %v8590
      %v8592 = vrot.slane %v8448, 5
      %v8593 = vrot.slane %v8592, 4
      %v8594 = vrot.slane %v8449, 5
      %v8595 = vsel %vm1565, %v8593, %v8594
      %v8596 = vrot.slane %v8594, 4
      %v8597 = vrot.slane %v8450, 5
      %v8598 = vsel %vm1565, %v8596, %v8597
      %v8599 = vrot.slane %v8451, 5
      %v8600 = vrot.slane %v8599, 4
      %v8601 = vrot.slane %v8452, 5
      %v8602 = vsel %vm1565, %v8600, %v8601
      %v8603 = vrot.slane %v8601, 4
      %v8604 = vrot.slane %v8453, 5
      %v8605 = vsel %vm1565, %v8603, %v8604
      %v8606 = vrot.slane %v8454, 5
      %v8607 = vrot.slane %v8606, 4
      %v8608 = vrot.slane %v8455, 5
      %v8609 = vsel %vm1565, %v8607, %v8608
      %v8610 = vrot.slane %v8608, 4
      %v8611 = vrot.slane %v8456, 5
      %v8612 = vsel %vm1565, %v8610, %v8611
      %v8613 = vrot.slane %v8457, 5
      %v8614 = vrot.slane %v8613, 4
      %v8615 = vrot.slane %v8458, 5
      %v8616 = vsel %vm1565, %v8614, %v8615
      %v8617 = vrot.slane %v8615, 4
      %v8618 = vrot.slane %v8459, 5
      %v8619 = vsel %vm1565, %v8617, %v8618
      %v8620 = vunpack.c.l.b16 %v8511
      %v8621 = vunpack.c.l.b16 %v8514
      %v8622 = vunpack.c.l.b16 %v8518
      %v8623 = vunpack.c.l.b16 %v8521
      %v8624 = vunpack.c.l.b16 %v8525
      %v8625 = vunpack.c.l.b16 %v8528
      %v8626 = vunpack.c.l.b16 %v8532
      %v8627 = vunpack.c.l.b16 %v8535
      %v8628 = vunpack.c.l.b16 %v8539
      %v8629 = vunpack.c.l.b16 %v8542
      %v8630 = vunpack.c.l.b16 %v8546
      %v8631 = vunpack.c.l.b16 %v8549
      %v8632 = vunpack.c.l.b16 %v8553
      %v8633 = vunpack.c.l.b16 %v8556
      %v8634 = vunpack.c.l.b16 %v8560
      %v8635 = vunpack.c.l.b16 %v8563
      %v8636 = vunpack.c.l.b16 %v8567
      %v8637 = vunpack.c.l.b16 %v8570
      %v8638 = vunpack.c.l.b16 %v8574
      %v8639 = vunpack.c.l.b16 %v8577
      %v8640 = vunpack.c.l.b16 %v8581
      %v8641 = vunpack.c.l.b16 %v8584
      %v8642 = vunpack.c.l.b16 %v8588
      %v8643 = vunpack.c.l.b16 %v8591
      %v8644 = vunpack.c.l.b16 %v8595
      %v8645 = vunpack.c.l.b16 %v8598
      %v8646 = vunpack.c.l.b16 %v8602
      %v8647 = vunpack.c.l.b16 %v8605
      %v8648 = vunpack.c.l.b16 %v8609
      %v8649 = vunpack.c.l.b16 %v8612
      %v8650 = vunpack.c.l.b16 %v8616
      %v8651 = vunpack.c.l.b16 %v8619
      %v8652 = vpack.c.b16 %v8621, %v8620
      %v8653 = vpack.c.b16 %v8623, %v8622
      %v8654 = vpack.c.b16 %v8625, %v8624
      %v8655 = vpack.c.b16 %v8627, %v8626
      %v8656 = vpack.c.b16 %v8629, %v8628
      %v8657 = vpack.c.b16 %v8631, %v8630
      %v8658 = vpack.c.b16 %v8633, %v8632
      %v8659 = vpack.c.b16 %v8635, %v8634
      %v8660 = vpack.c.b16 %v8637, %v8636
      %v8661 = vpack.c.b16 %v8639, %v8638
      %v8662 = vpack.c.b16 %v8641, %v8640
      %v8663 = vpack.c.b16 %v8643, %v8642
      %v8664 = vpack.c.b16 %v8645, %v8644
      %v8665 = vpack.c.b16 %v8647, %v8646
      %v8666 = vpack.c.b16 %v8649, %v8648
      %v8667 = vpack.c.b16 %v8651, %v8650
      %8684 = vst [vmem:[#allocation3 + $0x40] sm:$0xff] %v8652
      %8685 = vst [vmem:[#allocation3 + $0x88] sm:$0xff] %v8653
      %8686 = vst [vmem:[#allocation3 + $0xd0] sm:$0xff] %v8654
      %8687 = vst [vmem:[#allocation3 + $0x118] sm:$0xff] %v8655
      %8688 = vst [vmem:[#allocation3 + $0x160] sm:$0xff] %v8656
      %8689 = vst [vmem:[#allocation3 + $0x1a8] sm:$0xff] %v8657
      %8690 = vst [vmem:[#allocation3 + $0x1f0] sm:$0xff] %v8658
      %8691 = vst [vmem:[#allocation3 + $0x238] sm:$0xff] %v8659
      %8692 = vst [vmem:[#allocation3 + $0x280] sm:$0xff] %v8660
      %8693 = vst [vmem:[#allocation3 + $0x2c8] sm:$0xff] %v8661
      %8694 = vst [vmem:[#allocation3 + $0x310] sm:$0xff] %v8662
      %8695 = vst [vmem:[#allocation3 + $0x358] sm:$0xff] %v8663
      %8696 = vst [vmem:[#allocation3 + $0x3a0] sm:$0xff] %v8664
      %8697 = vst [vmem:[#allocation3 + $0x3e8] sm:$0xff] %v8665
      %8698 = vst [vmem:[#allocation3 + $0x430] sm:$0xff] %v8666
      %8699 = vst [vmem:[#allocation3 + $0x478] sm:$0xff] %v8667
      %v8700 = vld [vmem:[#allocation3] sm:$0xff]
      %v8701 = vld [vmem:[#allocation3 + $0x8] sm:$0xff]
      %v8702 = vld [vmem:[#allocation3 + $0x10] sm:$0xff]
      %v8703 = vld [vmem:[#allocation3 + $0x18] sm:$0xff]
      %v8704 = vld [vmem:[#allocation3 + $0x20] sm:$0xff]
      %v8705 = vld [vmem:[#allocation3 + $0x28] sm:$0xff]
      %v8706 = vld [vmem:[#allocation3 + $0x30] sm:$0xff]
      %v8707 = vld [vmem:[#allocation3 + $0x38] sm:$0xff]
      %v8708 = vld [vmem:[#allocation3 + $0x40] sm:$0xff]
      %v8709 = vld [vmem:[#allocation3 + $0x48] sm:$0xff]
      %v8710 = vld [vmem:[#allocation3 + $0x50] sm:$0xff]
      %v8711 = vld [vmem:[#allocation3 + $0x58] sm:$0xff]
      %v8712 = vld [vmem:[#allocation3 + $0x60] sm:$0xff]
      %v8713 = vld [vmem:[#allocation3 + $0x68] sm:$0xff]
      %v8714 = vld [vmem:[#allocation3 + $0x70] sm:$0xff]
      %v8715 = vld [vmem:[#allocation3 + $0x78] sm:$0xff]
      %v8716 = vld [vmem:[#allocation3 + $0x80] sm:$0xff]
      %v8717 = vld [vmem:[#allocation3 + $0x88] sm:$0xff]
      %v8718 = vld [vmem:[#allocation3 + $0x90] sm:$0xff]
      %v8719 = vld [vmem:[#allocation3 + $0x98] sm:$0xff]
      %v8720 = vld [vmem:[#allocation3 + $0xa0] sm:$0xff]
      %v8721 = vld [vmem:[#allocation3 + $0xa8] sm:$0xff]
      %v8722 = vld [vmem:[#allocation3 + $0xb0] sm:$0xff]
      %v8723 = vld [vmem:[#allocation3 + $0xb8] sm:$0xff]
      %v8724 = vld [vmem:[#allocation3 + $0xc0] sm:$0xff]
      %v8725 = vld [vmem:[#allocation3 + $0xc8] sm:$0xff]
      %v8726 = vld [vmem:[#allocation3 + $0xd0] sm:$0xff]
      %v8727 = vld [vmem:[#allocation3 + $0xd8] sm:$0xff]
      %v8728 = vld [vmem:[#allocation3 + $0xe0] sm:$0xff]
      %v8729 = vld [vmem:[#allocation3 + $0xe8] sm:$0xff]
      %v8730 = vld [vmem:[#allocation3 + $0xf0] sm:$0xff]
      %v8731 = vld [vmem:[#allocation3 + $0xf8] sm:$0xff]
      %v8732 = vld [vmem:[#allocation3 + $0x100] sm:$0xff]
      %v8733 = vld [vmem:[#allocation3 + $0x108] sm:$0xff]
      %v8734 = vld [vmem:[#allocation3 + $0x110] sm:$0xff]
      %v8735 = vld [vmem:[#allocation3 + $0x118] sm:$0xff]
      %v8736 = vld [vmem:[#allocation3 + $0x120] sm:$0xff]
      %v8737 = vld [vmem:[#allocation3 + $0x128] sm:$0xff]
      %v8738 = vld [vmem:[#allocation3 + $0x130] sm:$0xff]
      %v8739 = vld [vmem:[#allocation3 + $0x138] sm:$0xff]
      %v8740 = vld [vmem:[#allocation3 + $0x140] sm:$0xff]
      %v8741 = vld [vmem:[#allocation3 + $0x148] sm:$0xff]
      %v8742 = vld [vmem:[#allocation3 + $0x150] sm:$0xff]
      %v8743 = vld [vmem:[#allocation3 + $0x158] sm:$0xff]
      %v8744 = vld [vmem:[#allocation3 + $0x160] sm:$0xff]
      %v8745 = vld [vmem:[#allocation3 + $0x168] sm:$0xff]
      %v8746 = vld [vmem:[#allocation3 + $0x170] sm:$0xff]
      %v8747 = vld [vmem:[#allocation3 + $0x178] sm:$0xff]
      %v8748 = vld [vmem:[#allocation3 + $0x180] sm:$0xff]
      %v8749 = vld [vmem:[#allocation3 + $0x188] sm:$0xff]
      %v8750 = vld [vmem:[#allocation3 + $0x190] sm:$0xff]
      %v8751 = vld [vmem:[#allocation3 + $0x198] sm:$0xff]
      %v8752 = vld [vmem:[#allocation3 + $0x1a0] sm:$0xff]
      %v8753 = vld [vmem:[#allocation3 + $0x1a8] sm:$0xff]
      %v8754 = vld [vmem:[#allocation3 + $0x1b0] sm:$0xff]
      %v8755 = vld [vmem:[#allocation3 + $0x1b8] sm:$0xff]
      %v8756 = vld [vmem:[#allocation3 + $0x1c0] sm:$0xff]
      %v8757 = vld [vmem:[#allocation3 + $0x1c8] sm:$0xff]
      %v8758 = vld [vmem:[#allocation3 + $0x1d0] sm:$0xff]
      %v8759 = vld [vmem:[#allocation3 + $0x1d8] sm:$0xff]
      %v8760 = vld [vmem:[#allocation3 + $0x1e0] sm:$0xff]
      %v8761 = vld [vmem:[#allocation3 + $0x1e8] sm:$0xff]
      %v8762 = vld [vmem:[#allocation3 + $0x1f0] sm:$0xff]
      %v8763 = vld [vmem:[#allocation3 + $0x1f8] sm:$0xff]
      %v8764 = vld [vmem:[#allocation3 + $0x200] sm:$0xff]
      %v8765 = vld [vmem:[#allocation3 + $0x208] sm:$0xff]
      %v8766 = vld [vmem:[#allocation3 + $0x210] sm:$0xff]
      %v8767 = vld [vmem:[#allocation3 + $0x218] sm:$0xff]
      %v8768 = vld [vmem:[#allocation3 + $0x220] sm:$0xff]
      %v8769 = vld [vmem:[#allocation3 + $0x228] sm:$0xff]
      %v8770 = vld [vmem:[#allocation3 + $0x230] sm:$0xff]
      %v8771 = vld [vmem:[#allocation3 + $0x238] sm:$0xff]
      %v8772 = vld [vmem:[#allocation3 + $0x240] sm:$0xff]
      %v8773 = vld [vmem:[#allocation3 + $0x248] sm:$0xff]
      %v8774 = vld [vmem:[#allocation3 + $0x250] sm:$0xff]
      %v8775 = vld [vmem:[#allocation3 + $0x258] sm:$0xff]
      %v8776 = vld [vmem:[#allocation3 + $0x260] sm:$0xff]
      %v8777 = vld [vmem:[#allocation3 + $0x268] sm:$0xff]
      %v8778 = vld [vmem:[#allocation3 + $0x270] sm:$0xff]
      %v8779 = vld [vmem:[#allocation3 + $0x278] sm:$0xff]
      %v8780 = vld [vmem:[#allocation3 + $0x280] sm:$0xff]
      %v8781 = vld [vmem:[#allocation3 + $0x288] sm:$0xff]
      %v8782 = vld [vmem:[#allocation3 + $0x290] sm:$0xff]
      %v8783 = vld [vmem:[#allocation3 + $0x298] sm:$0xff]
      %v8784 = vld [vmem:[#allocation3 + $0x2a0] sm:$0xff]
      %v8785 = vld [vmem:[#allocation3 + $0x2a8] sm:$0xff]
      %v8786 = vld [vmem:[#allocation3 + $0x2b0] sm:$0xff]
      %v8787 = vld [vmem:[#allocation3 + $0x2b8] sm:$0xff]
      %v8788 = vld [vmem:[#allocation3 + $0x2c0] sm:$0xff]
      %v8789 = vld [vmem:[#allocation3 + $0x2c8] sm:$0xff]
      %v8790 = vld [vmem:[#allocation3 + $0x2d0] sm:$0xff]
      %v8791 = vld [vmem:[#allocation3 + $0x2d8] sm:$0xff]
      %v8792 = vld [vmem:[#allocation3 + $0x2e0] sm:$0xff]
      %v8793 = vld [vmem:[#allocation3 + $0x2e8] sm:$0xff]
      %v8794 = vld [vmem:[#allocation3 + $0x2f0] sm:$0xff]
      %v8795 = vld [vmem:[#allocation3 + $0x2f8] sm:$0xff]
      %v8796 = vld [vmem:[#allocation3 + $0x300] sm:$0xff]
      %v8797 = vld [vmem:[#allocation3 + $0x308] sm:$0xff]
      %v8798 = vld [vmem:[#allocation3 + $0x310] sm:$0xff]
      %v8799 = vld [vmem:[#allocation3 + $0x318] sm:$0xff]
      %v8800 = vld [vmem:[#allocation3 + $0x320] sm:$0xff]
      %v8801 = vld [vmem:[#allocation3 + $0x328] sm:$0xff]
      %v8802 = vld [vmem:[#allocation3 + $0x330] sm:$0xff]
      %v8803 = vld [vmem:[#allocation3 + $0x338] sm:$0xff]
      %v8804 = vld [vmem:[#allocation3 + $0x340] sm:$0xff]
      %v8805 = vld [vmem:[#allocation3 + $0x348] sm:$0xff]
      %v8806 = vld [vmem:[#allocation3 + $0x350] sm:$0xff]
      %v8807 = vld [vmem:[#allocation3 + $0x358] sm:$0xff]
      %v8808 = vld [vmem:[#allocation3 + $0x360] sm:$0xff]
      %v8809 = vld [vmem:[#allocation3 + $0x368] sm:$0xff]
      %v8810 = vld [vmem:[#allocation3 + $0x370] sm:$0xff]
      %v8811 = vld [vmem:[#allocation3 + $0x378] sm:$0xff]
      %v8812 = vld [vmem:[#allocation3 + $0x380] sm:$0xff]
      %v8813 = vld [vmem:[#allocation3 + $0x388] sm:$0xff]
      %v8814 = vld [vmem:[#allocation3 + $0x390] sm:$0xff]
      %v8815 = vld [vmem:[#allocation3 + $0x398] sm:$0xff]
      %v8816 = vld [vmem:[#allocation3 + $0x3a0] sm:$0xff]
      %v8817 = vld [vmem:[#allocation3 + $0x3a8] sm:$0xff]
      %v8818 = vld [vmem:[#allocation3 + $0x3b0] sm:$0xff]
      %v8819 = vld [vmem:[#allocation3 + $0x3b8] sm:$0xff]
      %v8820 = vld [vmem:[#allocation3 + $0x3c0] sm:$0xff]
      %v8821 = vld [vmem:[#allocation3 + $0x3c8] sm:$0xff]
      %v8822 = vld [vmem:[#allocation3 + $0x3d0] sm:$0xff]
      %v8823 = vld [vmem:[#allocation3 + $0x3d8] sm:$0xff]
      %v8824 = vld [vmem:[#allocation3 + $0x3e0] sm:$0xff]
      %v8825 = vld [vmem:[#allocation3 + $0x3e8] sm:$0xff]
      %v8826 = vld [vmem:[#allocation3 + $0x3f0] sm:$0xff]
      %v8827 = vld [vmem:[#allocation3 + $0x3f8] sm:$0xff]
      %v8828 = vld [vmem:[#allocation3 + $0x400] sm:$0xff]
      %v8829 = vld [vmem:[#allocation3 + $0x408] sm:$0xff]
      %v8830 = vld [vmem:[#allocation3 + $0x410] sm:$0xff]
      %v8831 = vld [vmem:[#allocation3 + $0x418] sm:$0xff]
      %v8832 = vld [vmem:[#allocation3 + $0x420] sm:$0xff]
      %v8833 = vld [vmem:[#allocation3 + $0x428] sm:$0xff]
      %v8834 = vld [vmem:[#allocation3 + $0x430] sm:$0xff]
      %v8835 = vld [vmem:[#allocation3 + $0x438] sm:$0xff]
      %v8836 = vld [vmem:[#allocation3 + $0x440] sm:$0xff]
      %v8837 = vld [vmem:[#allocation3 + $0x448] sm:$0xff]
      %v8838 = vld [vmem:[#allocation3 + $0x450] sm:$0xff]
      %v8839 = vld [vmem:[#allocation3 + $0x458] sm:$0xff]
      %v8840 = vld [vmem:[#allocation3 + $0x460] sm:$0xff]
      %v8841 = vld [vmem:[#allocation3 + $0x468] sm:$0xff]
      %v8842 = vld [vmem:[#allocation3 + $0x470] sm:$0xff]
      %v8843 = vld [vmem:[#allocation3 + $0x478] sm:$0xff]
      %v8844 = vld [vmem:[%s4] sm:$0xf]
      %v8845 = vld [vmem:[%s4 + $0x4] sm:$0xf]
      %v8846 = vld [vmem:[%s4 + $0x8] sm:$0xf]
      %v8847 = vld [vmem:[%s4 + $0xc] sm:$0xf]
      %v8848 = vld [vmem:[%s4 + $0x10] sm:$0xf]
      %v8849 = vld [vmem:[%s4 + $0x14] sm:$0xf]
      %v8850 = vld [vmem:[%s4 + $0x18] sm:$0xf]
      %v8851 = vld [vmem:[%s4 + $0x1c] sm:$0xf]
      %v8852 = vld [vmem:[%s4 + $0x20] sm:$0xf]
      %v8853 = vld [vmem:[%s4 + $0x24] sm:$0xf]
      %v8854 = vld [vmem:[%s4 + $0x28] sm:$0xf]
      %v8855 = vld [vmem:[%s4 + $0x2c] sm:$0xf]
      %v8856 = vld [vmem:[%s4 + $0x30] sm:$0xf]
      %v8857 = vld [vmem:[%s4 + $0x34] sm:$0xf]
      %v8858 = vld [vmem:[%s4 + $0x38] sm:$0xf]
      %v8859 = vld [vmem:[%s4 + $0x3c] sm:$0xf]
      %v8860 = vld [vmem:[%s4 + $0x40] sm:$0xf]
      %v8861 = vld [vmem:[%s4 + $0x44] sm:$0xf]
      %v8862 = vld [vmem:[%s4 + $0x48] sm:$0xf]
      %v8863 = vld [vmem:[%s4 + $0x4c] sm:$0xf]
      %v8864 = vld [vmem:[%s4 + $0x50] sm:$0xf]
      %v8865 = vld [vmem:[%s4 + $0x54] sm:$0xf]
      %v8866 = vld [vmem:[%s4 + $0x58] sm:$0xf]
      %v8867 = vld [vmem:[%s4 + $0x5c] sm:$0xf]
      %v8868 = vld [vmem:[%s4 + $0x60] sm:$0xf]
      %v8869 = vld [vmem:[%s4 + $0x64] sm:$0xf]
      %v8870 = vld [vmem:[%s4 + $0x68] sm:$0xf]
      %v8871 = vld [vmem:[%s4 + $0x6c] sm:$0xf]
      %v8872 = vld [vmem:[%s4 + $0x70] sm:$0xf]
      %v8873 = vld [vmem:[%s4 + $0x74] sm:$0xf]
      %v8874 = vld [vmem:[%s4 + $0x78] sm:$0xf]
      %v8875 = vld [vmem:[%s4 + $0x7c] sm:$0xf]
      %v8876 = vld [vmem:[%s4 + $0x80] sm:$0xf]
      %v8877 = vld [vmem:[%s4 + $0x84] sm:$0xf]
      %v8878 = vld [vmem:[%s4 + $0x88] sm:$0xf]
      %v8879 = vld [vmem:[%s4 + $0x8c] sm:$0xf]
      %v8880 = vld [vmem:[%s4 + $0x90] sm:$0xf]
      %v8881 = vld [vmem:[%s4 + $0x94] sm:$0xf]
      %v8882 = vld [vmem:[%s4 + $0x98] sm:$0xf]
      %v8883 = vld [vmem:[%s4 + $0x9c] sm:$0xf]
      %v8884 = vld [vmem:[%s4 + $0xa0] sm:$0xf]
      %v8885 = vld [vmem:[%s4 + $0xa4] sm:$0xf]
      %v8886 = vld [vmem:[%s4 + $0xa8] sm:$0xf]
      %v8887 = vld [vmem:[%s4 + $0xac] sm:$0xf]
      %v8888 = vld [vmem:[%s4 + $0xb0] sm:$0xf]
      %v8889 = vld [vmem:[%s4 + $0xb4] sm:$0xf]
      %v8890 = vld [vmem:[%s4 + $0xb8] sm:$0xf]
      %v8891 = vld [vmem:[%s4 + $0xbc] sm:$0xf]
      %v8892 = vld [vmem:[%s4 + $0xc0] sm:$0xf]
      %v8893 = vld [vmem:[%s4 + $0xc4] sm:$0xf]
      %v8894 = vld [vmem:[%s4 + $0xc8] sm:$0xf]
      %v8895 = vld [vmem:[%s4 + $0xcc] sm:$0xf]
      %v8896 = vld [vmem:[%s4 + $0xd0] sm:$0xf]
      %v8897 = vld [vmem:[%s4 + $0xd4] sm:$0xf]
      %v8898 = vld [vmem:[%s4 + $0xd8] sm:$0xf]
      %v8899 = vld [vmem:[%s4 + $0xdc] sm:$0xf]
      %v8900 = vld [vmem:[%s4 + $0xe0] sm:$0xf]
      %v8901 = vld [vmem:[%s4 + $0xe4] sm:$0xf]
      %v8902 = vld [vmem:[%s4 + $0xe8] sm:$0xf]
      %v8903 = vld [vmem:[%s4 + $0xec] sm:$0xf]
      %v8904 = vld [vmem:[%s4 + $0xf0] sm:$0xf]
      %v8905 = vld [vmem:[%s4 + $0xf4] sm:$0xf]
      %v8906 = vld [vmem:[%s4 + $0xf8] sm:$0xf]
      %v8907 = vld [vmem:[%s4 + $0xfc] sm:$0xf]
      %v8908 = vld [vmem:[%s4 + $0x100] sm:$0xf]
      %v8909 = vld [vmem:[%s4 + $0x104] sm:$0xf]
      %v8910 = vld [vmem:[%s4 + $0x108] sm:$0xf]
      %v8911 = vld [vmem:[%s4 + $0x10c] sm:$0xf]
      %v8912 = vld [vmem:[%s4 + $0x110] sm:$0xf]
      %v8913 = vld [vmem:[%s4 + $0x114] sm:$0xf]
      %v8914 = vld [vmem:[%s4 + $0x118] sm:$0xf]
      %v8915 = vld [vmem:[%s4 + $0x11c] sm:$0xf]
      %v8916 = vld [vmem:[%s4 + $0x120] sm:$0xf]
      %v8917 = vld [vmem:[%s4 + $0x124] sm:$0xf]
      %v8918 = vld [vmem:[%s4 + $0x128] sm:$0xf]
      %v8919 = vld [vmem:[%s4 + $0x12c] sm:$0xf]
      %v8920 = vld [vmem:[%s4 + $0x130] sm:$0xf]
      %v8921 = vld [vmem:[%s4 + $0x134] sm:$0xf]
      %v8922 = vld [vmem:[%s4 + $0x138] sm:$0xf]
      %v8923 = vld [vmem:[%s4 + $0x13c] sm:$0xf]
      %v8924 = vld [vmem:[%s4 + $0x140] sm:$0xf]
      %v8925 = vld [vmem:[%s4 + $0x144] sm:$0xf]
      %v8926 = vld [vmem:[%s4 + $0x148] sm:$0xf]
      %v8927 = vld [vmem:[%s4 + $0x14c] sm:$0xf]
      %v8928 = vld [vmem:[%s4 + $0x150] sm:$0xf]
      %v8929 = vld [vmem:[%s4 + $0x154] sm:$0xf]
      %v8930 = vld [vmem:[%s4 + $0x158] sm:$0xf]
      %v8931 = vld [vmem:[%s4 + $0x15c] sm:$0xf]
      %v8932 = vld [vmem:[%s4 + $0x160] sm:$0xf]
      %v8933 = vld [vmem:[%s4 + $0x164] sm:$0xf]
      %v8934 = vld [vmem:[%s4 + $0x168] sm:$0xf]
      %v8935 = vld [vmem:[%s4 + $0x16c] sm:$0xf]
      %v8936 = vld [vmem:[%s4 + $0x170] sm:$0xf]
      %v8937 = vld [vmem:[%s4 + $0x174] sm:$0xf]
      %v8938 = vld [vmem:[%s4 + $0x178] sm:$0xf]
      %v8939 = vld [vmem:[%s4 + $0x17c] sm:$0xf]
      %v8940 = vld [vmem:[%s4 + $0x180] sm:$0xf]
      %v8941 = vld [vmem:[%s4 + $0x184] sm:$0xf]
      %v8942 = vld [vmem:[%s4 + $0x188] sm:$0xf]
      %v8943 = vld [vmem:[%s4 + $0x18c] sm:$0xf]
      %v8944 = vld [vmem:[%s4 + $0x190] sm:$0xf]
      %v8945 = vld [vmem:[%s4 + $0x194] sm:$0xf]
      %v8946 = vld [vmem:[%s4 + $0x198] sm:$0xf]
      %v8947 = vld [vmem:[%s4 + $0x19c] sm:$0xf]
      %v8948 = vld [vmem:[%s4 + $0x1a0] sm:$0xf]
      %v8949 = vld [vmem:[%s4 + $0x1a4] sm:$0xf]
      %v8950 = vld [vmem:[%s4 + $0x1a8] sm:$0xf]
      %v8951 = vld [vmem:[%s4 + $0x1ac] sm:$0xf]
      %v8952 = vld [vmem:[%s4 + $0x1b0] sm:$0xf]
      %v8953 = vld [vmem:[%s4 + $0x1b4] sm:$0xf]
      %v8954 = vld [vmem:[%s4 + $0x1b8] sm:$0xf]
      %v8955 = vld [vmem:[%s4 + $0x1bc] sm:$0xf]
      %v8956 = vld [vmem:[%s4 + $0x1c0] sm:$0xf]
      %v8957 = vld [vmem:[%s4 + $0x1c4] sm:$0xf]
      %v8958 = vld [vmem:[%s4 + $0x1c8] sm:$0xf]
      %v8959 = vld [vmem:[%s4 + $0x1cc] sm:$0xf]
      %v8960 = vld [vmem:[%s4 + $0x1d0] sm:$0xf]
      %v8961 = vld [vmem:[%s4 + $0x1d4] sm:$0xf]
      %v8962 = vld [vmem:[%s4 + $0x1d8] sm:$0xf]
      %v8963 = vld [vmem:[%s4 + $0x1dc] sm:$0xf]
      %v8964 = vld [vmem:[%s4 + $0x1e0] sm:$0xf]
      %v8965 = vld [vmem:[%s4 + $0x1e4] sm:$0xf]
      %v8966 = vld [vmem:[%s4 + $0x1e8] sm:$0xf]
      %v8967 = vld [vmem:[%s4 + $0x1ec] sm:$0xf]
      %v8968 = vld [vmem:[%s4 + $0x1f0] sm:$0xf]
      %v8969 = vld [vmem:[%s4 + $0x1f4] sm:$0xf]
      %v8970 = vld [vmem:[%s4 + $0x1f8] sm:$0xf]
      %v8971 = vld [vmem:[%s4 + $0x1fc] sm:$0xf]
      %v8972 = vld [vmem:[%s4 + $0x200] sm:$0xf]
      %v8973 = vld [vmem:[%s4 + $0x204] sm:$0xf]
      %v8974 = vld [vmem:[%s4 + $0x208] sm:$0xf]
      %v8975 = vld [vmem:[%s4 + $0x20c] sm:$0xf]
      %v8976 = vld [vmem:[%s4 + $0x210] sm:$0xf]
      %v8977 = vld [vmem:[%s4 + $0x214] sm:$0xf]
      %v8978 = vld [vmem:[%s4 + $0x218] sm:$0xf]
      %v8979 = vld [vmem:[%s4 + $0x21c] sm:$0xf]
      %v8980 = vld [vmem:[%s4 + $0x220] sm:$0xf]
      %v8981 = vld [vmem:[%s4 + $0x224] sm:$0xf]
      %v8982 = vld [vmem:[%s4 + $0x228] sm:$0xf]
      %v8983 = vld [vmem:[%s4 + $0x22c] sm:$0xf]
      %v8984 = vld [vmem:[%s4 + $0x230] sm:$0xf]
      %v8985 = vld [vmem:[%s4 + $0x234] sm:$0xf]
      %v8986 = vld [vmem:[%s4 + $0x238] sm:$0xf]
      %v8987 = vld [vmem:[%s4 + $0x23c] sm:$0xf]
      %v9132 = vunpack.c.l.b16 %v8844
      %v9133 = vunpack.c.l.b16 %v8845
      %v9134 = vunpack.c.l.b16 %v8846
      %v9135 = vunpack.c.l.b16 %v8847
      %v9136 = vunpack.c.l.b16 %v8848
      %v9137 = vunpack.c.l.b16 %v8849
      %v9138 = vunpack.c.l.b16 %v8850
      %v9139 = vunpack.c.l.b16 %v8851
      %v9140 = vunpack.c.l.b16 %v8852
      %v9141 = vunpack.c.l.b16 %v8853
      %v9142 = vunpack.c.l.b16 %v8854
      %v9143 = vunpack.c.l.b16 %v8855
      %v9144 = vunpack.c.l.b16 %v8856
      %v9145 = vunpack.c.l.b16 %v8857
      %v9146 = vunpack.c.l.b16 %v8858
      %v9147 = vunpack.c.l.b16 %v8859
      %v9148 = vunpack.c.l.b16 %v8860
      %v9149 = vunpack.c.l.b16 %v8861
      %v9150 = vunpack.c.l.b16 %v8862
      %v9151 = vunpack.c.l.b16 %v8863
      %v9152 = vunpack.c.l.b16 %v8864
      %v9153 = vunpack.c.l.b16 %v8865
      %v9154 = vunpack.c.l.b16 %v8866
      %v9155 = vunpack.c.l.b16 %v8867
      %v9156 = vunpack.c.l.b16 %v8868
      %v9157 = vunpack.c.l.b16 %v8869
      %v9158 = vunpack.c.l.b16 %v8870
      %v9159 = vunpack.c.l.b16 %v8871
      %v9160 = vunpack.c.l.b16 %v8872
      %v9161 = vunpack.c.l.b16 %v8873
      %v9162 = vunpack.c.l.b16 %v8874
      %v9163 = vunpack.c.l.b16 %v8875
      %v9164 = vunpack.c.l.b16 %v8876
      %v9165 = vunpack.c.l.b16 %v8877
      %v9166 = vunpack.c.l.b16 %v8878
      %v9167 = vunpack.c.l.b16 %v8879
      %v9168 = vunpack.c.l.b16 %v8880
      %v9169 = vunpack.c.l.b16 %v8881
      %v9170 = vunpack.c.l.b16 %v8882
      %v9171 = vunpack.c.l.b16 %v8883
      %v9172 = vunpack.c.l.b16 %v8884
      %v9173 = vunpack.c.l.b16 %v8885
      %v9174 = vunpack.c.l.b16 %v8886
      %v9175 = vunpack.c.l.b16 %v8887
      %v9176 = vunpack.c.l.b16 %v8888
      %v9177 = vunpack.c.l.b16 %v8889
      %v9178 = vunpack.c.l.b16 %v8890
      %v9179 = vunpack.c.l.b16 %v8891
      %v9180 = vunpack.c.l.b16 %v8892
      %v9181 = vunpack.c.l.b16 %v8893
      %v9182 = vunpack.c.l.b16 %v8894
      %v9183 = vunpack.c.l.b16 %v8895
      %v9184 = vunpack.c.l.b16 %v8896
      %v9185 = vunpack.c.l.b16 %v8897
      %v9186 = vunpack.c.l.b16 %v8898
      %v9187 = vunpack.c.l.b16 %v8899
      %v9188 = vunpack.c.l.b16 %v8900
      %v9189 = vunpack.c.l.b16 %v8901
      %v9190 = vunpack.c.l.b16 %v8902
      %v9191 = vunpack.c.l.b16 %v8903
      %v9192 = vunpack.c.l.b16 %v8904
      %v9193 = vunpack.c.l.b16 %v8905
      %v9194 = vunpack.c.l.b16 %v8906
      %v9195 = vunpack.c.l.b16 %v8907
      %v9196 = vunpack.c.l.b16 %v8908
      %v9197 = vunpack.c.l.b16 %v8909
      %v9198 = vunpack.c.l.b16 %v8910
      %v9199 = vunpack.c.l.b16 %v8911
      %v9200 = vunpack.c.l.b16 %v8912
      %v9201 = vunpack.c.l.b16 %v8913
      %v9202 = vunpack.c.l.b16 %v8914
      %v9203 = vunpack.c.l.b16 %v8915
      %v9204 = vunpack.c.l.b16 %v8916
      %v9205 = vunpack.c.l.b16 %v8917
      %v9206 = vunpack.c.l.b16 %v8918
      %v9207 = vunpack.c.l.b16 %v8919
      %v9208 = vunpack.c.l.b16 %v8920
      %v9209 = vunpack.c.l.b16 %v8921
      %v9210 = vunpack.c.l.b16 %v8922
      %v9211 = vunpack.c.l.b16 %v8923
      %v9212 = vunpack.c.l.b16 %v8924
      %v9213 = vunpack.c.l.b16 %v8925
      %v9214 = vunpack.c.l.b16 %v8926
      %v9215 = vunpack.c.l.b16 %v8927
      %v9216 = vunpack.c.l.b16 %v8928
      %v9217 = vunpack.c.l.b16 %v8929
      %v9218 = vunpack.c.l.b16 %v8930
      %v9219 = vunpack.c.l.b16 %v8931
      %v9220 = vunpack.c.l.b16 %v8932
      %v9221 = vunpack.c.l.b16 %v8933
      %v9222 = vunpack.c.l.b16 %v8934
      %v9223 = vunpack.c.l.b16 %v8935
      %v9224 = vunpack.c.l.b16 %v8936
      %v9225 = vunpack.c.l.b16 %v8937
      %v9226 = vunpack.c.l.b16 %v8938
      %v9227 = vunpack.c.l.b16 %v8939
      %v9228 = vunpack.c.l.b16 %v8940
      %v9229 = vunpack.c.l.b16 %v8941
      %v9230 = vunpack.c.l.b16 %v8942
      %v9231 = vunpack.c.l.b16 %v8943
      %v9232 = vunpack.c.l.b16 %v8944
      %v9233 = vunpack.c.l.b16 %v8945
      %v9234 = vunpack.c.l.b16 %v8946
      %v9235 = vunpack.c.l.b16 %v8947
      %v9236 = vunpack.c.l.b16 %v8948
      %v9237 = vunpack.c.l.b16 %v8949
      %v9238 = vunpack.c.l.b16 %v8950
      %v9239 = vunpack.c.l.b16 %v8951
      %v9240 = vunpack.c.l.b16 %v8952
      %v9241 = vunpack.c.l.b16 %v8953
      %v9242 = vunpack.c.l.b16 %v8954
      %v9243 = vunpack.c.l.b16 %v8955
      %v9244 = vunpack.c.l.b16 %v8956
      %v9245 = vunpack.c.l.b16 %v8957
      %v9246 = vunpack.c.l.b16 %v8958
      %v9247 = vunpack.c.l.b16 %v8959
      %v9248 = vunpack.c.l.b16 %v8960
      %v9249 = vunpack.c.l.b16 %v8961
      %v9250 = vunpack.c.l.b16 %v8962
      %v9251 = vunpack.c.l.b16 %v8963
      %v9252 = vunpack.c.l.b16 %v8964
      %v9253 = vunpack.c.l.b16 %v8965
      %v9254 = vunpack.c.l.b16 %v8966
      %v9255 = vunpack.c.l.b16 %v8967
      %v9256 = vunpack.c.l.b16 %v8968
      %v9257 = vunpack.c.l.b16 %v8969
      %v9258 = vunpack.c.l.b16 %v8970
      %v9259 = vunpack.c.l.b16 %v8971
      %v9260 = vunpack.c.l.b16 %v8972
      %v9261 = vunpack.c.l.b16 %v8973
      %v9262 = vunpack.c.l.b16 %v8974
      %v9263 = vunpack.c.l.b16 %v8975
      %v9264 = vunpack.c.l.b16 %v8976
      %v9265 = vunpack.c.l.b16 %v8977
      %v9266 = vunpack.c.l.b16 %v8978
      %v9267 = vunpack.c.l.b16 %v8979
      %v9268 = vunpack.c.l.b16 %v8980
      %v9269 = vunpack.c.l.b16 %v8981
      %v9270 = vunpack.c.l.b16 %v8982
      %v9271 = vunpack.c.l.b16 %v8983
      %v9272 = vunpack.c.l.b16 %v8984
      %v9273 = vunpack.c.l.b16 %v8985
      %v9274 = vunpack.c.l.b16 %v8986
      %v9275 = vunpack.c.l.b16 %v8987
      %v9276 = vpack.c.b16 %v9133, %v9132
      %v9277 = vpack.c.b16 %v9135, %v9134
      %v9278 = vpack.c.b16 %v9137, %v9136
      %v9279 = vpack.c.b16 %v9139, %v9138
      %v9280 = vpack.c.b16 %v9141, %v9140
      %v9281 = vpack.c.b16 %v9143, %v9142
      %v9282 = vpack.c.b16 %v9145, %v9144
      %v9283 = vpack.c.b16 %v9147, %v9146
      %v9284 = vpack.c.b16 %v9149, %v9148
      %v9285 = vpack.c.b16 %v9151, %v9150
      %v9286 = vpack.c.b16 %v9153, %v9152
      %v9287 = vpack.c.b16 %v9155, %v9154
      %v9288 = vpack.c.b16 %v9157, %v9156
      %v9289 = vpack.c.b16 %v9159, %v9158
      %v9290 = vpack.c.b16 %v9161, %v9160
      %v9291 = vpack.c.b16 %v9163, %v9162
      %v9292 = vpack.c.b16 %v9165, %v9164
      %v9293 = vpack.c.b16 %v9167, %v9166
      %v9294 = vpack.c.b16 %v9169, %v9168
      %v9295 = vpack.c.b16 %v9171, %v9170
      %v9296 = vpack.c.b16 %v9173, %v9172
      %v9297 = vpack.c.b16 %v9175, %v9174
      %v9298 = vpack.c.b16 %v9177, %v9176
      %v9299 = vpack.c.b16 %v9179, %v9178
      %v9300 = vpack.c.b16 %v9181, %v9180
      %v9301 = vpack.c.b16 %v9183, %v9182
      %v9302 = vpack.c.b16 %v9185, %v9184
      %v9303 = vpack.c.b16 %v9187, %v9186
      %v9304 = vpack.c.b16 %v9189, %v9188
      %v9305 = vpack.c.b16 %v9191, %v9190
      %v9306 = vpack.c.b16 %v9193, %v9192
      %v9307 = vpack.c.b16 %v9195, %v9194
      %v9308 = vpack.c.b16 %v9197, %v9196
      %v9309 = vpack.c.b16 %v9199, %v9198
      %v9310 = vpack.c.b16 %v9201, %v9200
      %v9311 = vpack.c.b16 %v9203, %v9202
      %v9312 = vpack.c.b16 %v9205, %v9204
      %v9313 = vpack.c.b16 %v9207, %v9206
      %v9314 = vpack.c.b16 %v9209, %v9208
      %v9315 = vpack.c.b16 %v9211, %v9210
      %v9316 = vpack.c.b16 %v9213, %v9212
      %v9317 = vpack.c.b16 %v9215, %v9214
      %v9318 = vpack.c.b16 %v9217, %v9216
      %v9319 = vpack.c.b16 %v9219, %v9218
      %v9320 = vpack.c.b16 %v9221, %v9220
      %v9321 = vpack.c.b16 %v9223, %v9222
      %v9322 = vpack.c.b16 %v9225, %v9224
      %v9323 = vpack.c.b16 %v9227, %v9226
      %v9324 = vpack.c.b16 %v9229, %v9228
      %v9325 = vpack.c.b16 %v9231, %v9230
      %v9326 = vpack.c.b16 %v9233, %v9232
      %v9327 = vpack.c.b16 %v9235, %v9234
      %v9328 = vpack.c.b16 %v9237, %v9236
      %v9329 = vpack.c.b16 %v9239, %v9238
      %v9330 = vpack.c.b16 %v9241, %v9240
      %v9331 = vpack.c.b16 %v9243, %v9242
      %v9332 = vpack.c.b16 %v9245, %v9244
      %v9333 = vpack.c.b16 %v9247, %v9246
      %v9334 = vpack.c.b16 %v9249, %v9248
      %v9335 = vpack.c.b16 %v9251, %v9250
      %v9336 = vpack.c.b16 %v9253, %v9252
      %v9337 = vpack.c.b16 %v9255, %v9254
      %v9338 = vpack.c.b16 %v9257, %v9256
      %v9339 = vpack.c.b16 %v9259, %v9258
      %v9340 = vpack.c.b16 %v9261, %v9260
      %v9341 = vpack.c.b16 %v9263, %v9262
      %v9342 = vpack.c.b16 %v9265, %v9264
      %v9343 = vpack.c.b16 %v9267, %v9266
      %v9344 = vpack.c.b16 %v9269, %v9268
      %v9345 = vpack.c.b16 %v9271, %v9270
      %v9346 = vpack.c.b16 %v9273, %v9272
      %v9347 = vpack.c.b16 %v9275, %v9274
      %9420 = vmatprep.subr.bf16.mxu0 0
      %9421 = vmatpush1.bf16.msra.mxu0 %v9276
      %9422 = vmatprep.subr.bf16.mxu0 0
      %9423 = vmatpush1.bf16.msra.mxu0 %v9277
      %9424 = vmatprep.subr.bf16.mxu0 0
      %9425 = vmatpush1.bf16.msra.mxu0 %v9278
      %9426 = vmatprep.subr.bf16.mxu0 0
      %9427 = vmatpush1.bf16.msra.mxu0 %v9279
      %9428 = vmatprep.subr.bf16.mxu0 0
      %9429 = vmatpush1.bf16.msra.mxu0 %v9280
      %9430 = vmatprep.subr.bf16.mxu0 0
      %9431 = vmatpush1.bf16.msra.mxu0 %v9281
      %9432 = vmatprep.subr.bf16.mxu0 0
      %9433 = vmatpush1.bf16.msra.mxu0 %v9282
      %9434 = vmatprep.subr.bf16.mxu0 0
      %9435 = vmatpush1.bf16.msra.mxu0 %v9283
      %9436 = vmatprep.subr.bf16.mxu0 0
      %9437 = vmatpush1.bf16.msra.mxu0 %v9284
      %9438 = vmatprep.subr.bf16.mxu0 0
      %9439 = vmatpush1.bf16.msra.mxu0 %v9285
      %9440 = vmatprep.subr.bf16.mxu0 0
      %9441 = vmatpush1.bf16.msra.mxu0 %v9286
      %9442 = vmatprep.subr.bf16.mxu0 0
      %9443 = vmatpush1.bf16.msra.mxu0 %v9287
      %9444 = vmatprep.subr.bf16.mxu0 0
      %9445 = vmatpush1.bf16.msra.mxu0 %v9288
      %9446 = vmatprep.subr.bf16.mxu0 0
      %9447 = vmatpush1.bf16.msra.mxu0 %v9289
      %9448 = vmatprep.subr.bf16.mxu0 0
      %9449 = vmatpush1.bf16.msra.mxu0 %v9290
      %9450 = vmatprep.subr.bf16.mxu0 0
      %9451 = vmatpush1.bf16.msra.mxu0 %v9291
      %9452 = vmatprep.mubr.bf16.mxu0 %v8701
      %9453 = vmatmul.mubr.bf16.gmra.mrb[0].mxu0 %v8700
      %v9454 = vpop.f32.mrb[0].mxu0
      %v9455 = vadd.f32 0.0, %v9454
      %v9456 = vpop.f32.mrb[0].mxu0
      %v9457 = vpop.f32.mrb[0].mxu0
      %v9458 = vadd.f32 0.0, %v9457
      %v9459 = vpop.f32.mrb[0].mxu0
      %9460 = vmatprep.mubr.bf16.mxu0 %v8710
      %9461 = vmatmul.mubr.bf16.gmra.mrb[0].mxu0 %v8709
      %v9462 = vpop.f32.mrb[0].mxu0
      %v9463 = vadd.f32 0.0, %v9462
      %v9464 = vpop.f32.mrb[0].mxu0
      %v9465 = vpop.f32.mrb[0].mxu0
      %v9466 = vadd.f32 0.0, %v9465
      %v9467 = vpop.f32.mrb[0].mxu0
      %9468 = vmatprep.mubr.bf16.mxu0 %v8719
      %9469 = vmatmul.mubr.bf16.gmra.mrb[0].mxu0 %v8718
      %v9470 = vpop.f32.mrb[0].mxu0
      %v9471 = vadd.f32 0.0, %v9470
      %v9472 = vpop.f32.mrb[0].mxu0
      %v9473 = vpop.f32.mrb[0].mxu0
      %v9474 = vadd.f32 0.0, %v9473
      %v9475 = vpop.f32.mrb[0].mxu0
      %9476 = vmatprep.mubr.bf16.mxu0 %v8728
      %9477 = vmatmul.mubr.bf16.gmra.mrb[0].mxu0 %v8727
      %v9478 = vpop.f32.mrb[0].mxu0
      %v9479 = vadd.f32 0.0, %v9478
      %v9480 = vpop.f32.mrb[0].mxu0
      %v9481 = vpop.f32.mrb[0].mxu0
      %v9482 = vadd.f32 0.0, %v9481
      %v9483 = vpop.f32.mrb[0].mxu0
      %9484 = vmatprep.mubr.bf16.mxu0 %v8737
      %9485 = vmatmul.mubr.bf16.gmra.mrb[0].mxu0 %v8736
      %v9486 = vpop.f32.mrb[0].mxu0
      %v9487 = vadd.f32 0.0, %v9486
      %v9488 = vpop.f32.mrb[0].mxu0
      %v9489 = vpop.f32.mrb[0].mxu0
      %v9490 = vadd.f32 0.0, %v9489
      %v9491 = vpop.f32.mrb[0].mxu0
      %9492 = vmatprep.mubr.bf16.mxu0 %v8746
      %9493 = vmatmul.mubr.bf16.gmra.mrb[0].mxu0 %v8745
      %v9494 = vpop.f32.mrb[0].mxu0
      %v9495 = vadd.f32 0.0, %v9494
      %v9496 = vpop.f32.mrb[0].mxu0
      %v9497 = vpop.f32.mrb[0].mxu0
      %v9498 = vadd.f32 0.0, %v9497
      %v9499 = vpop.f32.mrb[0].mxu0
      %9500 = vmatprep.mubr.bf16.mxu0 %v8755
      %9501 = vmatmul.mubr.bf16.gmra.mrb[0].mxu0 %v8754
      %v9502 = vpop.f32.mrb[0].mxu0
      %v9503 = vadd.f32 0.0, %v9502
      %v9504 = vpop.f32.mrb[0].mxu0
      %v9505 = vpop.f32.mrb[0].mxu0
      %v9506 = vadd.f32 0.0, %v9505
      %v9507 = vpop.f32.mrb[0].mxu0
      %9508 = vmatprep.mubr.bf16.mxu0 %v8764
      %9509 = vmatmul.mubr.bf16.gmra.mrb[0].mxu0 %v8763
      %v9510 = vpop.f32.mrb[0].mxu0
      %v9511 = vadd.f32 0.0, %v9510
      %v9512 = vpop.f32.mrb[0].mxu0
      %v9513 = vpop.f32.mrb[0].mxu0
      %v9514 = vadd.f32 0.0, %v9513
      %v9515 = vpop.f32.mrb[0].mxu0
      %9516 = vmatprep.mubr.bf16.mxu0 %v8773
      %9517 = vmatmul.mubr.bf16.gmra.mrb[0].mxu0 %v8772
      %v9518 = vpop.f32.mrb[0].mxu0
      %v9519 = vadd.f32 0.0, %v9518
      %v9520 = vpop.f32.mrb[0].mxu0
      %v9521 = vpop.f32.mrb[0].mxu0
      %v9522 = vadd.f32 0.0, %v9521
      %v9523 = vpop.f32.mrb[0].mxu0
      %9524 = vmatprep.mubr.bf16.mxu0 %v8782
      %9525 = vmatmul.mubr.bf16.gmra.mrb[0].mxu0 %v8781
      %v9526 = vpop.f32.mrb[0].mxu0
      %v9527 = vadd.f32 0.0, %v9526
      %v9528 = vpop.f32.mrb[0].mxu0
      %v9529 = vpop.f32.mrb[0].mxu0
      %v9530 = vadd.f32 0.0, %v9529
      %v9531 = vpop.f32.mrb[0].mxu0
      %9532 = vmatprep.mubr.bf16.mxu0 %v8791
      %9533 = vmatmul.mubr.bf16.gmra.mrb[0].mxu0 %v8790
      %v9534 = vpop.f32.mrb[0].mxu0
      %v9535 = vadd.f32 0.0, %v9534
      %v9536 = vpop.f32.mrb[0].mxu0
      %v9537 = vpop.f32.mrb[0].mxu0
      %v9538 = vadd.f32 0.0, %v9537
      %v9539 = vpop.f32.mrb[0].mxu0
      %9540 = vmatprep.mubr.bf16.mxu0 %v8800
      %9541 = vmatmul.mubr.bf16.gmra.mrb[0].mxu0 %v8799
      %v9542 = vpop.f32.mrb[0].mxu0
      %v9543 = vadd.f32 0.0, %v9542
      %v9544 = vpop.f32.mrb[0].mxu0
      %v9545 = vpop.f32.mrb[0].mxu0
      %v9546 = vadd.f32 0.0, %v9545
      %v9547 = vpop.f32.mrb[0].mxu0
      %9548 = vmatprep.mubr.bf16.mxu0 %v8809
      %9549 = vmatmul.mubr.bf16.gmra.mrb[0].mxu0 %v8808
      %v9550 = vpop.f32.mrb[0].mxu0
      %v9551 = vadd.f32 0.0, %v9550
      %v9552 = vpop.f32.mrb[0].mxu0
      %v9553 = vpop.f32.mrb[0].mxu0
      %v9554 = vadd.f32 0.0, %v9553
      %v9555 = vpop.f32.mrb[0].mxu0
      %9556 = vmatprep.mubr.bf16.mxu0 %v8818
      %9557 = vmatmul.mubr.bf16.gmra.mrb[0].mxu0 %v8817
      %v9558 = vpop.f32.mrb[0].mxu0
      %v9559 = vadd.f32 0.0, %v9558
      %v9560 = vpop.f32.mrb[0].mxu0
      %v9561 = vpop.f32.mrb[0].mxu0
      %v9562 = vadd.f32 0.0, %v9561
      %v9563 = vpop.f32.mrb[0].mxu0
      %9564 = vmatprep.mubr.bf16.mxu0 %v8827
      %9565 = vmatmul.mubr.bf16.gmra.mrb[0].mxu0 %v8826
      %v9566 = vpop.f32.mrb[0].mxu0
      %v9567 = vadd.f32 0.0, %v9566
      %v9568 = vpop.f32.mrb[0].mxu0
      %v9569 = vpop.f32.mrb[0].mxu0
      %v9570 = vadd.f32 0.0, %v9569
      %v9571 = vpop.f32.mrb[0].mxu0
      %9572 = vmatprep.mubr.bf16.mxu0 %v8836
      %9573 = vmatmul.mubr.bf16.gmra.mrb[0].mxu0 %v8835
      %v9574 = vpop.f32.mrb[0].mxu0
      %v9575 = vadd.f32 0.0, %v9574
      %v9576 = vpop.f32.mrb[0].mxu0
      %v9577 = vpop.f32.mrb[0].mxu0
      %v9578 = vadd.f32 0.0, %v9577
      %v9579 = vpop.f32.mrb[0].mxu0
      %9580 = vdwg.mxu0
      %9581 = vmatprep.subr.bf16.mxu0 0
      %9582 = vmatpush1.bf16.msra.mxu0 %v9292
      %9583 = vmatprep.subr.bf16.mxu0 0
      %9584 = vmatpush1.bf16.msra.mxu0 %v9293
      %9585 = vmatprep.subr.bf16.mxu0 0
      %9586 = vmatpush1.bf16.msra.mxu0 %v9294
      %9587 = vmatprep.subr.bf16.mxu0 0
      %9588 = vmatpush1.bf16.msra.mxu0 %v9295
      %9589 = vmatprep.subr.bf16.mxu0 0
      %9590 = vmatpush1.bf16.msra.mxu0 %v9296
      %9591 = vmatprep.subr.bf16.mxu0 0
      %9592 = vmatpush1.bf16.msra.mxu0 %v9297
      %9593 = vmatprep.subr.bf16.mxu0 0
      %9594 = vmatpush1.bf16.msra.mxu0 %v9298
      %9595 = vmatprep.subr.bf16.mxu0 0
      %9596 = vmatpush1.bf16.msra.mxu0 %v9299
      %9597 = vmatprep.subr.bf16.mxu0 0
      %9598 = vmatpush1.bf16.msra.mxu0 %v9300
      %9599 = vmatprep.subr.bf16.mxu0 0
      %9600 = vmatpush1.bf16.msra.mxu0 %v9301
      %9601 = vmatprep.subr.bf16.mxu0 0
      %9602 = vmatpush1.bf16.msra.mxu0 %v9302
      %9603 = vmatprep.subr.bf16.mxu0 0
      %9604 = vmatpush1.bf16.msra.mxu0 %v9303
      %9605 = vmatprep.subr.bf16.mxu0 0
      %9606 = vmatpush1.bf16.msra.mxu0 %v9304
      %9607 = vmatprep.subr.bf16.mxu0 0
      %9608 = vmatpush1.bf16.msra.mxu0 %v9305
      %9609 = vmatprep.subr.bf16.mxu0 0
      %9610 = vmatpush1.bf16.msra.mxu0 %v9306
      %9611 = vmatprep.subr.bf16.mxu0 0
      %9612 = vmatpush1.bf16.msra.mxu0 %v9307
      %9613 = vmatprep.mubr.bf16.mxu0 %v8703
      %9614 = vmatmul.mubr.bf16.gmra.mrb[0].mxu0 %v8702
      %v9615 = vpop.f32.mrb[0].mxu0
      %v9616 = vadd.f32 %v9455, %v9615
      %v9617 = vpop.f32.mrb[0].mxu0
      %v9618 = vpop.f32.mrb[0].mxu0
      %v9619 = vadd.f32 %v9458, %v9618
      %v9620 = vpop.f32.mrb[0].mxu0
      %9621 = vmatprep.mubr.bf16.mxu0 %v8712
      %9622 = vmatmul.mubr.bf16.gmra.mrb[0].mxu0 %v8711
      %v9623 = vpop.f32.mrb[0].mxu0
      %v9624 = vadd.f32 %v9463, %v9623
      %v9625 = vpop.f32.mrb[0].mxu0
      %v9626 = vpop.f32.mrb[0].mxu0
      %v9627 = vadd.f32 %v9466, %v9626
      %v9628 = vpop.f32.mrb[0].mxu0
      %9629 = vmatprep.mubr.bf16.mxu0 %v8721
      %9630 = vmatmul.mubr.bf16.gmra.mrb[0].mxu0 %v8720
      %v9631 = vpop.f32.mrb[0].mxu0
      %v9632 = vadd.f32 %v9471, %v9631
      %v9633 = vpop.f32.mrb[0].mxu0
      %v9634 = vpop.f32.mrb[0].mxu0
      %v9635 = vadd.f32 %v9474, %v9634
      %v9636 = vpop.f32.mrb[0].mxu0
      %9637 = vmatprep.mubr.bf16.mxu0 %v8730
      %9638 = vmatmul.mubr.bf16.gmra.mrb[0].mxu0 %v8729
      %v9639 = vpop.f32.mrb[0].mxu0
      %v9640 = vadd.f32 %v9479, %v9639
      %v9641 = vpop.f32.mrb[0].mxu0
      %v9642 = vpop.f32.mrb[0].mxu0
      %v9643 = vadd.f32 %v9482, %v9642
      %v9644 = vpop.f32.mrb[0].mxu0
      %9645 = vmatprep.mubr.bf16.mxu0 %v8739
      %9646 = vmatmul.mubr.bf16.gmra.mrb[0].mxu0 %v8738
      %v9647 = vpop.f32.mrb[0].mxu0
      %v9648 = vadd.f32 %v9487, %v9647
      %v9649 = vpop.f32.mrb[0].mxu0
      %v9650 = vpop.f32.mrb[0].mxu0
      %v9651 = vadd.f32 %v9490, %v9650
      %v9652 = vpop.f32.mrb[0].mxu0
      %9653 = vmatprep.mubr.bf16.mxu0 %v8748
      %9654 = vmatmul.mubr.bf16.gmra.mrb[0].mxu0 %v8747
      %v9655 = vpop.f32.mrb[0].mxu0
      %v9656 = vadd.f32 %v9495, %v9655
      %v9657 = vpop.f32.mrb[0].mxu0
      %v9658 = vpop.f32.mrb[0].mxu0
      %v9659 = vadd.f32 %v9498, %v9658
      %v9660 = vpop.f32.mrb[0].mxu0
      %9661 = vmatprep.mubr.bf16.mxu0 %v8757
      %9662 = vmatmul.mubr.bf16.gmra.mrb[0].mxu0 %v8756
      %v9663 = vpop.f32.mrb[0].mxu0
      %v9664 = vadd.f32 %v9503, %v9663
      %v9665 = vpop.f32.mrb[0].mxu0
      %v9666 = vpop.f32.mrb[0].mxu0
      %v9667 = vadd.f32 %v9506, %v9666
      %v9668 = vpop.f32.mrb[0].mxu0
      %9669 = vmatprep.mubr.bf16.mxu0 %v8766
      %9670 = vmatmul.mubr.bf16.gmra.mrb[0].mxu0 %v8765
      %v9671 = vpop.f32.mrb[0].mxu0
      %v9672 = vadd.f32 %v9511, %v9671
      %v9673 = vpop.f32.mrb[0].mxu0
      %v9674 = vpop.f32.mrb[0].mxu0
      %v9675 = vadd.f32 %v9514, %v9674
      %v9676 = vpop.f32.mrb[0].mxu0
      %9677 = vmatprep.mubr.bf16.mxu0 %v8775
      %9678 = vmatmul.mubr.bf16.gmra.mrb[0].mxu0 %v8774
      %v9679 = vpop.f32.mrb[0].mxu0
      %v9680 = vadd.f32 %v9519, %v9679
      %v9681 = vpop.f32.mrb[0].mxu0
      %v9682 = vpop.f32.mrb[0].mxu0
      %v9683 = vadd.f32 %v9522, %v9682
      %v9684 = vpop.f32.mrb[0].mxu0
      %9685 = vmatprep.mubr.bf16.mxu0 %v8784
      %9686 = vmatmul.mubr.bf16.gmra.mrb[0].mxu0 %v8783
      %v9687 = vpop.f32.mrb[0].mxu0
      %v9688 = vadd.f32 %v9527, %v9687
      %v9689 = vpop.f32.mrb[0].mxu0
      %v9690 = vpop.f32.mrb[0].mxu0
      %v9691 = vadd.f32 %v9530, %v9690
      %v9692 = vpop.f32.mrb[0].mxu0
      %9693 = vmatprep.mubr.bf16.mxu0 %v8793
      %9694 = vmatmul.mubr.bf16.gmra.mrb[0].mxu0 %v8792
      %v9695 = vpop.f32.mrb[0].mxu0
      %v9696 = vadd.f32 %v9535, %v9695
      %v9697 = vpop.f32.mrb[0].mxu0
      %v9698 = vpop.f32.mrb[0].mxu0
      %v9699 = vadd.f32 %v9538, %v9698
      %v9700 = vpop.f32.mrb[0].mxu0
      %9701 = vmatprep.mubr.bf16.mxu0 %v8802
      %9702 = vmatmul.mubr.bf16.gmra.mrb[0].mxu0 %v8801
      %v9703 = vpop.f32.mrb[0].mxu0
      %v9704 = vadd.f32 %v9543, %v9703
      %v9705 = vpop.f32.mrb[0].mxu0
      %v9706 = vpop.f32.mrb[0].mxu0
      %v9707 = vadd.f32 %v9546, %v9706
      %v9708 = vpop.f32.mrb[0].mxu0
      %9709 = vmatprep.mubr.bf16.mxu0 %v8811
      %9710 = vmatmul.mubr.bf16.gmra.mrb[0].mxu0 %v8810
      %v9711 = vpop.f32.mrb[0].mxu0
      %v9712 = vadd.f32 %v9551, %v9711
      %v9713 = vpop.f32.mrb[0].mxu0
      %v9714 = vpop.f32.mrb[0].mxu0
      %v9715 = vadd.f32 %v9554, %v9714
      %v9716 = vpop.f32.mrb[0].mxu0
      %9717 = vmatprep.mubr.bf16.mxu0 %v8820
      %9718 = vmatmul.mubr.bf16.gmra.mrb[0].mxu0 %v8819
      %v9719 = vpop.f32.mrb[0].mxu0
      %v9720 = vadd.f32 %v9559, %v9719
      %v9721 = vpop.f32.mrb[0].mxu0
      %v9722 = vpop.f32.mrb[0].mxu0
      %v9723 = vadd.f32 %v9562, %v9722
      %v9724 = vpop.f32.mrb[0].mxu0
      %9725 = vmatprep.mubr.bf16.mxu0 %v8829
      %9726 = vmatmul.mubr.bf16.gmra.mrb[0].mxu0 %v8828
      %v9727 = vpop.f32.mrb[0].mxu0
      %v9728 = vadd.f32 %v9567, %v9727
      %v9729 = vpop.f32.mrb[0].mxu0
      %v9730 = vpop.f32.mrb[0].mxu0
      %v9731 = vadd.f32 %v9570, %v9730
      %v9732 = vpop.f32.mrb[0].mxu0
      %9733 = vmatprep.mubr.bf16.mxu0 %v8838
      %9734 = vmatmul.mubr.bf16.gmra.mrb[0].mxu0 %v8837
      %v9735 = vpop.f32.mrb[0].mxu0
      %v9736 = vadd.f32 %v9575, %v9735
      %v9737 = vpop.f32.mrb[0].mxu0
      %v9738 = vpop.f32.mrb[0].mxu0
      %v9739 = vadd.f32 %v9578, %v9738
      %v9740 = vpop.f32.mrb[0].mxu0
      %9741 = vdwg.mxu0
      %9742 = vmatprep.subr.bf16.mxu0 0
      %9743 = vmatpush1.bf16.msra.mxu0 %v9308
      %9744 = vmatprep.subr.bf16.mxu0 0
      %9745 = vmatpush1.bf16.msra.mxu0 %v9309
      %9746 = vmatprep.subr.bf16.mxu0 0
      %9747 = vmatpush1.bf16.msra.mxu0 %v9310
      %9748 = vmatprep.subr.bf16.mxu0 0
      %9749 = vmatpush1.bf16.msra.mxu0 %v9311
      %9750 = vmatprep.subr.bf16.mxu0 0
      %9751 = vmatpush1.bf16.msra.mxu0 %v9312
      %9752 = vmatprep.subr.bf16.mxu0 0
      %9753 = vmatpush1.bf16.msra.mxu0 %v9313
      %9754 = vmatprep.subr.bf16.mxu0 0
      %9755 = vmatpush1.bf16.msra.mxu0 %v9314
      %9756 = vmatprep.subr.bf16.mxu0 0
      %9757 = vmatpush1.bf16.msra.mxu0 %v9315
      %9758 = vmatprep.subr.bf16.mxu0 0
      %9759 = vmatpush1.bf16.msra.mxu0 %v9316
      %9760 = vmatprep.subr.bf16.mxu0 0
      %9761 = vmatpush1.bf16.msra.mxu0 %v9317
      %9762 = vmatprep.subr.bf16.mxu0 0
      %9763 = vmatpush1.bf16.msra.mxu0 %v9318
      %9764 = vmatprep.subr.bf16.mxu0 0
      %9765 = vmatpush1.bf16.msra.mxu0 %v9319
      %9766 = vmatprep.subr.bf16.mxu0 0
      %9767 = vmatpush1.bf16.msra.mxu0 %v9320
      %9768 = vmatprep.subr.bf16.mxu0 0
      %9769 = vmatpush1.bf16.msra.mxu0 %v9321
      %9770 = vmatprep.subr.bf16.mxu0 0
      %9771 = vmatpush1.bf16.msra.mxu0 %v9322
      %9772 = vmatprep.subr.bf16.mxu0 0
      %9773 = vmatpush1.bf16.msra.mxu0 %v9323
      %9774 = vmatprep.mubr.bf16.mxu0 %v8705
      %9775 = vmatmul.mubr.bf16.gmra.mrb[0].mxu0 %v8704
      %v9776 = vpop.f32.mrb[0].mxu0
      %v9777 = vadd.f32 %v9616, %v9776
      %v9778 = vpop.f32.mrb[0].mxu0
      %v9779 = vpop.f32.mrb[0].mxu0
      %v9780 = vadd.f32 %v9619, %v9779
      %v9781 = vpop.f32.mrb[0].mxu0
      %9782 = vmatprep.mubr.bf16.mxu0 %v8714
      %9783 = vmatmul.mubr.bf16.gmra.mrb[0].mxu0 %v8713
      %v9784 = vpop.f32.mrb[0].mxu0
      %v9785 = vadd.f32 %v9624, %v9784
      %v9786 = vpop.f32.mrb[0].mxu0
      %v9787 = vpop.f32.mrb[0].mxu0
      %v9788 = vadd.f32 %v9627, %v9787
      %v9789 = vpop.f32.mrb[0].mxu0
      %9790 = vmatprep.mubr.bf16.mxu0 %v8723
      %9791 = vmatmul.mubr.bf16.gmra.mrb[0].mxu0 %v8722
      %v9792 = vpop.f32.mrb[0].mxu0
      %v9793 = vadd.f32 %v9632, %v9792
      %v9794 = vpop.f32.mrb[0].mxu0
      %v9795 = vpop.f32.mrb[0].mxu0
      %v9796 = vadd.f32 %v9635, %v9795
      %v9797 = vpop.f32.mrb[0].mxu0
      %9798 = vmatprep.mubr.bf16.mxu0 %v8732
      %9799 = vmatmul.mubr.bf16.gmra.mrb[0].mxu0 %v8731
      %v9800 = vpop.f32.mrb[0].mxu0
      %v9801 = vadd.f32 %v9640, %v9800
      %v9802 = vpop.f32.mrb[0].mxu0
      %v9803 = vpop.f32.mrb[0].mxu0
      %v9804 = vadd.f32 %v9643, %v9803
      %v9805 = vpop.f32.mrb[0].mxu0
      %9806 = vmatprep.mubr.bf16.mxu0 %v8741
      %9807 = vmatmul.mubr.bf16.gmra.mrb[0].mxu0 %v8740
      %v9808 = vpop.f32.mrb[0].mxu0
      %v9809 = vadd.f32 %v9648, %v9808
      %v9810 = vpop.f32.mrb[0].mxu0
      %v9811 = vpop.f32.mrb[0].mxu0
      %v9812 = vadd.f32 %v9651, %v9811
      %v9813 = vpop.f32.mrb[0].mxu0
      %9814 = vmatprep.mubr.bf16.mxu0 %v8750
      %9815 = vmatmul.mubr.bf16.gmra.mrb[0].mxu0 %v8749
      %v9816 = vpop.f32.mrb[0].mxu0
      %v9817 = vadd.f32 %v9656, %v9816
      %v9818 = vpop.f32.mrb[0].mxu0
      %v9819 = vpop.f32.mrb[0].mxu0
      %v9820 = vadd.f32 %v9659, %v9819
      %v9821 = vpop.f32.mrb[0].mxu0
      %9822 = vmatprep.mubr.bf16.mxu0 %v8759
      %9823 = vmatmul.mubr.bf16.gmra.mrb[0].mxu0 %v8758
      %v9824 = vpop.f32.mrb[0].mxu0
      %v9825 = vadd.f32 %v9664, %v9824
      %v9826 = vpop.f32.mrb[0].mxu0
      %v9827 = vpop.f32.mrb[0].mxu0
      %v9828 = vadd.f32 %v9667, %v9827
      %v9829 = vpop.f32.mrb[0].mxu0
      %9830 = vmatprep.mubr.bf16.mxu0 %v8768
      %9831 = vmatmul.mubr.bf16.gmra.mrb[0].mxu0 %v8767
      %v9832 = vpop.f32.mrb[0].mxu0
      %v9833 = vadd.f32 %v9672, %v9832
      %v9834 = vpop.f32.mrb[0].mxu0
      %v9835 = vpop.f32.mrb[0].mxu0
      %v9836 = vadd.f32 %v9675, %v9835
      %v9837 = vpop.f32.mrb[0].mxu0
      %9838 = vmatprep.mubr.bf16.mxu0 %v8777
      %9839 = vmatmul.mubr.bf16.gmra.mrb[0].mxu0 %v8776
      %v9840 = vpop.f32.mrb[0].mxu0
      %v9841 = vadd.f32 %v9680, %v9840
      %v9842 = vpop.f32.mrb[0].mxu0
      %v9843 = vpop.f32.mrb[0].mxu0
      %v9844 = vadd.f32 %v9683, %v9843
      %v9845 = vpop.f32.mrb[0].mxu0
      %9846 = vmatprep.mubr.bf16.mxu0 %v8786
      %9847 = vmatmul.mubr.bf16.gmra.mrb[0].mxu0 %v8785
      %v9848 = vpop.f32.mrb[0].mxu0
      %v9849 = vadd.f32 %v9688, %v9848
      %v9850 = vpop.f32.mrb[0].mxu0
      %v9851 = vpop.f32.mrb[0].mxu0
      %v9852 = vadd.f32 %v9691, %v9851
      %v9853 = vpop.f32.mrb[0].mxu0
      %9854 = vmatprep.mubr.bf16.mxu0 %v8795
      %9855 = vmatmul.mubr.bf16.gmra.mrb[0].mxu0 %v8794
      %v9856 = vpop.f32.mrb[0].mxu0
      %v9857 = vadd.f32 %v9696, %v9856
      %v9858 = vpop.f32.mrb[0].mxu0
      %v9859 = vpop.f32.mrb[0].mxu0
      %v9860 = vadd.f32 %v9699, %v9859
      %v9861 = vpop.f32.mrb[0].mxu0
      %9862 = vmatprep.mubr.bf16.mxu0 %v8804
      %9863 = vmatmul.mubr.bf16.gmra.mrb[0].mxu0 %v8803
      %v9864 = vpop.f32.mrb[0].mxu0
      %v9865 = vadd.f32 %v9704, %v9864
      %v9866 = vpop.f32.mrb[0].mxu0
      %v9867 = vpop.f32.mrb[0].mxu0
      %v9868 = vadd.f32 %v9707, %v9867
      %v9869 = vpop.f32.mrb[0].mxu0
      %9870 = vmatprep.mubr.bf16.mxu0 %v8813
      %9871 = vmatmul.mubr.bf16.gmra.mrb[0].mxu0 %v8812
      %v9872 = vpop.f32.mrb[0].mxu0
      %v9873 = vadd.f32 %v9712, %v9872
      %v9874 = vpop.f32.mrb[0].mxu0
      %v9875 = vpop.f32.mrb[0].mxu0
      %v9876 = vadd.f32 %v9715, %v9875
      %v9877 = vpop.f32.mrb[0].mxu0
      %9878 = vmatprep.mubr.bf16.mxu0 %v8822
      %9879 = vmatmul.mubr.bf16.gmra.mrb[0].mxu0 %v8821
      %v9880 = vpop.f32.mrb[0].mxu0
      %v9881 = vadd.f32 %v9720, %v9880
      %v9882 = vpop.f32.mrb[0].mxu0
      %v9883 = vpop.f32.mrb[0].mxu0
      %v9884 = vadd.f32 %v9723, %v9883
      %v9885 = vpop.f32.mrb[0].mxu0
      %9886 = vmatprep.mubr.bf16.mxu0 %v8831
      %9887 = vmatmul.mubr.bf16.gmra.mrb[0].mxu0 %v8830
      %v9888 = vpop.f32.mrb[0].mxu0
      %v9889 = vadd.f32 %v9728, %v9888
      %v9890 = vpop.f32.mrb[0].mxu0
      %v9891 = vpop.f32.mrb[0].mxu0
      %v9892 = vadd.f32 %v9731, %v9891
      %v9893 = vpop.f32.mrb[0].mxu0
      %9894 = vmatprep.mubr.bf16.mxu0 %v8840
      %9895 = vmatmul.mubr.bf16.gmra.mrb[0].mxu0 %v8839
      %v9896 = vpop.f32.mrb[0].mxu0
      %v9897 = vadd.f32 %v9736, %v9896
      %v9898 = vpop.f32.mrb[0].mxu0
      %v9899 = vpop.f32.mrb[0].mxu0
      %v9900 = vadd.f32 %v9739, %v9899
      %v9901 = vpop.f32.mrb[0].mxu0
      %9902 = vdwg.mxu0
      %9903 = vmatprep.subr.bf16.mxu0 0
      %9904 = vmatpush1.bf16.msra.mxu0 %v9324
      %9905 = vmatprep.subr.bf16.mxu0 0
      %9906 = vmatpush1.bf16.msra.mxu0 %v9325
      %9907 = vmatprep.subr.bf16.mxu0 0
      %9908 = vmatpush1.bf16.msra.mxu0 %v9326
      %9909 = vmatprep.subr.bf16.mxu0 0
      %9910 = vmatpush1.bf16.msra.mxu0 %v9327
      %9911 = vmatprep.subr.bf16.mxu0 0
      %9912 = vmatpush1.bf16.msra.mxu0 %v9328
      %9913 = vmatprep.subr.bf16.mxu0 0
      %9914 = vmatpush1.bf16.msra.mxu0 %v9329
      %9915 = vmatprep.subr.bf16.mxu0 0
      %9916 = vmatpush1.bf16.msra.mxu0 %v9330
      %9917 = vmatprep.subr.bf16.mxu0 0
      %9918 = vmatpush1.bf16.msra.mxu0 %v9331
      %9919 = vmatprep.subr.bf16.mxu0 0
      %9920 = vmatpush1.bf16.msra.mxu0 %v9332
      %9921 = vmatprep.subr.bf16.mxu0 0
      %9922 = vmatpush1.bf16.msra.mxu0 %v9333
      %9923 = vmatprep.subr.bf16.mxu0 0
      %9924 = vmatpush1.bf16.msra.mxu0 %v9334
      %9925 = vmatprep.subr.bf16.mxu0 0
      %9926 = vmatpush1.bf16.msra.mxu0 %v9335
      %9927 = vmatprep.subr.bf16.mxu0 0
      %9928 = vmatpush1.bf16.msra.mxu0 %v9336
      %9929 = vmatprep.subr.bf16.mxu0 0
      %9930 = vmatpush1.bf16.msra.mxu0 %v9337
      %9931 = vmatprep.subr.bf16.mxu0 0
      %9932 = vmatpush1.bf16.msra.mxu0 %v9338
      %9933 = vmatprep.subr.bf16.mxu0 0
      %9934 = vmatpush1.bf16.msra.mxu0 %v9339
      %9935 = vmatprep.mubr.bf16.mxu0 %v8707
      %9936 = vmatmul.mubr.bf16.gmra.mrb[0].mxu0 %v8706
      %v9937 = vpop.f32.mrb[0].mxu0
      %v9938 = vadd.f32 %v9777, %v9937
      %v9939 = vpop.f32.mrb[0].mxu0
      %v9940 = vpop.f32.mrb[0].mxu0
      %v9941 = vadd.f32 %v9780, %v9940
      %v9942 = vpop.f32.mrb[0].mxu0
      %9943 = vmatprep.mubr.bf16.mxu0 %v8716
      %9944 = vmatmul.mubr.bf16.gmra.mrb[0].mxu0 %v8715
      %v9945 = vpop.f32.mrb[0].mxu0
      %v9946 = vadd.f32 %v9785, %v9945
      %v9947 = vpop.f32.mrb[0].mxu0
      %v9948 = vpop.f32.mrb[0].mxu0
      %v9949 = vadd.f32 %v9788, %v9948
      %v9950 = vpop.f32.mrb[0].mxu0
      %9951 = vmatprep.mubr.bf16.mxu0 %v8725
      %9952 = vmatmul.mubr.bf16.gmra.mrb[0].mxu0 %v8724
      %v9953 = vpop.f32.mrb[0].mxu0
      %v9954 = vadd.f32 %v9793, %v9953
      %v9955 = vpop.f32.mrb[0].mxu0
      %v9956 = vpop.f32.mrb[0].mxu0
      %v9957 = vadd.f32 %v9796, %v9956
      %v9958 = vpop.f32.mrb[0].mxu0
      %9959 = vmatprep.mubr.bf16.mxu0 %v8734
      %9960 = vmatmul.mubr.bf16.gmra.mrb[0].mxu0 %v8733
      %v9961 = vpop.f32.mrb[0].mxu0
      %v9962 = vadd.f32 %v9801, %v9961
      %v9963 = vpop.f32.mrb[0].mxu0
      %v9964 = vpop.f32.mrb[0].mxu0
      %v9965 = vadd.f32 %v9804, %v9964
      %v9966 = vpop.f32.mrb[0].mxu0
      %9967 = vmatprep.mubr.bf16.mxu0 %v8743
      %9968 = vmatmul.mubr.bf16.gmra.mrb[0].mxu0 %v8742
      %v9969 = vpop.f32.mrb[0].mxu0
      %v9970 = vadd.f32 %v9809, %v9969
      %v9971 = vpop.f32.mrb[0].mxu0
      %v9972 = vpop.f32.mrb[0].mxu0
      %v9973 = vadd.f32 %v9812, %v9972
      %v9974 = vpop.f32.mrb[0].mxu0
      %9975 = vmatprep.mubr.bf16.mxu0 %v8752
      %9976 = vmatmul.mubr.bf16.gmra.mrb[0].mxu0 %v8751
      %v9977 = vpop.f32.mrb[0].mxu0
      %v9978 = vadd.f32 %v9817, %v9977
      %v9979 = vpop.f32.mrb[0].mxu0
      %v9980 = vpop.f32.mrb[0].mxu0
      %v9981 = vadd.f32 %v9820, %v9980
      %v9982 = vpop.f32.mrb[0].mxu0
      %9983 = vmatprep.mubr.bf16.mxu0 %v8761
      %9984 = vmatmul.mubr.bf16.gmra.mrb[0].mxu0 %v8760
      %v9985 = vpop.f32.mrb[0].mxu0
      %v9986 = vadd.f32 %v9825, %v9985
      %v9987 = vpop.f32.mrb[0].mxu0
      %v9988 = vpop.f32.mrb[0].mxu0
      %v9989 = vadd.f32 %v9828, %v9988
      %v9990 = vpop.f32.mrb[0].mxu0
      %9991 = vmatprep.mubr.bf16.mxu0 %v8770
      %9992 = vmatmul.mubr.bf16.gmra.mrb[0].mxu0 %v8769
      %v9993 = vpop.f32.mrb[0].mxu0
      %v9994 = vadd.f32 %v9833, %v9993
      %v9995 = vpop.f32.mrb[0].mxu0
      %v9996 = vpop.f32.mrb[0].mxu0
      %v9997 = vadd.f32 %v9836, %v9996
      %v9998 = vpop.f32.mrb[0].mxu0
      %9999 = vmatprep.mubr.bf16.mxu0 %v8779
      %10000 = vmatmul.mubr.bf16.gmra.mrb[0].mxu0 %v8778
      %v10001 = vpop.f32.mrb[0].mxu0
      %v10002 = vadd.f32 %v9841, %v10001
      %v10003 = vpop.f32.mrb[0].mxu0
      %v10004 = vpop.f32.mrb[0].mxu0
      %v10005 = vadd.f32 %v9844, %v10004
      %v10006 = vpop.f32.mrb[0].mxu0
      %10007 = vmatprep.mubr.bf16.mxu0 %v8788
      %10008 = vmatmul.mubr.bf16.gmra.mrb[0].mxu0 %v8787
      %v10009 = vpop.f32.mrb[0].mxu0
      %v10010 = vadd.f32 %v9849, %v10009
      %v10011 = vpop.f32.mrb[0].mxu0
      %v10012 = vpop.f32.mrb[0].mxu0
      %v10013 = vadd.f32 %v9852, %v10012
      %v10014 = vpop.f32.mrb[0].mxu0
      %10015 = vmatprep.mubr.bf16.mxu0 %v8797
      %10016 = vmatmul.mubr.bf16.gmra.mrb[0].mxu0 %v8796
      %v10017 = vpop.f32.mrb[0].mxu0
      %v10018 = vadd.f32 %v9857, %v10017
      %v10019 = vpop.f32.mrb[0].mxu0
      %v10020 = vpop.f32.mrb[0].mxu0
      %v10021 = vadd.f32 %v9860, %v10020
      %v10022 = vpop.f32.mrb[0].mxu0
      %10023 = vmatprep.mubr.bf16.mxu0 %v8806
      %10024 = vmatmul.mubr.bf16.gmra.mrb[0].mxu0 %v8805
      %v10025 = vpop.f32.mrb[0].mxu0
      %v10026 = vadd.f32 %v9865, %v10025
      %v10027 = vpop.f32.mrb[0].mxu0
      %v10028 = vpop.f32.mrb[0].mxu0
      %v10029 = vadd.f32 %v9868, %v10028
      %v10030 = vpop.f32.mrb[0].mxu0
      %10031 = vmatprep.mubr.bf16.mxu0 %v8815
      %10032 = vmatmul.mubr.bf16.gmra.mrb[0].mxu0 %v8814
      %v10033 = vpop.f32.mrb[0].mxu0
      %v10034 = vadd.f32 %v9873, %v10033
      %v10035 = vpop.f32.mrb[0].mxu0
      %v10036 = vpop.f32.mrb[0].mxu0
      %v10037 = vadd.f32 %v9876, %v10036
      %v10038 = vpop.f32.mrb[0].mxu0
      %10039 = vmatprep.mubr.bf16.mxu0 %v8824
      %10040 = vmatmul.mubr.bf16.gmra.mrb[0].mxu0 %v8823
      %v10041 = vpop.f32.mrb[0].mxu0
      %v10042 = vadd.f32 %v9881, %v10041
      %v10043 = vpop.f32.mrb[0].mxu0
      %v10044 = vpop.f32.mrb[0].mxu0
      %v10045 = vadd.f32 %v9884, %v10044
      %v10046 = vpop.f32.mrb[0].mxu0
      %10047 = vmatprep.mubr.bf16.mxu0 %v8833
      %10048 = vmatmul.mubr.bf16.gmra.mrb[0].mxu0 %v8832
      %v10049 = vpop.f32.mrb[0].mxu0
      %v10050 = vadd.f32 %v9889, %v10049
      %v10051 = vpop.f32.mrb[0].mxu0
      %v10052 = vpop.f32.mrb[0].mxu0
      %v10053 = vadd.f32 %v9892, %v10052
      %v10054 = vpop.f32.mrb[0].mxu0
      %10055 = vmatprep.mubr.bf16.mxu0 %v8842
      %10056 = vmatmul.mubr.bf16.gmra.mrb[0].mxu0 %v8841
      %v10057 = vpop.f32.mrb[0].mxu0
      %v10058 = vadd.f32 %v9897, %v10057
      %v10059 = vpop.f32.mrb[0].mxu0
      %v10060 = vpop.f32.mrb[0].mxu0
      %v10061 = vadd.f32 %v9900, %v10060
      %v10062 = vpop.f32.mrb[0].mxu0
      %10063 = vdwg.mxu0
      %10064 = vmatprep.subr.bf16.mxu0 0
      %10065 = vmatpush1.bf16.msra.mxu0 %v9340
      %10066 = vmatprep.subr.bf16.mxu0 0
      %10067 = vmatpush1.bf16.msra.mxu0 %v9341
      %10068 = vmatprep.subr.bf16.mxu0 0
      %10069 = vmatpush1.bf16.msra.mxu0 %v9342
      %10070 = vmatprep.subr.bf16.mxu0 0
      %10071 = vmatpush1.bf16.msra.mxu0 %v9343
      %10072 = vmatprep.subr.bf16.mxu0 0
      %10073 = vmatpush1.bf16.msra.mxu0 %v9344
      %10074 = vmatprep.subr.bf16.mxu0 0
      %10075 = vmatpush1.bf16.msra.mxu0 %v9345
      %10076 = vmatprep.subr.bf16.mxu0 0
      %10077 = vmatpush1.bf16.msra.mxu0 %v9346
      %10078 = vmatprep.subr.bf16.mxu0 0
      %10079 = vmatpush1.bf16.msra.mxu0 %v9347
      %10080 = vmatprep.subr.bf16.mxu0 0
      %10081 = vmatpush1.bf16.msra.mxu0 0
      %10082 = vmatprep.subr.bf16.mxu0 0
      %10083 = vmatpush1.bf16.msra.mxu0 0
      %10084 = vmatprep.subr.bf16.mxu0 0
      %10085 = vmatpush1.bf16.msra.mxu0 0
      %10086 = vmatprep.subr.bf16.mxu0 0
      %10087 = vmatpush1.bf16.msra.mxu0 0
      %10088 = vmatprep.subr.bf16.mxu0 0
      %10089 = vmatpush1.bf16.msra.mxu0 0
      %10090 = vmatprep.subr.bf16.mxu0 0
      %10091 = vmatpush1.bf16.msra.mxu0 0
      %10092 = vmatprep.subr.bf16.mxu0 0
      %10093 = vmatpush1.bf16.msra.mxu0 0
      %10094 = vmatprep.subr.bf16.mxu0 0
      %10095 = vmatpush1.bf16.msra.mxu0 0
      %10096 = vmatprep.mubr.bf16.mxu0 0
      %10097 = vmatmul.mubr.bf16.gmra.mrb[0].mxu0 %v8708
      %v10098 = vpop.f32.mrb[0].mxu0
      %v10099 = vadd.f32 %v9938, %v10098
      %v10100 = vpop.f32.mrb[0].mxu0
      %v10101 = vpop.f32.mrb[0].mxu0
      %v10102 = vadd.f32 %v9941, %v10101
      %v10103 = vpop.f32.mrb[0].mxu0
      %10104 = vmatprep.mubr.bf16.mxu0 0
      %10105 = vmatmul.mubr.bf16.gmra.mrb[0].mxu0 %v8717
      %v10106 = vpop.f32.mrb[0].mxu0
      %v10107 = vadd.f32 %v9946, %v10106
      %v10108 = vpop.f32.mrb[0].mxu0
      %v10109 = vpop.f32.mrb[0].mxu0
      %v10110 = vadd.f32 %v9949, %v10109
      %v10111 = vpop.f32.mrb[0].mxu0
      %10112 = vmatprep.mubr.bf16.mxu0 0
      %10113 = vmatmul.mubr.bf16.gmra.mrb[0].mxu0 %v8726
      %v10114 = vpop.f32.mrb[0].mxu0
      %v10115 = vadd.f32 %v9954, %v10114
      %v10116 = vpop.f32.mrb[0].mxu0
      %v10117 = vpop.f32.mrb[0].mxu0
      %v10118 = vadd.f32 %v9957, %v10117
      %v10119 = vpop.f32.mrb[0].mxu0
      %10120 = vmatprep.mubr.bf16.mxu0 0
      %10121 = vmatmul.mubr.bf16.gmra.mrb[0].mxu0 %v8735
      %v10122 = vpop.f32.mrb[0].mxu0
      %v10123 = vadd.f32 %v9962, %v10122
      %v10124 = vpop.f32.mrb[0].mxu0
      %v10125 = vpop.f32.mrb[0].mxu0
      %v10126 = vadd.f32 %v9965, %v10125
      %v10127 = vpop.f32.mrb[0].mxu0
      %10128 = vmatprep.mubr.bf16.mxu0 0
      %10129 = vmatmul.mubr.bf16.gmra.mrb[0].mxu0 %v8744
      %v10130 = vpop.f32.mrb[0].mxu0
      %v10131 = vadd.f32 %v9970, %v10130
      %v10132 = vpop.f32.mrb[0].mxu0
      %v10133 = vpop.f32.mrb[0].mxu0
      %v10134 = vadd.f32 %v9973, %v10133
      %v10135 = vpop.f32.mrb[0].mxu0
      %10136 = vmatprep.mubr.bf16.mxu0 0
      %10137 = vmatmul.mubr.bf16.gmra.mrb[0].mxu0 %v8753
      %v10138 = vpop.f32.mrb[0].mxu0
      %v10139 = vadd.f32 %v9978, %v10138
      %v10140 = vpop.f32.mrb[0].mxu0
      %v10141 = vpop.f32.mrb[0].mxu0
      %v10142 = vadd.f32 %v9981, %v10141
      %v10143 = vpop.f32.mrb[0].mxu0
      %10144 = vmatprep.mubr.bf16.mxu0 0
      %10145 = vmatmul.mubr.bf16.gmra.mrb[0].mxu0 %v8762
      %v10146 = vpop.f32.mrb[0].mxu0
      %v10147 = vadd.f32 %v9986, %v10146
      %v10148 = vpop.f32.mrb[0].mxu0
      %v10149 = vpop.f32.mrb[0].mxu0
      %v10150 = vadd.f32 %v9989, %v10149
      %v10151 = vpop.f32.mrb[0].mxu0
      %10152 = vmatprep.mubr.bf16.mxu0 0
      %10153 = vmatmul.mubr.bf16.gmra.mrb[0].mxu0 %v8771
      %v10154 = vpop.f32.mrb[0].mxu0
      %v10155 = vadd.f32 %v9994, %v10154
      %v10156 = vpop.f32.mrb[0].mxu0
      %v10157 = vpop.f32.mrb[0].mxu0
      %v10158 = vadd.f32 %v9997, %v10157
      %v10159 = vpop.f32.mrb[0].mxu0
      %10160 = vmatprep.mubr.bf16.mxu0 0
      %10161 = vmatmul.mubr.bf16.gmra.mrb[0].mxu0 %v8780
      %v10162 = vpop.f32.mrb[0].mxu0
      %v10163 = vadd.f32 %v10002, %v10162
      %v10164 = vpop.f32.mrb[0].mxu0
      %v10165 = vpop.f32.mrb[0].mxu0
      %v10166 = vadd.f32 %v10005, %v10165
      %v10167 = vpop.f32.mrb[0].mxu0
      %10168 = vmatprep.mubr.bf16.mxu0 0
      %10169 = vmatmul.mubr.bf16.gmra.mrb[0].mxu0 %v8789
      %v10170 = vpop.f32.mrb[0].mxu0
      %v10171 = vadd.f32 %v10010, %v10170
      %v10172 = vpop.f32.mrb[0].mxu0
      %v10173 = vpop.f32.mrb[0].mxu0
      %v10174 = vadd.f32 %v10013, %v10173
      %v10175 = vpop.f32.mrb[0].mxu0
      %10176 = vmatprep.mubr.bf16.mxu0 0
      %10177 = vmatmul.mubr.bf16.gmra.mrb[0].mxu0 %v8798
      %v10178 = vpop.f32.mrb[0].mxu0
      %v10179 = vadd.f32 %v10018, %v10178
      %v10180 = vpop.f32.mrb[0].mxu0
      %v10181 = vpop.f32.mrb[0].mxu0
      %v10182 = vadd.f32 %v10021, %v10181
      %v10183 = vpop.f32.mrb[0].mxu0
      %10184 = vmatprep.mubr.bf16.mxu0 0
      %10185 = vmatmul.mubr.bf16.gmra.mrb[0].mxu0 %v8807
      %v10186 = vpop.f32.mrb[0].mxu0
      %v10187 = vadd.f32 %v10026, %v10186
      %v10188 = vpop.f32.mrb[0].mxu0
      %v10189 = vpop.f32.mrb[0].mxu0
      %v10190 = vadd.f32 %v10029, %v10189
      %v10191 = vpop.f32.mrb[0].mxu0
      %10192 = vmatprep.mubr.bf16.mxu0 0
      %10193 = vmatmul.mubr.bf16.gmra.mrb[0].mxu0 %v8816
      %v10194 = vpop.f32.mrb[0].mxu0
      %v10195 = vadd.f32 %v10034, %v10194
      %v10196 = vpop.f32.mrb[0].mxu0
      %v10197 = vpop.f32.mrb[0].mxu0
      %v10198 = vadd.f32 %v10037, %v10197
      %v10199 = vpop.f32.mrb[0].mxu0
      %10200 = vmatprep.mubr.bf16.mxu0 0
      %10201 = vmatmul.mubr.bf16.gmra.mrb[0].mxu0 %v8825
      %v10202 = vpop.f32.mrb[0].mxu0
      %v10203 = vadd.f32 %v10042, %v10202
      %v10204 = vpop.f32.mrb[0].mxu0
      %v10205 = vpop.f32.mrb[0].mxu0
      %v10206 = vadd.f32 %v10045, %v10205
      %v10207 = vpop.f32.mrb[0].mxu0
      %10208 = vmatprep.mubr.bf16.mxu0 0
      %10209 = vmatmul.mubr.bf16.gmra.mrb[0].mxu0 %v8834
      %v10210 = vpop.f32.mrb[0].mxu0
      %v10211 = vadd.f32 %v10050, %v10210
      %v10212 = vpop.f32.mrb[0].mxu0
      %v10213 = vpop.f32.mrb[0].mxu0
      %v10214 = vadd.f32 %v10053, %v10213
      %v10215 = vpop.f32.mrb[0].mxu0
      %10216 = vmatprep.mubr.bf16.mxu0 0
      %10217 = vmatmul.mubr.bf16.gmra.mrb[0].mxu0 %v8843
      %v10218 = vpop.f32.mrb[0].mxu0
      %v10219 = vadd.f32 %v10058, %v10218
      %v10220 = vpop.f32.mrb[0].mxu0
      %v10221 = vpop.f32.mrb[0].mxu0
      %v10222 = vadd.f32 %v10061, %v10221
      %v10223 = vpop.f32.mrb[0].mxu0
      %10224 = vdwg.mxu0
      %v10225 = vld [vmem:[%s5] sm:$0x1]
      %v10227 = vlaneseq
      %v10228 = vshrl.u32 %v10227, 7
      %v10229 = vsub.s32 0, %v10228
      %v10230 = vrot.slane %v10225, %v10229
      %v10232 = vmul.f32 %v10099, %v10230
      %v10233 = vmul.f32 %v10102, %v10230
      %v10234 = vmul.f32 %v10107, %v10230
      %v10235 = vmul.f32 %v10110, %v10230
      %v10236 = vmul.f32 %v10115, %v10230
      %v10237 = vmul.f32 %v10118, %v10230
      %v10238 = vmul.f32 %v10123, %v10230
      %v10239 = vmul.f32 %v10126, %v10230
      %v10240 = vmul.f32 %v10131, %v10230
      %v10241 = vmul.f32 %v10134, %v10230
      %v10242 = vmul.f32 %v10139, %v10230
      %v10243 = vmul.f32 %v10142, %v10230
      %v10244 = vmul.f32 %v10147, %v10230
      %v10245 = vmul.f32 %v10150, %v10230
      %v10246 = vmul.f32 %v10155, %v10230
      %v10247 = vmul.f32 %v10158, %v10230
      %v10248 = vmul.f32 %v10163, %v10230
      %v10249 = vmul.f32 %v10166, %v10230
      %v10250 = vmul.f32 %v10171, %v10230
      %v10251 = vmul.f32 %v10174, %v10230
      %v10252 = vmul.f32 %v10179, %v10230
      %v10253 = vmul.f32 %v10182, %v10230
      %v10254 = vmul.f32 %v10187, %v10230
      %v10255 = vmul.f32 %v10190, %v10230
      %v10256 = vmul.f32 %v10195, %v10230
      %v10257 = vmul.f32 %v10198, %v10230
      %v10258 = vmul.f32 %v10203, %v10230
      %v10259 = vmul.f32 %v10206, %v10230
      %v10260 = vmul.f32 %v10211, %v10230
      %v10261 = vmul.f32 %v10214, %v10230
      %v10262 = vmul.f32 %v10219, %v10230
      %v10263 = vmul.f32 %v10222, %v10230
      %v10264 = vld [vmem:[%s6] sm:$0x1]
      %v10266 = vlaneseq
      %v10267 = vshrl.u32 %v10266, 7
      %v10268 = vsub.s32 0, %v10267
      %v10269 = vrot.slane %v10264, %v10268
      %v10271 = vadd.f32 %v10232, %v10269
      %v10272 = vadd.f32 %v10233, %v10269
      %v10273 = vadd.f32 %v10234, %v10269
      %v10274 = vadd.f32 %v10235, %v10269
      %v10275 = vadd.f32 %v10236, %v10269
      %v10276 = vadd.f32 %v10237, %v10269
      %v10277 = vadd.f32 %v10238, %v10269
      %v10278 = vadd.f32 %v10239, %v10269
      %v10279 = vadd.f32 %v10240, %v10269
      %v10280 = vadd.f32 %v10241, %v10269
      %v10281 = vadd.f32 %v10242, %v10269
      %v10282 = vadd.f32 %v10243, %v10269
      %v10283 = vadd.f32 %v10244, %v10269
      %v10284 = vadd.f32 %v10245, %v10269
      %v10285 = vadd.f32 %v10246, %v10269
      %v10286 = vadd.f32 %v10247, %v10269
      %v10287 = vadd.f32 %v10248, %v10269
      %v10288 = vadd.f32 %v10249, %v10269
      %v10289 = vadd.f32 %v10250, %v10269
      %v10290 = vadd.f32 %v10251, %v10269
      %v10291 = vadd.f32 %v10252, %v10269
      %v10292 = vadd.f32 %v10253, %v10269
      %v10293 = vadd.f32 %v10254, %v10269
      %v10294 = vadd.f32 %v10255, %v10269
      %v10295 = vadd.f32 %v10256, %v10269
      %v10296 = vadd.f32 %v10257, %v10269
      %v10297 = vadd.f32 %v10258, %v10269
      %v10298 = vadd.f32 %v10259, %v10269
      %v10299 = vadd.f32 %v10260, %v10269
      %v10300 = vadd.f32 %v10261, %v10269
      %v10301 = vadd.f32 %v10262, %v10269
      %v10302 = vadd.f32 %v10263, %v10269
      %v10303 = vmax.f32 %v10271, 0.0
      %v10304 = vmax.f32 %v10272, 0.0
      %v10305 = vmax.f32 %v10273, 0.0
      %v10306 = vmax.f32 %v10274, 0.0
      %v10307 = vmax.f32 %v10275, 0.0
      %v10308 = vmax.f32 %v10276, 0.0
      %v10309 = vmax.f32 %v10277, 0.0
      %v10310 = vmax.f32 %v10278, 0.0
      %v10311 = vmax.f32 %v10279, 0.0
      %v10312 = vmax.f32 %v10280, 0.0
      %v10313 = vmax.f32 %v10281, 0.0
      %v10314 = vmax.f32 %v10282, 0.0
      %v10315 = vmax.f32 %v10283, 0.0
      %v10316 = vmax.f32 %v10284, 0.0
      %v10317 = vmax.f32 %v10285, 0.0
      %v10318 = vmax.f32 %v10286, 0.0
      %v10319 = vmax.f32 %v10287, 0.0
      %v10320 = vmax.f32 %v10288, 0.0
      %v10321 = vmax.f32 %v10289, 0.0
      %v10322 = vmax.f32 %v10290, 0.0
      %v10323 = vmax.f32 %v10291, 0.0
      %v10324 = vmax.f32 %v10292, 0.0
      %v10325 = vmax.f32 %v10293, 0.0
      %v10326 = vmax.f32 %v10294, 0.0
      %v10327 = vmax.f32 %v10295, 0.0
      %v10328 = vmax.f32 %v10296, 0.0
      %v10329 = vmax.f32 %v10297, 0.0
      %v10330 = vmax.f32 %v10298, 0.0
      %v10331 = vmax.f32 %v10299, 0.0
      %v10332 = vmax.f32 %v10300, 0.0
      %v10333 = vmax.f32 %v10301, 0.0
      %v10334 = vmax.f32 %v10302, 0.0
      %vm10335 = vcmask 64512
      %10336 = vst.msk [vmem:[%s278] sm:$0xff] %vm10335, %v10303
      %10337 = vst.msk [vmem:[%s278 + $0x8] sm:$0xff] %vm10335, %v10304
      %10338 = vst.msk [vmem:[%s278 + $0x10] sm:$0xff] %vm10335, %v10305
      %10339 = vst.msk [vmem:[%s278 + $0x18] sm:$0xff] %vm10335, %v10306
      %10340 = vst.msk [vmem:[%s278 + $0x20] sm:$0xff] %vm10335, %v10307
      %10341 = vst.msk [vmem:[%s278 + $0x28] sm:$0xff] %vm10335, %v10308
      %10342 = vst.msk [vmem:[%s278 + $0x30] sm:$0xff] %vm10335, %v10309
      %10343 = vst.msk [vmem:[%s278 + $0x38] sm:$0xff] %vm10335, %v10310
      %10344 = vst.msk [vmem:[%s278 + $0x40] sm:$0xff] %vm10335, %v10311
      %10345 = vst.msk [vmem:[%s278 + $0x48] sm:$0xff] %vm10335, %v10312
      %10346 = vst.msk [vmem:[%s278 + $0x50] sm:$0xff] %vm10335, %v10313
      %10347 = vst.msk [vmem:[%s278 + $0x58] sm:$0xff] %vm10335, %v10314
      %10348 = vst.msk [vmem:[%s278 + $0x60] sm:$0xff] %vm10335, %v10315
      %10349 = vst.msk [vmem:[%s278 + $0x68] sm:$0xff] %vm10335, %v10316
      %10350 = vst.msk [vmem:[%s278 + $0x70] sm:$0xff] %vm10335, %v10317
      %10351 = vst.msk [vmem:[%s278 + $0x78] sm:$0xff] %vm10335, %v10318
      %10352 = vst.msk [vmem:[%s278 + $0x80] sm:$0xff] %vm10335, %v10319
      %10353 = vst.msk [vmem:[%s278 + $0x88] sm:$0xff] %vm10335, %v10320
      %10354 = vst.msk [vmem:[%s278 + $0x90] sm:$0xff] %vm10335, %v10321
      %10355 = vst.msk [vmem:[%s278 + $0x98] sm:$0xff] %vm10335, %v10322
      %10356 = vst.msk [vmem:[%s278 + $0xa0] sm:$0xff] %vm10335, %v10323
      %10357 = vst.msk [vmem:[%s278 + $0xa8] sm:$0xff] %vm10335, %v10324
      %10358 = vst.msk [vmem:[%s278 + $0xb0] sm:$0xff] %vm10335, %v10325
      %10359 = vst.msk [vmem:[%s278 + $0xb8] sm:$0xff] %vm10335, %v10326
      %10360 = vst.msk [vmem:[%s278 + $0xc0] sm:$0xff] %vm10335, %v10327
      %10361 = vst.msk [vmem:[%s278 + $0xc8] sm:$0xff] %vm10335, %v10328
      %10362 = vst.msk [vmem:[%s278 + $0xd0] sm:$0xff] %vm10335, %v10329
      %10363 = vst.msk [vmem:[%s278 + $0xd8] sm:$0xff] %vm10335, %v10330
      %10364 = vst.msk [vmem:[%s278 + $0xe0] sm:$0xff] %vm10335, %v10331
      %10365 = vst.msk [vmem:[%s278 + $0xe8] sm:$0xff] %vm10335, %v10332
      %10366 = vst.msk [vmem:[%s278 + $0xf0] sm:$0xff] %vm10335, %v10333
      %10367 = vst.msk [vmem:[%s278 + $0xf8] sm:$0xff] %vm10335, %v10334
      %p10368 = scmp.lt.s32.totalorder %s18, 1
      %s10369 = scalar_select %p10368, %s18, 1
      %s10370 = smul.addr %s10369, 32
      %s10371 = smul.addr %s10370, 8
      %s10372 = scalar_lea.vmem %s7, %s10371
      // Predicated region
      $region49: #{conv_block_3_forward.1} parent=47 // pred_check
        %p10373 = pneg %p188
      $region50: #{conv_block_3_forward.1} parent=47 // pred_check_branch
        %10375 = sbr.rel (%p10373) target = $region52
      $region51: #{conv_block_3_forward.1} parent=47 // pred_region
        _
      $region52: #{conv_block_3_forward.1} parent=47 // pred_fallthru
        _
    $region48: #{conv_block_3_forward.1} parent=5 // pred_fallthru
      _
    %p10376 = scmp.le.s32.totalorder 2, %s13
    // Predicated region
    $region53: #{conv_block_3_forward.1} parent=5 // pred_check
      %p10377 = pneg %p10376
    $region54: #{conv_block_3_forward.1} parent=5 // pred_check_branch
      %10379 = sbr.rel (%p10377) target = $region56
    $region55: #{conv_block_3_forward.1} parent=5 // pred_region
      %s10380 = ssub.s32 %s13, 2
      // Predicated region
      $region57: #{conv_block_3_forward.1} parent=55 // pred_check
        %p10381 = pneg %p194
      $region58: #{conv_block_3_forward.1} parent=55 // pred_check_branch
        %10383 = sbr.rel (%p10381) target = $region60
      $region59: #{conv_block_3_forward.1} parent=55 // pred_region
        %p10384 = scmp.lt.s32.totalorder %s19, 1
        %s10385 = scalar_select %p10384, %s19, 1
        %s10386 = smul.addr %s10385, 32
        %s10387 = smul.addr %s10386, 8
        %s10388 = scalar_lea.vmem %s7, %s10387
      $region60: #{conv_block_3_forward.1} parent=55 // pred_fallthru
        _
    $region56: #{conv_block_3_forward.1} parent=5 // pred_fallthru
      _
  $region6: #{conv_block_3_forward.1} parent=0 // loop_footer
    %s17 = sadd.s32 1, %s13
  $region7: #{conv_block_3_forward.1} parent=0 // loop_footer_branch
    %12 = sbr.rel target = $region3
  $region8: #{conv_block_3_forward.1} parent=0 // loop_exit
    _

</llo_original>
